<compile_context>
chip_gen: v7x
topology: tpu7x:2x2x1
jax: 0.10.0
libtpu: 0.0.40
codegen_flags: <defaults>
</compile_context>

<pallas_src>
import numpy as np
import jax
import jax.numpy as jnp
from jax.experimental import pallas as pl
from jax.experimental.pallas import tpu as pltpu


# ---------------------------------------------------------------------------
# Fused Pallas kernel: 5 conv blocks + linear + sigmoid for ONE image
# ---------------------------------------------------------------------------
def _conv_epilogue(x, bst, cout):
    """conv bias + LeakyReLU(0.2) + Dropout2d(eval=identity) + folded eval-BN."""
    bias = bst[0:1, :cout]
    scale = bst[1:2, :cout]
    shift = bst[2:3, :cout]
    x = x + bias
    x = jnp.where(x >= 0.0, x, 0.2 * x)      # LeakyReLU(0.2)
    return x * scale + shift                 # BN (eval, folded); identity for block 0


def fused_discriminator_kernel(
        p0_ref,                                   # [1, 256, 36]  layer-0 im2col patches
        w0_ref, w1_ref, w2_ref, w3_ref, w4_ref,   # conv weights
        s1_ref, s2_ref, s3_ref, s4_ref,           # 0/1 stride-2 patch-selection constants
        bst_ref,                                  # [5, 3, 256]   bias / BN-scale / BN-shift
        lw_ref, lb_ref,                           # 128-lane padded linear weight / bias
        o_ref):                                   # [1, 8, 128]   lane-dense output
    f32 = jnp.float32

    # ---- block 0: Conv(Cin->16) + LeakyReLU (no BN) ------------------------
    x = jnp.dot(p0_ref[0], w0_ref[...], preferred_element_type=f32)     # [256, 16]
    x = _conv_epilogue(x, bst_ref[0], 16)

    # ---- blocks 1..4: conv as 9 accumulated (Sel_t @ act) @ W_t matmuls ----
    def conv_block(x, s_ref, w_ref, bst, cout):
        acc = None
        for t in range(9):                       # static unroll over the 3x3 taps
            tap = jnp.dot(s_ref[t], x, preferred_element_type=f32)      # [M', Cin]
            y = jnp.dot(tap, w_ref[t], preferred_element_type=f32)      # [M', Cout]
            acc = y if acc is None else acc + y
        return _conv_epilogue(acc, bst, cout)

    x = conv_block(x, s1_ref, w1_ref, bst_ref[1], 32)    # [64, 32]
    x = conv_block(x, s2_ref, w2_ref, bst_ref[2], 64)    # [16, 64]
    x = conv_block(x, s3_ref, w3_ref, bst_ref[3], 128)   # [8, 128]  (rows 4..7 padding)
    x = conv_block(x, s4_ref, w4_ref, bst_ref[4], 256)   # [8, 256]  (rows 1..7 padding)

    # ---- adv layer: Linear(256 -> 1) + Sigmoid, padded to 128 lanes --------
    z = jnp.dot(x, lw_ref[...], preferred_element_type=f32) + lb_ref[...]   # [8, 128]
    z = 1.0 / (1.0 + jnp.exp(-z))                                           # Sigmoid
    o_ref[...] = z[None, :, :].astype(o_ref.dtype)       # full (1,8,128) unmasked store


# ---------------------------------------------------------------------------
# Host-side prep
# ---------------------------------------------------------------------------
def im2col_layer0(x_nhwc):
    """3x3 / stride-2 / pad-1 im2col of the input image (one-time XLA prep)."""
    N, H, W, C = x_nhwc.shape
    xp = jnp.pad(x_nhwc, ((0, 0), (1, 1), (1, 1), (0, 0)))
    Ho, Wo = H // 2, W // 2
    cols = []
    for kh in range(3):
        for kw in range(3):
            cols.append(xp[:, kh:kh + 2 * Ho:2, kw:kw + 2 * Wo:2, :])
    patches = jnp.concatenate(cols, axis=-1)              # [N, Ho, Wo, 9*C]
    return patches.reshape(N, Ho * Wo, 9 * C)


def build_sel(hi, wi, row_pad=None, col_pad=None):
    """Constant 0/1 matrices: sel[t, o, i] = 1 iff flat input pixel i is tap
    t (= kh*3+kw) of output position o for a 3x3/stride-2/pad-1 conv on an
    (hi, wi) grid.  Out-of-bounds taps (zero padding) are all-zero rows."""
    ho, wo = hi // 2, wi // 2
    n_rows = max(ho * wo, row_pad or 0)
    n_cols = max(hi * wi, col_pad or 0)
    sel = np.zeros((9, n_rows, n_cols), np.float32)
    for kh in range(3):
        for kw in range(3):
            t = kh * 3 + kw
            for oh in range(ho):
                ih = 2 * oh + kh - 1
                if not 0 <= ih < hi:
                    continue
                for ow in range(wo):
                    iw = 2 * ow + kw - 1
                    if 0 <= iw < wi:
                        sel[t, oh * wo + ow, ih * wi + iw] = 1.0
    return jnp.asarray(sel)


def prepare_kernel_params(conv_params, lin_w, lin_b, img_hw=32):
    kp = {}
    # conv weights: OIHW -> (kh, kw, cin, cout) -> per-tap matmul matrices
    for li, p in enumerate(conv_params):
        w = jnp.transpose(p["w"], (2, 3, 1, 0))           # [3, 3, Cin, Cout]
        cin, cout = w.shape[2], w.shape[3]
        if li == 0:
            kp["w0"] = w.reshape(9 * cin, cout)           # matches im2col (kh,kw,c) order
        else:
            kp[f"w{li}"] = w.reshape(9, cin, cout)
    # packed bias / BN-scale / BN-shift table (zero padded to 256 channels)
    bst = np.zeros((5, 3, 256), np.float32)
    for li, p in enumerate(conv_params):
        cout = p["b"].shape[0]
        bst[li, 0, :cout] = np.asarray(p["b"])
        bst[li, 1, :cout] = np.asarray(p["scale"])
        bst[li, 2, :cout] = np.asarray(p["shift"])
    kp["bst"] = jnp.asarray(bst)
    # stride-2 patch-selection constants for blocks 1..4 (pad tiny dims to 8 rows)
    hw = img_hw // 2
    for li in range(1, 5):
        in_rows = hw * hw
        out_rows = (hw // 2) * (hw // 2)
        kp[f"sel{li}"] = build_sel(
            hw, hw,
            row_pad=8 if out_rows < 8 else None,
            col_pad=8 if in_rows < 8 else None)
        hw //= 2
    # adv layer: pad the 1-wide linear to a 128-lane-dense matmul
    lw = np.zeros((256, 128), np.float32)
    lw[:, 0] = np.asarray(lin_w)[:, 0]
    lb = np.zeros((1, 128), np.float32)
    lb[0, 0] = np.asarray(lin_b)[0]
    kp["lin_w"] = jnp.asarray(lw)
    kp["lin_b"] = jnp.asarray(lb)
    return kp


def discriminator_forward_pallas(x_nchw, kp):
    N, C, H, W = x_nchw.shape
    # ds_size = IMGSIZE // 2**5 must be 1 so NHWC flatten == PyTorch NCHW flatten.
    assert H == 32 and W == 32, "fused kernel assumes 32x32 input (ds_size == 1)"
    x_nhwc = jnp.transpose(x_nchw, (0, 2, 3, 1))
    patches0 = im2col_layer0(x_nhwc)                      # [N, 256, 9*C]

    def full(arr):
        nd = arr.ndim
        return pl.BlockSpec(arr.shape, lambda b, nd=nd: (0,) * nd)

    operands = (patches0, kp["w0"], kp["w1"], kp["w2"], kp["w3"], kp["w4"],
                kp["sel1"], kp["sel2"], kp["sel3"], kp["sel4"],
                kp["bst"], kp["lin_w"], kp["lin_b"])

    in_specs = [pl.BlockSpec((1,) + patches0.shape[1:], lambda b: (b, 0, 0))]
    in_specs += [full(a) for a in operands[1:]]

    out = pl.pallas_call(
        fused_discriminator_kernel,
        out_shape=jax.ShapeDtypeStruct((N, 8, 128), jnp.float32),
        grid=(N,),
        in_specs=in_specs,
        out_specs=pl.BlockSpec((1, 8, 128), lambda b: (b, 0, 0)),
        compiler_params=pltpu.CompilerParams(
            dimension_semantics=("parallel",)),           # v7x: one image per TensorCore
    )(*operands)
    return out[:, 0, :1]                                  # [N, 1]


# ---------------------------------------------------------------------------
# Deterministic parameter construction (synthetic, mimics module __init__ shapes)
# ---------------------------------------------------------------------------
def build_params(key, in_ch):
    channels = [in_ch, 16, 32, 64, 128, 256]
    bn_flags = [False, True, True, True, True]
    eps = 1e-5
    conv_params = []
    for cin, cout, bn in zip(channels[:-1], channels[1:], bn_flags):
        key, kw, kb, kg, kbe, km, kv = jax.random.split(key, 7)
        w = 0.05 * jax.random.normal(kw, (cout, cin, 3, 3), jnp.float32)  # OIHW
        b = 0.01 * jax.random.normal(kb, (cout,), jnp.float32)
        if bn:
            gamma = 1.0 + 0.1 * jax.random.normal(kg, (cout,), jnp.float32)
            beta = 0.05 * jax.random.normal(kbe, (cout,), jnp.float32)
            r_mean = 0.02 * jax.random.normal(km, (cout,), jnp.float32)
            r_var = 1.0 + 0.1 * jnp.abs(jax.random.normal(kv, (cout,), jnp.float32))
            scale = gamma / jnp.sqrt(r_var + eps)
            shift = beta - r_mean * scale
        else:
            scale = jnp.ones((cout,), jnp.float32)
            shift = jnp.zeros((cout,), jnp.float32)
        conv_params.append(dict(w=w, b=b, scale=scale, shift=shift))
    key, kw, kb = jax.random.split(key, 3)
    lin_w = 0.05 * jax.random.normal(kw, (256, 1), jnp.float32)
    lin_b = 0.01 * jax.random.normal(kb, (1,), jnp.float32)
    return conv_params, lin_w, lin_b


# ---------------------------------------------------------------------------
# Pure-JAX reference (mirrors PyTorch NCHW semantics) for correctness check
# ---------------------------------------------------------------------------
def reference_forward(x_nchw, conv_params, lin_w, lin_b):
    out = x_nchw
    for p in conv_params:
        out = jax.lax.conv_general_dilated(
            out, p["w"], window_strides=(2, 2), padding=((1, 1), (1, 1)),
            dimension_numbers=("NCHW", "OIHW", "NCHW"))
        out = out + p["b"][None, :, None, None]
        out = jnp.where(out >= 0.0, out, 0.2 * out)
        out = out * p["scale"][None, :, None, None] + p["shift"][None, :, None, None]
    feat = out.reshape(out.shape[0], -1)
    return jax.nn.sigmoid(feat @ lin_w + lin_b)


if __name__ == "__main__":
    # cfg.DATASET.N_CLASS = 1  -> in_channels = N_CLASS + 3 = 4
    # cfg.DATASET.IMGSIZE = (32, 32) -> ds_size = 32 // 2**5 = 1
    N, C_IN, IMG = 2, 4, 32
    key = jax.random.PRNGKey(0)
    key, kx = jax.random.split(key)
    x = jax.random.normal(kx, (N, C_IN, IMG, IMG), jnp.float32)  # NCHW like PyTorch

    conv_params, lin_w, lin_b = build_params(key, C_IN)
    kparams = prepare_kernel_params(conv_params, lin_w, lin_b, IMG)

    fwd = jax.jit(discriminator_forward_pallas)
    score = jax.block_until_ready(fwd(x, kparams))

    ref = reference_forward(x, conv_params, lin_w, lin_b)
    assert score.shape == (N, 1)
    assert jnp.allclose(score, ref, atol=1e-4, rtol=1e-4), (score, ref)

    print("KERNEL_OK")
</pallas_src>

<mosaic_0001>
module attributes {stable_mosaic.version = 11 : i64} {
  func.func @fused_discriminator_kernel(%arg0: i32, %arg1: memref<1x256x36xf32, #tpu.memory_space<vmem>>, %arg2: memref<36x16xf32, #tpu.memory_space<vmem>>, %arg3: memref<9x16x32xf32, #tpu.memory_space<vmem>>, %arg4: memref<9x32x64xf32, #tpu.memory_space<vmem>>, %arg5: memref<9x64x128xf32, #tpu.memory_space<vmem>>, %arg6: memref<9x128x256xf32, #tpu.memory_space<vmem>>, %arg7: memref<9x64x256xf32, #tpu.memory_space<vmem>>, %arg8: memref<9x16x64xf32, #tpu.memory_space<vmem>>, %arg9: memref<9x8x16xf32, #tpu.memory_space<vmem>>, %arg10: memref<9x8x8xf32, #tpu.memory_space<vmem>>, %arg11: memref<5x3x256xf32, #tpu.memory_space<vmem>>, %arg12: memref<256x128xf32, #tpu.memory_space<vmem>>, %arg13: memref<1x128xf32, #tpu.memory_space<vmem>>, %arg14: memref<1x8x128xf32, #tpu.memory_space<vmem>>) attributes {dimension_semantics = [#tpu.dimension_semantics<parallel>], iteration_bounds = array<i64: 2>, scalar_prefetch = 0 : i64, scratch_operands = 0 : i64, tpu.core_type = #tpu.core_type<tc>, window_params = [{transform_indices = @transform_0, window_bounds = array<i64: 1, 256, 36>}, {pipeline_mode = #tpu.pipeline_mode<synchronous>, transform_indices = @transform_1, window_bounds = array<i64: 36, 16>}, {pipeline_mode = #tpu.pipeline_mode<synchronous>, transform_indices = @transform_2, window_bounds = array<i64: 9, 16, 32>}, {pipeline_mode = #tpu.pipeline_mode<synchronous>, transform_indices = @transform_3, window_bounds = array<i64: 9, 32, 64>}, {pipeline_mode = #tpu.pipeline_mode<synchronous>, transform_indices = @transform_4, window_bounds = array<i64: 9, 64, 128>}, {pipeline_mode = #tpu.pipeline_mode<synchronous>, transform_indices = @transform_5, window_bounds = array<i64: 9, 128, 256>}, {pipeline_mode = #tpu.pipeline_mode<synchronous>, transform_indices = @transform_6, window_bounds = array<i64: 9, 64, 256>}, {pipeline_mode = #tpu.pipeline_mode<synchronous>, transform_indices = @transform_7, window_bounds = array<i64: 9, 16, 64>}, {pipeline_mode = #tpu.pipeline_mode<synchronous>, transform_indices = @transform_8, window_bounds = array<i64: 9, 8, 16>}, {pipeline_mode = #tpu.pipeline_mode<synchronous>, transform_indices = @transform_9, window_bounds = array<i64: 9, 8, 8>}, {pipeline_mode = #tpu.pipeline_mode<synchronous>, transform_indices = @transform_10, window_bounds = array<i64: 5, 3, 256>}, {pipeline_mode = #tpu.pipeline_mode<synchronous>, transform_indices = @transform_11, window_bounds = array<i64: 256, 128>}, {pipeline_mode = #tpu.pipeline_mode<synchronous>, transform_indices = @transform_12, window_bounds = array<i64: 1, 128>}, {transform_indices = @transform_13, window_bounds = array<i64: 1, 8, 128>}]} {
    %c0 = arith.constant 0 : index
    %c0_0 = arith.constant 0 : index
    %c0_1 = arith.constant 0 : index
    %0 = vector.load %arg1[%c0, %c0_0, %c0_1] : memref<1x256x36xf32, #tpu.memory_space<vmem>>, vector<1x256x36xf32>
    %1 = vector.shape_cast %0 : vector<1x256x36xf32> to vector<256x36xf32>
    %c0_2 = arith.constant 0 : index
    %c0_3 = arith.constant 0 : index
    %2 = vector.load %arg2[%c0_2, %c0_3] : memref<36x16xf32, #tpu.memory_space<vmem>>, vector<36x16xf32>
    %cst = arith.constant dense<0.000000e+00> : vector<256x16xf32>
    %3 = tpu.matmul %1, %2, %cst {dimension_numbers = #tpu.dot_dimension_numbers<[1], [0], [0], [1], [0, 0, 1, 1], [], []>} : vector<256x36xf32>, vector<36x16xf32>, vector<256x16xf32> -> vector<256x16xf32>
    %c0_4 = arith.constant 0 : index
    %c0_5 = arith.constant 0 : index
    %c0_6 = arith.constant 0 : index
    %4 = vector.load %arg11[%c0_4, %c0_5, %c0_6] : memref<5x3x256xf32, #tpu.memory_space<vmem>>, vector<1x3x256xf32>
    %5 = vector.shape_cast %4 : vector<1x3x256xf32> to vector<3x256xf32>
    %6 = vector.extract_strided_slice %5 {offsets = [0, 0], sizes = [1, 16], strides = [1, 1]} : vector<3x256xf32> to vector<1x16xf32>
    %7 = vector.extract_strided_slice %5 {offsets = [1, 0], sizes = [1, 16], strides = [1, 1]} : vector<3x256xf32> to vector<1x16xf32>
    %8 = vector.extract_strided_slice %5 {offsets = [2, 0], sizes = [1, 16], strides = [1, 1]} : vector<3x256xf32> to vector<1x16xf32>
    %9 = vector.broadcast %6 : vector<1x16xf32> to vector<256x16xf32>
    %10 = arith.addf %3, %9 : vector<256x16xf32>
    %cst_7 = arith.constant 0.000000e+00 : f32
    %11 = vector.broadcast %cst_7 : f32 to vector<256x16xf32>
    %12 = arith.cmpf oge, %10, %11 : vector<256x16xf32>
    %cst_8 = arith.constant 2.000000e-01 : f32
    %13 = vector.broadcast %cst_8 : f32 to vector<256x16xf32>
    %14 = arith.mulf %13, %10 : vector<256x16xf32>
    %15 = arith.select %12, %10, %14 : vector<256x16xi1>, vector<256x16xf32>
    %16 = vector.broadcast %7 : vector<1x16xf32> to vector<256x16xf32>
    %17 = arith.mulf %15, %16 : vector<256x16xf32>
    %18 = vector.broadcast %8 : vector<1x16xf32> to vector<256x16xf32>
    %19 = arith.addf %17, %18 : vector<256x16xf32>
    %c1 = arith.constant 1 : index
    %c0_9 = arith.constant 0 : index
    %c0_10 = arith.constant 0 : index
    %20 = vector.load %arg11[%c1, %c0_9, %c0_10] : memref<5x3x256xf32, #tpu.memory_space<vmem>>, vector<1x3x256xf32>
    %21 = vector.shape_cast %20 : vector<1x3x256xf32> to vector<3x256xf32>
    %c0_11 = arith.constant 0 : index
    %c0_12 = arith.constant 0 : index
    %c0_13 = arith.constant 0 : index
    %22 = vector.load %arg7[%c0_11, %c0_12, %c0_13] : memref<9x64x256xf32, #tpu.memory_space<vmem>>, vector<1x64x256xf32>
    %23 = vector.shape_cast %22 : vector<1x64x256xf32> to vector<64x256xf32>
    %cst_14 = arith.constant dense<0.000000e+00> : vector<64x16xf32>
    %24 = tpu.matmul %23, %19, %cst_14 {dimension_numbers = #tpu.dot_dimension_numbers<[1], [0], [0], [1], [0, 0, 1, 1], [], []>} : vector<64x256xf32>, vector<256x16xf32>, vector<64x16xf32> -> vector<64x16xf32>
    %c0_15 = arith.constant 0 : index
    %c0_16 = arith.constant 0 : index
    %c0_17 = arith.constant 0 : index
    %25 = vector.load %arg3[%c0_15, %c0_16, %c0_17] : memref<9x16x32xf32, #tpu.memory_space<vmem>>, vector<1x16x32xf32>
    %26 = vector.shape_cast %25 : vector<1x16x32xf32> to vector<16x32xf32>
    %cst_18 = arith.constant dense<0.000000e+00> : vector<64x32xf32>
    %27 = tpu.matmul %24, %26, %cst_18 {dimension_numbers = #tpu.dot_dimension_numbers<[1], [0], [0], [1], [0, 0, 1, 1], [], []>} : vector<64x16xf32>, vector<16x32xf32>, vector<64x32xf32> -> vector<64x32xf32>
    %c1_19 = arith.constant 1 : index
    %c0_20 = arith.constant 0 : index
    %c0_21 = arith.constant 0 : index
    %28 = vector.load %arg7[%c1_19, %c0_20, %c0_21] : memref<9x64x256xf32, #tpu.memory_space<vmem>>, vector<1x64x256xf32>
    %29 = vector.shape_cast %28 : vector<1x64x256xf32> to vector<64x256xf32>
    %cst_22 = arith.constant dense<0.000000e+00> : vector<64x16xf32>
    %30 = tpu.matmul %29, %19, %cst_22 {dimension_numbers = #tpu.dot_dimension_numbers<[1], [0], [0], [1], [0, 0, 1, 1], [], []>} : vector<64x256xf32>, vector<256x16xf32>, vector<64x16xf32> -> vector<64x16xf32>
    %c1_23 = arith.constant 1 : index
    %c0_24 = arith.constant 0 : index
    %c0_25 = arith.constant 0 : index
    %31 = vector.load %arg3[%c1_23, %c0_24, %c0_25] : memref<9x16x32xf32, #tpu.memory_space<vmem>>, vector<1x16x32xf32>
    %32 = vector.shape_cast %31 : vector<1x16x32xf32> to vector<16x32xf32>
    %cst_26 = arith.constant dense<0.000000e+00> : vector<64x32xf32>
    %33 = tpu.matmul %30, %32, %cst_26 {dimension_numbers = #tpu.dot_dimension_numbers<[1], [0], [0], [1], [0, 0, 1, 1], [], []>} : vector<64x16xf32>, vector<16x32xf32>, vector<64x32xf32> -> vector<64x32xf32>
    %34 = arith.addf %27, %33 : vector<64x32xf32>
    %c2 = arith.constant 2 : index
    %c0_27 = arith.constant 0 : index
    %c0_28 = arith.constant 0 : index
    %35 = vector.load %arg7[%c2, %c0_27, %c0_28] : memref<9x64x256xf32, #tpu.memory_space<vmem>>, vector<1x64x256xf32>
    %36 = vector.shape_cast %35 : vector<1x64x256xf32> to vector<64x256xf32>
    %cst_29 = arith.constant dense<0.000000e+00> : vector<64x16xf32>
    %37 = tpu.matmul %36, %19, %cst_29 {dimension_numbers = #tpu.dot_dimension_numbers<[1], [0], [0], [1], [0, 0, 1, 1], [], []>} : vector<64x256xf32>, vector<256x16xf32>, vector<64x16xf32> -> vector<64x16xf32>
    %c2_30 = arith.constant 2 : index
    %c0_31 = arith.constant 0 : index
    %c0_32 = arith.constant 0 : index
    %38 = vector.load %arg3[%c2_30, %c0_31, %c0_32] : memref<9x16x32xf32, #tpu.memory_space<vmem>>, vector<1x16x32xf32>
    %39 = vector.shape_cast %38 : vector<1x16x32xf32> to vector<16x32xf32>
    %cst_33 = arith.constant dense<0.000000e+00> : vector<64x32xf32>
    %40 = tpu.matmul %37, %39, %cst_33 {dimension_numbers = #tpu.dot_dimension_numbers<[1], [0], [0], [1], [0, 0, 1, 1], [], []>} : vector<64x16xf32>, vector<16x32xf32>, vector<64x32xf32> -> vector<64x32xf32>
    %41 = arith.addf %34, %40 : vector<64x32xf32>
    %c3 = arith.constant 3 : index
    %c0_34 = arith.constant 0 : index
    %c0_35 = arith.constant 0 : index
    %42 = vector.load %arg7[%c3, %c0_34, %c0_35] : memref<9x64x256xf32, #tpu.memory_space<vmem>>, vector<1x64x256xf32>
    %43 = vector.shape_cast %42 : vector<1x64x256xf32> to vector<64x256xf32>
    %cst_36 = arith.constant dense<0.000000e+00> : vector<64x16xf32>
    %44 = tpu.matmul %43, %19, %cst_36 {dimension_numbers = #tpu.dot_dimension_numbers<[1], [0], [0], [1], [0, 0, 1, 1], [], []>} : vector<64x256xf32>, vector<256x16xf32>, vector<64x16xf32> -> vector<64x16xf32>
    %c3_37 = arith.constant 3 : index
    %c0_38 = arith.constant 0 : index
    %c0_39 = arith.constant 0 : index
    %45 = vector.load %arg3[%c3_37, %c0_38, %c0_39] : memref<9x16x32xf32, #tpu.memory_space<vmem>>, vector<1x16x32xf32>
    %46 = vector.shape_cast %45 : vector<1x16x32xf32> to vector<16x32xf32>
    %cst_40 = arith.constant dense<0.000000e+00> : vector<64x32xf32>
    %47 = tpu.matmul %44, %46, %cst_40 {dimension_numbers = #tpu.dot_dimension_numbers<[1], [0], [0], [1], [0, 0, 1, 1], [], []>} : vector<64x16xf32>, vector<16x32xf32>, vector<64x32xf32> -> vector<64x32xf32>
    %48 = arith.addf %41, %47 : vector<64x32xf32>
    %c4 = arith.constant 4 : index
    %c0_41 = arith.constant 0 : index
    %c0_42 = arith.constant 0 : index
    %49 = vector.load %arg7[%c4, %c0_41, %c0_42] : memref<9x64x256xf32, #tpu.memory_space<vmem>>, vector<1x64x256xf32>
    %50 = vector.shape_cast %49 : vector<1x64x256xf32> to vector<64x256xf32>
    %cst_43 = arith.constant dense<0.000000e+00> : vector<64x16xf32>
    %51 = tpu.matmul %50, %19, %cst_43 {dimension_numbers = #tpu.dot_dimension_numbers<[1], [0], [0], [1], [0, 0, 1, 1], [], []>} : vector<64x256xf32>, vector<256x16xf32>, vector<64x16xf32> -> vector<64x16xf32>
    %c4_44 = arith.constant 4 : index
    %c0_45 = arith.constant 0 : index
    %c0_46 = arith.constant 0 : index
    %52 = vector.load %arg3[%c4_44, %c0_45, %c0_46] : memref<9x16x32xf32, #tpu.memory_space<vmem>>, vector<1x16x32xf32>
    %53 = vector.shape_cast %52 : vector<1x16x32xf32> to vector<16x32xf32>
    %cst_47 = arith.constant dense<0.000000e+00> : vector<64x32xf32>
    %54 = tpu.matmul %51, %53, %cst_47 {dimension_numbers = #tpu.dot_dimension_numbers<[1], [0], [0], [1], [0, 0, 1, 1], [], []>} : vector<64x16xf32>, vector<16x32xf32>, vector<64x32xf32> -> vector<64x32xf32>
    %55 = arith.addf %48, %54 : vector<64x32xf32>
    %c5 = arith.constant 5 : index
    %c0_48 = arith.constant 0 : index
    %c0_49 = arith.constant 0 : index
    %56 = vector.load %arg7[%c5, %c0_48, %c0_49] : memref<9x64x256xf32, #tpu.memory_space<vmem>>, vector<1x64x256xf32>
    %57 = vector.shape_cast %56 : vector<1x64x256xf32> to vector<64x256xf32>
    %cst_50 = arith.constant dense<0.000000e+00> : vector<64x16xf32>
    %58 = tpu.matmul %57, %19, %cst_50 {dimension_numbers = #tpu.dot_dimension_numbers<[1], [0], [0], [1], [0, 0, 1, 1], [], []>} : vector<64x256xf32>, vector<256x16xf32>, vector<64x16xf32> -> vector<64x16xf32>
    %c5_51 = arith.constant 5 : index
    %c0_52 = arith.constant 0 : index
    %c0_53 = arith.constant 0 : index
    %59 = vector.load %arg3[%c5_51, %c0_52, %c0_53] : memref<9x16x32xf32, #tpu.memory_space<vmem>>, vector<1x16x32xf32>
    %60 = vector.shape_cast %59 : vector<1x16x32xf32> to vector<16x32xf32>
    %cst_54 = arith.constant dense<0.000000e+00> : vector<64x32xf32>
    %61 = tpu.matmul %58, %60, %cst_54 {dimension_numbers = #tpu.dot_dimension_numbers<[1], [0], [0], [1], [0, 0, 1, 1], [], []>} : vector<64x16xf32>, vector<16x32xf32>, vector<64x32xf32> -> vector<64x32xf32>
    %62 = arith.addf %55, %61 : vector<64x32xf32>
    %c6 = arith.constant 6 : index
    %c0_55 = arith.constant 0 : index
    %c0_56 = arith.constant 0 : index
    %63 = vector.load %arg7[%c6, %c0_55, %c0_56] : memref<9x64x256xf32, #tpu.memory_space<vmem>>, vector<1x64x256xf32>
    %64 = vector.shape_cast %63 : vector<1x64x256xf32> to vector<64x256xf32>
    %cst_57 = arith.constant dense<0.000000e+00> : vector<64x16xf32>
    %65 = tpu.matmul %64, %19, %cst_57 {dimension_numbers = #tpu.dot_dimension_numbers<[1], [0], [0], [1], [0, 0, 1, 1], [], []>} : vector<64x256xf32>, vector<256x16xf32>, vector<64x16xf32> -> vector<64x16xf32>
    %c6_58 = arith.constant 6 : index
    %c0_59 = arith.constant 0 : index
    %c0_60 = arith.constant 0 : index
    %66 = vector.load %arg3[%c6_58, %c0_59, %c0_60] : memref<9x16x32xf32, #tpu.memory_space<vmem>>, vector<1x16x32xf32>
    %67 = vector.shape_cast %66 : vector<1x16x32xf32> to vector<16x32xf32>
    %cst_61 = arith.constant dense<0.000000e+00> : vector<64x32xf32>
    %68 = tpu.matmul %65, %67, %cst_61 {dimension_numbers = #tpu.dot_dimension_numbers<[1], [0], [0], [1], [0, 0, 1, 1], [], []>} : vector<64x16xf32>, vector<16x32xf32>, vector<64x32xf32> -> vector<64x32xf32>
    %69 = arith.addf %62, %68 : vector<64x32xf32>
    %c7 = arith.constant 7 : index
    %c0_62 = arith.constant 0 : index
    %c0_63 = arith.constant 0 : index
    %70 = vector.load %arg7[%c7, %c0_62, %c0_63] : memref<9x64x256xf32, #tpu.memory_space<vmem>>, vector<1x64x256xf32>
    %71 = vector.shape_cast %70 : vector<1x64x256xf32> to vector<64x256xf32>
    %cst_64 = arith.constant dense<0.000000e+00> : vector<64x16xf32>
    %72 = tpu.matmul %71, %19, %cst_64 {dimension_numbers = #tpu.dot_dimension_numbers<[1], [0], [0], [1], [0, 0, 1, 1], [], []>} : vector<64x256xf32>, vector<256x16xf32>, vector<64x16xf32> -> vector<64x16xf32>
    %c7_65 = arith.constant 7 : index
    %c0_66 = arith.constant 0 : index
    %c0_67 = arith.constant 0 : index
    %73 = vector.load %arg3[%c7_65, %c0_66, %c0_67] : memref<9x16x32xf32, #tpu.memory_space<vmem>>, vector<1x16x32xf32>
    %74 = vector.shape_cast %73 : vector<1x16x32xf32> to vector<16x32xf32>
    %cst_68 = arith.constant dense<0.000000e+00> : vector<64x32xf32>
    %75 = tpu.matmul %72, %74, %cst_68 {dimension_numbers = #tpu.dot_dimension_numbers<[1], [0], [0], [1], [0, 0, 1, 1], [], []>} : vector<64x16xf32>, vector<16x32xf32>, vector<64x32xf32> -> vector<64x32xf32>
    %76 = arith.addf %69, %75 : vector<64x32xf32>
    %c8 = arith.constant 8 : index
    %c0_69 = arith.constant 0 : index
    %c0_70 = arith.constant 0 : index
    %77 = vector.load %arg7[%c8, %c0_69, %c0_70] : memref<9x64x256xf32, #tpu.memory_space<vmem>>, vector<1x64x256xf32>
    %78 = vector.shape_cast %77 : vector<1x64x256xf32> to vector<64x256xf32>
    %cst_71 = arith.constant dense<0.000000e+00> : vector<64x16xf32>
    %79 = tpu.matmul %78, %19, %cst_71 {dimension_numbers = #tpu.dot_dimension_numbers<[1], [0], [0], [1], [0, 0, 1, 1], [], []>} : vector<64x256xf32>, vector<256x16xf32>, vector<64x16xf32> -> vector<64x16xf32>
    %c8_72 = arith.constant 8 : index
    %c0_73 = arith.constant 0 : index
    %c0_74 = arith.constant 0 : index
    %80 = vector.load %arg3[%c8_72, %c0_73, %c0_74] : memref<9x16x32xf32, #tpu.memory_space<vmem>>, vector<1x16x32xf32>
    %81 = vector.shape_cast %80 : vector<1x16x32xf32> to vector<16x32xf32>
    %cst_75 = arith.constant dense<0.000000e+00> : vector<64x32xf32>
    %82 = tpu.matmul %79, %81, %cst_75 {dimension_numbers = #tpu.dot_dimension_numbers<[1], [0], [0], [1], [0, 0, 1, 1], [], []>} : vector<64x16xf32>, vector<16x32xf32>, vector<64x32xf32> -> vector<64x32xf32>
    %83 = arith.addf %76, %82 : vector<64x32xf32>
    %84 = vector.extract_strided_slice %21 {offsets = [0, 0], sizes = [1, 32], strides = [1, 1]} : vector<3x256xf32> to vector<1x32xf32>
    %85 = vector.extract_strided_slice %21 {offsets = [1, 0], sizes = [1, 32], strides = [1, 1]} : vector<3x256xf32> to vector<1x32xf32>
    %86 = vector.extract_strided_slice %21 {offsets = [2, 0], sizes = [1, 32], strides = [1, 1]} : vector<3x256xf32> to vector<1x32xf32>
    %87 = vector.broadcast %84 : vector<1x32xf32> to vector<64x32xf32>
    %88 = arith.addf %83, %87 : vector<64x32xf32>
    %cst_76 = arith.constant 0.000000e+00 : f32
    %89 = vector.broadcast %cst_76 : f32 to vector<64x32xf32>
    %90 = arith.cmpf oge, %88, %89 : vector<64x32xf32>
    %cst_77 = arith.constant 2.000000e-01 : f32
    %91 = vector.broadcast %cst_77 : f32 to vector<64x32xf32>
    %92 = arith.mulf %91, %88 : vector<64x32xf32>
    %93 = arith.select %90, %88, %92 : vector<64x32xi1>, vector<64x32xf32>
    %94 = vector.broadcast %85 : vector<1x32xf32> to vector<64x32xf32>
    %95 = arith.mulf %93, %94 : vector<64x32xf32>
    %96 = vector.broadcast %86 : vector<1x32xf32> to vector<64x32xf32>
    %97 = arith.addf %95, %96 : vector<64x32xf32>
    %c2_78 = arith.constant 2 : index
    %c0_79 = arith.constant 0 : index
    %c0_80 = arith.constant 0 : index
    %98 = vector.load %arg11[%c2_78, %c0_79, %c0_80] : memref<5x3x256xf32, #tpu.memory_space<vmem>>, vector<1x3x256xf32>
    %99 = vector.shape_cast %98 : vector<1x3x256xf32> to vector<3x256xf32>
    %c0_81 = arith.constant 0 : index
    %c0_82 = arith.constant 0 : index
    %c0_83 = arith.constant 0 : index
    %100 = vector.load %arg8[%c0_81, %c0_82, %c0_83] : memref<9x16x64xf32, #tpu.memory_space<vmem>>, vector<1x16x64xf32>
    %101 = vector.shape_cast %100 : vector<1x16x64xf32> to vector<16x64xf32>
    %cst_84 = arith.constant dense<0.000000e+00> : vector<16x32xf32>
    %102 = tpu.matmul %101, %97, %cst_84 {dimension_numbers = #tpu.dot_dimension_numbers<[1], [0], [0], [1], [0, 0, 1, 1], [], []>} : vector<16x64xf32>, vector<64x32xf32>, vector<16x32xf32> -> vector<16x32xf32>
    %c0_85 = arith.constant 0 : index
    %c0_86 = arith.constant 0 : index
    %c0_87 = arith.constant 0 : index
    %103 = vector.load %arg4[%c0_85, %c0_86, %c0_87] : memref<9x32x64xf32, #tpu.memory_space<vmem>>, vector<1x32x64xf32>
    %104 = vector.shape_cast %103 : vector<1x32x64xf32> to vector<32x64xf32>
    %cst_88 = arith.constant dense<0.000000e+00> : vector<16x64xf32>
    %105 = tpu.matmul %102, %104, %cst_88 {dimension_numbers = #tpu.dot_dimension_numbers<[1], [0], [0], [1], [0, 0, 1, 1], [], []>} : vector<16x32xf32>, vector<32x64xf32>, vector<16x64xf32> -> vector<16x64xf32>
    %c1_89 = arith.constant 1 : index
    %c0_90 = arith.constant 0 : index
    %c0_91 = arith.constant 0 : index
    %106 = vector.load %arg8[%c1_89, %c0_90, %c0_91] : memref<9x16x64xf32, #tpu.memory_space<vmem>>, vector<1x16x64xf32>
    %107 = vector.shape_cast %106 : vector<1x16x64xf32> to vector<16x64xf32>
    %cst_92 = arith.constant dense<0.000000e+00> : vector<16x32xf32>
    %108 = tpu.matmul %107, %97, %cst_92 {dimension_numbers = #tpu.dot_dimension_numbers<[1], [0], [0], [1], [0, 0, 1, 1], [], []>} : vector<16x64xf32>, vector<64x32xf32>, vector<16x32xf32> -> vector<16x32xf32>
    %c1_93 = arith.constant 1 : index
    %c0_94 = arith.constant 0 : index
    %c0_95 = arith.constant 0 : index
    %109 = vector.load %arg4[%c1_93, %c0_94, %c0_95] : memref<9x32x64xf32, #tpu.memory_space<vmem>>, vector<1x32x64xf32>
    %110 = vector.shape_cast %109 : vector<1x32x64xf32> to vector<32x64xf32>
    %cst_96 = arith.constant dense<0.000000e+00> : vector<16x64xf32>
    %111 = tpu.matmul %108, %110, %cst_96 {dimension_numbers = #tpu.dot_dimension_numbers<[1], [0], [0], [1], [0, 0, 1, 1], [], []>} : vector<16x32xf32>, vector<32x64xf32>, vector<16x64xf32> -> vector<16x64xf32>
    %112 = arith.addf %105, %111 : vector<16x64xf32>
    %c2_97 = arith.constant 2 : index
    %c0_98 = arith.constant 0 : index
    %c0_99 = arith.constant 0 : index
    %113 = vector.load %arg8[%c2_97, %c0_98, %c0_99] : memref<9x16x64xf32, #tpu.memory_space<vmem>>, vector<1x16x64xf32>
    %114 = vector.shape_cast %113 : vector<1x16x64xf32> to vector<16x64xf32>
    %cst_100 = arith.constant dense<0.000000e+00> : vector<16x32xf32>
    %115 = tpu.matmul %114, %97, %cst_100 {dimension_numbers = #tpu.dot_dimension_numbers<[1], [0], [0], [1], [0, 0, 1, 1], [], []>} : vector<16x64xf32>, vector<64x32xf32>, vector<16x32xf32> -> vector<16x32xf32>
    %c2_101 = arith.constant 2 : index
    %c0_102 = arith.constant 0 : index
    %c0_103 = arith.constant 0 : index
    %116 = vector.load %arg4[%c2_101, %c0_102, %c0_103] : memref<9x32x64xf32, #tpu.memory_space<vmem>>, vector<1x32x64xf32>
    %117 = vector.shape_cast %116 : vector<1x32x64xf32> to vector<32x64xf32>
    %cst_104 = arith.constant dense<0.000000e+00> : vector<16x64xf32>
    %118 = tpu.matmul %115, %117, %cst_104 {dimension_numbers = #tpu.dot_dimension_numbers<[1], [0], [0], [1], [0, 0, 1, 1], [], []>} : vector<16x32xf32>, vector<32x64xf32>, vector<16x64xf32> -> vector<16x64xf32>
    %119 = arith.addf %112, %118 : vector<16x64xf32>
    %c3_105 = arith.constant 3 : index
    %c0_106 = arith.constant 0 : index
    %c0_107 = arith.constant 0 : index
    %120 = vector.load %arg8[%c3_105, %c0_106, %c0_107] : memref<9x16x64xf32, #tpu.memory_space<vmem>>, vector<1x16x64xf32>
    %121 = vector.shape_cast %120 : vector<1x16x64xf32> to vector<16x64xf32>
    %cst_108 = arith.constant dense<0.000000e+00> : vector<16x32xf32>
    %122 = tpu.matmul %121, %97, %cst_108 {dimension_numbers = #tpu.dot_dimension_numbers<[1], [0], [0], [1], [0, 0, 1, 1], [], []>} : vector<16x64xf32>, vector<64x32xf32>, vector<16x32xf32> -> vector<16x32xf32>
    %c3_109 = arith.constant 3 : index
    %c0_110 = arith.constant 0 : index
    %c0_111 = arith.constant 0 : index
    %123 = vector.load %arg4[%c3_109, %c0_110, %c0_111] : memref<9x32x64xf32, #tpu.memory_space<vmem>>, vector<1x32x64xf32>
    %124 = vector.shape_cast %123 : vector<1x32x64xf32> to vector<32x64xf32>
    %cst_112 = arith.constant dense<0.000000e+00> : vector<16x64xf32>
    %125 = tpu.matmul %122, %124, %cst_112 {dimension_numbers = #tpu.dot_dimension_numbers<[1], [0], [0], [1], [0, 0, 1, 1], [], []>} : vector<16x32xf32>, vector<32x64xf32>, vector<16x64xf32> -> vector<16x64xf32>
    %126 = arith.addf %119, %125 : vector<16x64xf32>
    %c4_113 = arith.constant 4 : index
    %c0_114 = arith.constant 0 : index
    %c0_115 = arith.constant 0 : index
    %127 = vector.load %arg8[%c4_113, %c0_114, %c0_115] : memref<9x16x64xf32, #tpu.memory_space<vmem>>, vector<1x16x64xf32>
    %128 = vector.shape_cast %127 : vector<1x16x64xf32> to vector<16x64xf32>
    %cst_116 = arith.constant dense<0.000000e+00> : vector<16x32xf32>
    %129 = tpu.matmul %128, %97, %cst_116 {dimension_numbers = #tpu.dot_dimension_numbers<[1], [0], [0], [1], [0, 0, 1, 1], [], []>} : vector<16x64xf32>, vector<64x32xf32>, vector<16x32xf32> -> vector<16x32xf32>
    %c4_117 = arith.constant 4 : index
    %c0_118 = arith.constant 0 : index
    %c0_119 = arith.constant 0 : index
    %130 = vector.load %arg4[%c4_117, %c0_118, %c0_119] : memref<9x32x64xf32, #tpu.memory_space<vmem>>, vector<1x32x64xf32>
    %131 = vector.shape_cast %130 : vector<1x32x64xf32> to vector<32x64xf32>
    %cst_120 = arith.constant dense<0.000000e+00> : vector<16x64xf32>
    %132 = tpu.matmul %129, %131, %cst_120 {dimension_numbers = #tpu.dot_dimension_numbers<[1], [0], [0], [1], [0, 0, 1, 1], [], []>} : vector<16x32xf32>, vector<32x64xf32>, vector<16x64xf32> -> vector<16x64xf32>
    %133 = arith.addf %126, %132 : vector<16x64xf32>
    %c5_121 = arith.constant 5 : index
    %c0_122 = arith.constant 0 : index
    %c0_123 = arith.constant 0 : index
    %134 = vector.load %arg8[%c5_121, %c0_122, %c0_123] : memref<9x16x64xf32, #tpu.memory_space<vmem>>, vector<1x16x64xf32>
    %135 = vector.shape_cast %134 : vector<1x16x64xf32> to vector<16x64xf32>
    %cst_124 = arith.constant dense<0.000000e+00> : vector<16x32xf32>
    %136 = tpu.matmul %135, %97, %cst_124 {dimension_numbers = #tpu.dot_dimension_numbers<[1], [0], [0], [1], [0, 0, 1, 1], [], []>} : vector<16x64xf32>, vector<64x32xf32>, vector<16x32xf32> -> vector<16x32xf32>
    %c5_125 = arith.constant 5 : index
    %c0_126 = arith.constant 0 : index
    %c0_127 = arith.constant 0 : index
    %137 = vector.load %arg4[%c5_125, %c0_126, %c0_127] : memref<9x32x64xf32, #tpu.memory_space<vmem>>, vector<1x32x64xf32>
    %138 = vector.shape_cast %137 : vector<1x32x64xf32> to vector<32x64xf32>
    %cst_128 = arith.constant dense<0.000000e+00> : vector<16x64xf32>
    %139 = tpu.matmul %136, %138, %cst_128 {dimension_numbers = #tpu.dot_dimension_numbers<[1], [0], [0], [1], [0, 0, 1, 1], [], []>} : vector<16x32xf32>, vector<32x64xf32>, vector<16x64xf32> -> vector<16x64xf32>
    %140 = arith.addf %133, %139 : vector<16x64xf32>
    %c6_129 = arith.constant 6 : index
    %c0_130 = arith.constant 0 : index
    %c0_131 = arith.constant 0 : index
    %141 = vector.load %arg8[%c6_129, %c0_130, %c0_131] : memref<9x16x64xf32, #tpu.memory_space<vmem>>, vector<1x16x64xf32>
    %142 = vector.shape_cast %141 : vector<1x16x64xf32> to vector<16x64xf32>
    %cst_132 = arith.constant dense<0.000000e+00> : vector<16x32xf32>
    %143 = tpu.matmul %142, %97, %cst_132 {dimension_numbers = #tpu.dot_dimension_numbers<[1], [0], [0], [1], [0, 0, 1, 1], [], []>} : vector<16x64xf32>, vector<64x32xf32>, vector<16x32xf32> -> vector<16x32xf32>
    %c6_133 = arith.constant 6 : index
    %c0_134 = arith.constant 0 : index
    %c0_135 = arith.constant 0 : index
    %144 = vector.load %arg4[%c6_133, %c0_134, %c0_135] : memref<9x32x64xf32, #tpu.memory_space<vmem>>, vector<1x32x64xf32>
    %145 = vector.shape_cast %144 : vector<1x32x64xf32> to vector<32x64xf32>
    %cst_136 = arith.constant dense<0.000000e+00> : vector<16x64xf32>
    %146 = tpu.matmul %143, %145, %cst_136 {dimension_numbers = #tpu.dot_dimension_numbers<[1], [0], [0], [1], [0, 0, 1, 1], [], []>} : vector<16x32xf32>, vector<32x64xf32>, vector<16x64xf32> -> vector<16x64xf32>
    %147 = arith.addf %140, %146 : vector<16x64xf32>
    %c7_137 = arith.constant 7 : index
    %c0_138 = arith.constant 0 : index
    %c0_139 = arith.constant 0 : index
    %148 = vector.load %arg8[%c7_137, %c0_138, %c0_139] : memref<9x16x64xf32, #tpu.memory_space<vmem>>, vector<1x16x64xf32>
    %149 = vector.shape_cast %148 : vector<1x16x64xf32> to vector<16x64xf32>
    %cst_140 = arith.constant dense<0.000000e+00> : vector<16x32xf32>
    %150 = tpu.matmul %149, %97, %cst_140 {dimension_numbers = #tpu.dot_dimension_numbers<[1], [0], [0], [1], [0, 0, 1, 1], [], []>} : vector<16x64xf32>, vector<64x32xf32>, vector<16x32xf32> -> vector<16x32xf32>
    %c7_141 = arith.constant 7 : index
    %c0_142 = arith.constant 0 : index
    %c0_143 = arith.constant 0 : index
    %151 = vector.load %arg4[%c7_141, %c0_142, %c0_143] : memref<9x32x64xf32, #tpu.memory_space<vmem>>, vector<1x32x64xf32>
    %152 = vector.shape_cast %151 : vector<1x32x64xf32> to vector<32x64xf32>
    %cst_144 = arith.constant dense<0.000000e+00> : vector<16x64xf32>
    %153 = tpu.matmul %150, %152, %cst_144 {dimension_numbers = #tpu.dot_dimension_numbers<[1], [0], [0], [1], [0, 0, 1, 1], [], []>} : vector<16x32xf32>, vector<32x64xf32>, vector<16x64xf32> -> vector<16x64xf32>
    %154 = arith.addf %147, %153 : vector<16x64xf32>
    %c8_145 = arith.constant 8 : index
    %c0_146 = arith.constant 0 : index
    %c0_147 = arith.constant 0 : index
    %155 = vector.load %arg8[%c8_145, %c0_146, %c0_147] : memref<9x16x64xf32, #tpu.memory_space<vmem>>, vector<1x16x64xf32>
    %156 = vector.shape_cast %155 : vector<1x16x64xf32> to vector<16x64xf32>
    %cst_148 = arith.constant dense<0.000000e+00> : vector<16x32xf32>
    %157 = tpu.matmul %156, %97, %cst_148 {dimension_numbers = #tpu.dot_dimension_numbers<[1], [0], [0], [1], [0, 0, 1, 1], [], []>} : vector<16x64xf32>, vector<64x32xf32>, vector<16x32xf32> -> vector<16x32xf32>
    %c8_149 = arith.constant 8 : index
    %c0_150 = arith.constant 0 : index
    %c0_151 = arith.constant 0 : index
    %158 = vector.load %arg4[%c8_149, %c0_150, %c0_151] : memref<9x32x64xf32, #tpu.memory_space<vmem>>, vector<1x32x64xf32>
    %159 = vector.shape_cast %158 : vector<1x32x64xf32> to vector<32x64xf32>
    %cst_152 = arith.constant dense<0.000000e+00> : vector<16x64xf32>
    %160 = tpu.matmul %157, %159, %cst_152 {dimension_numbers = #tpu.dot_dimension_numbers<[1], [0], [0], [1], [0, 0, 1, 1], [], []>} : vector<16x32xf32>, vector<32x64xf32>, vector<16x64xf32> -> vector<16x64xf32>
    %161 = arith.addf %154, %160 : vector<16x64xf32>
    %162 = vector.extract_strided_slice %99 {offsets = [0, 0], sizes = [1, 64], strides = [1, 1]} : vector<3x256xf32> to vector<1x64xf32>
    %163 = vector.extract_strided_slice %99 {offsets = [1, 0], sizes = [1, 64], strides = [1, 1]} : vector<3x256xf32> to vector<1x64xf32>
    %164 = vector.extract_strided_slice %99 {offsets = [2, 0], sizes = [1, 64], strides = [1, 1]} : vector<3x256xf32> to vector<1x64xf32>
    %165 = vector.broadcast %162 : vector<1x64xf32> to vector<16x64xf32>
    %166 = arith.addf %161, %165 : vector<16x64xf32>
    %cst_153 = arith.constant 0.000000e+00 : f32
    %167 = vector.broadcast %cst_153 : f32 to vector<16x64xf32>
    %168 = arith.cmpf oge, %166, %167 : vector<16x64xf32>
    %cst_154 = arith.constant 2.000000e-01 : f32
    %169 = vector.broadcast %cst_154 : f32 to vector<16x64xf32>
    %170 = arith.mulf %169, %166 : vector<16x64xf32>
    %171 = arith.select %168, %166, %170 : vector<16x64xi1>, vector<16x64xf32>
    %172 = vector.broadcast %163 : vector<1x64xf32> to vector<16x64xf32>
    %173 = arith.mulf %171, %172 : vector<16x64xf32>
    %174 = vector.broadcast %164 : vector<1x64xf32> to vector<16x64xf32>
    %175 = arith.addf %173, %174 : vector<16x64xf32>
    %c3_155 = arith.constant 3 : index
    %c0_156 = arith.constant 0 : index
    %c0_157 = arith.constant 0 : index
    %176 = vector.load %arg11[%c3_155, %c0_156, %c0_157] : memref<5x3x256xf32, #tpu.memory_space<vmem>>, vector<1x3x256xf32>
    %177 = vector.shape_cast %176 : vector<1x3x256xf32> to vector<3x256xf32>
    %c0_158 = arith.constant 0 : index
    %c0_159 = arith.constant 0 : index
    %c0_160 = arith.constant 0 : index
    %178 = vector.load %arg9[%c0_158, %c0_159, %c0_160] : memref<9x8x16xf32, #tpu.memory_space<vmem>>, vector<1x8x16xf32>
    %179 = vector.shape_cast %178 : vector<1x8x16xf32> to vector<8x16xf32>
    %cst_161 = arith.constant dense<0.000000e+00> : vector<8x64xf32>
    %180 = tpu.matmul %179, %175, %cst_161 {dimension_numbers = #tpu.dot_dimension_numbers<[1], [0], [0], [1], [0, 0, 1, 1], [], []>} : vector<8x16xf32>, vector<16x64xf32>, vector<8x64xf32> -> vector<8x64xf32>
    %c0_162 = arith.constant 0 : index
    %c0_163 = arith.constant 0 : index
    %c0_164 = arith.constant 0 : index
    %181 = vector.load %arg5[%c0_162, %c0_163, %c0_164] : memref<9x64x128xf32, #tpu.memory_space<vmem>>, vector<1x64x128xf32>
    %182 = vector.shape_cast %181 : vector<1x64x128xf32> to vector<64x128xf32>
    %cst_165 = arith.constant dense<0.000000e+00> : vector<8x128xf32>
    %183 = tpu.matmul %180, %182, %cst_165 {dimension_numbers = #tpu.dot_dimension_numbers<[1], [0], [0], [1], [0, 0, 1, 1], [], []>} : vector<8x64xf32>, vector<64x128xf32>, vector<8x128xf32> -> vector<8x128xf32>
    %c1_166 = arith.constant 1 : index
    %c0_167 = arith.constant 0 : index
    %c0_168 = arith.constant 0 : index
    %184 = vector.load %arg9[%c1_166, %c0_167, %c0_168] : memref<9x8x16xf32, #tpu.memory_space<vmem>>, vector<1x8x16xf32>
    %185 = vector.shape_cast %184 : vector<1x8x16xf32> to vector<8x16xf32>
    %cst_169 = arith.constant dense<0.000000e+00> : vector<8x64xf32>
    %186 = tpu.matmul %185, %175, %cst_169 {dimension_numbers = #tpu.dot_dimension_numbers<[1], [0], [0], [1], [0, 0, 1, 1], [], []>} : vector<8x16xf32>, vector<16x64xf32>, vector<8x64xf32> -> vector<8x64xf32>
    %c1_170 = arith.constant 1 : index
    %c0_171 = arith.constant 0 : index
    %c0_172 = arith.constant 0 : index
    %187 = vector.load %arg5[%c1_170, %c0_171, %c0_172] : memref<9x64x128xf32, #tpu.memory_space<vmem>>, vector<1x64x128xf32>
    %188 = vector.shape_cast %187 : vector<1x64x128xf32> to vector<64x128xf32>
    %cst_173 = arith.constant dense<0.000000e+00> : vector<8x128xf32>
    %189 = tpu.matmul %186, %188, %cst_173 {dimension_numbers = #tpu.dot_dimension_numbers<[1], [0], [0], [1], [0, 0, 1, 1], [], []>} : vector<8x64xf32>, vector<64x128xf32>, vector<8x128xf32> -> vector<8x128xf32>
    %190 = arith.addf %183, %189 : vector<8x128xf32>
    %c2_174 = arith.constant 2 : index
    %c0_175 = arith.constant 0 : index
    %c0_176 = arith.constant 0 : index
    %191 = vector.load %arg9[%c2_174, %c0_175, %c0_176] : memref<9x8x16xf32, #tpu.memory_space<vmem>>, vector<1x8x16xf32>
    %192 = vector.shape_cast %191 : vector<1x8x16xf32> to vector<8x16xf32>
    %cst_177 = arith.constant dense<0.000000e+00> : vector<8x64xf32>
    %193 = tpu.matmul %192, %175, %cst_177 {dimension_numbers = #tpu.dot_dimension_numbers<[1], [0], [0], [1], [0, 0, 1, 1], [], []>} : vector<8x16xf32>, vector<16x64xf32>, vector<8x64xf32> -> vector<8x64xf32>
    %c2_178 = arith.constant 2 : index
    %c0_179 = arith.constant 0 : index
    %c0_180 = arith.constant 0 : index
    %194 = vector.load %arg5[%c2_178, %c0_179, %c0_180] : memref<9x64x128xf32, #tpu.memory_space<vmem>>, vector<1x64x128xf32>
    %195 = vector.shape_cast %194 : vector<1x64x128xf32> to vector<64x128xf32>
    %cst_181 = arith.constant dense<0.000000e+00> : vector<8x128xf32>
    %196 = tpu.matmul %193, %195, %cst_181 {dimension_numbers = #tpu.dot_dimension_numbers<[1], [0], [0], [1], [0, 0, 1, 1], [], []>} : vector<8x64xf32>, vector<64x128xf32>, vector<8x128xf32> -> vector<8x128xf32>
    %197 = arith.addf %190, %196 : vector<8x128xf32>
    %c3_182 = arith.constant 3 : index
    %c0_183 = arith.constant 0 : index
    %c0_184 = arith.constant 0 : index
    %198 = vector.load %arg9[%c3_182, %c0_183, %c0_184] : memref<9x8x16xf32, #tpu.memory_space<vmem>>, vector<1x8x16xf32>
    %199 = vector.shape_cast %198 : vector<1x8x16xf32> to vector<8x16xf32>
    %cst_185 = arith.constant dense<0.000000e+00> : vector<8x64xf32>
    %200 = tpu.matmul %199, %175, %cst_185 {dimension_numbers = #tpu.dot_dimension_numbers<[1], [0], [0], [1], [0, 0, 1, 1], [], []>} : vector<8x16xf32>, vector<16x64xf32>, vector<8x64xf32> -> vector<8x64xf32>
    %c3_186 = arith.constant 3 : index
    %c0_187 = arith.constant 0 : index
    %c0_188 = arith.constant 0 : index
    %201 = vector.load %arg5[%c3_186, %c0_187, %c0_188] : memref<9x64x128xf32, #tpu.memory_space<vmem>>, vector<1x64x128xf32>
    %202 = vector.shape_cast %201 : vector<1x64x128xf32> to vector<64x128xf32>
    %cst_189 = arith.constant dense<0.000000e+00> : vector<8x128xf32>
    %203 = tpu.matmul %200, %202, %cst_189 {dimension_numbers = #tpu.dot_dimension_numbers<[1], [0], [0], [1], [0, 0, 1, 1], [], []>} : vector<8x64xf32>, vector<64x128xf32>, vector<8x128xf32> -> vector<8x128xf32>
    %204 = arith.addf %197, %203 : vector<8x128xf32>
    %c4_190 = arith.constant 4 : index
    %c0_191 = arith.constant 0 : index
    %c0_192 = arith.constant 0 : index
    %205 = vector.load %arg9[%c4_190, %c0_191, %c0_192] : memref<9x8x16xf32, #tpu.memory_space<vmem>>, vector<1x8x16xf32>
    %206 = vector.shape_cast %205 : vector<1x8x16xf32> to vector<8x16xf32>
    %cst_193 = arith.constant dense<0.000000e+00> : vector<8x64xf32>
    %207 = tpu.matmul %206, %175, %cst_193 {dimension_numbers = #tpu.dot_dimension_numbers<[1], [0], [0], [1], [0, 0, 1, 1], [], []>} : vector<8x16xf32>, vector<16x64xf32>, vector<8x64xf32> -> vector<8x64xf32>
    %c4_194 = arith.constant 4 : index
    %c0_195 = arith.constant 0 : index
    %c0_196 = arith.constant 0 : index
    %208 = vector.load %arg5[%c4_194, %c0_195, %c0_196] : memref<9x64x128xf32, #tpu.memory_space<vmem>>, vector<1x64x128xf32>
    %209 = vector.shape_cast %208 : vector<1x64x128xf32> to vector<64x128xf32>
    %cst_197 = arith.constant dense<0.000000e+00> : vector<8x128xf32>
    %210 = tpu.matmul %207, %209, %cst_197 {dimension_numbers = #tpu.dot_dimension_numbers<[1], [0], [0], [1], [0, 0, 1, 1], [], []>} : vector<8x64xf32>, vector<64x128xf32>, vector<8x128xf32> -> vector<8x128xf32>
    %211 = arith.addf %204, %210 : vector<8x128xf32>
    %c5_198 = arith.constant 5 : index
    %c0_199 = arith.constant 0 : index
    %c0_200 = arith.constant 0 : index
    %212 = vector.load %arg9[%c5_198, %c0_199, %c0_200] : memref<9x8x16xf32, #tpu.memory_space<vmem>>, vector<1x8x16xf32>
    %213 = vector.shape_cast %212 : vector<1x8x16xf32> to vector<8x16xf32>
    %cst_201 = arith.constant dense<0.000000e+00> : vector<8x64xf32>
    %214 = tpu.matmul %213, %175, %cst_201 {dimension_numbers = #tpu.dot_dimension_numbers<[1], [0], [0], [1], [0, 0, 1, 1], [], []>} : vector<8x16xf32>, vector<16x64xf32>, vector<8x64xf32> -> vector<8x64xf32>
    %c5_202 = arith.constant 5 : index
    %c0_203 = arith.constant 0 : index
    %c0_204 = arith.constant 0 : index
    %215 = vector.load %arg5[%c5_202, %c0_203, %c0_204] : memref<9x64x128xf32, #tpu.memory_space<vmem>>, vector<1x64x128xf32>
    %216 = vector.shape_cast %215 : vector<1x64x128xf32> to vector<64x128xf32>
    %cst_205 = arith.constant dense<0.000000e+00> : vector<8x128xf32>
    %217 = tpu.matmul %214, %216, %cst_205 {dimension_numbers = #tpu.dot_dimension_numbers<[1], [0], [0], [1], [0, 0, 1, 1], [], []>} : vector<8x64xf32>, vector<64x128xf32>, vector<8x128xf32> -> vector<8x128xf32>
    %218 = arith.addf %211, %217 : vector<8x128xf32>
    %c6_206 = arith.constant 6 : index
    %c0_207 = arith.constant 0 : index
    %c0_208 = arith.constant 0 : index
    %219 = vector.load %arg9[%c6_206, %c0_207, %c0_208] : memref<9x8x16xf32, #tpu.memory_space<vmem>>, vector<1x8x16xf32>
    %220 = vector.shape_cast %219 : vector<1x8x16xf32> to vector<8x16xf32>
    %cst_209 = arith.constant dense<0.000000e+00> : vector<8x64xf32>
    %221 = tpu.matmul %220, %175, %cst_209 {dimension_numbers = #tpu.dot_dimension_numbers<[1], [0], [0], [1], [0, 0, 1, 1], [], []>} : vector<8x16xf32>, vector<16x64xf32>, vector<8x64xf32> -> vector<8x64xf32>
    %c6_210 = arith.constant 6 : index
    %c0_211 = arith.constant 0 : index
    %c0_212 = arith.constant 0 : index
    %222 = vector.load %arg5[%c6_210, %c0_211, %c0_212] : memref<9x64x128xf32, #tpu.memory_space<vmem>>, vector<1x64x128xf32>
    %223 = vector.shape_cast %222 : vector<1x64x128xf32> to vector<64x128xf32>
    %cst_213 = arith.constant dense<0.000000e+00> : vector<8x128xf32>
    %224 = tpu.matmul %221, %223, %cst_213 {dimension_numbers = #tpu.dot_dimension_numbers<[1], [0], [0], [1], [0, 0, 1, 1], [], []>} : vector<8x64xf32>, vector<64x128xf32>, vector<8x128xf32> -> vector<8x128xf32>
    %225 = arith.addf %218, %224 : vector<8x128xf32>
    %c7_214 = arith.constant 7 : index
    %c0_215 = arith.constant 0 : index
    %c0_216 = arith.constant 0 : index
    %226 = vector.load %arg9[%c7_214, %c0_215, %c0_216] : memref<9x8x16xf32, #tpu.memory_space<vmem>>, vector<1x8x16xf32>
    %227 = vector.shape_cast %226 : vector<1x8x16xf32> to vector<8x16xf32>
    %cst_217 = arith.constant dense<0.000000e+00> : vector<8x64xf32>
    %228 = tpu.matmul %227, %175, %cst_217 {dimension_numbers = #tpu.dot_dimension_numbers<[1], [0], [0], [1], [0, 0, 1, 1], [], []>} : vector<8x16xf32>, vector<16x64xf32>, vector<8x64xf32> -> vector<8x64xf32>
    %c7_218 = arith.constant 7 : index
    %c0_219 = arith.constant 0 : index
    %c0_220 = arith.constant 0 : index
    %229 = vector.load %arg5[%c7_218, %c0_219, %c0_220] : memref<9x64x128xf32, #tpu.memory_space<vmem>>, vector<1x64x128xf32>
    %230 = vector.shape_cast %229 : vector<1x64x128xf32> to vector<64x128xf32>
    %cst_221 = arith.constant dense<0.000000e+00> : vector<8x128xf32>
    %231 = tpu.matmul %228, %230, %cst_221 {dimension_numbers = #tpu.dot_dimension_numbers<[1], [0], [0], [1], [0, 0, 1, 1], [], []>} : vector<8x64xf32>, vector<64x128xf32>, vector<8x128xf32> -> vector<8x128xf32>
    %232 = arith.addf %225, %231 : vector<8x128xf32>
    %c8_222 = arith.constant 8 : index
    %c0_223 = arith.constant 0 : index
    %c0_224 = arith.constant 0 : index
    %233 = vector.load %arg9[%c8_222, %c0_223, %c0_224] : memref<9x8x16xf32, #tpu.memory_space<vmem>>, vector<1x8x16xf32>
    %234 = vector.shape_cast %233 : vector<1x8x16xf32> to vector<8x16xf32>
    %cst_225 = arith.constant dense<0.000000e+00> : vector<8x64xf32>
    %235 = tpu.matmul %234, %175, %cst_225 {dimension_numbers = #tpu.dot_dimension_numbers<[1], [0], [0], [1], [0, 0, 1, 1], [], []>} : vector<8x16xf32>, vector<16x64xf32>, vector<8x64xf32> -> vector<8x64xf32>
    %c8_226 = arith.constant 8 : index
    %c0_227 = arith.constant 0 : index
    %c0_228 = arith.constant 0 : index
    %236 = vector.load %arg5[%c8_226, %c0_227, %c0_228] : memref<9x64x128xf32, #tpu.memory_space<vmem>>, vector<1x64x128xf32>
    %237 = vector.shape_cast %236 : vector<1x64x128xf32> to vector<64x128xf32>
    %cst_229 = arith.constant dense<0.000000e+00> : vector<8x128xf32>
    %238 = tpu.matmul %235, %237, %cst_229 {dimension_numbers = #tpu.dot_dimension_numbers<[1], [0], [0], [1], [0, 0, 1, 1], [], []>} : vector<8x64xf32>, vector<64x128xf32>, vector<8x128xf32> -> vector<8x128xf32>
    %239 = arith.addf %232, %238 : vector<8x128xf32>
    %240 = vector.extract_strided_slice %177 {offsets = [0, 0], sizes = [1, 128], strides = [1, 1]} : vector<3x256xf32> to vector<1x128xf32>
    %241 = vector.extract_strided_slice %177 {offsets = [1, 0], sizes = [1, 128], strides = [1, 1]} : vector<3x256xf32> to vector<1x128xf32>
    %242 = vector.extract_strided_slice %177 {offsets = [2, 0], sizes = [1, 128], strides = [1, 1]} : vector<3x256xf32> to vector<1x128xf32>
    %243 = vector.broadcast %240 : vector<1x128xf32> to vector<8x128xf32>
    %244 = arith.addf %239, %243 : vector<8x128xf32>
    %cst_230 = arith.constant 0.000000e+00 : f32
    %245 = vector.broadcast %cst_230 : f32 to vector<8x128xf32>
    %246 = arith.cmpf oge, %244, %245 : vector<8x128xf32>
    %cst_231 = arith.constant 2.000000e-01 : f32
    %247 = vector.broadcast %cst_231 : f32 to vector<8x128xf32>
    %248 = arith.mulf %247, %244 : vector<8x128xf32>
    %249 = arith.select %246, %244, %248 : vector<8x128xi1>, vector<8x128xf32>
    %250 = vector.broadcast %241 : vector<1x128xf32> to vector<8x128xf32>
    %251 = arith.mulf %249, %250 : vector<8x128xf32>
    %252 = vector.broadcast %242 : vector<1x128xf32> to vector<8x128xf32>
    %253 = arith.addf %251, %252 : vector<8x128xf32>
    %c4_232 = arith.constant 4 : index
    %c0_233 = arith.constant 0 : index
    %c0_234 = arith.constant 0 : index
    %254 = vector.load %arg11[%c4_232, %c0_233, %c0_234] : memref<5x3x256xf32, #tpu.memory_space<vmem>>, vector<1x3x256xf32>
    %255 = vector.shape_cast %254 : vector<1x3x256xf32> to vector<3x256xf32>
    %c0_235 = arith.constant 0 : index
    %c0_236 = arith.constant 0 : index
    %c0_237 = arith.constant 0 : index
    %256 = vector.load %arg10[%c0_235, %c0_236, %c0_237] : memref<9x8x8xf32, #tpu.memory_space<vmem>>, vector<1x8x8xf32>
    %257 = vector.shape_cast %256 : vector<1x8x8xf32> to vector<8x8xf32>
    %cst_238 = arith.constant dense<0.000000e+00> : vector<8x128xf32>
    %258 = tpu.matmul %257, %253, %cst_238 {dimension_numbers = #tpu.dot_dimension_numbers<[1], [0], [0], [1], [0, 0, 1, 1], [], []>} : vector<8x8xf32>, vector<8x128xf32>, vector<8x128xf32> -> vector<8x128xf32>
    %c0_239 = arith.constant 0 : index
    %c0_240 = arith.constant 0 : index
    %c0_241 = arith.constant 0 : index
    %259 = vector.load %arg6[%c0_239, %c0_240, %c0_241] : memref<9x128x256xf32, #tpu.memory_space<vmem>>, vector<1x128x256xf32>
    %260 = vector.shape_cast %259 : vector<1x128x256xf32> to vector<128x256xf32>
    %cst_242 = arith.constant dense<0.000000e+00> : vector<8x256xf32>
    %261 = tpu.matmul %258, %260, %cst_242 {dimension_numbers = #tpu.dot_dimension_numbers<[1], [0], [0], [1], [0, 0, 1, 1], [], []>} : vector<8x128xf32>, vector<128x256xf32>, vector<8x256xf32> -> vector<8x256xf32>
    %c1_243 = arith.constant 1 : index
    %c0_244 = arith.constant 0 : index
    %c0_245 = arith.constant 0 : index
    %262 = vector.load %arg10[%c1_243, %c0_244, %c0_245] : memref<9x8x8xf32, #tpu.memory_space<vmem>>, vector<1x8x8xf32>
    %263 = vector.shape_cast %262 : vector<1x8x8xf32> to vector<8x8xf32>
    %cst_246 = arith.constant dense<0.000000e+00> : vector<8x128xf32>
    %264 = tpu.matmul %263, %253, %cst_246 {dimension_numbers = #tpu.dot_dimension_numbers<[1], [0], [0], [1], [0, 0, 1, 1], [], []>} : vector<8x8xf32>, vector<8x128xf32>, vector<8x128xf32> -> vector<8x128xf32>
    %c1_247 = arith.constant 1 : index
    %c0_248 = arith.constant 0 : index
    %c0_249 = arith.constant 0 : index
    %265 = vector.load %arg6[%c1_247, %c0_248, %c0_249] : memref<9x128x256xf32, #tpu.memory_space<vmem>>, vector<1x128x256xf32>
    %266 = vector.shape_cast %265 : vector<1x128x256xf32> to vector<128x256xf32>
    %cst_250 = arith.constant dense<0.000000e+00> : vector<8x256xf32>
    %267 = tpu.matmul %264, %266, %cst_250 {dimension_numbers = #tpu.dot_dimension_numbers<[1], [0], [0], [1], [0, 0, 1, 1], [], []>} : vector<8x128xf32>, vector<128x256xf32>, vector<8x256xf32> -> vector<8x256xf32>
    %268 = arith.addf %261, %267 : vector<8x256xf32>
    %c2_251 = arith.constant 2 : index
    %c0_252 = arith.constant 0 : index
    %c0_253 = arith.constant 0 : index
    %269 = vector.load %arg10[%c2_251, %c0_252, %c0_253] : memref<9x8x8xf32, #tpu.memory_space<vmem>>, vector<1x8x8xf32>
    %270 = vector.shape_cast %269 : vector<1x8x8xf32> to vector<8x8xf32>
    %cst_254 = arith.constant dense<0.000000e+00> : vector<8x128xf32>
    %271 = tpu.matmul %270, %253, %cst_254 {dimension_numbers = #tpu.dot_dimension_numbers<[1], [0], [0], [1], [0, 0, 1, 1], [], []>} : vector<8x8xf32>, vector<8x128xf32>, vector<8x128xf32> -> vector<8x128xf32>
    %c2_255 = arith.constant 2 : index
    %c0_256 = arith.constant 0 : index
    %c0_257 = arith.constant 0 : index
    %272 = vector.load %arg6[%c2_255, %c0_256, %c0_257] : memref<9x128x256xf32, #tpu.memory_space<vmem>>, vector<1x128x256xf32>
    %273 = vector.shape_cast %272 : vector<1x128x256xf32> to vector<128x256xf32>
    %cst_258 = arith.constant dense<0.000000e+00> : vector<8x256xf32>
    %274 = tpu.matmul %271, %273, %cst_258 {dimension_numbers = #tpu.dot_dimension_numbers<[1], [0], [0], [1], [0, 0, 1, 1], [], []>} : vector<8x128xf32>, vector<128x256xf32>, vector<8x256xf32> -> vector<8x256xf32>
    %275 = arith.addf %268, %274 : vector<8x256xf32>
    %c3_259 = arith.constant 3 : index
    %c0_260 = arith.constant 0 : index
    %c0_261 = arith.constant 0 : index
    %276 = vector.load %arg10[%c3_259, %c0_260, %c0_261] : memref<9x8x8xf32, #tpu.memory_space<vmem>>, vector<1x8x8xf32>
    %277 = vector.shape_cast %276 : vector<1x8x8xf32> to vector<8x8xf32>
    %cst_262 = arith.constant dense<0.000000e+00> : vector<8x128xf32>
    %278 = tpu.matmul %277, %253, %cst_262 {dimension_numbers = #tpu.dot_dimension_numbers<[1], [0], [0], [1], [0, 0, 1, 1], [], []>} : vector<8x8xf32>, vector<8x128xf32>, vector<8x128xf32> -> vector<8x128xf32>
    %c3_263 = arith.constant 3 : index
    %c0_264 = arith.constant 0 : index
    %c0_265 = arith.constant 0 : index
    %279 = vector.load %arg6[%c3_263, %c0_264, %c0_265] : memref<9x128x256xf32, #tpu.memory_space<vmem>>, vector<1x128x256xf32>
    %280 = vector.shape_cast %279 : vector<1x128x256xf32> to vector<128x256xf32>
    %cst_266 = arith.constant dense<0.000000e+00> : vector<8x256xf32>
    %281 = tpu.matmul %278, %280, %cst_266 {dimension_numbers = #tpu.dot_dimension_numbers<[1], [0], [0], [1], [0, 0, 1, 1], [], []>} : vector<8x128xf32>, vector<128x256xf32>, vector<8x256xf32> -> vector<8x256xf32>
    %282 = arith.addf %275, %281 : vector<8x256xf32>
    %c4_267 = arith.constant 4 : index
    %c0_268 = arith.constant 0 : index
    %c0_269 = arith.constant 0 : index
    %283 = vector.load %arg10[%c4_267, %c0_268, %c0_269] : memref<9x8x8xf32, #tpu.memory_space<vmem>>, vector<1x8x8xf32>
    %284 = vector.shape_cast %283 : vector<1x8x8xf32> to vector<8x8xf32>
    %cst_270 = arith.constant dense<0.000000e+00> : vector<8x128xf32>
    %285 = tpu.matmul %284, %253, %cst_270 {dimension_numbers = #tpu.dot_dimension_numbers<[1], [0], [0], [1], [0, 0, 1, 1], [], []>} : vector<8x8xf32>, vector<8x128xf32>, vector<8x128xf32> -> vector<8x128xf32>
    %c4_271 = arith.constant 4 : index
    %c0_272 = arith.constant 0 : index
    %c0_273 = arith.constant 0 : index
    %286 = vector.load %arg6[%c4_271, %c0_272, %c0_273] : memref<9x128x256xf32, #tpu.memory_space<vmem>>, vector<1x128x256xf32>
    %287 = vector.shape_cast %286 : vector<1x128x256xf32> to vector<128x256xf32>
    %cst_274 = arith.constant dense<0.000000e+00> : vector<8x256xf32>
    %288 = tpu.matmul %285, %287, %cst_274 {dimension_numbers = #tpu.dot_dimension_numbers<[1], [0], [0], [1], [0, 0, 1, 1], [], []>} : vector<8x128xf32>, vector<128x256xf32>, vector<8x256xf32> -> vector<8x256xf32>
    %289 = arith.addf %282, %288 : vector<8x256xf32>
    %c5_275 = arith.constant 5 : index
    %c0_276 = arith.constant 0 : index
    %c0_277 = arith.constant 0 : index
    %290 = vector.load %arg10[%c5_275, %c0_276, %c0_277] : memref<9x8x8xf32, #tpu.memory_space<vmem>>, vector<1x8x8xf32>
    %291 = vector.shape_cast %290 : vector<1x8x8xf32> to vector<8x8xf32>
    %cst_278 = arith.constant dense<0.000000e+00> : vector<8x128xf32>
    %292 = tpu.matmul %291, %253, %cst_278 {dimension_numbers = #tpu.dot_dimension_numbers<[1], [0], [0], [1], [0, 0, 1, 1], [], []>} : vector<8x8xf32>, vector<8x128xf32>, vector<8x128xf32> -> vector<8x128xf32>
    %c5_279 = arith.constant 5 : index
    %c0_280 = arith.constant 0 : index
    %c0_281 = arith.constant 0 : index
    %293 = vector.load %arg6[%c5_279, %c0_280, %c0_281] : memref<9x128x256xf32, #tpu.memory_space<vmem>>, vector<1x128x256xf32>
    %294 = vector.shape_cast %293 : vector<1x128x256xf32> to vector<128x256xf32>
    %cst_282 = arith.constant dense<0.000000e+00> : vector<8x256xf32>
    %295 = tpu.matmul %292, %294, %cst_282 {dimension_numbers = #tpu.dot_dimension_numbers<[1], [0], [0], [1], [0, 0, 1, 1], [], []>} : vector<8x128xf32>, vector<128x256xf32>, vector<8x256xf32> -> vector<8x256xf32>
    %296 = arith.addf %289, %295 : vector<8x256xf32>
    %c6_283 = arith.constant 6 : index
    %c0_284 = arith.constant 0 : index
    %c0_285 = arith.constant 0 : index
    %297 = vector.load %arg10[%c6_283, %c0_284, %c0_285] : memref<9x8x8xf32, #tpu.memory_space<vmem>>, vector<1x8x8xf32>
    %298 = vector.shape_cast %297 : vector<1x8x8xf32> to vector<8x8xf32>
    %cst_286 = arith.constant dense<0.000000e+00> : vector<8x128xf32>
    %299 = tpu.matmul %298, %253, %cst_286 {dimension_numbers = #tpu.dot_dimension_numbers<[1], [0], [0], [1], [0, 0, 1, 1], [], []>} : vector<8x8xf32>, vector<8x128xf32>, vector<8x128xf32> -> vector<8x128xf32>
    %c6_287 = arith.constant 6 : index
    %c0_288 = arith.constant 0 : index
    %c0_289 = arith.constant 0 : index
    %300 = vector.load %arg6[%c6_287, %c0_288, %c0_289] : memref<9x128x256xf32, #tpu.memory_space<vmem>>, vector<1x128x256xf32>
    %301 = vector.shape_cast %300 : vector<1x128x256xf32> to vector<128x256xf32>
    %cst_290 = arith.constant dense<0.000000e+00> : vector<8x256xf32>
    %302 = tpu.matmul %299, %301, %cst_290 {dimension_numbers = #tpu.dot_dimension_numbers<[1], [0], [0], [1], [0, 0, 1, 1], [], []>} : vector<8x128xf32>, vector<128x256xf32>, vector<8x256xf32> -> vector<8x256xf32>
    %303 = arith.addf %296, %302 : vector<8x256xf32>
    %c7_291 = arith.constant 7 : index
    %c0_292 = arith.constant 0 : index
    %c0_293 = arith.constant 0 : index
    %304 = vector.load %arg10[%c7_291, %c0_292, %c0_293] : memref<9x8x8xf32, #tpu.memory_space<vmem>>, vector<1x8x8xf32>
    %305 = vector.shape_cast %304 : vector<1x8x8xf32> to vector<8x8xf32>
    %cst_294 = arith.constant dense<0.000000e+00> : vector<8x128xf32>
    %306 = tpu.matmul %305, %253, %cst_294 {dimension_numbers = #tpu.dot_dimension_numbers<[1], [0], [0], [1], [0, 0, 1, 1], [], []>} : vector<8x8xf32>, vector<8x128xf32>, vector<8x128xf32> -> vector<8x128xf32>
    %c7_295 = arith.constant 7 : index
    %c0_296 = arith.constant 0 : index
    %c0_297 = arith.constant 0 : index
    %307 = vector.load %arg6[%c7_295, %c0_296, %c0_297] : memref<9x128x256xf32, #tpu.memory_space<vmem>>, vector<1x128x256xf32>
    %308 = vector.shape_cast %307 : vector<1x128x256xf32> to vector<128x256xf32>
    %cst_298 = arith.constant dense<0.000000e+00> : vector<8x256xf32>
    %309 = tpu.matmul %306, %308, %cst_298 {dimension_numbers = #tpu.dot_dimension_numbers<[1], [0], [0], [1], [0, 0, 1, 1], [], []>} : vector<8x128xf32>, vector<128x256xf32>, vector<8x256xf32> -> vector<8x256xf32>
    %310 = arith.addf %303, %309 : vector<8x256xf32>
    %c8_299 = arith.constant 8 : index
    %c0_300 = arith.constant 0 : index
    %c0_301 = arith.constant 0 : index
    %311 = vector.load %arg10[%c8_299, %c0_300, %c0_301] : memref<9x8x8xf32, #tpu.memory_space<vmem>>, vector<1x8x8xf32>
    %312 = vector.shape_cast %311 : vector<1x8x8xf32> to vector<8x8xf32>
    %cst_302 = arith.constant dense<0.000000e+00> : vector<8x128xf32>
    %313 = tpu.matmul %312, %253, %cst_302 {dimension_numbers = #tpu.dot_dimension_numbers<[1], [0], [0], [1], [0, 0, 1, 1], [], []>} : vector<8x8xf32>, vector<8x128xf32>, vector<8x128xf32> -> vector<8x128xf32>
    %c8_303 = arith.constant 8 : index
    %c0_304 = arith.constant 0 : index
    %c0_305 = arith.constant 0 : index
    %314 = vector.load %arg6[%c8_303, %c0_304, %c0_305] : memref<9x128x256xf32, #tpu.memory_space<vmem>>, vector<1x128x256xf32>
    %315 = vector.shape_cast %314 : vector<1x128x256xf32> to vector<128x256xf32>
    %cst_306 = arith.constant dense<0.000000e+00> : vector<8x256xf32>
    %316 = tpu.matmul %313, %315, %cst_306 {dimension_numbers = #tpu.dot_dimension_numbers<[1], [0], [0], [1], [0, 0, 1, 1], [], []>} : vector<8x128xf32>, vector<128x256xf32>, vector<8x256xf32> -> vector<8x256xf32>
    %317 = arith.addf %310, %316 : vector<8x256xf32>
    %318 = vector.extract_strided_slice %255 {offsets = [0, 0], sizes = [1, 256], strides = [1, 1]} : vector<3x256xf32> to vector<1x256xf32>
    %319 = vector.extract_strided_slice %255 {offsets = [1, 0], sizes = [1, 256], strides = [1, 1]} : vector<3x256xf32> to vector<1x256xf32>
    %320 = vector.extract_strided_slice %255 {offsets = [2, 0], sizes = [1, 256], strides = [1, 1]} : vector<3x256xf32> to vector<1x256xf32>
    %321 = vector.broadcast %318 : vector<1x256xf32> to vector<8x256xf32>
    %322 = arith.addf %317, %321 : vector<8x256xf32>
    %cst_307 = arith.constant 0.000000e+00 : f32
    %323 = vector.broadcast %cst_307 : f32 to vector<8x256xf32>
    %324 = arith.cmpf oge, %322, %323 : vector<8x256xf32>
    %cst_308 = arith.constant 2.000000e-01 : f32
    %325 = vector.broadcast %cst_308 : f32 to vector<8x256xf32>
    %326 = arith.mulf %325, %322 : vector<8x256xf32>
    %327 = arith.select %324, %322, %326 : vector<8x256xi1>, vector<8x256xf32>
    %328 = vector.broadcast %319 : vector<1x256xf32> to vector<8x256xf32>
    %329 = arith.mulf %327, %328 : vector<8x256xf32>
    %330 = vector.broadcast %320 : vector<1x256xf32> to vector<8x256xf32>
    %331 = arith.addf %329, %330 : vector<8x256xf32>
    %c0_309 = arith.constant 0 : index
    %c0_310 = arith.constant 0 : index
    %332 = vector.load %arg12[%c0_309, %c0_310] : memref<256x128xf32, #tpu.memory_space<vmem>>, vector<256x128xf32>
    %cst_311 = arith.constant dense<0.000000e+00> : vector<8x128xf32>
    %333 = tpu.matmul %331, %332, %cst_311 {dimension_numbers = #tpu.dot_dimension_numbers<[1], [0], [0], [1], [0, 0, 1, 1], [], []>} : vector<8x256xf32>, vector<256x128xf32>, vector<8x128xf32> -> vector<8x128xf32>
    %c0_312 = arith.constant 0 : index
    %c0_313 = arith.constant 0 : index
    %334 = vector.load %arg13[%c0_312, %c0_313] : memref<1x128xf32, #tpu.memory_space<vmem>>, vector<1x128xf32>
    %335 = vector.broadcast %334 : vector<1x128xf32> to vector<8x128xf32>
    %336 = arith.addf %333, %335 : vector<8x128xf32>
    %cst_314 = arith.constant 0.000000e+00 : f32
    %337 = vector.broadcast %cst_314 : f32 to vector<8x128xf32>
    %338 = arith.subf %337, %336 : vector<8x128xf32>
    %339 = math.exp %338 : vector<8x128xf32>
    %cst_315 = arith.constant 1.000000e+00 : f32
    %340 = vector.broadcast %cst_315 : f32 to vector<8x128xf32>
    %341 = arith.addf %340, %339 : vector<8x128xf32>
    %cst_316 = arith.constant 1.000000e+00 : f32
    %342 = vector.broadcast %cst_316 : f32 to vector<8x128xf32>
    %343 = arith.divf %342, %341 : vector<8x128xf32>
    %344 = vector.shape_cast %343 : vector<8x128xf32> to vector<1x8x128xf32>
    %c0_317 = arith.constant 0 : index
    %c0_318 = arith.constant 0 : index
    %c0_319 = arith.constant 0 : index
    %345 = vector.load %arg14[%c0_317, %c0_318, %c0_319] : memref<1x8x128xf32, #tpu.memory_space<vmem>>, vector<1x8x128xf32>
    tpu.vector_store %arg14[%c0_317, %c0_318, %c0_319], %344 {strides = array<i32>} : memref<1x8x128xf32, #tpu.memory_space<vmem>>, vector<1x8x128xf32>,
    return
  }
  func.func @transform_0(%arg0: i32) -> (i32, i32, i32) {
    %c0_i32 = arith.constant 0 : i32
    %c0_i32_0 = arith.constant 0 : i32
    %c0_i32_1 = arith.constant 0 : i32
    return %arg0, %c0_i32, %c0_i32_0 : i32, i32, i32
  }
  func.func @transform_1(%arg0: i32) -> (i32, i32) {
    %c0_i32 = arith.constant 0 : i32
    %c0_i32_0 = arith.constant 0 : i32
    %c0_i32_1 = arith.constant 0 : i32
    return %c0_i32, %c0_i32_0 : i32, i32
  }
  func.func @transform_2(%arg0: i32) -> (i32, i32, i32) {
    %c0_i32 = arith.constant 0 : i32
    %c0_i32_0 = arith.constant 0 : i32
    %c0_i32_1 = arith.constant 0 : i32
    %c0_i32_2 = arith.constant 0 : i32
    return %c0_i32, %c0_i32_0, %c0_i32_1 : i32, i32, i32
  }
  func.func @transform_3(%arg0: i32) -> (i32, i32, i32) {
    %c0_i32 = arith.constant 0 : i32
    %c0_i32_0 = arith.constant 0 : i32
    %c0_i32_1 = arith.constant 0 : i32
    %c0_i32_2 = arith.constant 0 : i32
    return %c0_i32, %c0_i32_0, %c0_i32_1 : i32, i32, i32
  }
  func.func @transform_4(%arg0: i32) -> (i32, i32, i32) {
    %c0_i32 = arith.constant 0 : i32
    %c0_i32_0 = arith.constant 0 : i32
    %c0_i32_1 = arith.constant 0 : i32
    %c0_i32_2 = arith.constant 0 : i32
    return %c0_i32, %c0_i32_0, %c0_i32_1 : i32, i32, i32
  }
  func.func @transform_5(%arg0: i32) -> (i32, i32, i32) {
    %c0_i32 = arith.constant 0 : i32
    %c0_i32_0 = arith.constant 0 : i32
    %c0_i32_1 = arith.constant 0 : i32
    %c0_i32_2 = arith.constant 0 : i32
    return %c0_i32, %c0_i32_0, %c0_i32_1 : i32, i32, i32
  }
  func.func @transform_6(%arg0: i32) -> (i32, i32, i32) {
    %c0_i32 = arith.constant 0 : i32
    %c0_i32_0 = arith.constant 0 : i32
    %c0_i32_1 = arith.constant 0 : i32
    %c0_i32_2 = arith.constant 0 : i32
    return %c0_i32, %c0_i32_0, %c0_i32_1 : i32, i32, i32
  }
  func.func @transform_7(%arg0: i32) -> (i32, i32, i32) {
    %c0_i32 = arith.constant 0 : i32
    %c0_i32_0 = arith.constant 0 : i32
    %c0_i32_1 = arith.constant 0 : i32
    %c0_i32_2 = arith.constant 0 : i32
    return %c0_i32, %c0_i32_0, %c0_i32_1 : i32, i32, i32
  }
  func.func @transform_8(%arg0: i32) -> (i32, i32, i32) {
    %c0_i32 = arith.constant 0 : i32
    %c0_i32_0 = arith.constant 0 : i32
    %c0_i32_1 = arith.constant 0 : i32
    %c0_i32_2 = arith.constant 0 : i32
    return %c0_i32, %c0_i32_0, %c0_i32_1 : i32, i32, i32
  }
  func.func @transform_9(%arg0: i32) -> (i32, i32, i32) {
    %c0_i32 = arith.constant 0 : i32
    %c0_i32_0 = arith.constant 0 : i32
    %c0_i32_1 = arith.constant 0 : i32
    %c0_i32_2 = arith.constant 0 : i32
    return %c0_i32, %c0_i32_0, %c0_i32_1 : i32, i32, i32
  }
  func.func @transform_10(%arg0: i32) -> (i32, i32, i32) {
    %c0_i32 = arith.constant 0 : i32
    %c0_i32_0 = arith.constant 0 : i32
    %c0_i32_1 = arith.constant 0 : i32
    %c0_i32_2 = arith.constant 0 : i32
    return %c0_i32, %c0_i32_0, %c0_i32_1 : i32, i32, i32
  }
  func.func @transform_11(%arg0: i32) -> (i32, i32) {
    %c0_i32 = arith.constant 0 : i32
    %c0_i32_0 = arith.constant 0 : i32
    %c0_i32_1 = arith.constant 0 : i32
    return %c0_i32, %c0_i32_0 : i32, i32
  }
  func.func @transform_12(%arg0: i32) -> (i32, i32) {
    %c0_i32 = arith.constant 0 : i32
    %c0_i32_0 = arith.constant 0 : i32
    %c0_i32_1 = arith.constant 0 : i32
    return %c0_i32, %c0_i32_0 : i32, i32
  }
  func.func @transform_13(%arg0: i32) -> (i32, i32, i32) {
    %c0_i32 = arith.constant 0 : i32
    %c0_i32_0 = arith.constant 0 : i32
    %c0_i32_1 = arith.constant 0 : i32
    return %arg0, %c0_i32, %c0_i32_0 : i32, i32, i32
  }
}

</mosaic_0001>

<llo_original>
// kernel: discriminator_forward_pallas.1
$region0: #{discriminator_forward_pallas.1}
  #allocation0 [shape = 'u32[]', space=smem, size = 0x4, offset = 0x4, fixed_abs, tag = 'smem constant byte address 0x4 - core index']
  #allocation1 [shape = 'u32[144,128]{1,0:T(1,128)}', space=vmem, size = 0x12000, scoped, tag = 'internal scratch']
  %s0 = inlined_call_operand.vmem [shape: f32[2,256,36], index: 0, kind: input, shape index: {}]
  %s1 = inlined_call_operand.vmem [shape: f32[36,16], index: 1, kind: input, shape index: {}]
  %s2 = inlined_call_operand.vmem [shape: f32[9,16,32], index: 2, kind: input, shape index: {}]
  %s3 = inlined_call_operand.vmem [shape: f32[9,32,64], index: 3, kind: input, shape index: {}]
  %s4 = inlined_call_operand.vmem [shape: f32[9,64,128], index: 4, kind: input, shape index: {}]
  %s5 = inlined_call_operand.vmem [shape: f32[9,128,256], index: 5, kind: input, shape index: {}]
  %s6 = inlined_call_operand.vmem [shape: f32[9,64,256], index: 6, kind: input, shape index: {}]
  %s7 = inlined_call_operand.vmem [shape: f32[9,16,64], index: 7, kind: input, shape index: {}]
  %s8 = inlined_call_operand.vmem [shape: f32[9,8,16], index: 8, kind: input, shape index: {}]
  %s9 = inlined_call_operand.vmem [shape: f32[9,8,8], index: 9, kind: input, shape index: {}]
  %s10 = inlined_call_operand.vmem [shape: f32[5,3,256], index: 10, kind: input, shape index: {}]
  %s11 = inlined_call_operand.vmem [shape: f32[256,128], index: 11, kind: input, shape index: {}]
  %s12 = inlined_call_operand.vmem [shape: f32[1,128], index: 12, kind: input, shape index: {}]
  %s13 = inlined_call_operand.vmem [shape: f32[2,8,128], index: 13, kind: output, shape index: {}]
  %s14 = sld [smem:[#allocation0]]
  $region85: #{discriminator_forward_pallas.1} parent=0
    _
  %s16 = ssub.s32 1, %s14
  %s17 = scalar_select 0, %s16, %s14
  loop: start=0, step=1, limit=4
  $region2: #{discriminator_forward_pallas.1} parent=0 // loop_pre_header
    _
  $region3: #{discriminator_forward_pallas.1} parent=0 // loop_header
    %s19 = sphi 0, %s23
    %p20 = scmp.ge.s32.totalorder %s19, 4
    %s29 = sphi 0, %s31
    %s32 = sphi 0, %s29
    %s33 = sphi 0, %s32
    %s49 = sphi 0, %s33
    %s53 = sphi 0, %s53
    %s55 = sphi 0, %s53
    %s56 = sphi 0, %s55
    %s70 = sphi 0, %s56
    %s74 = sphi 0, %s74
    %s76 = sphi 0, %s74
    %s77 = sphi 0, %s76
    %s91 = sphi 0, %s77
    %s95 = sphi 0, %s95
    %s97 = sphi 0, %s95
    %s98 = sphi 0, %s97
    %s112 = sphi 0, %s98
    %s116 = sphi 0, %s116
    %s118 = sphi 0, %s116
    %s119 = sphi 0, %s118
    %s133 = sphi 0, %s119
    %s137 = sphi 0, %s137
    %s139 = sphi 0, %s137
    %s140 = sphi 0, %s139
    %s154 = sphi 0, %s140
    %s158 = sphi 0, %s158
    %s160 = sphi 0, %s158
    %s161 = sphi 0, %s160
    %s175 = sphi 0, %s161
    %s179 = sphi 0, %s179
    %s181 = sphi 0, %s179
    %s182 = sphi 0, %s181
    %s196 = sphi 0, %s182
    %s200 = sphi 0, %s200
    %s202 = sphi 0, %s200
    %s203 = sphi 0, %s202
    %s217 = sphi 0, %s203
    %s221 = sphi 0, %s221
    %s223 = sphi 0, %s221
    %s224 = sphi 0, %s223
    %s238 = sphi 0, %s224
    %s242 = sphi 0, %s242
    %s244 = sphi 0, %s242
    %s245 = sphi 0, %s244
    %s259 = sphi 0, %s245
    %s263 = sphi 0, %s263
    %s265 = sphi 0, %s263
    %s266 = sphi 0, %s265
    %s280 = sphi 0, %s266
    %s284 = sphi 0, %s284
    %s286 = sphi 0, %s284
    %s287 = sphi 0, %s286
    %s301 = sphi 0, %s287
    %s307 = sphi 0, %s309
    %s310 = sphi 0, %s307
    %s311 = sphi 0, %s310
    %s327 = sphi 0, %s311
  $region4: #{discriminator_forward_pallas.1} parent=0 // loop_header_branch
    %22 = sbr.rel (%p20) target = $region8
  $region5: #{discriminator_forward_pallas.1} parent=0 // loop_body
    %s24 = ssub.s32 %s19, 1
    %s25 = ssub.s32 %s19, 2
    %s26 = sadd.s32 %s19, 1
    %s27 = ssub.s32 %s19, %s26
    %p28 = scmp.eq.s32.totalorder %s27, 0
    %s30 = sadd.s32 %s29, 1
    %s31 = scalar_select %p28, %s29, %s30
    %p34 = pneg %p28
    %p35 = scmp.eq.s32.totalorder %s19, 1
    %p36 = por %p34, %p35
    %p37 = scmp.ne.s32.totalorder %s29, %s32
    %p38 = scmp.eq.s32.totalorder %s19, 0
    %p39 = por %p37, %p38
    %p40 = scmp.ne.s32.totalorder %s29, %s32
    %p41 = scmp.eq.s32.totalorder %s24, 1
    %p42 = por %p40, %p41
    %p43 = scmp.ne.s32.totalorder %s32, %s33
    %p44 = scmp.eq.s32.totalorder %s24, 0
    %p45 = por %p43, %p44
    %p46 = scmp.ne.s32.totalorder %s32, %s33
    %p47 = scmp.eq.s32.totalorder %s25, 1
    %p48 = por %p46, %p47
    %p50 = scmp.ne.s32.totalorder %s33, %s49
    %p51 = scmp.eq.s32.totalorder %s25, 0
    %p52 = por %p50, %p51
    %s54 = sadd.s32 %s53, 1
    %p57 = scmp.eq.s32.totalorder %s19, 1
    %p58 = scmp.ne.s32.totalorder %s53, %s55
    %p59 = scmp.eq.s32.totalorder %s19, 0
    %p60 = por %p58, %p59
    %p61 = scmp.ne.s32.totalorder %s53, %s55
    %p62 = scmp.eq.s32.totalorder %s24, 1
    %p63 = por %p61, %p62
    %p64 = scmp.ne.s32.totalorder %s55, %s56
    %p65 = scmp.eq.s32.totalorder %s24, 0
    %p66 = por %p64, %p65
    %p67 = scmp.ne.s32.totalorder %s55, %s56
    %p68 = scmp.eq.s32.totalorder %s25, 1
    %p69 = por %p67, %p68
    %p71 = scmp.ne.s32.totalorder %s56, %s70
    %p72 = scmp.eq.s32.totalorder %s25, 0
    %p73 = por %p71, %p72
    %s75 = sadd.s32 %s74, 1
    %p78 = scmp.eq.s32.totalorder %s19, 1
    %p79 = scmp.ne.s32.totalorder %s74, %s76
    %p80 = scmp.eq.s32.totalorder %s19, 0
    %p81 = por %p79, %p80
    %p82 = scmp.ne.s32.totalorder %s74, %s76
    %p83 = scmp.eq.s32.totalorder %s24, 1
    %p84 = por %p82, %p83
    %p85 = scmp.ne.s32.totalorder %s76, %s77
    %p86 = scmp.eq.s32.totalorder %s24, 0
    %p87 = por %p85, %p86
    %p88 = scmp.ne.s32.totalorder %s76, %s77
    %p89 = scmp.eq.s32.totalorder %s25, 1
    %p90 = por %p88, %p89
    %p92 = scmp.ne.s32.totalorder %s77, %s91
    %p93 = scmp.eq.s32.totalorder %s25, 0
    %p94 = por %p92, %p93
    %s96 = sadd.s32 %s95, 1
    %p99 = scmp.eq.s32.totalorder %s19, 1
    %p100 = scmp.ne.s32.totalorder %s95, %s97
    %p101 = scmp.eq.s32.totalorder %s19, 0
    %p102 = por %p100, %p101
    %p103 = scmp.ne.s32.totalorder %s95, %s97
    %p104 = scmp.eq.s32.totalorder %s24, 1
    %p105 = por %p103, %p104
    %p106 = scmp.ne.s32.totalorder %s97, %s98
    %p107 = scmp.eq.s32.totalorder %s24, 0
    %p108 = por %p106, %p107
    %p109 = scmp.ne.s32.totalorder %s97, %s98
    %p110 = scmp.eq.s32.totalorder %s25, 1
    %p111 = por %p109, %p110
    %p113 = scmp.ne.s32.totalorder %s98, %s112
    %p114 = scmp.eq.s32.totalorder %s25, 0
    %p115 = por %p113, %p114
    %s117 = sadd.s32 %s116, 1
    %p120 = scmp.eq.s32.totalorder %s19, 1
    %p121 = scmp.ne.s32.totalorder %s116, %s118
    %p122 = scmp.eq.s32.totalorder %s19, 0
    %p123 = por %p121, %p122
    %p124 = scmp.ne.s32.totalorder %s116, %s118
    %p125 = scmp.eq.s32.totalorder %s24, 1
    %p126 = por %p124, %p125
    %p127 = scmp.ne.s32.totalorder %s118, %s119
    %p128 = scmp.eq.s32.totalorder %s24, 0
    %p129 = por %p127, %p128
    %p130 = scmp.ne.s32.totalorder %s118, %s119
    %p131 = scmp.eq.s32.totalorder %s25, 1
    %p132 = por %p130, %p131
    %p134 = scmp.ne.s32.totalorder %s119, %s133
    %p135 = scmp.eq.s32.totalorder %s25, 0
    %p136 = por %p134, %p135
    %s138 = sadd.s32 %s137, 1
    %p141 = scmp.eq.s32.totalorder %s19, 1
    %p142 = scmp.ne.s32.totalorder %s137, %s139
    %p143 = scmp.eq.s32.totalorder %s19, 0
    %p144 = por %p142, %p143
    %p145 = scmp.ne.s32.totalorder %s137, %s139
    %p146 = scmp.eq.s32.totalorder %s24, 1
    %p147 = por %p145, %p146
    %p148 = scmp.ne.s32.totalorder %s139, %s140
    %p149 = scmp.eq.s32.totalorder %s24, 0
    %p150 = por %p148, %p149
    %p151 = scmp.ne.s32.totalorder %s139, %s140
    %p152 = scmp.eq.s32.totalorder %s25, 1
    %p153 = por %p151, %p152
    %p155 = scmp.ne.s32.totalorder %s140, %s154
    %p156 = scmp.eq.s32.totalorder %s25, 0
    %p157 = por %p155, %p156
    %s159 = sadd.s32 %s158, 1
    %p162 = scmp.eq.s32.totalorder %s19, 1
    %p163 = scmp.ne.s32.totalorder %s158, %s160
    %p164 = scmp.eq.s32.totalorder %s19, 0
    %p165 = por %p163, %p164
    %p166 = scmp.ne.s32.totalorder %s158, %s160
    %p167 = scmp.eq.s32.totalorder %s24, 1
    %p168 = por %p166, %p167
    %p169 = scmp.ne.s32.totalorder %s160, %s161
    %p170 = scmp.eq.s32.totalorder %s24, 0
    %p171 = por %p169, %p170
    %p172 = scmp.ne.s32.totalorder %s160, %s161
    %p173 = scmp.eq.s32.totalorder %s25, 1
    %p174 = por %p172, %p173
    %p176 = scmp.ne.s32.totalorder %s161, %s175
    %p177 = scmp.eq.s32.totalorder %s25, 0
    %p178 = por %p176, %p177
    %s180 = sadd.s32 %s179, 1
    %p183 = scmp.eq.s32.totalorder %s19, 1
    %p184 = scmp.ne.s32.totalorder %s179, %s181
    %p185 = scmp.eq.s32.totalorder %s19, 0
    %p186 = por %p184, %p185
    %p187 = scmp.ne.s32.totalorder %s179, %s181
    %p188 = scmp.eq.s32.totalorder %s24, 1
    %p189 = por %p187, %p188
    %p190 = scmp.ne.s32.totalorder %s181, %s182
    %p191 = scmp.eq.s32.totalorder %s24, 0
    %p192 = por %p190, %p191
    %p193 = scmp.ne.s32.totalorder %s181, %s182
    %p194 = scmp.eq.s32.totalorder %s25, 1
    %p195 = por %p193, %p194
    %p197 = scmp.ne.s32.totalorder %s182, %s196
    %p198 = scmp.eq.s32.totalorder %s25, 0
    %p199 = por %p197, %p198
    %s201 = sadd.s32 %s200, 1
    %p204 = scmp.eq.s32.totalorder %s19, 1
    %p205 = scmp.ne.s32.totalorder %s200, %s202
    %p206 = scmp.eq.s32.totalorder %s19, 0
    %p207 = por %p205, %p206
    %p208 = scmp.ne.s32.totalorder %s200, %s202
    %p209 = scmp.eq.s32.totalorder %s24, 1
    %p210 = por %p208, %p209
    %p211 = scmp.ne.s32.totalorder %s202, %s203
    %p212 = scmp.eq.s32.totalorder %s24, 0
    %p213 = por %p211, %p212
    %p214 = scmp.ne.s32.totalorder %s202, %s203
    %p215 = scmp.eq.s32.totalorder %s25, 1
    %p216 = por %p214, %p215
    %p218 = scmp.ne.s32.totalorder %s203, %s217
    %p219 = scmp.eq.s32.totalorder %s25, 0
    %p220 = por %p218, %p219
    %s222 = sadd.s32 %s221, 1
    %p225 = scmp.eq.s32.totalorder %s19, 1
    %p226 = scmp.ne.s32.totalorder %s221, %s223
    %p227 = scmp.eq.s32.totalorder %s19, 0
    %p228 = por %p226, %p227
    %p229 = scmp.ne.s32.totalorder %s221, %s223
    %p230 = scmp.eq.s32.totalorder %s24, 1
    %p231 = por %p229, %p230
    %p232 = scmp.ne.s32.totalorder %s223, %s224
    %p233 = scmp.eq.s32.totalorder %s24, 0
    %p234 = por %p232, %p233
    %p235 = scmp.ne.s32.totalorder %s223, %s224
    %p236 = scmp.eq.s32.totalorder %s25, 1
    %p237 = por %p235, %p236
    %p239 = scmp.ne.s32.totalorder %s224, %s238
    %p240 = scmp.eq.s32.totalorder %s25, 0
    %p241 = por %p239, %p240
    %s243 = sadd.s32 %s242, 1
    %p246 = scmp.eq.s32.totalorder %s19, 1
    %p247 = scmp.ne.s32.totalorder %s242, %s244
    %p248 = scmp.eq.s32.totalorder %s19, 0
    %p249 = por %p247, %p248
    %p250 = scmp.ne.s32.totalorder %s242, %s244
    %p251 = scmp.eq.s32.totalorder %s24, 1
    %p252 = por %p250, %p251
    %p253 = scmp.ne.s32.totalorder %s244, %s245
    %p254 = scmp.eq.s32.totalorder %s24, 0
    %p255 = por %p253, %p254
    %p256 = scmp.ne.s32.totalorder %s244, %s245
    %p257 = scmp.eq.s32.totalorder %s25, 1
    %p258 = por %p256, %p257
    %p260 = scmp.ne.s32.totalorder %s245, %s259
    %p261 = scmp.eq.s32.totalorder %s25, 0
    %p262 = por %p260, %p261
    %s264 = sadd.s32 %s263, 1
    %p267 = scmp.eq.s32.totalorder %s19, 1
    %p268 = scmp.ne.s32.totalorder %s263, %s265
    %p269 = scmp.eq.s32.totalorder %s19, 0
    %p270 = por %p268, %p269
    %p271 = scmp.ne.s32.totalorder %s263, %s265
    %p272 = scmp.eq.s32.totalorder %s24, 1
    %p273 = por %p271, %p272
    %p274 = scmp.ne.s32.totalorder %s265, %s266
    %p275 = scmp.eq.s32.totalorder %s24, 0
    %p276 = por %p274, %p275
    %p277 = scmp.ne.s32.totalorder %s265, %s266
    %p278 = scmp.eq.s32.totalorder %s25, 1
    %p279 = por %p277, %p278
    %p281 = scmp.ne.s32.totalorder %s266, %s280
    %p282 = scmp.eq.s32.totalorder %s25, 0
    %p283 = por %p281, %p282
    %s285 = sadd.s32 %s284, 1
    %p288 = scmp.eq.s32.totalorder %s19, 1
    %p289 = scmp.ne.s32.totalorder %s284, %s286
    %p290 = scmp.eq.s32.totalorder %s19, 0
    %p291 = por %p289, %p290
    %p292 = scmp.ne.s32.totalorder %s284, %s286
    %p293 = scmp.eq.s32.totalorder %s24, 1
    %p294 = por %p292, %p293
    %p295 = scmp.ne.s32.totalorder %s286, %s287
    %p296 = scmp.eq.s32.totalorder %s24, 0
    %p297 = por %p295, %p296
    %p298 = scmp.ne.s32.totalorder %s286, %s287
    %p299 = scmp.eq.s32.totalorder %s25, 1
    %p300 = por %p298, %p299
    %p302 = scmp.ne.s32.totalorder %s287, %s301
    %p303 = scmp.eq.s32.totalorder %s25, 0
    %p304 = por %p302, %p303
    %s305 = ssub.s32 %s19, %s26
    %p306 = scmp.eq.s32.totalorder %s305, 0
    %s308 = sadd.s32 %s307, 1
    %s309 = scalar_select %p306, %s307, %s308
    %p312 = pneg %p306
    %p313 = scmp.eq.s32.totalorder %s19, 1
    %p314 = por %p312, %p313
    %p315 = scmp.ne.s32.totalorder %s307, %s310
    %p316 = scmp.eq.s32.totalorder %s19, 0
    %p317 = por %p315, %p316
    %p318 = scmp.ne.s32.totalorder %s307, %s310
    %p319 = scmp.eq.s32.totalorder %s24, 1
    %p320 = por %p318, %p319
    %p321 = scmp.ne.s32.totalorder %s310, %s311
    %p322 = scmp.eq.s32.totalorder %s24, 0
    %p323 = por %p321, %p322
    %p324 = scmp.ne.s32.totalorder %s310, %s311
    %p325 = scmp.eq.s32.totalorder %s25, 1
    %p326 = por %p324, %p325
    %p328 = scmp.ne.s32.totalorder %s311, %s327
    %p329 = scmp.eq.s32.totalorder %s25, 0
    %p330 = por %p328, %p329
    %p331 = scmp.le.s32.totalorder 1, %s19
    %p332 = scmp.lt.s32.totalorder %s19, 3
    %p333 = pnand %p331, %p332
    %p334 = pneg %p333
    // Predicated region
    $region9: #{discriminator_forward_pallas.1} parent=5 // pred_check
      _
    $region10: #{discriminator_forward_pallas.1} parent=5 // pred_check_branch
      %336 = sbr.rel (%p333) target = $region12
    $region11: #{discriminator_forward_pallas.1} parent=5 // pred_region
      %s337 = ssub.s32 %s19, 1
      // Predicated region
      $region13: #{discriminator_forward_pallas.1} parent=11 // pred_check
        %p338 = pneg %p66
      $region14: #{discriminator_forward_pallas.1} parent=11 // pred_check_branch
        %340 = sbr.rel (%p338) target = $region16
      $region15: #{discriminator_forward_pallas.1} parent=11 // pred_region
        _
      $region16: #{discriminator_forward_pallas.1} parent=11 // pred_fallthru
        _
      // Predicated region
      $region17: #{discriminator_forward_pallas.1} parent=11 // pred_check
        %p341 = pneg %p87
      $region18: #{discriminator_forward_pallas.1} parent=11 // pred_check_branch
        %343 = sbr.rel (%p341) target = $region20
      $region19: #{discriminator_forward_pallas.1} parent=11 // pred_region
        _
      $region20: #{discriminator_forward_pallas.1} parent=11 // pred_fallthru
        _
      // Predicated region
      $region21: #{discriminator_forward_pallas.1} parent=11 // pred_check
        %p344 = pneg %p108
      $region22: #{discriminator_forward_pallas.1} parent=11 // pred_check_branch
        %346 = sbr.rel (%p344) target = $region24
      $region23: #{discriminator_forward_pallas.1} parent=11 // pred_region
        _
      $region24: #{discriminator_forward_pallas.1} parent=11 // pred_fallthru
        _
      // Predicated region
      $region25: #{discriminator_forward_pallas.1} parent=11 // pred_check
        %p347 = pneg %p129
      $region26: #{discriminator_forward_pallas.1} parent=11 // pred_check_branch
        %349 = sbr.rel (%p347) target = $region28
      $region27: #{discriminator_forward_pallas.1} parent=11 // pred_region
        _
      $region28: #{discriminator_forward_pallas.1} parent=11 // pred_fallthru
        _
      // Predicated region
      $region29: #{discriminator_forward_pallas.1} parent=11 // pred_check
        %p350 = pneg %p150
      $region30: #{discriminator_forward_pallas.1} parent=11 // pred_check_branch
        %352 = sbr.rel (%p350) target = $region32
      $region31: #{discriminator_forward_pallas.1} parent=11 // pred_region
        _
      $region32: #{discriminator_forward_pallas.1} parent=11 // pred_fallthru
        _
      // Predicated region
      $region33: #{discriminator_forward_pallas.1} parent=11 // pred_check
        %p353 = pneg %p171
      $region34: #{discriminator_forward_pallas.1} parent=11 // pred_check_branch
        %355 = sbr.rel (%p353) target = $region36
      $region35: #{discriminator_forward_pallas.1} parent=11 // pred_region
        _
      $region36: #{discriminator_forward_pallas.1} parent=11 // pred_fallthru
        _
      // Predicated region
      $region37: #{discriminator_forward_pallas.1} parent=11 // pred_check
        %p356 = pneg %p192
      $region38: #{discriminator_forward_pallas.1} parent=11 // pred_check_branch
        %358 = sbr.rel (%p356) target = $region40
      $region39: #{discriminator_forward_pallas.1} parent=11 // pred_region
        _
      $region40: #{discriminator_forward_pallas.1} parent=11 // pred_fallthru
        _
      // Predicated region
      $region41: #{discriminator_forward_pallas.1} parent=11 // pred_check
        %p359 = pneg %p213
      $region42: #{discriminator_forward_pallas.1} parent=11 // pred_check_branch
        %361 = sbr.rel (%p359) target = $region44
      $region43: #{discriminator_forward_pallas.1} parent=11 // pred_region
        _
      $region44: #{discriminator_forward_pallas.1} parent=11 // pred_fallthru
        _
      // Predicated region
      $region45: #{discriminator_forward_pallas.1} parent=11 // pred_check
        %p362 = pneg %p234
      $region46: #{discriminator_forward_pallas.1} parent=11 // pred_check_branch
        %364 = sbr.rel (%p362) target = $region48
      $region47: #{discriminator_forward_pallas.1} parent=11 // pred_region
        _
      $region48: #{discriminator_forward_pallas.1} parent=11 // pred_fallthru
        _
      // Predicated region
      $region49: #{discriminator_forward_pallas.1} parent=11 // pred_check
        %p365 = pneg %p255
      $region50: #{discriminator_forward_pallas.1} parent=11 // pred_check_branch
        %367 = sbr.rel (%p365) target = $region52
      $region51: #{discriminator_forward_pallas.1} parent=11 // pred_region
        _
      $region52: #{discriminator_forward_pallas.1} parent=11 // pred_fallthru
        _
      // Predicated region
      $region53: #{discriminator_forward_pallas.1} parent=11 // pred_check
        %p368 = pneg %p276
      $region54: #{discriminator_forward_pallas.1} parent=11 // pred_check_branch
        %370 = sbr.rel (%p368) target = $region56
      $region55: #{discriminator_forward_pallas.1} parent=11 // pred_region
        _
      $region56: #{discriminator_forward_pallas.1} parent=11 // pred_fallthru
        _
      // Predicated region
      $region57: #{discriminator_forward_pallas.1} parent=11 // pred_check
        %p371 = pneg %p297
      $region58: #{discriminator_forward_pallas.1} parent=11 // pred_check_branch
        %373 = sbr.rel (%p371) target = $region60
      $region59: #{discriminator_forward_pallas.1} parent=11 // pred_region
        _
      $region60: #{discriminator_forward_pallas.1} parent=11 // pred_fallthru
        _
    $region12: #{discriminator_forward_pallas.1} parent=5 // pred_fallthru
      _
    %p374 = scmp.lt.s32.totalorder %s19, 2
    // Predicated region
    $region61: #{discriminator_forward_pallas.1} parent=5 // pred_check
      %p375 = pneg %p374
    $region62: #{discriminator_forward_pallas.1} parent=5 // pred_check_branch
      %377 = sbr.rel (%p375) target = $region64
    $region63: #{discriminator_forward_pallas.1} parent=5 // pred_region
      // Predicated region
      $region65: #{discriminator_forward_pallas.1} parent=63 // pred_check
        %p378 = pneg %p39
      $region66: #{discriminator_forward_pallas.1} parent=63 // pred_check_branch
        %380 = sbr.rel (%p378) target = $region68
      $region67: #{discriminator_forward_pallas.1} parent=63 // pred_region
        %p381 = scmp.lt.s32.totalorder %s19, 1
        %s382 = scalar_select %p381, %s19, 1
        %s383 = smul.addr %s382, 32
        %s384 = smul.addr %s383, 8
        %s385 = scalar_lea.vmem %s0, %s384
      $region68: #{discriminator_forward_pallas.1} parent=63 // pred_fallthru
        _
    $region64: #{discriminator_forward_pallas.1} parent=5 // pred_fallthru
      _
    %p386 = scmp.le.s32.totalorder 1, %s19
    %p387 = scmp.lt.s32.totalorder %s19, 3
    %p388 = pnand %p386, %p387
    %p389 = pneg %p388
    // Predicated region
    $region69: #{discriminator_forward_pallas.1} parent=5 // pred_check
      _
    $region70: #{discriminator_forward_pallas.1} parent=5 // pred_check_branch
      %391 = sbr.rel (%p388) target = $region72
    $region71: #{discriminator_forward_pallas.1} parent=5 // pred_region
      %s392 = ssub.s32 %s19, 1
      %p393 = scmp.lt.s32.totalorder %s24, 1
      %s394 = scalar_select %p393, %s24, 1
      %s395 = smul.addr %s394, 32
      %s396 = smul.addr %s395, 8
      %s397 = scalar_lea.vmem %s0, %s396
      %p398 = pneg %p45
      %p399 = pneg %p42
      %p400 = pneg %p66
      %p401 = pneg %p63
      %p402 = pneg %p87
      %p403 = pneg %p84
      %p404 = pneg %p108
      %p405 = pneg %p105
      %p406 = pneg %p129
      %p407 = pneg %p126
      %p408 = pneg %p150
      %p409 = pneg %p147
      %p410 = pneg %p171
      %p411 = pneg %p168
      %p412 = pneg %p192
      %p413 = pneg %p189
      %p414 = pneg %p213
      %p415 = pneg %p210
      %p416 = pneg %p234
      %p417 = pneg %p231
      %p418 = pneg %p255
      %p419 = pneg %p252
      %p420 = pneg %p276
      %p421 = pneg %p273
      %p422 = pneg %p297
      %p423 = pneg %p294
      %p424 = pneg %p323
      %p425 = pneg %p320
      %p426 = scmp.lt.s32.totalorder %s24, 1
      %s427 = scalar_select %p426, %s24, 1
      %s428 = smul.addr %s427, 8
      %s429 = scalar_lea.vmem %s13, %s428
      %p430 = scmp.lt.s32.totalorder %s24, 1
      %s431 = scalar_select %p430, %s24, 1
      %s432 = smul.addr %s431, 32
      %s433 = smul.addr %s432, 8
      %s434 = scalar_lea.vmem %s0, %s433
      %p435 = scmp.lt.s32.totalorder %s24, 1
      %s436 = scalar_select %p435, %s24, 1
      %s437 = smul.addr %s436, 8
      %s438 = scalar_lea.vmem %s13, %s437
      %v439 = vld [vmem:[%s434] sm:$0xff]
      %v440 = vld [vmem:[%s434 + $0x8] sm:$0xff]
      %v441 = vld [vmem:[%s434 + $0x10] sm:$0xff]
      %v442 = vld [vmem:[%s434 + $0x18] sm:$0xff]
      %v443 = vld [vmem:[%s434 + $0x20] sm:$0xff]
      %v444 = vld [vmem:[%s434 + $0x28] sm:$0xff]
      %v445 = vld [vmem:[%s434 + $0x30] sm:$0xff]
      %v446 = vld [vmem:[%s434 + $0x38] sm:$0xff]
      %v447 = vld [vmem:[%s434 + $0x40] sm:$0xff]
      %v448 = vld [vmem:[%s434 + $0x48] sm:$0xff]
      %v449 = vld [vmem:[%s434 + $0x50] sm:$0xff]
      %v450 = vld [vmem:[%s434 + $0x58] sm:$0xff]
      %v451 = vld [vmem:[%s434 + $0x60] sm:$0xff]
      %v452 = vld [vmem:[%s434 + $0x68] sm:$0xff]
      %v453 = vld [vmem:[%s434 + $0x70] sm:$0xff]
      %v454 = vld [vmem:[%s434 + $0x78] sm:$0xff]
      %v455 = vld [vmem:[%s434 + $0x80] sm:$0xff]
      %v456 = vld [vmem:[%s434 + $0x88] sm:$0xff]
      %v457 = vld [vmem:[%s434 + $0x90] sm:$0xff]
      %v458 = vld [vmem:[%s434 + $0x98] sm:$0xff]
      %v459 = vld [vmem:[%s434 + $0xa0] sm:$0xff]
      %v460 = vld [vmem:[%s434 + $0xa8] sm:$0xff]
      %v461 = vld [vmem:[%s434 + $0xb0] sm:$0xff]
      %v462 = vld [vmem:[%s434 + $0xb8] sm:$0xff]
      %v463 = vld [vmem:[%s434 + $0xc0] sm:$0xff]
      %v464 = vld [vmem:[%s434 + $0xc8] sm:$0xff]
      %v465 = vld [vmem:[%s434 + $0xd0] sm:$0xff]
      %v466 = vld [vmem:[%s434 + $0xd8] sm:$0xff]
      %v467 = vld [vmem:[%s434 + $0xe0] sm:$0xff]
      %v468 = vld [vmem:[%s434 + $0xe8] sm:$0xff]
      %v469 = vld [vmem:[%s434 + $0xf0] sm:$0xff]
      %v470 = vld [vmem:[%s434 + $0xf8] sm:$0xff]
      %v471 = vld [vmem:[%s1] sm:$0xff]
      %v472 = vld [vmem:[%s1 + $0x8] sm:$0xff]
      %v473 = vld [vmem:[%s1 + $0x10] sm:$0xff]
      %v474 = vld [vmem:[%s1 + $0x18] sm:$0xff]
      %v475 = vld [vmem:[%s1 + $0x20] sm:$0xf]
      %v476 = vld [vmem:[%s10] sm:$0x77]
      %v477 = vlaneseq
      %v478 = vshrl.u32 %v477, 7
      %v479 = vsub.s32 0, %v478
      %v480 = vrot.slane %v476, %v479
      %vm481 = vcmask 293888
      %v483 = vsel %vm481, %v439, 0
      %v486 = vsel %vm481, %v440, 0
      %v489 = vsel %vm481, %v441, 0
      %v492 = vsel %vm481, %v442, 0
      %v495 = vsel %vm481, %v443, 0
      %v498 = vsel %vm481, %v444, 0
      %v501 = vsel %vm481, %v445, 0
      %v504 = vsel %vm481, %v446, 0
      %v507 = vsel %vm481, %v447, 0
      %v510 = vsel %vm481, %v448, 0
      %v513 = vsel %vm481, %v449, 0
      %v516 = vsel %vm481, %v450, 0
      %v519 = vsel %vm481, %v451, 0
      %v522 = vsel %vm481, %v452, 0
      %v525 = vsel %vm481, %v453, 0
      %v528 = vsel %vm481, %v454, 0
      %v531 = vsel %vm481, %v455, 0
      %v534 = vsel %vm481, %v456, 0
      %v537 = vsel %vm481, %v457, 0
      %v540 = vsel %vm481, %v458, 0
      %v543 = vsel %vm481, %v459, 0
      %v546 = vsel %vm481, %v460, 0
      %v549 = vsel %vm481, %v461, 0
      %v552 = vsel %vm481, %v462, 0
      %v555 = vsel %vm481, %v463, 0
      %v558 = vsel %vm481, %v464, 0
      %v561 = vsel %vm481, %v465, 0
      %v564 = vsel %vm481, %v466, 0
      %v567 = vsel %vm481, %v467, 0
      %v570 = vsel %vm481, %v468, 0
      %v573 = vsel %vm481, %v469, 0
      %v576 = vsel %vm481, %v470, 0
      %vm578 = vcmask 1043456
      %v580 = vsel %vm578, %v475, 0
      %582 = vmatprep.subr.mxu0 0.0
      %583 = vmatpush1.msra.mxu0 %v471
      %584 = vmatprep.subr.mxu0 0.0
      %585 = vmatpush1.msra.mxu0 %v472
      %586 = vmatprep.subr.mxu0 0.0
      %587 = vmatpush1.msra.mxu0 %v473
      %588 = vmatprep.subr.mxu0 0.0
      %589 = vmatpush1.msra.mxu0 %v474
      %590 = vmatprep.subr.mxu0 0.0
      %591 = vmatpush1.msra.mxu0 %v580
      %592 = vmatprep.subr.mxu0 0.0
      %593 = vmatpush1.msra.mxu0 0.0
      %594 = vmatprep.subr.mxu0 0.0
      %595 = vmatpush1.msra.mxu0 0.0
      %596 = vmatprep.subr.mxu0 0.0
      %597 = vmatpush1.msra.mxu0 0.0
      %598 = vmatprep.subr.mxu0 0.0
      %599 = vmatpush1.msra.mxu0 0.0
      %600 = vmatprep.subr.mxu0 0.0
      %601 = vmatpush1.msra.mxu0 0.0
      %602 = vmatprep.subr.mxu0 0.0
      %603 = vmatpush1.msra.mxu0 0.0
      %604 = vmatprep.subr.mxu0 0.0
      %605 = vmatpush1.msra.mxu0 0.0
      %606 = vmatprep.subr.mxu0 0.0
      %607 = vmatpush1.msra.mxu0 0.0
      %608 = vmatprep.subr.mxu0 0.0
      %609 = vmatpush1.msra.mxu0 0.0
      %610 = vmatprep.subr.mxu0 0.0
      %611 = vmatpush1.msra.mxu0 0.0
      %612 = vmatprep.subr.mxu0 0.0
      %613 = vmatpush1.msra.mxu0 0.0
      %614 = vmatprep.subr.mxu0 0.0
      %615 = vmatpush1.msra.mxu0 0.0
      %616 = vmatprep.subr.mxu0 0.0
      %617 = vmatpush1.msra.mxu0 0.0
      %618 = vmatprep.subr.mxu0 0.0
      %619 = vmatpush1.msra.mxu0 0.0
      %620 = vmatprep.subr.mxu0 0.0
      %621 = vmatpush1.msra.mxu0 0.0
      %622 = vmatprep.subr.mxu0 0.0
      %623 = vmatpush1.msra.mxu0 0.0
      %624 = vmatprep.subr.mxu0 0.0
      %625 = vmatpush1.msra.mxu0 0.0
      %626 = vmatprep.subr.mxu0 0.0
      %627 = vmatpush1.msra.mxu0 0.0
      %628 = vmatprep.subr.mxu0 0.0
      %629 = vmatpush1.msra.mxu0 0.0
      %630 = vmatprep.subr.mxu0 0.0
      %631 = vmatpush1.msra.mxu0 0.0
      %632 = vmatprep.subr.mxu0 0.0
      %633 = vmatpush1.msra.mxu0 0.0
      %634 = vmatprep.subr.mxu0 0.0
      %635 = vmatpush1.msra.mxu0 0.0
      %636 = vmatprep.subr.mxu0 0.0
      %637 = vmatpush1.msra.mxu0 0.0
      %638 = vmatprep.subr.mxu0 0.0
      %639 = vmatpush1.msra.mxu0 0.0
      %640 = vmatprep.subr.mxu0 0.0
      %641 = vmatpush1.msra.mxu0 0.0
      %642 = vmatprep.subr.mxu0 0.0
      %643 = vmatpush1.msra.mxu0 0.0
      %644 = vmatprep.subr.mxu0 0.0
      %645 = vmatpush1.msra.mxu0 0.0
      %646 = vmatprep.mubr.f32.mxu0 0.0
      %647 = vmatmul.mubr.f32.gmra.mrb[0].mxu0 %v483
      %v648 = vpop.f32.mrb[0].mxu0
      %v649 = vadd.f32 %v480, %v648
      %v650 = vpop.f32.mrb[0].mxu0
      %651 = vmatprep.mubr.f32.mxu0 0.0
      %652 = vmatmul.mubr.f32.gmra.mrb[0].mxu0 %v486
      %v653 = vpop.f32.mrb[0].mxu0
      %v654 = vadd.f32 %v480, %v653
      %v655 = vpop.f32.mrb[0].mxu0
      %656 = vmatprep.mubr.f32.mxu0 0.0
      %657 = vmatmul.mubr.f32.gmra.mrb[0].mxu0 %v489
      %v658 = vpop.f32.mrb[0].mxu0
      %v659 = vadd.f32 %v480, %v658
      %v660 = vpop.f32.mrb[0].mxu0
      %661 = vmatprep.mubr.f32.mxu0 0.0
      %662 = vmatmul.mubr.f32.gmra.mrb[0].mxu0 %v492
      %v663 = vpop.f32.mrb[0].mxu0
      %v664 = vadd.f32 %v480, %v663
      %v665 = vpop.f32.mrb[0].mxu0
      %666 = vmatprep.mubr.f32.mxu0 0.0
      %667 = vmatmul.mubr.f32.gmra.mrb[0].mxu0 %v495
      %v668 = vpop.f32.mrb[0].mxu0
      %v669 = vadd.f32 %v480, %v668
      %v670 = vpop.f32.mrb[0].mxu0
      %671 = vmatprep.mubr.f32.mxu0 0.0
      %672 = vmatmul.mubr.f32.gmra.mrb[0].mxu0 %v498
      %v673 = vpop.f32.mrb[0].mxu0
      %v674 = vadd.f32 %v480, %v673
      %v675 = vpop.f32.mrb[0].mxu0
      %676 = vmatprep.mubr.f32.mxu0 0.0
      %677 = vmatmul.mubr.f32.gmra.mrb[0].mxu0 %v501
      %v678 = vpop.f32.mrb[0].mxu0
      %v679 = vadd.f32 %v480, %v678
      %v680 = vpop.f32.mrb[0].mxu0
      %681 = vmatprep.mubr.f32.mxu0 0.0
      %682 = vmatmul.mubr.f32.gmra.mrb[0].mxu0 %v504
      %v683 = vpop.f32.mrb[0].mxu0
      %v684 = vadd.f32 %v480, %v683
      %v685 = vpop.f32.mrb[0].mxu0
      %686 = vmatprep.mubr.f32.mxu0 0.0
      %687 = vmatmul.mubr.f32.gmra.mrb[0].mxu0 %v507
      %v688 = vpop.f32.mrb[0].mxu0
      %v689 = vadd.f32 %v480, %v688
      %v690 = vpop.f32.mrb[0].mxu0
      %691 = vmatprep.mubr.f32.mxu0 0.0
      %692 = vmatmul.mubr.f32.gmra.mrb[0].mxu0 %v510
      %v693 = vpop.f32.mrb[0].mxu0
      %v694 = vadd.f32 %v480, %v693
      %v695 = vpop.f32.mrb[0].mxu0
      %696 = vmatprep.mubr.f32.mxu0 0.0
      %697 = vmatmul.mubr.f32.gmra.mrb[0].mxu0 %v513
      %v698 = vpop.f32.mrb[0].mxu0
      %v699 = vadd.f32 %v480, %v698
      %v700 = vpop.f32.mrb[0].mxu0
      %701 = vmatprep.mubr.f32.mxu0 0.0
      %702 = vmatmul.mubr.f32.gmra.mrb[0].mxu0 %v516
      %v703 = vpop.f32.mrb[0].mxu0
      %v704 = vadd.f32 %v480, %v703
      %v705 = vpop.f32.mrb[0].mxu0
      %706 = vmatprep.mubr.f32.mxu0 0.0
      %707 = vmatmul.mubr.f32.gmra.mrb[0].mxu0 %v519
      %v708 = vpop.f32.mrb[0].mxu0
      %v709 = vadd.f32 %v480, %v708
      %v710 = vpop.f32.mrb[0].mxu0
      %711 = vmatprep.mubr.f32.mxu0 0.0
      %712 = vmatmul.mubr.f32.gmra.mrb[0].mxu0 %v522
      %v713 = vpop.f32.mrb[0].mxu0
      %v714 = vadd.f32 %v480, %v713
      %v715 = vpop.f32.mrb[0].mxu0
      %716 = vmatprep.mubr.f32.mxu0 0.0
      %717 = vmatmul.mubr.f32.gmra.mrb[0].mxu0 %v525
      %v718 = vpop.f32.mrb[0].mxu0
      %v719 = vadd.f32 %v480, %v718
      %v720 = vpop.f32.mrb[0].mxu0
      %721 = vmatprep.mubr.f32.mxu0 0.0
      %722 = vmatmul.mubr.f32.gmra.mrb[0].mxu0 %v528
      %v723 = vpop.f32.mrb[0].mxu0
      %v724 = vadd.f32 %v480, %v723
      %v725 = vpop.f32.mrb[0].mxu0
      %726 = vmatprep.mubr.f32.mxu0 0.0
      %727 = vmatmul.mubr.f32.gmra.mrb[0].mxu0 %v531
      %v728 = vpop.f32.mrb[0].mxu0
      %v729 = vadd.f32 %v480, %v728
      %v730 = vpop.f32.mrb[0].mxu0
      %731 = vmatprep.mubr.f32.mxu0 0.0
      %732 = vmatmul.mubr.f32.gmra.mrb[0].mxu0 %v534
      %v733 = vpop.f32.mrb[0].mxu0
      %v734 = vadd.f32 %v480, %v733
      %v735 = vpop.f32.mrb[0].mxu0
      %736 = vmatprep.mubr.f32.mxu0 0.0
      %737 = vmatmul.mubr.f32.gmra.mrb[0].mxu0 %v537
      %v738 = vpop.f32.mrb[0].mxu0
      %v739 = vadd.f32 %v480, %v738
      %v740 = vpop.f32.mrb[0].mxu0
      %741 = vmatprep.mubr.f32.mxu0 0.0
      %742 = vmatmul.mubr.f32.gmra.mrb[0].mxu0 %v540
      %v743 = vpop.f32.mrb[0].mxu0
      %v744 = vadd.f32 %v480, %v743
      %v745 = vpop.f32.mrb[0].mxu0
      %746 = vmatprep.mubr.f32.mxu0 0.0
      %747 = vmatmul.mubr.f32.gmra.mrb[0].mxu0 %v543
      %v748 = vpop.f32.mrb[0].mxu0
      %v749 = vadd.f32 %v480, %v748
      %v750 = vpop.f32.mrb[0].mxu0
      %751 = vmatprep.mubr.f32.mxu0 0.0
      %752 = vmatmul.mubr.f32.gmra.mrb[0].mxu0 %v546
      %v753 = vpop.f32.mrb[0].mxu0
      %v754 = vadd.f32 %v480, %v753
      %v755 = vpop.f32.mrb[0].mxu0
      %756 = vmatprep.mubr.f32.mxu0 0.0
      %757 = vmatmul.mubr.f32.gmra.mrb[0].mxu0 %v549
      %v758 = vpop.f32.mrb[0].mxu0
      %v759 = vadd.f32 %v480, %v758
      %v760 = vpop.f32.mrb[0].mxu0
      %761 = vmatprep.mubr.f32.mxu0 0.0
      %762 = vmatmul.mubr.f32.gmra.mrb[0].mxu0 %v552
      %v763 = vpop.f32.mrb[0].mxu0
      %v764 = vadd.f32 %v480, %v763
      %v765 = vpop.f32.mrb[0].mxu0
      %766 = vmatprep.mubr.f32.mxu0 0.0
      %767 = vmatmul.mubr.f32.gmra.mrb[0].mxu0 %v555
      %v768 = vpop.f32.mrb[0].mxu0
      %v769 = vadd.f32 %v480, %v768
      %v770 = vpop.f32.mrb[0].mxu0
      %771 = vmatprep.mubr.f32.mxu0 0.0
      %772 = vmatmul.mubr.f32.gmra.mrb[0].mxu0 %v558
      %v773 = vpop.f32.mrb[0].mxu0
      %v774 = vadd.f32 %v480, %v773
      %v775 = vpop.f32.mrb[0].mxu0
      %776 = vmatprep.mubr.f32.mxu0 0.0
      %777 = vmatmul.mubr.f32.gmra.mrb[0].mxu0 %v561
      %v778 = vpop.f32.mrb[0].mxu0
      %v779 = vadd.f32 %v480, %v778
      %v780 = vpop.f32.mrb[0].mxu0
      %781 = vmatprep.mubr.f32.mxu0 0.0
      %782 = vmatmul.mubr.f32.gmra.mrb[0].mxu0 %v564
      %v783 = vpop.f32.mrb[0].mxu0
      %v784 = vadd.f32 %v480, %v783
      %v785 = vpop.f32.mrb[0].mxu0
      %786 = vmatprep.mubr.f32.mxu0 0.0
      %787 = vmatmul.mubr.f32.gmra.mrb[0].mxu0 %v567
      %v788 = vpop.f32.mrb[0].mxu0
      %v789 = vadd.f32 %v480, %v788
      %v790 = vpop.f32.mrb[0].mxu0
      %791 = vmatprep.mubr.f32.mxu0 0.0
      %792 = vmatmul.mubr.f32.gmra.mrb[0].mxu0 %v570
      %v793 = vpop.f32.mrb[0].mxu0
      %v794 = vadd.f32 %v480, %v793
      %v795 = vpop.f32.mrb[0].mxu0
      %796 = vmatprep.mubr.f32.mxu0 0.0
      %797 = vmatmul.mubr.f32.gmra.mrb[0].mxu0 %v573
      %v798 = vpop.f32.mrb[0].mxu0
      %v799 = vadd.f32 %v480, %v798
      %v800 = vpop.f32.mrb[0].mxu0
      %801 = vmatprep.mubr.f32.mxu0 0.0
      %802 = vmatmul.mubr.f32.gmra.mrb[0].mxu0 %v576
      %v803 = vpop.f32.mrb[0].mxu0
      %v804 = vadd.f32 %v480, %v803
      %v805 = vpop.f32.mrb[0].mxu0
      %806 = vdwg.mxu0
      %vm807 = vcmp.ge.f32.partialorder %v649, 0.0
      %vm808 = vcmp.ge.f32.partialorder %v654, 0.0
      %vm809 = vcmp.ge.f32.partialorder %v659, 0.0
      %vm810 = vcmp.ge.f32.partialorder %v664, 0.0
      %vm811 = vcmp.ge.f32.partialorder %v669, 0.0
      %vm812 = vcmp.ge.f32.partialorder %v674, 0.0
      %vm813 = vcmp.ge.f32.partialorder %v679, 0.0
      %vm814 = vcmp.ge.f32.partialorder %v684, 0.0
      %vm815 = vcmp.ge.f32.partialorder %v689, 0.0
      %vm816 = vcmp.ge.f32.partialorder %v694, 0.0
      %vm817 = vcmp.ge.f32.partialorder %v699, 0.0
      %vm818 = vcmp.ge.f32.partialorder %v704, 0.0
      %vm819 = vcmp.ge.f32.partialorder %v709, 0.0
      %vm820 = vcmp.ge.f32.partialorder %v714, 0.0
      %vm821 = vcmp.ge.f32.partialorder %v719, 0.0
      %vm822 = vcmp.ge.f32.partialorder %v724, 0.0
      %vm823 = vcmp.ge.f32.partialorder %v729, 0.0
      %vm824 = vcmp.ge.f32.partialorder %v734, 0.0
      %vm825 = vcmp.ge.f32.partialorder %v739, 0.0
      %vm826 = vcmp.ge.f32.partialorder %v744, 0.0
      %vm827 = vcmp.ge.f32.partialorder %v749, 0.0
      %vm828 = vcmp.ge.f32.partialorder %v754, 0.0
      %vm829 = vcmp.ge.f32.partialorder %v759, 0.0
      %vm830 = vcmp.ge.f32.partialorder %v764, 0.0
      %vm831 = vcmp.ge.f32.partialorder %v769, 0.0
      %vm832 = vcmp.ge.f32.partialorder %v774, 0.0
      %vm833 = vcmp.ge.f32.partialorder %v779, 0.0
      %vm834 = vcmp.ge.f32.partialorder %v784, 0.0
      %vm835 = vcmp.ge.f32.partialorder %v789, 0.0
      %vm836 = vcmp.ge.f32.partialorder %v794, 0.0
      %vm837 = vcmp.ge.f32.partialorder %v799, 0.0
      %vm838 = vcmp.ge.f32.partialorder %v804, 0.0
      %v839 = vmul.f32 %v649, 0.2
      %v840 = vmul.f32 %v654, 0.2
      %v841 = vmul.f32 %v659, 0.2
      %v842 = vmul.f32 %v664, 0.2
      %v843 = vmul.f32 %v669, 0.2
      %v844 = vmul.f32 %v674, 0.2
      %v845 = vmul.f32 %v679, 0.2
      %v846 = vmul.f32 %v684, 0.2
      %v847 = vmul.f32 %v689, 0.2
      %v848 = vmul.f32 %v694, 0.2
      %v849 = vmul.f32 %v699, 0.2
      %v850 = vmul.f32 %v704, 0.2
      %v851 = vmul.f32 %v709, 0.2
      %v852 = vmul.f32 %v714, 0.2
      %v853 = vmul.f32 %v719, 0.2
      %v854 = vmul.f32 %v724, 0.2
      %v855 = vmul.f32 %v729, 0.2
      %v856 = vmul.f32 %v734, 0.2
      %v857 = vmul.f32 %v739, 0.2
      %v858 = vmul.f32 %v744, 0.2
      %v859 = vmul.f32 %v749, 0.2
      %v860 = vmul.f32 %v754, 0.2
      %v861 = vmul.f32 %v759, 0.2
      %v862 = vmul.f32 %v764, 0.2
      %v863 = vmul.f32 %v769, 0.2
      %v864 = vmul.f32 %v774, 0.2
      %v865 = vmul.f32 %v779, 0.2
      %v866 = vmul.f32 %v784, 0.2
      %v867 = vmul.f32 %v789, 0.2
      %v868 = vmul.f32 %v794, 0.2
      %v869 = vmul.f32 %v799, 0.2
      %v870 = vmul.f32 %v804, 0.2
      %v871 = vsel %vm807, %v649, %v839
      %v872 = vsel %vm808, %v654, %v840
      %v873 = vsel %vm809, %v659, %v841
      %v874 = vsel %vm810, %v664, %v842
      %v875 = vsel %vm811, %v669, %v843
      %v876 = vsel %vm812, %v674, %v844
      %v877 = vsel %vm813, %v679, %v845
      %v878 = vsel %vm814, %v684, %v846
      %v879 = vsel %vm815, %v689, %v847
      %v880 = vsel %vm816, %v694, %v848
      %v881 = vsel %vm817, %v699, %v849
      %v882 = vsel %vm818, %v704, %v850
      %v883 = vsel %vm819, %v709, %v851
      %v884 = vsel %vm820, %v714, %v852
      %v885 = vsel %vm821, %v719, %v853
      %v886 = vsel %vm822, %v724, %v854
      %v887 = vsel %vm823, %v729, %v855
      %v888 = vsel %vm824, %v734, %v856
      %v889 = vsel %vm825, %v739, %v857
      %v890 = vsel %vm826, %v744, %v858
      %v891 = vsel %vm827, %v749, %v859
      %v892 = vsel %vm828, %v754, %v860
      %v893 = vsel %vm829, %v759, %v861
      %v894 = vsel %vm830, %v764, %v862
      %v895 = vsel %vm831, %v769, %v863
      %v896 = vsel %vm832, %v774, %v864
      %v897 = vsel %vm833, %v779, %v865
      %v898 = vsel %vm834, %v784, %v866
      %v899 = vsel %vm835, %v789, %v867
      %v900 = vsel %vm836, %v794, %v868
      %v901 = vsel %vm837, %v799, %v869
      %v902 = vsel %vm838, %v804, %v870
      %v903 = vlaneseq
      %v904 = vshrl.u32 %v903, 7
      %v905 = vsub.s32 1, %v904
      %v906 = vrot.slane %v476, %v905
      %v907 = vmul.f32 %v871, %v906
      %v908 = vmul.f32 %v872, %v906
      %v909 = vmul.f32 %v873, %v906
      %v910 = vmul.f32 %v874, %v906
      %v911 = vmul.f32 %v875, %v906
      %v912 = vmul.f32 %v876, %v906
      %v913 = vmul.f32 %v877, %v906
      %v914 = vmul.f32 %v878, %v906
      %v915 = vmul.f32 %v879, %v906
      %v916 = vmul.f32 %v880, %v906
      %v917 = vmul.f32 %v881, %v906
      %v918 = vmul.f32 %v882, %v906
      %v919 = vmul.f32 %v883, %v906
      %v920 = vmul.f32 %v884, %v906
      %v921 = vmul.f32 %v885, %v906
      %v922 = vmul.f32 %v886, %v906
      %v923 = vmul.f32 %v887, %v906
      %v924 = vmul.f32 %v888, %v906
      %v925 = vmul.f32 %v889, %v906
      %v926 = vmul.f32 %v890, %v906
      %v927 = vmul.f32 %v891, %v906
      %v928 = vmul.f32 %v892, %v906
      %v929 = vmul.f32 %v893, %v906
      %v930 = vmul.f32 %v894, %v906
      %v931 = vmul.f32 %v895, %v906
      %v932 = vmul.f32 %v896, %v906
      %v933 = vmul.f32 %v897, %v906
      %v934 = vmul.f32 %v898, %v906
      %v935 = vmul.f32 %v899, %v906
      %v936 = vmul.f32 %v900, %v906
      %v937 = vmul.f32 %v901, %v906
      %v938 = vmul.f32 %v902, %v906
      %v939 = vlaneseq
      %v940 = vshrl.u32 %v939, 7
      %v941 = vsub.s32 2, %v940
      %v942 = vrot.slane %v476, %v941
      %v943 = vadd.f32 %v907, %v942
      %v944 = vadd.f32 %v908, %v942
      %v945 = vadd.f32 %v909, %v942
      %v946 = vadd.f32 %v910, %v942
      %v947 = vadd.f32 %v911, %v942
      %v948 = vadd.f32 %v912, %v942
      %v949 = vadd.f32 %v913, %v942
      %v950 = vadd.f32 %v914, %v942
      %v951 = vadd.f32 %v915, %v942
      %v952 = vadd.f32 %v916, %v942
      %v953 = vadd.f32 %v917, %v942
      %v954 = vadd.f32 %v918, %v942
      %v955 = vadd.f32 %v919, %v942
      %v956 = vadd.f32 %v920, %v942
      %v957 = vadd.f32 %v921, %v942
      %v958 = vadd.f32 %v922, %v942
      %v959 = vadd.f32 %v923, %v942
      %v960 = vadd.f32 %v924, %v942
      %v961 = vadd.f32 %v925, %v942
      %v962 = vadd.f32 %v926, %v942
      %v963 = vadd.f32 %v927, %v942
      %v964 = vadd.f32 %v928, %v942
      %v965 = vadd.f32 %v929, %v942
      %v966 = vadd.f32 %v930, %v942
      %v967 = vadd.f32 %v931, %v942
      %v968 = vadd.f32 %v932, %v942
      %v969 = vadd.f32 %v933, %v942
      %v970 = vadd.f32 %v934, %v942
      %v971 = vadd.f32 %v935, %v942
      %v972 = vadd.f32 %v936, %v942
      %v973 = vadd.f32 %v937, %v942
      %v974 = vadd.f32 %v938, %v942
      %s975 = scalar_lea.vmem %s10, 8
      %v976 = vld [vmem:[%s975] sm:$0x77]
      %v977 = vld [vmem:[%s6] sm:$0xff]
      %v978 = vld [vmem:[%s6 + $0x8] sm:$0xff]
      %v979 = vld [vmem:[%s6 + $0x10] sm:$0xff]
      %v980 = vld [vmem:[%s6 + $0x18] sm:$0xff]
      %v981 = vld [vmem:[%s6 + $0x20] sm:$0xff]
      %v982 = vld [vmem:[%s6 + $0x28] sm:$0xff]
      %v983 = vld [vmem:[%s6 + $0x30] sm:$0xff]
      %v984 = vld [vmem:[%s6 + $0x38] sm:$0xff]
      %v985 = vld [vmem:[%s6 + $0x40] sm:$0xff]
      %v986 = vld [vmem:[%s6 + $0x48] sm:$0xff]
      %v987 = vld [vmem:[%s6 + $0x50] sm:$0xff]
      %v988 = vld [vmem:[%s6 + $0x58] sm:$0xff]
      %v989 = vld [vmem:[%s6 + $0x60] sm:$0xff]
      %v990 = vld [vmem:[%s6 + $0x68] sm:$0xff]
      %v991 = vld [vmem:[%s6 + $0x70] sm:$0xff]
      %v992 = vld [vmem:[%s6 + $0x78] sm:$0xff]
      %993 = vmatprep.subr.mxu0 0.0
      %994 = vmatpush1.msra.mxu0 %v943
      %995 = vmatprep.subr.mxu0 0.0
      %996 = vmatpush1.msra.mxu0 %v944
      %997 = vmatprep.subr.mxu0 0.0
      %998 = vmatpush1.msra.mxu0 %v945
      %999 = vmatprep.subr.mxu0 0.0
      %1000 = vmatpush1.msra.mxu0 %v946
      %1001 = vmatprep.subr.mxu0 0.0
      %1002 = vmatpush1.msra.mxu0 %v947
      %1003 = vmatprep.subr.mxu0 0.0
      %1004 = vmatpush1.msra.mxu0 %v948
      %1005 = vmatprep.subr.mxu0 0.0
      %1006 = vmatpush1.msra.mxu0 %v949
      %1007 = vmatprep.subr.mxu0 0.0
      %1008 = vmatpush1.msra.mxu0 %v950
      %1009 = vmatprep.subr.mxu0 0.0
      %1010 = vmatpush1.msra.mxu0 %v951
      %1011 = vmatprep.subr.mxu0 0.0
      %1012 = vmatpush1.msra.mxu0 %v952
      %1013 = vmatprep.subr.mxu0 0.0
      %1014 = vmatpush1.msra.mxu0 %v953
      %1015 = vmatprep.subr.mxu0 0.0
      %1016 = vmatpush1.msra.mxu0 %v954
      %1017 = vmatprep.subr.mxu0 0.0
      %1018 = vmatpush1.msra.mxu0 %v955
      %1019 = vmatprep.subr.mxu0 0.0
      %1020 = vmatpush1.msra.mxu0 %v956
      %1021 = vmatprep.subr.mxu0 0.0
      %1022 = vmatpush1.msra.mxu0 %v957
      %1023 = vmatprep.subr.mxu0 0.0
      %1024 = vmatpush1.msra.mxu0 %v958
      %1025 = vmatprep.subr.mxu0 0.0
      %1026 = vmatpush1.msra.mxu0 %v959
      %1027 = vmatprep.subr.mxu0 0.0
      %1028 = vmatpush1.msra.mxu0 %v960
      %1029 = vmatprep.subr.mxu0 0.0
      %1030 = vmatpush1.msra.mxu0 %v961
      %1031 = vmatprep.subr.mxu0 0.0
      %1032 = vmatpush1.msra.mxu0 %v962
      %1033 = vmatprep.subr.mxu0 0.0
      %1034 = vmatpush1.msra.mxu0 %v963
      %1035 = vmatprep.subr.mxu0 0.0
      %1036 = vmatpush1.msra.mxu0 %v964
      %1037 = vmatprep.subr.mxu0 0.0
      %1038 = vmatpush1.msra.mxu0 %v965
      %1039 = vmatprep.subr.mxu0 0.0
      %1040 = vmatpush1.msra.mxu0 %v966
      %1041 = vmatprep.subr.mxu0 0.0
      %1042 = vmatpush1.msra.mxu0 %v967
      %1043 = vmatprep.subr.mxu0 0.0
      %1044 = vmatpush1.msra.mxu0 %v968
      %1045 = vmatprep.subr.mxu0 0.0
      %1046 = vmatpush1.msra.mxu0 %v969
      %1047 = vmatprep.subr.mxu0 0.0
      %1048 = vmatpush1.msra.mxu0 %v970
      %1049 = vmatprep.subr.mxu0 0.0
      %1050 = vmatpush1.msra.mxu0 %v971
      %1051 = vmatprep.subr.mxu0 0.0
      %1052 = vmatpush1.msra.mxu0 %v972
      %1053 = vmatprep.subr.mxu0 0.0
      %1054 = vmatpush1.msra.mxu0 %v973
      %1055 = vmatprep.subr.mxu0 0.0
      %1056 = vmatpush1.msra.mxu0 %v974
      %1057 = vmatprep.mubr.f32.mxu0 %v978
      %1058 = vmatmul.mubr.f32.gmra.mrb[0].mxu0 %v977
      %v1059 = vpop.f32.mrb[0].mxu0
      %v1060 = vadd.f32 0.0, %v1059
      %v1061 = vpop.f32.mrb[0].mxu0
      %1062 = vmatprep.mubr.f32.mxu0 %v980
      %1063 = vmatmul.mubr.f32.gmra.mrb[0].mxu0 %v979
      %v1064 = vpop.f32.mrb[0].mxu0
      %v1065 = vadd.f32 0.0, %v1064
      %v1066 = vpop.f32.mrb[0].mxu0
      %1067 = vmatprep.mubr.f32.mxu0 %v982
      %1068 = vmatmul.mubr.f32.gmra.mrb[0].mxu0 %v981
      %v1069 = vpop.f32.mrb[0].mxu0
      %v1070 = vadd.f32 0.0, %v1069
      %v1071 = vpop.f32.mrb[0].mxu0
      %1072 = vmatprep.mubr.f32.mxu0 %v984
      %1073 = vmatmul.mubr.f32.gmra.mrb[0].mxu0 %v983
      %v1074 = vpop.f32.mrb[0].mxu0
      %v1075 = vadd.f32 0.0, %v1074
      %v1076 = vpop.f32.mrb[0].mxu0
      %1077 = vmatprep.mubr.f32.mxu0 %v986
      %1078 = vmatmul.mubr.f32.gmra.mrb[0].mxu0 %v985
      %v1079 = vpop.f32.mrb[0].mxu0
      %v1080 = vadd.f32 0.0, %v1079
      %v1081 = vpop.f32.mrb[0].mxu0
      %1082 = vmatprep.mubr.f32.mxu0 %v988
      %1083 = vmatmul.mubr.f32.gmra.mrb[0].mxu0 %v987
      %v1084 = vpop.f32.mrb[0].mxu0
      %v1085 = vadd.f32 0.0, %v1084
      %v1086 = vpop.f32.mrb[0].mxu0
      %1087 = vmatprep.mubr.f32.mxu0 %v990
      %1088 = vmatmul.mubr.f32.gmra.mrb[0].mxu0 %v989
      %v1089 = vpop.f32.mrb[0].mxu0
      %v1090 = vadd.f32 0.0, %v1089
      %v1091 = vpop.f32.mrb[0].mxu0
      %1092 = vmatprep.mubr.f32.mxu0 %v992
      %1093 = vmatmul.mubr.f32.gmra.mrb[0].mxu0 %v991
      %v1094 = vpop.f32.mrb[0].mxu0
      %v1095 = vadd.f32 0.0, %v1094
      %v1096 = vpop.f32.mrb[0].mxu0
      %1097 = vdwg.mxu0
      %v1098 = vld [vmem:[%s2] sm:$0xff]
      %v1099 = vld [vmem:[%s2 + $0x8] sm:$0xff]
      %s1100 = scalar_lea.vmem %s6, 128
      %v1101 = vld [vmem:[%s1100] sm:$0xff]
      %v1102 = vld [vmem:[%s1100 + $0x8] sm:$0xff]
      %v1103 = vld [vmem:[%s1100 + $0x10] sm:$0xff]
      %v1104 = vld [vmem:[%s1100 + $0x18] sm:$0xff]
      %v1105 = vld [vmem:[%s1100 + $0x20] sm:$0xff]
      %v1106 = vld [vmem:[%s1100 + $0x28] sm:$0xff]
      %v1107 = vld [vmem:[%s1100 + $0x30] sm:$0xff]
      %v1108 = vld [vmem:[%s1100 + $0x38] sm:$0xff]
      %v1109 = vld [vmem:[%s1100 + $0x40] sm:$0xff]
      %v1110 = vld [vmem:[%s1100 + $0x48] sm:$0xff]
      %v1111 = vld [vmem:[%s1100 + $0x50] sm:$0xff]
      %v1112 = vld [vmem:[%s1100 + $0x58] sm:$0xff]
      %v1113 = vld [vmem:[%s1100 + $0x60] sm:$0xff]
      %v1114 = vld [vmem:[%s1100 + $0x68] sm:$0xff]
      %v1115 = vld [vmem:[%s1100 + $0x70] sm:$0xff]
      %v1116 = vld [vmem:[%s1100 + $0x78] sm:$0xff]
      %1117 = vmatprep.subr.mxu0 0.0
      %1118 = vmatpush1.msra.mxu0 %v943
      %1119 = vmatprep.subr.mxu0 0.0
      %1120 = vmatpush1.msra.mxu0 %v944
      %1121 = vmatprep.subr.mxu0 0.0
      %1122 = vmatpush1.msra.mxu0 %v945
      %1123 = vmatprep.subr.mxu0 0.0
      %1124 = vmatpush1.msra.mxu0 %v946
      %1125 = vmatprep.subr.mxu0 0.0
      %1126 = vmatpush1.msra.mxu0 %v947
      %1127 = vmatprep.subr.mxu0 0.0
      %1128 = vmatpush1.msra.mxu0 %v948
      %1129 = vmatprep.subr.mxu0 0.0
      %1130 = vmatpush1.msra.mxu0 %v949
      %1131 = vmatprep.subr.mxu0 0.0
      %1132 = vmatpush1.msra.mxu0 %v950
      %1133 = vmatprep.subr.mxu0 0.0
      %1134 = vmatpush1.msra.mxu0 %v951
      %1135 = vmatprep.subr.mxu0 0.0
      %1136 = vmatpush1.msra.mxu0 %v952
      %1137 = vmatprep.subr.mxu0 0.0
      %1138 = vmatpush1.msra.mxu0 %v953
      %1139 = vmatprep.subr.mxu0 0.0
      %1140 = vmatpush1.msra.mxu0 %v954
      %1141 = vmatprep.subr.mxu0 0.0
      %1142 = vmatpush1.msra.mxu0 %v955
      %1143 = vmatprep.subr.mxu0 0.0
      %1144 = vmatpush1.msra.mxu0 %v956
      %1145 = vmatprep.subr.mxu0 0.0
      %1146 = vmatpush1.msra.mxu0 %v957
      %1147 = vmatprep.subr.mxu0 0.0
      %1148 = vmatpush1.msra.mxu0 %v958
      %1149 = vmatprep.subr.mxu0 0.0
      %1150 = vmatpush1.msra.mxu0 %v959
      %1151 = vmatprep.subr.mxu0 0.0
      %1152 = vmatpush1.msra.mxu0 %v960
      %1153 = vmatprep.subr.mxu0 0.0
      %1154 = vmatpush1.msra.mxu0 %v961
      %1155 = vmatprep.subr.mxu0 0.0
      %1156 = vmatpush1.msra.mxu0 %v962
      %1157 = vmatprep.subr.mxu0 0.0
      %1158 = vmatpush1.msra.mxu0 %v963
      %1159 = vmatprep.subr.mxu0 0.0
      %1160 = vmatpush1.msra.mxu0 %v964
      %1161 = vmatprep.subr.mxu0 0.0
      %1162 = vmatpush1.msra.mxu0 %v965
      %1163 = vmatprep.subr.mxu0 0.0
      %1164 = vmatpush1.msra.mxu0 %v966
      %1165 = vmatprep.subr.mxu0 0.0
      %1166 = vmatpush1.msra.mxu0 %v967
      %1167 = vmatprep.subr.mxu0 0.0
      %1168 = vmatpush1.msra.mxu0 %v968
      %1169 = vmatprep.subr.mxu0 0.0
      %1170 = vmatpush1.msra.mxu0 %v969
      %1171 = vmatprep.subr.mxu0 0.0
      %1172 = vmatpush1.msra.mxu0 %v970
      %1173 = vmatprep.subr.mxu0 0.0
      %1174 = vmatpush1.msra.mxu0 %v971
      %1175 = vmatprep.subr.mxu0 0.0
      %1176 = vmatpush1.msra.mxu0 %v972
      %1177 = vmatprep.subr.mxu0 0.0
      %1178 = vmatpush1.msra.mxu0 %v973
      %1179 = vmatprep.subr.mxu0 0.0
      %1180 = vmatpush1.msra.mxu0 %v974
      %1181 = vmatprep.mubr.f32.mxu0 %v1102
      %1182 = vmatmul.mubr.f32.gmra.mrb[0].mxu0 %v1101
      %v1183 = vpop.f32.mrb[0].mxu0
      %v1184 = vadd.f32 0.0, %v1183
      %v1185 = vpop.f32.mrb[0].mxu0
      %1186 = vmatprep.mubr.f32.mxu0 %v1104
      %1187 = vmatmul.mubr.f32.gmra.mrb[0].mxu0 %v1103
      %v1188 = vpop.f32.mrb[0].mxu0
      %v1189 = vadd.f32 0.0, %v1188
      %v1190 = vpop.f32.mrb[0].mxu0
      %1191 = vmatprep.mubr.f32.mxu0 %v1106
      %1192 = vmatmul.mubr.f32.gmra.mrb[0].mxu0 %v1105
      %v1193 = vpop.f32.mrb[0].mxu0
      %v1194 = vadd.f32 0.0, %v1193
      %v1195 = vpop.f32.mrb[0].mxu0
      %1196 = vmatprep.mubr.f32.mxu0 %v1108
      %1197 = vmatmul.mubr.f32.gmra.mrb[0].mxu0 %v1107
      %v1198 = vpop.f32.mrb[0].mxu0
      %v1199 = vadd.f32 0.0, %v1198
      %v1200 = vpop.f32.mrb[0].mxu0
      %1201 = vmatprep.mubr.f32.mxu0 %v1110
      %1202 = vmatmul.mubr.f32.gmra.mrb[0].mxu0 %v1109
      %v1203 = vpop.f32.mrb[0].mxu0
      %v1204 = vadd.f32 0.0, %v1203
      %v1205 = vpop.f32.mrb[0].mxu0
      %1206 = vmatprep.mubr.f32.mxu0 %v1112
      %1207 = vmatmul.mubr.f32.gmra.mrb[0].mxu0 %v1111
      %v1208 = vpop.f32.mrb[0].mxu0
      %v1209 = vadd.f32 0.0, %v1208
      %v1210 = vpop.f32.mrb[0].mxu0
      %1211 = vmatprep.mubr.f32.mxu0 %v1114
      %1212 = vmatmul.mubr.f32.gmra.mrb[0].mxu0 %v1113
      %v1213 = vpop.f32.mrb[0].mxu0
      %v1214 = vadd.f32 0.0, %v1213
      %v1215 = vpop.f32.mrb[0].mxu0
      %1216 = vmatprep.mubr.f32.mxu0 %v1116
      %1217 = vmatmul.mubr.f32.gmra.mrb[0].mxu0 %v1115
      %v1218 = vpop.f32.mrb[0].mxu0
      %v1219 = vadd.f32 0.0, %v1218
      %v1220 = vpop.f32.mrb[0].mxu0
      %1221 = vdwg.mxu0
      %s1222 = scalar_lea.vmem %s2, 16
      %v1223 = vld [vmem:[%s1222] sm:$0xff]
      %v1224 = vld [vmem:[%s1222 + $0x8] sm:$0xff]
      %vm1225 = vcmask 130048
      %v1227 = vsel %vm1225, %v1184, 0
      %v1230 = vsel %vm1225, %v1189, 0
      %v1233 = vsel %vm1225, %v1194, 0
      %v1236 = vsel %vm1225, %v1199, 0
      %v1239 = vsel %vm1225, %v1204, 0
      %v1242 = vsel %vm1225, %v1209, 0
      %v1245 = vsel %vm1225, %v1214, 0
      %v1248 = vsel %vm1225, %v1219, 0
      %1250 = vmatprep.subr.mxu0 0.0
      %1251 = vmatpush1.msra.mxu0 %v1223
      %1252 = vmatprep.subr.mxu0 0.0
      %1253 = vmatpush1.msra.mxu0 %v1224
      %1254 = vmatprep.subr.mxu0 0.0
      %1255 = vmatpush1.msra.mxu0 0.0
      %1256 = vmatprep.subr.mxu0 0.0
      %1257 = vmatpush1.msra.mxu0 0.0
      %1258 = vmatprep.subr.mxu0 0.0
      %1259 = vmatpush1.msra.mxu0 0.0
      %1260 = vmatprep.subr.mxu0 0.0
      %1261 = vmatpush1.msra.mxu0 0.0
      %1262 = vmatprep.subr.mxu0 0.0
      %1263 = vmatpush1.msra.mxu0 0.0
      %1264 = vmatprep.subr.mxu0 0.0
      %1265 = vmatpush1.msra.mxu0 0.0
      %1266 = vmatprep.subr.mxu0 0.0
      %1267 = vmatpush1.msra.mxu0 0.0
      %1268 = vmatprep.subr.mxu0 0.0
      %1269 = vmatpush1.msra.mxu0 0.0
      %1270 = vmatprep.subr.mxu0 0.0
      %1271 = vmatpush1.msra.mxu0 0.0
      %1272 = vmatprep.subr.mxu0 0.0
      %1273 = vmatpush1.msra.mxu0 0.0
      %1274 = vmatprep.subr.mxu0 0.0
      %1275 = vmatpush1.msra.mxu0 0.0
      %1276 = vmatprep.subr.mxu0 0.0
      %1277 = vmatpush1.msra.mxu0 0.0
      %1278 = vmatprep.subr.mxu0 0.0
      %1279 = vmatpush1.msra.mxu0 0.0
      %1280 = vmatprep.subr.mxu0 0.0
      %1281 = vmatpush1.msra.mxu0 0.0
      %1282 = vmatprep.subr.mxu0 0.0
      %1283 = vmatpush1.msra.mxu0 0.0
      %1284 = vmatprep.subr.mxu0 0.0
      %1285 = vmatpush1.msra.mxu0 0.0
      %1286 = vmatprep.subr.mxu0 0.0
      %1287 = vmatpush1.msra.mxu0 0.0
      %1288 = vmatprep.subr.mxu0 0.0
      %1289 = vmatpush1.msra.mxu0 0.0
      %1290 = vmatprep.subr.mxu0 0.0
      %1291 = vmatpush1.msra.mxu0 0.0
      %1292 = vmatprep.subr.mxu0 0.0
      %1293 = vmatpush1.msra.mxu0 0.0
      %1294 = vmatprep.subr.mxu0 0.0
      %1295 = vmatpush1.msra.mxu0 0.0
      %1296 = vmatprep.subr.mxu0 0.0
      %1297 = vmatpush1.msra.mxu0 0.0
      %1298 = vmatprep.subr.mxu0 0.0
      %1299 = vmatpush1.msra.mxu0 0.0
      %1300 = vmatprep.subr.mxu0 0.0
      %1301 = vmatpush1.msra.mxu0 0.0
      %1302 = vmatprep.subr.mxu0 0.0
      %1303 = vmatpush1.msra.mxu0 0.0
      %1304 = vmatprep.subr.mxu0 0.0
      %1305 = vmatpush1.msra.mxu0 0.0
      %1306 = vmatprep.subr.mxu0 0.0
      %1307 = vmatpush1.msra.mxu0 0.0
      %1308 = vmatprep.subr.mxu0 0.0
      %1309 = vmatpush1.msra.mxu0 0.0
      %1310 = vmatprep.subr.mxu0 0.0
      %1311 = vmatpush1.msra.mxu0 0.0
      %1312 = vmatprep.subr.mxu0 0.0
      %1313 = vmatpush1.msra.mxu0 0.0
      %1314 = vmatprep.mubr.f32.mxu0 0.0
      %1315 = vmatmul.mubr.f32.gmra.mrb[0].mxu0 %v1227
      %v1316 = vpop.f32.mrb[0].mxu0
      %v1317 = vadd.f32 0.0, %v1316
      %v1318 = vpop.f32.mrb[0].mxu0
      %1319 = vmatprep.mubr.f32.mxu0 0.0
      %1320 = vmatmul.mubr.f32.gmra.mrb[0].mxu0 %v1230
      %v1321 = vpop.f32.mrb[0].mxu0
      %v1322 = vadd.f32 0.0, %v1321
      %v1323 = vpop.f32.mrb[0].mxu0
      %1324 = vmatprep.mubr.f32.mxu0 0.0
      %1325 = vmatmul.mubr.f32.gmra.mrb[0].mxu0 %v1233
      %v1326 = vpop.f32.mrb[0].mxu0
      %v1327 = vadd.f32 0.0, %v1326
      %v1328 = vpop.f32.mrb[0].mxu0
      %1329 = vmatprep.mubr.f32.mxu0 0.0
      %1330 = vmatmul.mubr.f32.gmra.mrb[0].mxu0 %v1236
      %v1331 = vpop.f32.mrb[0].mxu0
      %v1332 = vadd.f32 0.0, %v1331
      %v1333 = vpop.f32.mrb[0].mxu0
      %1334 = vmatprep.mubr.f32.mxu0 0.0
      %1335 = vmatmul.mubr.f32.gmra.mrb[0].mxu0 %v1239
      %v1336 = vpop.f32.mrb[0].mxu0
      %v1337 = vadd.f32 0.0, %v1336
      %v1338 = vpop.f32.mrb[0].mxu0
      %1339 = vmatprep.mubr.f32.mxu0 0.0
      %1340 = vmatmul.mubr.f32.gmra.mrb[0].mxu0 %v1242
      %v1341 = vpop.f32.mrb[0].mxu0
      %v1342 = vadd.f32 0.0, %v1341
      %v1343 = vpop.f32.mrb[0].mxu0
      %1344 = vmatprep.mubr.f32.mxu0 0.0
      %1345 = vmatmul.mubr.f32.gmra.mrb[0].mxu0 %v1245
      %v1346 = vpop.f32.mrb[0].mxu0
      %v1347 = vadd.f32 0.0, %v1346
      %v1348 = vpop.f32.mrb[0].mxu0
      %1349 = vmatprep.mubr.f32.mxu0 0.0
      %1350 = vmatmul.mubr.f32.gmra.mrb[0].mxu0 %v1248
      %v1351 = vpop.f32.mrb[0].mxu0
      %v1352 = vadd.f32 0.0, %v1351
      %v1353 = vpop.f32.mrb[0].mxu0
      %1354 = vdwg.mxu0
      %v1356 = vsel %vm1225, %v1060, 0
      %v1359 = vsel %vm1225, %v1065, 0
      %v1362 = vsel %vm1225, %v1070, 0
      %v1365 = vsel %vm1225, %v1075, 0
      %v1368 = vsel %vm1225, %v1080, 0
      %v1371 = vsel %vm1225, %v1085, 0
      %v1374 = vsel %vm1225, %v1090, 0
      %v1377 = vsel %vm1225, %v1095, 0
      %1379 = vmatprep.subr.mxu0 0.0
      %1380 = vmatpush1.msra.mxu0 %v1098
      %1381 = vmatprep.subr.mxu0 0.0
      %1382 = vmatpush1.msra.mxu0 %v1099
      %1383 = vmatprep.subr.mxu0 0.0
      %1384 = vmatpush1.msra.mxu0 0.0
      %1385 = vmatprep.subr.mxu0 0.0
      %1386 = vmatpush1.msra.mxu0 0.0
      %1387 = vmatprep.subr.mxu0 0.0
      %1388 = vmatpush1.msra.mxu0 0.0
      %1389 = vmatprep.subr.mxu0 0.0
      %1390 = vmatpush1.msra.mxu0 0.0
      %1391 = vmatprep.subr.mxu0 0.0
      %1392 = vmatpush1.msra.mxu0 0.0
      %1393 = vmatprep.subr.mxu0 0.0
      %1394 = vmatpush1.msra.mxu0 0.0
      %1395 = vmatprep.subr.mxu0 0.0
      %1396 = vmatpush1.msra.mxu0 0.0
      %1397 = vmatprep.subr.mxu0 0.0
      %1398 = vmatpush1.msra.mxu0 0.0
      %1399 = vmatprep.subr.mxu0 0.0
      %1400 = vmatpush1.msra.mxu0 0.0
      %1401 = vmatprep.subr.mxu0 0.0
      %1402 = vmatpush1.msra.mxu0 0.0
      %1403 = vmatprep.subr.mxu0 0.0
      %1404 = vmatpush1.msra.mxu0 0.0
      %1405 = vmatprep.subr.mxu0 0.0
      %1406 = vmatpush1.msra.mxu0 0.0
      %1407 = vmatprep.subr.mxu0 0.0
      %1408 = vmatpush1.msra.mxu0 0.0
      %1409 = vmatprep.subr.mxu0 0.0
      %1410 = vmatpush1.msra.mxu0 0.0
      %1411 = vmatprep.subr.mxu0 0.0
      %1412 = vmatpush1.msra.mxu0 0.0
      %1413 = vmatprep.subr.mxu0 0.0
      %1414 = vmatpush1.msra.mxu0 0.0
      %1415 = vmatprep.subr.mxu0 0.0
      %1416 = vmatpush1.msra.mxu0 0.0
      %1417 = vmatprep.subr.mxu0 0.0
      %1418 = vmatpush1.msra.mxu0 0.0
      %1419 = vmatprep.subr.mxu0 0.0
      %1420 = vmatpush1.msra.mxu0 0.0
      %1421 = vmatprep.subr.mxu0 0.0
      %1422 = vmatpush1.msra.mxu0 0.0
      %1423 = vmatprep.subr.mxu0 0.0
      %1424 = vmatpush1.msra.mxu0 0.0
      %1425 = vmatprep.subr.mxu0 0.0
      %1426 = vmatpush1.msra.mxu0 0.0
      %1427 = vmatprep.subr.mxu0 0.0
      %1428 = vmatpush1.msra.mxu0 0.0
      %1429 = vmatprep.subr.mxu0 0.0
      %1430 = vmatpush1.msra.mxu0 0.0
      %1431 = vmatprep.subr.mxu0 0.0
      %1432 = vmatpush1.msra.mxu0 0.0
      %1433 = vmatprep.subr.mxu0 0.0
      %1434 = vmatpush1.msra.mxu0 0.0
      %1435 = vmatprep.subr.mxu0 0.0
      %1436 = vmatpush1.msra.mxu0 0.0
      %1437 = vmatprep.subr.mxu0 0.0
      %1438 = vmatpush1.msra.mxu0 0.0
      %1439 = vmatprep.subr.mxu0 0.0
      %1440 = vmatpush1.msra.mxu0 0.0
      %1441 = vmatprep.subr.mxu0 0.0
      %1442 = vmatpush1.msra.mxu0 0.0
      %1443 = vmatprep.mubr.f32.mxu0 0.0
      %1444 = vmatmul.mubr.f32.gmra.mrb[0].mxu0 %v1356
      %v1445 = vpop.f32.mrb[0].mxu0
      %v1446 = vadd.f32 %v1317, %v1445
      %v1447 = vpop.f32.mrb[0].mxu0
      %1448 = vmatprep.mubr.f32.mxu0 0.0
      %1449 = vmatmul.mubr.f32.gmra.mrb[0].mxu0 %v1359
      %v1450 = vpop.f32.mrb[0].mxu0
      %v1451 = vadd.f32 %v1322, %v1450
      %v1452 = vpop.f32.mrb[0].mxu0
      %1453 = vmatprep.mubr.f32.mxu0 0.0
      %1454 = vmatmul.mubr.f32.gmra.mrb[0].mxu0 %v1362
      %v1455 = vpop.f32.mrb[0].mxu0
      %v1456 = vadd.f32 %v1327, %v1455
      %v1457 = vpop.f32.mrb[0].mxu0
      %1458 = vmatprep.mubr.f32.mxu0 0.0
      %1459 = vmatmul.mubr.f32.gmra.mrb[0].mxu0 %v1365
      %v1460 = vpop.f32.mrb[0].mxu0
      %v1461 = vadd.f32 %v1332, %v1460
      %v1462 = vpop.f32.mrb[0].mxu0
      %1463 = vmatprep.mubr.f32.mxu0 0.0
      %1464 = vmatmul.mubr.f32.gmra.mrb[0].mxu0 %v1368
      %v1465 = vpop.f32.mrb[0].mxu0
      %v1466 = vadd.f32 %v1337, %v1465
      %v1467 = vpop.f32.mrb[0].mxu0
      %1468 = vmatprep.mubr.f32.mxu0 0.0
      %1469 = vmatmul.mubr.f32.gmra.mrb[0].mxu0 %v1371
      %v1470 = vpop.f32.mrb[0].mxu0
      %v1471 = vadd.f32 %v1342, %v1470
      %v1472 = vpop.f32.mrb[0].mxu0
      %1473 = vmatprep.mubr.f32.mxu0 0.0
      %1474 = vmatmul.mubr.f32.gmra.mrb[0].mxu0 %v1374
      %v1475 = vpop.f32.mrb[0].mxu0
      %v1476 = vadd.f32 %v1347, %v1475
      %v1477 = vpop.f32.mrb[0].mxu0
      %1478 = vmatprep.mubr.f32.mxu0 0.0
      %1479 = vmatmul.mubr.f32.gmra.mrb[0].mxu0 %v1377
      %v1480 = vpop.f32.mrb[0].mxu0
      %v1481 = vadd.f32 %v1352, %v1480
      %v1482 = vpop.f32.mrb[0].mxu0
      %1483 = vdwg.mxu0
      %s1484 = scalar_lea.vmem %s6, 256
      %v1485 = vld [vmem:[%s1484] sm:$0xff]
      %v1486 = vld [vmem:[%s1484 + $0x8] sm:$0xff]
      %v1487 = vld [vmem:[%s1484 + $0x10] sm:$0xff]
      %v1488 = vld [vmem:[%s1484 + $0x18] sm:$0xff]
      %v1489 = vld [vmem:[%s1484 + $0x20] sm:$0xff]
      %v1490 = vld [vmem:[%s1484 + $0x28] sm:$0xff]
      %v1491 = vld [vmem:[%s1484 + $0x30] sm:$0xff]
      %v1492 = vld [vmem:[%s1484 + $0x38] sm:$0xff]
      %v1493 = vld [vmem:[%s1484 + $0x40] sm:$0xff]
      %v1494 = vld [vmem:[%s1484 + $0x48] sm:$0xff]
      %v1495 = vld [vmem:[%s1484 + $0x50] sm:$0xff]
      %v1496 = vld [vmem:[%s1484 + $0x58] sm:$0xff]
      %v1497 = vld [vmem:[%s1484 + $0x60] sm:$0xff]
      %v1498 = vld [vmem:[%s1484 + $0x68] sm:$0xff]
      %v1499 = vld [vmem:[%s1484 + $0x70] sm:$0xff]
      %v1500 = vld [vmem:[%s1484 + $0x78] sm:$0xff]
      %1501 = vmatprep.subr.mxu0 0.0
      %1502 = vmatpush1.msra.mxu0 %v943
      %1503 = vmatprep.subr.mxu0 0.0
      %1504 = vmatpush1.msra.mxu0 %v944
      %1505 = vmatprep.subr.mxu0 0.0
      %1506 = vmatpush1.msra.mxu0 %v945
      %1507 = vmatprep.subr.mxu0 0.0
      %1508 = vmatpush1.msra.mxu0 %v946
      %1509 = vmatprep.subr.mxu0 0.0
      %1510 = vmatpush1.msra.mxu0 %v947
      %1511 = vmatprep.subr.mxu0 0.0
      %1512 = vmatpush1.msra.mxu0 %v948
      %1513 = vmatprep.subr.mxu0 0.0
      %1514 = vmatpush1.msra.mxu0 %v949
      %1515 = vmatprep.subr.mxu0 0.0
      %1516 = vmatpush1.msra.mxu0 %v950
      %1517 = vmatprep.subr.mxu0 0.0
      %1518 = vmatpush1.msra.mxu0 %v951
      %1519 = vmatprep.subr.mxu0 0.0
      %1520 = vmatpush1.msra.mxu0 %v952
      %1521 = vmatprep.subr.mxu0 0.0
      %1522 = vmatpush1.msra.mxu0 %v953
      %1523 = vmatprep.subr.mxu0 0.0
      %1524 = vmatpush1.msra.mxu0 %v954
      %1525 = vmatprep.subr.mxu0 0.0
      %1526 = vmatpush1.msra.mxu0 %v955
      %1527 = vmatprep.subr.mxu0 0.0
      %1528 = vmatpush1.msra.mxu0 %v956
      %1529 = vmatprep.subr.mxu0 0.0
      %1530 = vmatpush1.msra.mxu0 %v957
      %1531 = vmatprep.subr.mxu0 0.0
      %1532 = vmatpush1.msra.mxu0 %v958
      %1533 = vmatprep.subr.mxu0 0.0
      %1534 = vmatpush1.msra.mxu0 %v959
      %1535 = vmatprep.subr.mxu0 0.0
      %1536 = vmatpush1.msra.mxu0 %v960
      %1537 = vmatprep.subr.mxu0 0.0
      %1538 = vmatpush1.msra.mxu0 %v961
      %1539 = vmatprep.subr.mxu0 0.0
      %1540 = vmatpush1.msra.mxu0 %v962
      %1541 = vmatprep.subr.mxu0 0.0
      %1542 = vmatpush1.msra.mxu0 %v963
      %1543 = vmatprep.subr.mxu0 0.0
      %1544 = vmatpush1.msra.mxu0 %v964
      %1545 = vmatprep.subr.mxu0 0.0
      %1546 = vmatpush1.msra.mxu0 %v965
      %1547 = vmatprep.subr.mxu0 0.0
      %1548 = vmatpush1.msra.mxu0 %v966
      %1549 = vmatprep.subr.mxu0 0.0
      %1550 = vmatpush1.msra.mxu0 %v967
      %1551 = vmatprep.subr.mxu0 0.0
      %1552 = vmatpush1.msra.mxu0 %v968
      %1553 = vmatprep.subr.mxu0 0.0
      %1554 = vmatpush1.msra.mxu0 %v969
      %1555 = vmatprep.subr.mxu0 0.0
      %1556 = vmatpush1.msra.mxu0 %v970
      %1557 = vmatprep.subr.mxu0 0.0
      %1558 = vmatpush1.msra.mxu0 %v971
      %1559 = vmatprep.subr.mxu0 0.0
      %1560 = vmatpush1.msra.mxu0 %v972
      %1561 = vmatprep.subr.mxu0 0.0
      %1562 = vmatpush1.msra.mxu0 %v973
      %1563 = vmatprep.subr.mxu0 0.0
      %1564 = vmatpush1.msra.mxu0 %v974
      %1565 = vmatprep.mubr.f32.mxu0 %v1486
      %1566 = vmatmul.mubr.f32.gmra.mrb[0].mxu0 %v1485
      %v1567 = vpop.f32.mrb[0].mxu0
      %v1568 = vadd.f32 0.0, %v1567
      %v1569 = vpop.f32.mrb[0].mxu0
      %1570 = vmatprep.mubr.f32.mxu0 %v1488
      %1571 = vmatmul.mubr.f32.gmra.mrb[0].mxu0 %v1487
      %v1572 = vpop.f32.mrb[0].mxu0
      %v1573 = vadd.f32 0.0, %v1572
      %v1574 = vpop.f32.mrb[0].mxu0
      %1575 = vmatprep.mubr.f32.mxu0 %v1490
      %1576 = vmatmul.mubr.f32.gmra.mrb[0].mxu0 %v1489
      %v1577 = vpop.f32.mrb[0].mxu0
      %v1578 = vadd.f32 0.0, %v1577
      %v1579 = vpop.f32.mrb[0].mxu0
      %1580 = vmatprep.mubr.f32.mxu0 %v1492
      %1581 = vmatmul.mubr.f32.gmra.mrb[0].mxu0 %v1491
      %v1582 = vpop.f32.mrb[0].mxu0
      %v1583 = vadd.f32 0.0, %v1582
      %v1584 = vpop.f32.mrb[0].mxu0
      %1585 = vmatprep.mubr.f32.mxu0 %v1494
      %1586 = vmatmul.mubr.f32.gmra.mrb[0].mxu0 %v1493
      %v1587 = vpop.f32.mrb[0].mxu0
      %v1588 = vadd.f32 0.0, %v1587
      %v1589 = vpop.f32.mrb[0].mxu0
      %1590 = vmatprep.mubr.f32.mxu0 %v1496
      %1591 = vmatmul.mubr.f32.gmra.mrb[0].mxu0 %v1495
      %v1592 = vpop.f32.mrb[0].mxu0
      %v1593 = vadd.f32 0.0, %v1592
      %v1594 = vpop.f32.mrb[0].mxu0
      %1595 = vmatprep.mubr.f32.mxu0 %v1498
      %1596 = vmatmul.mubr.f32.gmra.mrb[0].mxu0 %v1497
      %v1597 = vpop.f32.mrb[0].mxu0
      %v1598 = vadd.f32 0.0, %v1597
      %v1599 = vpop.f32.mrb[0].mxu0
      %1600 = vmatprep.mubr.f32.mxu0 %v1500
      %1601 = vmatmul.mubr.f32.gmra.mrb[0].mxu0 %v1499
      %v1602 = vpop.f32.mrb[0].mxu0
      %v1603 = vadd.f32 0.0, %v1602
      %v1604 = vpop.f32.mrb[0].mxu0
      %1605 = vdwg.mxu0
      %s1606 = scalar_lea.vmem %s2, 32
      %v1607 = vld [vmem:[%s1606] sm:$0xff]
      %v1608 = vld [vmem:[%s1606 + $0x8] sm:$0xff]
      %v1610 = vsel %vm1225, %v1568, 0
      %v1613 = vsel %vm1225, %v1573, 0
      %v1616 = vsel %vm1225, %v1578, 0
      %v1619 = vsel %vm1225, %v1583, 0
      %v1622 = vsel %vm1225, %v1588, 0
      %v1625 = vsel %vm1225, %v1593, 0
      %v1628 = vsel %vm1225, %v1598, 0
      %v1631 = vsel %vm1225, %v1603, 0
      %1633 = vmatprep.subr.mxu0 0.0
      %1634 = vmatpush1.msra.mxu0 %v1607
      %1635 = vmatprep.subr.mxu0 0.0
      %1636 = vmatpush1.msra.mxu0 %v1608
      %1637 = vmatprep.subr.mxu0 0.0
      %1638 = vmatpush1.msra.mxu0 0.0
      %1639 = vmatprep.subr.mxu0 0.0
      %1640 = vmatpush1.msra.mxu0 0.0
      %1641 = vmatprep.subr.mxu0 0.0
      %1642 = vmatpush1.msra.mxu0 0.0
      %1643 = vmatprep.subr.mxu0 0.0
      %1644 = vmatpush1.msra.mxu0 0.0
      %1645 = vmatprep.subr.mxu0 0.0
      %1646 = vmatpush1.msra.mxu0 0.0
      %1647 = vmatprep.subr.mxu0 0.0
      %1648 = vmatpush1.msra.mxu0 0.0
      %1649 = vmatprep.subr.mxu0 0.0
      %1650 = vmatpush1.msra.mxu0 0.0
      %1651 = vmatprep.subr.mxu0 0.0
      %1652 = vmatpush1.msra.mxu0 0.0
      %1653 = vmatprep.subr.mxu0 0.0
      %1654 = vmatpush1.msra.mxu0 0.0
      %1655 = vmatprep.subr.mxu0 0.0
      %1656 = vmatpush1.msra.mxu0 0.0
      %1657 = vmatprep.subr.mxu0 0.0
      %1658 = vmatpush1.msra.mxu0 0.0
      %1659 = vmatprep.subr.mxu0 0.0
      %1660 = vmatpush1.msra.mxu0 0.0
      %1661 = vmatprep.subr.mxu0 0.0
      %1662 = vmatpush1.msra.mxu0 0.0
      %1663 = vmatprep.subr.mxu0 0.0
      %1664 = vmatpush1.msra.mxu0 0.0
      %1665 = vmatprep.subr.mxu0 0.0
      %1666 = vmatpush1.msra.mxu0 0.0
      %1667 = vmatprep.subr.mxu0 0.0
      %1668 = vmatpush1.msra.mxu0 0.0
      %1669 = vmatprep.subr.mxu0 0.0
      %1670 = vmatpush1.msra.mxu0 0.0
      %1671 = vmatprep.subr.mxu0 0.0
      %1672 = vmatpush1.msra.mxu0 0.0
      %1673 = vmatprep.subr.mxu0 0.0
      %1674 = vmatpush1.msra.mxu0 0.0
      %1675 = vmatprep.subr.mxu0 0.0
      %1676 = vmatpush1.msra.mxu0 0.0
      %1677 = vmatprep.subr.mxu0 0.0
      %1678 = vmatpush1.msra.mxu0 0.0
      %1679 = vmatprep.subr.mxu0 0.0
      %1680 = vmatpush1.msra.mxu0 0.0
      %1681 = vmatprep.subr.mxu0 0.0
      %1682 = vmatpush1.msra.mxu0 0.0
      %1683 = vmatprep.subr.mxu0 0.0
      %1684 = vmatpush1.msra.mxu0 0.0
      %1685 = vmatprep.subr.mxu0 0.0
      %1686 = vmatpush1.msra.mxu0 0.0
      %1687 = vmatprep.subr.mxu0 0.0
      %1688 = vmatpush1.msra.mxu0 0.0
      %1689 = vmatprep.subr.mxu0 0.0
      %1690 = vmatpush1.msra.mxu0 0.0
      %1691 = vmatprep.subr.mxu0 0.0
      %1692 = vmatpush1.msra.mxu0 0.0
      %1693 = vmatprep.subr.mxu0 0.0
      %1694 = vmatpush1.msra.mxu0 0.0
      %1695 = vmatprep.subr.mxu0 0.0
      %1696 = vmatpush1.msra.mxu0 0.0
      %1697 = vmatprep.mubr.f32.mxu0 0.0
      %1698 = vmatmul.mubr.f32.gmra.mrb[0].mxu0 %v1610
      %v1699 = vpop.f32.mrb[0].mxu0
      %v1700 = vadd.f32 0.0, %v1699
      %v1701 = vpop.f32.mrb[0].mxu0
      %1702 = vmatprep.mubr.f32.mxu0 0.0
      %1703 = vmatmul.mubr.f32.gmra.mrb[0].mxu0 %v1613
      %v1704 = vpop.f32.mrb[0].mxu0
      %v1705 = vadd.f32 0.0, %v1704
      %v1706 = vpop.f32.mrb[0].mxu0
      %1707 = vmatprep.mubr.f32.mxu0 0.0
      %1708 = vmatmul.mubr.f32.gmra.mrb[0].mxu0 %v1616
      %v1709 = vpop.f32.mrb[0].mxu0
      %v1710 = vadd.f32 0.0, %v1709
      %v1711 = vpop.f32.mrb[0].mxu0
      %1712 = vmatprep.mubr.f32.mxu0 0.0
      %1713 = vmatmul.mubr.f32.gmra.mrb[0].mxu0 %v1619
      %v1714 = vpop.f32.mrb[0].mxu0
      %v1715 = vadd.f32 0.0, %v1714
      %v1716 = vpop.f32.mrb[0].mxu0
      %1717 = vmatprep.mubr.f32.mxu0 0.0
      %1718 = vmatmul.mubr.f32.gmra.mrb[0].mxu0 %v1622
      %v1719 = vpop.f32.mrb[0].mxu0
      %v1720 = vadd.f32 0.0, %v1719
      %v1721 = vpop.f32.mrb[0].mxu0
      %1722 = vmatprep.mubr.f32.mxu0 0.0
      %1723 = vmatmul.mubr.f32.gmra.mrb[0].mxu0 %v1625
      %v1724 = vpop.f32.mrb[0].mxu0
      %v1725 = vadd.f32 0.0, %v1724
      %v1726 = vpop.f32.mrb[0].mxu0
      %1727 = vmatprep.mubr.f32.mxu0 0.0
      %1728 = vmatmul.mubr.f32.gmra.mrb[0].mxu0 %v1628
      %v1729 = vpop.f32.mrb[0].mxu0
      %v1730 = vadd.f32 0.0, %v1729
      %v1731 = vpop.f32.mrb[0].mxu0
      %1732 = vmatprep.mubr.f32.mxu0 0.0
      %1733 = vmatmul.mubr.f32.gmra.mrb[0].mxu0 %v1631
      %v1734 = vpop.f32.mrb[0].mxu0
      %v1735 = vadd.f32 0.0, %v1734
      %v1736 = vpop.f32.mrb[0].mxu0
      %1737 = vdwg.mxu0
      %v1738 = vadd.f32 %v1446, %v1700
      %v1739 = vadd.f32 %v1451, %v1705
      %v1740 = vadd.f32 %v1456, %v1710
      %v1741 = vadd.f32 %v1461, %v1715
      %v1742 = vadd.f32 %v1466, %v1720
      %v1743 = vadd.f32 %v1471, %v1725
      %v1744 = vadd.f32 %v1476, %v1730
      %v1745 = vadd.f32 %v1481, %v1735
      %s1746 = scalar_lea.vmem %s6, 384
      %v1747 = vld [vmem:[%s1746] sm:$0xff]
      %v1748 = vld [vmem:[%s1746 + $0x8] sm:$0xff]
      %v1749 = vld [vmem:[%s1746 + $0x10] sm:$0xff]
      %v1750 = vld [vmem:[%s1746 + $0x18] sm:$0xff]
      %v1751 = vld [vmem:[%s1746 + $0x20] sm:$0xff]
      %v1752 = vld [vmem:[%s1746 + $0x28] sm:$0xff]
      %v1753 = vld [vmem:[%s1746 + $0x30] sm:$0xff]
      %v1754 = vld [vmem:[%s1746 + $0x38] sm:$0xff]
      %v1755 = vld [vmem:[%s1746 + $0x40] sm:$0xff]
      %v1756 = vld [vmem:[%s1746 + $0x48] sm:$0xff]
      %v1757 = vld [vmem:[%s1746 + $0x50] sm:$0xff]
      %v1758 = vld [vmem:[%s1746 + $0x58] sm:$0xff]
      %v1759 = vld [vmem:[%s1746 + $0x60] sm:$0xff]
      %v1760 = vld [vmem:[%s1746 + $0x68] sm:$0xff]
      %v1761 = vld [vmem:[%s1746 + $0x70] sm:$0xff]
      %v1762 = vld [vmem:[%s1746 + $0x78] sm:$0xff]
      %1763 = vmatprep.subr.mxu0 0.0
      %1764 = vmatpush1.msra.mxu0 %v943
      %1765 = vmatprep.subr.mxu0 0.0
      %1766 = vmatpush1.msra.mxu0 %v944
      %1767 = vmatprep.subr.mxu0 0.0
      %1768 = vmatpush1.msra.mxu0 %v945
      %1769 = vmatprep.subr.mxu0 0.0
      %1770 = vmatpush1.msra.mxu0 %v946
      %1771 = vmatprep.subr.mxu0 0.0
      %1772 = vmatpush1.msra.mxu0 %v947
      %1773 = vmatprep.subr.mxu0 0.0
      %1774 = vmatpush1.msra.mxu0 %v948
      %1775 = vmatprep.subr.mxu0 0.0
      %1776 = vmatpush1.msra.mxu0 %v949
      %1777 = vmatprep.subr.mxu0 0.0
      %1778 = vmatpush1.msra.mxu0 %v950
      %1779 = vmatprep.subr.mxu0 0.0
      %1780 = vmatpush1.msra.mxu0 %v951
      %1781 = vmatprep.subr.mxu0 0.0
      %1782 = vmatpush1.msra.mxu0 %v952
      %1783 = vmatprep.subr.mxu0 0.0
      %1784 = vmatpush1.msra.mxu0 %v953
      %1785 = vmatprep.subr.mxu0 0.0
      %1786 = vmatpush1.msra.mxu0 %v954
      %1787 = vmatprep.subr.mxu0 0.0
      %1788 = vmatpush1.msra.mxu0 %v955
      %1789 = vmatprep.subr.mxu0 0.0
      %1790 = vmatpush1.msra.mxu0 %v956
      %1791 = vmatprep.subr.mxu0 0.0
      %1792 = vmatpush1.msra.mxu0 %v957
      %1793 = vmatprep.subr.mxu0 0.0
      %1794 = vmatpush1.msra.mxu0 %v958
      %1795 = vmatprep.subr.mxu0 0.0
      %1796 = vmatpush1.msra.mxu0 %v959
      %1797 = vmatprep.subr.mxu0 0.0
      %1798 = vmatpush1.msra.mxu0 %v960
      %1799 = vmatprep.subr.mxu0 0.0
      %1800 = vmatpush1.msra.mxu0 %v961
      %1801 = vmatprep.subr.mxu0 0.0
      %1802 = vmatpush1.msra.mxu0 %v962
      %1803 = vmatprep.subr.mxu0 0.0
      %1804 = vmatpush1.msra.mxu0 %v963
      %1805 = vmatprep.subr.mxu0 0.0
      %1806 = vmatpush1.msra.mxu0 %v964
      %1807 = vmatprep.subr.mxu0 0.0
      %1808 = vmatpush1.msra.mxu0 %v965
      %1809 = vmatprep.subr.mxu0 0.0
      %1810 = vmatpush1.msra.mxu0 %v966
      %1811 = vmatprep.subr.mxu0 0.0
      %1812 = vmatpush1.msra.mxu0 %v967
      %1813 = vmatprep.subr.mxu0 0.0
      %1814 = vmatpush1.msra.mxu0 %v968
      %1815 = vmatprep.subr.mxu0 0.0
      %1816 = vmatpush1.msra.mxu0 %v969
      %1817 = vmatprep.subr.mxu0 0.0
      %1818 = vmatpush1.msra.mxu0 %v970
      %1819 = vmatprep.subr.mxu0 0.0
      %1820 = vmatpush1.msra.mxu0 %v971
      %1821 = vmatprep.subr.mxu0 0.0
      %1822 = vmatpush1.msra.mxu0 %v972
      %1823 = vmatprep.subr.mxu0 0.0
      %1824 = vmatpush1.msra.mxu0 %v973
      %1825 = vmatprep.subr.mxu0 0.0
      %1826 = vmatpush1.msra.mxu0 %v974
      %1827 = vmatprep.mubr.f32.mxu0 %v1748
      %1828 = vmatmul.mubr.f32.gmra.mrb[0].mxu0 %v1747
      %v1829 = vpop.f32.mrb[0].mxu0
      %v1830 = vadd.f32 0.0, %v1829
      %v1831 = vpop.f32.mrb[0].mxu0
      %1832 = vmatprep.mubr.f32.mxu0 %v1750
      %1833 = vmatmul.mubr.f32.gmra.mrb[0].mxu0 %v1749
      %v1834 = vpop.f32.mrb[0].mxu0
      %v1835 = vadd.f32 0.0, %v1834
      %v1836 = vpop.f32.mrb[0].mxu0
      %1837 = vmatprep.mubr.f32.mxu0 %v1752
      %1838 = vmatmul.mubr.f32.gmra.mrb[0].mxu0 %v1751
      %v1839 = vpop.f32.mrb[0].mxu0
      %v1840 = vadd.f32 0.0, %v1839
      %v1841 = vpop.f32.mrb[0].mxu0
      %1842 = vmatprep.mubr.f32.mxu0 %v1754
      %1843 = vmatmul.mubr.f32.gmra.mrb[0].mxu0 %v1753
      %v1844 = vpop.f32.mrb[0].mxu0
      %v1845 = vadd.f32 0.0, %v1844
      %v1846 = vpop.f32.mrb[0].mxu0
      %1847 = vmatprep.mubr.f32.mxu0 %v1756
      %1848 = vmatmul.mubr.f32.gmra.mrb[0].mxu0 %v1755
      %v1849 = vpop.f32.mrb[0].mxu0
      %v1850 = vadd.f32 0.0, %v1849
      %v1851 = vpop.f32.mrb[0].mxu0
      %1852 = vmatprep.mubr.f32.mxu0 %v1758
      %1853 = vmatmul.mubr.f32.gmra.mrb[0].mxu0 %v1757
      %v1854 = vpop.f32.mrb[0].mxu0
      %v1855 = vadd.f32 0.0, %v1854
      %v1856 = vpop.f32.mrb[0].mxu0
      %1857 = vmatprep.mubr.f32.mxu0 %v1760
      %1858 = vmatmul.mubr.f32.gmra.mrb[0].mxu0 %v1759
      %v1859 = vpop.f32.mrb[0].mxu0
      %v1860 = vadd.f32 0.0, %v1859
      %v1861 = vpop.f32.mrb[0].mxu0
      %1862 = vmatprep.mubr.f32.mxu0 %v1762
      %1863 = vmatmul.mubr.f32.gmra.mrb[0].mxu0 %v1761
      %v1864 = vpop.f32.mrb[0].mxu0
      %v1865 = vadd.f32 0.0, %v1864
      %v1866 = vpop.f32.mrb[0].mxu0
      %1867 = vdwg.mxu0
      %s1868 = scalar_lea.vmem %s2, 48
      %v1869 = vld [vmem:[%s1868] sm:$0xff]
      %v1870 = vld [vmem:[%s1868 + $0x8] sm:$0xff]
      %v1872 = vsel %vm1225, %v1830, 0
      %v1875 = vsel %vm1225, %v1835, 0
      %v1878 = vsel %vm1225, %v1840, 0
      %v1881 = vsel %vm1225, %v1845, 0
      %v1884 = vsel %vm1225, %v1850, 0
      %v1887 = vsel %vm1225, %v1855, 0
      %v1890 = vsel %vm1225, %v1860, 0
      %v1893 = vsel %vm1225, %v1865, 0
      %1895 = vmatprep.subr.mxu0 0.0
      %1896 = vmatpush1.msra.mxu0 %v1869
      %1897 = vmatprep.subr.mxu0 0.0
      %1898 = vmatpush1.msra.mxu0 %v1870
      %1899 = vmatprep.subr.mxu0 0.0
      %1900 = vmatpush1.msra.mxu0 0.0
      %1901 = vmatprep.subr.mxu0 0.0
      %1902 = vmatpush1.msra.mxu0 0.0
      %1903 = vmatprep.subr.mxu0 0.0
      %1904 = vmatpush1.msra.mxu0 0.0
      %1905 = vmatprep.subr.mxu0 0.0
      %1906 = vmatpush1.msra.mxu0 0.0
      %1907 = vmatprep.subr.mxu0 0.0
      %1908 = vmatpush1.msra.mxu0 0.0
      %1909 = vmatprep.subr.mxu0 0.0
      %1910 = vmatpush1.msra.mxu0 0.0
      %1911 = vmatprep.subr.mxu0 0.0
      %1912 = vmatpush1.msra.mxu0 0.0
      %1913 = vmatprep.subr.mxu0 0.0
      %1914 = vmatpush1.msra.mxu0 0.0
      %1915 = vmatprep.subr.mxu0 0.0
      %1916 = vmatpush1.msra.mxu0 0.0
      %1917 = vmatprep.subr.mxu0 0.0
      %1918 = vmatpush1.msra.mxu0 0.0
      %1919 = vmatprep.subr.mxu0 0.0
      %1920 = vmatpush1.msra.mxu0 0.0
      %1921 = vmatprep.subr.mxu0 0.0
      %1922 = vmatpush1.msra.mxu0 0.0
      %1923 = vmatprep.subr.mxu0 0.0
      %1924 = vmatpush1.msra.mxu0 0.0
      %1925 = vmatprep.subr.mxu0 0.0
      %1926 = vmatpush1.msra.mxu0 0.0
      %1927 = vmatprep.subr.mxu0 0.0
      %1928 = vmatpush1.msra.mxu0 0.0
      %1929 = vmatprep.subr.mxu0 0.0
      %1930 = vmatpush1.msra.mxu0 0.0
      %1931 = vmatprep.subr.mxu0 0.0
      %1932 = vmatpush1.msra.mxu0 0.0
      %1933 = vmatprep.subr.mxu0 0.0
      %1934 = vmatpush1.msra.mxu0 0.0
      %1935 = vmatprep.subr.mxu0 0.0
      %1936 = vmatpush1.msra.mxu0 0.0
      %1937 = vmatprep.subr.mxu0 0.0
      %1938 = vmatpush1.msra.mxu0 0.0
      %1939 = vmatprep.subr.mxu0 0.0
      %1940 = vmatpush1.msra.mxu0 0.0
      %1941 = vmatprep.subr.mxu0 0.0
      %1942 = vmatpush1.msra.mxu0 0.0
      %1943 = vmatprep.subr.mxu0 0.0
      %1944 = vmatpush1.msra.mxu0 0.0
      %1945 = vmatprep.subr.mxu0 0.0
      %1946 = vmatpush1.msra.mxu0 0.0
      %1947 = vmatprep.subr.mxu0 0.0
      %1948 = vmatpush1.msra.mxu0 0.0
      %1949 = vmatprep.subr.mxu0 0.0
      %1950 = vmatpush1.msra.mxu0 0.0
      %1951 = vmatprep.subr.mxu0 0.0
      %1952 = vmatpush1.msra.mxu0 0.0
      %1953 = vmatprep.subr.mxu0 0.0
      %1954 = vmatpush1.msra.mxu0 0.0
      %1955 = vmatprep.subr.mxu0 0.0
      %1956 = vmatpush1.msra.mxu0 0.0
      %1957 = vmatprep.subr.mxu0 0.0
      %1958 = vmatpush1.msra.mxu0 0.0
      %1959 = vmatprep.mubr.f32.mxu0 0.0
      %1960 = vmatmul.mubr.f32.gmra.mrb[0].mxu0 %v1872
      %v1961 = vpop.f32.mrb[0].mxu0
      %v1962 = vadd.f32 0.0, %v1961
      %v1963 = vpop.f32.mrb[0].mxu0
      %1964 = vmatprep.mubr.f32.mxu0 0.0
      %1965 = vmatmul.mubr.f32.gmra.mrb[0].mxu0 %v1875
      %v1966 = vpop.f32.mrb[0].mxu0
      %v1967 = vadd.f32 0.0, %v1966
      %v1968 = vpop.f32.mrb[0].mxu0
      %1969 = vmatprep.mubr.f32.mxu0 0.0
      %1970 = vmatmul.mubr.f32.gmra.mrb[0].mxu0 %v1878
      %v1971 = vpop.f32.mrb[0].mxu0
      %v1972 = vadd.f32 0.0, %v1971
      %v1973 = vpop.f32.mrb[0].mxu0
      %1974 = vmatprep.mubr.f32.mxu0 0.0
      %1975 = vmatmul.mubr.f32.gmra.mrb[0].mxu0 %v1881
      %v1976 = vpop.f32.mrb[0].mxu0
      %v1977 = vadd.f32 0.0, %v1976
      %v1978 = vpop.f32.mrb[0].mxu0
      %1979 = vmatprep.mubr.f32.mxu0 0.0
      %1980 = vmatmul.mubr.f32.gmra.mrb[0].mxu0 %v1884
      %v1981 = vpop.f32.mrb[0].mxu0
      %v1982 = vadd.f32 0.0, %v1981
      %v1983 = vpop.f32.mrb[0].mxu0
      %1984 = vmatprep.mubr.f32.mxu0 0.0
      %1985 = vmatmul.mubr.f32.gmra.mrb[0].mxu0 %v1887
      %v1986 = vpop.f32.mrb[0].mxu0
      %v1987 = vadd.f32 0.0, %v1986
      %v1988 = vpop.f32.mrb[0].mxu0
      %1989 = vmatprep.mubr.f32.mxu0 0.0
      %1990 = vmatmul.mubr.f32.gmra.mrb[0].mxu0 %v1890
      %v1991 = vpop.f32.mrb[0].mxu0
      %v1992 = vadd.f32 0.0, %v1991
      %v1993 = vpop.f32.mrb[0].mxu0
      %1994 = vmatprep.mubr.f32.mxu0 0.0
      %1995 = vmatmul.mubr.f32.gmra.mrb[0].mxu0 %v1893
      %v1996 = vpop.f32.mrb[0].mxu0
      %v1997 = vadd.f32 0.0, %v1996
      %v1998 = vpop.f32.mrb[0].mxu0
      %1999 = vdwg.mxu0
      %v2000 = vadd.f32 %v1738, %v1962
      %v2001 = vadd.f32 %v1739, %v1967
      %v2002 = vadd.f32 %v1740, %v1972
      %v2003 = vadd.f32 %v1741, %v1977
      %v2004 = vadd.f32 %v1742, %v1982
      %v2005 = vadd.f32 %v1743, %v1987
      %v2006 = vadd.f32 %v1744, %v1992
      %v2007 = vadd.f32 %v1745, %v1997
      %s2008 = scalar_lea.vmem %s6, 512
      %v2009 = vld [vmem:[%s2008] sm:$0xff]
      %v2010 = vld [vmem:[%s2008 + $0x8] sm:$0xff]
      %v2011 = vld [vmem:[%s2008 + $0x10] sm:$0xff]
      %v2012 = vld [vmem:[%s2008 + $0x18] sm:$0xff]
      %v2013 = vld [vmem:[%s2008 + $0x20] sm:$0xff]
      %v2014 = vld [vmem:[%s2008 + $0x28] sm:$0xff]
      %v2015 = vld [vmem:[%s2008 + $0x30] sm:$0xff]
      %v2016 = vld [vmem:[%s2008 + $0x38] sm:$0xff]
      %v2017 = vld [vmem:[%s2008 + $0x40] sm:$0xff]
      %v2018 = vld [vmem:[%s2008 + $0x48] sm:$0xff]
      %v2019 = vld [vmem:[%s2008 + $0x50] sm:$0xff]
      %v2020 = vld [vmem:[%s2008 + $0x58] sm:$0xff]
      %v2021 = vld [vmem:[%s2008 + $0x60] sm:$0xff]
      %v2022 = vld [vmem:[%s2008 + $0x68] sm:$0xff]
      %v2023 = vld [vmem:[%s2008 + $0x70] sm:$0xff]
      %v2024 = vld [vmem:[%s2008 + $0x78] sm:$0xff]
      %2025 = vmatprep.subr.mxu0 0.0
      %2026 = vmatpush1.msra.mxu0 %v943
      %2027 = vmatprep.subr.mxu0 0.0
      %2028 = vmatpush1.msra.mxu0 %v944
      %2029 = vmatprep.subr.mxu0 0.0
      %2030 = vmatpush1.msra.mxu0 %v945
      %2031 = vmatprep.subr.mxu0 0.0
      %2032 = vmatpush1.msra.mxu0 %v946
      %2033 = vmatprep.subr.mxu0 0.0
      %2034 = vmatpush1.msra.mxu0 %v947
      %2035 = vmatprep.subr.mxu0 0.0
      %2036 = vmatpush1.msra.mxu0 %v948
      %2037 = vmatprep.subr.mxu0 0.0
      %2038 = vmatpush1.msra.mxu0 %v949
      %2039 = vmatprep.subr.mxu0 0.0
      %2040 = vmatpush1.msra.mxu0 %v950
      %2041 = vmatprep.subr.mxu0 0.0
      %2042 = vmatpush1.msra.mxu0 %v951
      %2043 = vmatprep.subr.mxu0 0.0
      %2044 = vmatpush1.msra.mxu0 %v952
      %2045 = vmatprep.subr.mxu0 0.0
      %2046 = vmatpush1.msra.mxu0 %v953
      %2047 = vmatprep.subr.mxu0 0.0
      %2048 = vmatpush1.msra.mxu0 %v954
      %2049 = vmatprep.subr.mxu0 0.0
      %2050 = vmatpush1.msra.mxu0 %v955
      %2051 = vmatprep.subr.mxu0 0.0
      %2052 = vmatpush1.msra.mxu0 %v956
      %2053 = vmatprep.subr.mxu0 0.0
      %2054 = vmatpush1.msra.mxu0 %v957
      %2055 = vmatprep.subr.mxu0 0.0
      %2056 = vmatpush1.msra.mxu0 %v958
      %2057 = vmatprep.subr.mxu0 0.0
      %2058 = vmatpush1.msra.mxu0 %v959
      %2059 = vmatprep.subr.mxu0 0.0
      %2060 = vmatpush1.msra.mxu0 %v960
      %2061 = vmatprep.subr.mxu0 0.0
      %2062 = vmatpush1.msra.mxu0 %v961
      %2063 = vmatprep.subr.mxu0 0.0
      %2064 = vmatpush1.msra.mxu0 %v962
      %2065 = vmatprep.subr.mxu0 0.0
      %2066 = vmatpush1.msra.mxu0 %v963
      %2067 = vmatprep.subr.mxu0 0.0
      %2068 = vmatpush1.msra.mxu0 %v964
      %2069 = vmatprep.subr.mxu0 0.0
      %2070 = vmatpush1.msra.mxu0 %v965
      %2071 = vmatprep.subr.mxu0 0.0
      %2072 = vmatpush1.msra.mxu0 %v966
      %2073 = vmatprep.subr.mxu0 0.0
      %2074 = vmatpush1.msra.mxu0 %v967
      %2075 = vmatprep.subr.mxu0 0.0
      %2076 = vmatpush1.msra.mxu0 %v968
      %2077 = vmatprep.subr.mxu0 0.0
      %2078 = vmatpush1.msra.mxu0 %v969
      %2079 = vmatprep.subr.mxu0 0.0
      %2080 = vmatpush1.msra.mxu0 %v970
      %2081 = vmatprep.subr.mxu0 0.0
      %2082 = vmatpush1.msra.mxu0 %v971
      %2083 = vmatprep.subr.mxu0 0.0
      %2084 = vmatpush1.msra.mxu0 %v972
      %2085 = vmatprep.subr.mxu0 0.0
      %2086 = vmatpush1.msra.mxu0 %v973
      %2087 = vmatprep.subr.mxu0 0.0
      %2088 = vmatpush1.msra.mxu0 %v974
      %2089 = vmatprep.mubr.f32.mxu0 %v2010
      %2090 = vmatmul.mubr.f32.gmra.mrb[0].mxu0 %v2009
      %v2091 = vpop.f32.mrb[0].mxu0
      %v2092 = vadd.f32 0.0, %v2091
      %v2093 = vpop.f32.mrb[0].mxu0
      %2094 = vmatprep.mubr.f32.mxu0 %v2012
      %2095 = vmatmul.mubr.f32.gmra.mrb[0].mxu0 %v2011
      %v2096 = vpop.f32.mrb[0].mxu0
      %v2097 = vadd.f32 0.0, %v2096
      %v2098 = vpop.f32.mrb[0].mxu0
      %2099 = vmatprep.mubr.f32.mxu0 %v2014
      %2100 = vmatmul.mubr.f32.gmra.mrb[0].mxu0 %v2013
      %v2101 = vpop.f32.mrb[0].mxu0
      %v2102 = vadd.f32 0.0, %v2101
      %v2103 = vpop.f32.mrb[0].mxu0
      %2104 = vmatprep.mubr.f32.mxu0 %v2016
      %2105 = vmatmul.mubr.f32.gmra.mrb[0].mxu0 %v2015
      %v2106 = vpop.f32.mrb[0].mxu0
      %v2107 = vadd.f32 0.0, %v2106
      %v2108 = vpop.f32.mrb[0].mxu0
      %2109 = vmatprep.mubr.f32.mxu0 %v2018
      %2110 = vmatmul.mubr.f32.gmra.mrb[0].mxu0 %v2017
      %v2111 = vpop.f32.mrb[0].mxu0
      %v2112 = vadd.f32 0.0, %v2111
      %v2113 = vpop.f32.mrb[0].mxu0
      %2114 = vmatprep.mubr.f32.mxu0 %v2020
      %2115 = vmatmul.mubr.f32.gmra.mrb[0].mxu0 %v2019
      %v2116 = vpop.f32.mrb[0].mxu0
      %v2117 = vadd.f32 0.0, %v2116
      %v2118 = vpop.f32.mrb[0].mxu0
      %2119 = vmatprep.mubr.f32.mxu0 %v2022
      %2120 = vmatmul.mubr.f32.gmra.mrb[0].mxu0 %v2021
      %v2121 = vpop.f32.mrb[0].mxu0
      %v2122 = vadd.f32 0.0, %v2121
      %v2123 = vpop.f32.mrb[0].mxu0
      %2124 = vmatprep.mubr.f32.mxu0 %v2024
      %2125 = vmatmul.mubr.f32.gmra.mrb[0].mxu0 %v2023
      %v2126 = vpop.f32.mrb[0].mxu0
      %v2127 = vadd.f32 0.0, %v2126
      %v2128 = vpop.f32.mrb[0].mxu0
      %2129 = vdwg.mxu0
      %s2130 = scalar_lea.vmem %s2, 64
      %v2131 = vld [vmem:[%s2130] sm:$0xff]
      %v2132 = vld [vmem:[%s2130 + $0x8] sm:$0xff]
      %v2134 = vsel %vm1225, %v2092, 0
      %v2137 = vsel %vm1225, %v2097, 0
      %v2140 = vsel %vm1225, %v2102, 0
      %v2143 = vsel %vm1225, %v2107, 0
      %v2146 = vsel %vm1225, %v2112, 0
      %v2149 = vsel %vm1225, %v2117, 0
      %v2152 = vsel %vm1225, %v2122, 0
      %v2155 = vsel %vm1225, %v2127, 0
      %2157 = vmatprep.subr.mxu0 0.0
      %2158 = vmatpush1.msra.mxu0 %v2131
      %2159 = vmatprep.subr.mxu0 0.0
      %2160 = vmatpush1.msra.mxu0 %v2132
      %2161 = vmatprep.subr.mxu0 0.0
      %2162 = vmatpush1.msra.mxu0 0.0
      %2163 = vmatprep.subr.mxu0 0.0
      %2164 = vmatpush1.msra.mxu0 0.0
      %2165 = vmatprep.subr.mxu0 0.0
      %2166 = vmatpush1.msra.mxu0 0.0
      %2167 = vmatprep.subr.mxu0 0.0
      %2168 = vmatpush1.msra.mxu0 0.0
      %2169 = vmatprep.subr.mxu0 0.0
      %2170 = vmatpush1.msra.mxu0 0.0
      %2171 = vmatprep.subr.mxu0 0.0
      %2172 = vmatpush1.msra.mxu0 0.0
      %2173 = vmatprep.subr.mxu0 0.0
      %2174 = vmatpush1.msra.mxu0 0.0
      %2175 = vmatprep.subr.mxu0 0.0
      %2176 = vmatpush1.msra.mxu0 0.0
      %2177 = vmatprep.subr.mxu0 0.0
      %2178 = vmatpush1.msra.mxu0 0.0
      %2179 = vmatprep.subr.mxu0 0.0
      %2180 = vmatpush1.msra.mxu0 0.0
      %2181 = vmatprep.subr.mxu0 0.0
      %2182 = vmatpush1.msra.mxu0 0.0
      %2183 = vmatprep.subr.mxu0 0.0
      %2184 = vmatpush1.msra.mxu0 0.0
      %2185 = vmatprep.subr.mxu0 0.0
      %2186 = vmatpush1.msra.mxu0 0.0
      %2187 = vmatprep.subr.mxu0 0.0
      %2188 = vmatpush1.msra.mxu0 0.0
      %2189 = vmatprep.subr.mxu0 0.0
      %2190 = vmatpush1.msra.mxu0 0.0
      %2191 = vmatprep.subr.mxu0 0.0
      %2192 = vmatpush1.msra.mxu0 0.0
      %2193 = vmatprep.subr.mxu0 0.0
      %2194 = vmatpush1.msra.mxu0 0.0
      %2195 = vmatprep.subr.mxu0 0.0
      %2196 = vmatpush1.msra.mxu0 0.0
      %2197 = vmatprep.subr.mxu0 0.0
      %2198 = vmatpush1.msra.mxu0 0.0
      %2199 = vmatprep.subr.mxu0 0.0
      %2200 = vmatpush1.msra.mxu0 0.0
      %2201 = vmatprep.subr.mxu0 0.0
      %2202 = vmatpush1.msra.mxu0 0.0
      %2203 = vmatprep.subr.mxu0 0.0
      %2204 = vmatpush1.msra.mxu0 0.0
      %2205 = vmatprep.subr.mxu0 0.0
      %2206 = vmatpush1.msra.mxu0 0.0
      %2207 = vmatprep.subr.mxu0 0.0
      %2208 = vmatpush1.msra.mxu0 0.0
      %2209 = vmatprep.subr.mxu0 0.0
      %2210 = vmatpush1.msra.mxu0 0.0
      %2211 = vmatprep.subr.mxu0 0.0
      %2212 = vmatpush1.msra.mxu0 0.0
      %2213 = vmatprep.subr.mxu0 0.0
      %2214 = vmatpush1.msra.mxu0 0.0
      %2215 = vmatprep.subr.mxu0 0.0
      %2216 = vmatpush1.msra.mxu0 0.0
      %2217 = vmatprep.subr.mxu0 0.0
      %2218 = vmatpush1.msra.mxu0 0.0
      %2219 = vmatprep.subr.mxu0 0.0
      %2220 = vmatpush1.msra.mxu0 0.0
      %2221 = vmatprep.mubr.f32.mxu0 0.0
      %2222 = vmatmul.mubr.f32.gmra.mrb[0].mxu0 %v2134
      %v2223 = vpop.f32.mrb[0].mxu0
      %v2224 = vadd.f32 0.0, %v2223
      %v2225 = vpop.f32.mrb[0].mxu0
      %2226 = vmatprep.mubr.f32.mxu0 0.0
      %2227 = vmatmul.mubr.f32.gmra.mrb[0].mxu0 %v2137
      %v2228 = vpop.f32.mrb[0].mxu0
      %v2229 = vadd.f32 0.0, %v2228
      %v2230 = vpop.f32.mrb[0].mxu0
      %2231 = vmatprep.mubr.f32.mxu0 0.0
      %2232 = vmatmul.mubr.f32.gmra.mrb[0].mxu0 %v2140
      %v2233 = vpop.f32.mrb[0].mxu0
      %v2234 = vadd.f32 0.0, %v2233
      %v2235 = vpop.f32.mrb[0].mxu0
      %2236 = vmatprep.mubr.f32.mxu0 0.0
      %2237 = vmatmul.mubr.f32.gmra.mrb[0].mxu0 %v2143
      %v2238 = vpop.f32.mrb[0].mxu0
      %v2239 = vadd.f32 0.0, %v2238
      %v2240 = vpop.f32.mrb[0].mxu0
      %2241 = vmatprep.mubr.f32.mxu0 0.0
      %2242 = vmatmul.mubr.f32.gmra.mrb[0].mxu0 %v2146
      %v2243 = vpop.f32.mrb[0].mxu0
      %v2244 = vadd.f32 0.0, %v2243
      %v2245 = vpop.f32.mrb[0].mxu0
      %2246 = vmatprep.mubr.f32.mxu0 0.0
      %2247 = vmatmul.mubr.f32.gmra.mrb[0].mxu0 %v2149
      %v2248 = vpop.f32.mrb[0].mxu0
      %v2249 = vadd.f32 0.0, %v2248
      %v2250 = vpop.f32.mrb[0].mxu0
      %2251 = vmatprep.mubr.f32.mxu0 0.0
      %2252 = vmatmul.mubr.f32.gmra.mrb[0].mxu0 %v2152
      %v2253 = vpop.f32.mrb[0].mxu0
      %v2254 = vadd.f32 0.0, %v2253
      %v2255 = vpop.f32.mrb[0].mxu0
      %2256 = vmatprep.mubr.f32.mxu0 0.0
      %2257 = vmatmul.mubr.f32.gmra.mrb[0].mxu0 %v2155
      %v2258 = vpop.f32.mrb[0].mxu0
      %v2259 = vadd.f32 0.0, %v2258
      %v2260 = vpop.f32.mrb[0].mxu0
      %2261 = vdwg.mxu0
      %v2262 = vadd.f32 %v2000, %v2224
      %v2263 = vadd.f32 %v2001, %v2229
      %v2264 = vadd.f32 %v2002, %v2234
      %v2265 = vadd.f32 %v2003, %v2239
      %v2266 = vadd.f32 %v2004, %v2244
      %v2267 = vadd.f32 %v2005, %v2249
      %v2268 = vadd.f32 %v2006, %v2254
      %v2269 = vadd.f32 %v2007, %v2259
      %s2270 = scalar_lea.vmem %s6, 640
      %v2271 = vld [vmem:[%s2270] sm:$0xff]
      %v2272 = vld [vmem:[%s2270 + $0x8] sm:$0xff]
      %v2273 = vld [vmem:[%s2270 + $0x10] sm:$0xff]
      %v2274 = vld [vmem:[%s2270 + $0x18] sm:$0xff]
      %v2275 = vld [vmem:[%s2270 + $0x20] sm:$0xff]
      %v2276 = vld [vmem:[%s2270 + $0x28] sm:$0xff]
      %v2277 = vld [vmem:[%s2270 + $0x30] sm:$0xff]
      %v2278 = vld [vmem:[%s2270 + $0x38] sm:$0xff]
      %v2279 = vld [vmem:[%s2270 + $0x40] sm:$0xff]
      %v2280 = vld [vmem:[%s2270 + $0x48] sm:$0xff]
      %v2281 = vld [vmem:[%s2270 + $0x50] sm:$0xff]
      %v2282 = vld [vmem:[%s2270 + $0x58] sm:$0xff]
      %v2283 = vld [vmem:[%s2270 + $0x60] sm:$0xff]
      %v2284 = vld [vmem:[%s2270 + $0x68] sm:$0xff]
      %v2285 = vld [vmem:[%s2270 + $0x70] sm:$0xff]
      %v2286 = vld [vmem:[%s2270 + $0x78] sm:$0xff]
      %2287 = vmatprep.subr.mxu0 0.0
      %2288 = vmatpush1.msra.mxu0 %v943
      %2289 = vmatprep.subr.mxu0 0.0
      %2290 = vmatpush1.msra.mxu0 %v944
      %2291 = vmatprep.subr.mxu0 0.0
      %2292 = vmatpush1.msra.mxu0 %v945
      %2293 = vmatprep.subr.mxu0 0.0
      %2294 = vmatpush1.msra.mxu0 %v946
      %2295 = vmatprep.subr.mxu0 0.0
      %2296 = vmatpush1.msra.mxu0 %v947
      %2297 = vmatprep.subr.mxu0 0.0
      %2298 = vmatpush1.msra.mxu0 %v948
      %2299 = vmatprep.subr.mxu0 0.0
      %2300 = vmatpush1.msra.mxu0 %v949
      %2301 = vmatprep.subr.mxu0 0.0
      %2302 = vmatpush1.msra.mxu0 %v950
      %2303 = vmatprep.subr.mxu0 0.0
      %2304 = vmatpush1.msra.mxu0 %v951
      %2305 = vmatprep.subr.mxu0 0.0
      %2306 = vmatpush1.msra.mxu0 %v952
      %2307 = vmatprep.subr.mxu0 0.0
      %2308 = vmatpush1.msra.mxu0 %v953
      %2309 = vmatprep.subr.mxu0 0.0
      %2310 = vmatpush1.msra.mxu0 %v954
      %2311 = vmatprep.subr.mxu0 0.0
      %2312 = vmatpush1.msra.mxu0 %v955
      %2313 = vmatprep.subr.mxu0 0.0
      %2314 = vmatpush1.msra.mxu0 %v956
      %2315 = vmatprep.subr.mxu0 0.0
      %2316 = vmatpush1.msra.mxu0 %v957
      %2317 = vmatprep.subr.mxu0 0.0
      %2318 = vmatpush1.msra.mxu0 %v958
      %2319 = vmatprep.subr.mxu0 0.0
      %2320 = vmatpush1.msra.mxu0 %v959
      %2321 = vmatprep.subr.mxu0 0.0
      %2322 = vmatpush1.msra.mxu0 %v960
      %2323 = vmatprep.subr.mxu0 0.0
      %2324 = vmatpush1.msra.mxu0 %v961
      %2325 = vmatprep.subr.mxu0 0.0
      %2326 = vmatpush1.msra.mxu0 %v962
      %2327 = vmatprep.subr.mxu0 0.0
      %2328 = vmatpush1.msra.mxu0 %v963
      %2329 = vmatprep.subr.mxu0 0.0
      %2330 = vmatpush1.msra.mxu0 %v964
      %2331 = vmatprep.subr.mxu0 0.0
      %2332 = vmatpush1.msra.mxu0 %v965
      %2333 = vmatprep.subr.mxu0 0.0
      %2334 = vmatpush1.msra.mxu0 %v966
      %2335 = vmatprep.subr.mxu0 0.0
      %2336 = vmatpush1.msra.mxu0 %v967
      %2337 = vmatprep.subr.mxu0 0.0
      %2338 = vmatpush1.msra.mxu0 %v968
      %2339 = vmatprep.subr.mxu0 0.0
      %2340 = vmatpush1.msra.mxu0 %v969
      %2341 = vmatprep.subr.mxu0 0.0
      %2342 = vmatpush1.msra.mxu0 %v970
      %2343 = vmatprep.subr.mxu0 0.0
      %2344 = vmatpush1.msra.mxu0 %v971
      %2345 = vmatprep.subr.mxu0 0.0
      %2346 = vmatpush1.msra.mxu0 %v972
      %2347 = vmatprep.subr.mxu0 0.0
      %2348 = vmatpush1.msra.mxu0 %v973
      %2349 = vmatprep.subr.mxu0 0.0
      %2350 = vmatpush1.msra.mxu0 %v974
      %2351 = vmatprep.mubr.f32.mxu0 %v2272
      %2352 = vmatmul.mubr.f32.gmra.mrb[0].mxu0 %v2271
      %v2353 = vpop.f32.mrb[0].mxu0
      %v2354 = vadd.f32 0.0, %v2353
      %v2355 = vpop.f32.mrb[0].mxu0
      %2356 = vmatprep.mubr.f32.mxu0 %v2274
      %2357 = vmatmul.mubr.f32.gmra.mrb[0].mxu0 %v2273
      %v2358 = vpop.f32.mrb[0].mxu0
      %v2359 = vadd.f32 0.0, %v2358
      %v2360 = vpop.f32.mrb[0].mxu0
      %2361 = vmatprep.mubr.f32.mxu0 %v2276
      %2362 = vmatmul.mubr.f32.gmra.mrb[0].mxu0 %v2275
      %v2363 = vpop.f32.mrb[0].mxu0
      %v2364 = vadd.f32 0.0, %v2363
      %v2365 = vpop.f32.mrb[0].mxu0
      %2366 = vmatprep.mubr.f32.mxu0 %v2278
      %2367 = vmatmul.mubr.f32.gmra.mrb[0].mxu0 %v2277
      %v2368 = vpop.f32.mrb[0].mxu0
      %v2369 = vadd.f32 0.0, %v2368
      %v2370 = vpop.f32.mrb[0].mxu0
      %2371 = vmatprep.mubr.f32.mxu0 %v2280
      %2372 = vmatmul.mubr.f32.gmra.mrb[0].mxu0 %v2279
      %v2373 = vpop.f32.mrb[0].mxu0
      %v2374 = vadd.f32 0.0, %v2373
      %v2375 = vpop.f32.mrb[0].mxu0
      %2376 = vmatprep.mubr.f32.mxu0 %v2282
      %2377 = vmatmul.mubr.f32.gmra.mrb[0].mxu0 %v2281
      %v2378 = vpop.f32.mrb[0].mxu0
      %v2379 = vadd.f32 0.0, %v2378
      %v2380 = vpop.f32.mrb[0].mxu0
      %2381 = vmatprep.mubr.f32.mxu0 %v2284
      %2382 = vmatmul.mubr.f32.gmra.mrb[0].mxu0 %v2283
      %v2383 = vpop.f32.mrb[0].mxu0
      %v2384 = vadd.f32 0.0, %v2383
      %v2385 = vpop.f32.mrb[0].mxu0
      %2386 = vmatprep.mubr.f32.mxu0 %v2286
      %2387 = vmatmul.mubr.f32.gmra.mrb[0].mxu0 %v2285
      %v2388 = vpop.f32.mrb[0].mxu0
      %v2389 = vadd.f32 0.0, %v2388
      %v2390 = vpop.f32.mrb[0].mxu0
      %2391 = vdwg.mxu0
      %s2392 = scalar_lea.vmem %s2, 80
      %v2393 = vld [vmem:[%s2392] sm:$0xff]
      %v2394 = vld [vmem:[%s2392 + $0x8] sm:$0xff]
      %v2396 = vsel %vm1225, %v2354, 0
      %v2399 = vsel %vm1225, %v2359, 0
      %v2402 = vsel %vm1225, %v2364, 0
      %v2405 = vsel %vm1225, %v2369, 0
      %v2408 = vsel %vm1225, %v2374, 0
      %v2411 = vsel %vm1225, %v2379, 0
      %v2414 = vsel %vm1225, %v2384, 0
      %v2417 = vsel %vm1225, %v2389, 0
      %2419 = vmatprep.subr.mxu0 0.0
      %2420 = vmatpush1.msra.mxu0 %v2393
      %2421 = vmatprep.subr.mxu0 0.0
      %2422 = vmatpush1.msra.mxu0 %v2394
      %2423 = vmatprep.subr.mxu0 0.0
      %2424 = vmatpush1.msra.mxu0 0.0
      %2425 = vmatprep.subr.mxu0 0.0
      %2426 = vmatpush1.msra.mxu0 0.0
      %2427 = vmatprep.subr.mxu0 0.0
      %2428 = vmatpush1.msra.mxu0 0.0
      %2429 = vmatprep.subr.mxu0 0.0
      %2430 = vmatpush1.msra.mxu0 0.0
      %2431 = vmatprep.subr.mxu0 0.0
      %2432 = vmatpush1.msra.mxu0 0.0
      %2433 = vmatprep.subr.mxu0 0.0
      %2434 = vmatpush1.msra.mxu0 0.0
      %2435 = vmatprep.subr.mxu0 0.0
      %2436 = vmatpush1.msra.mxu0 0.0
      %2437 = vmatprep.subr.mxu0 0.0
      %2438 = vmatpush1.msra.mxu0 0.0
      %2439 = vmatprep.subr.mxu0 0.0
      %2440 = vmatpush1.msra.mxu0 0.0
      %2441 = vmatprep.subr.mxu0 0.0
      %2442 = vmatpush1.msra.mxu0 0.0
      %2443 = vmatprep.subr.mxu0 0.0
      %2444 = vmatpush1.msra.mxu0 0.0
      %2445 = vmatprep.subr.mxu0 0.0
      %2446 = vmatpush1.msra.mxu0 0.0
      %2447 = vmatprep.subr.mxu0 0.0
      %2448 = vmatpush1.msra.mxu0 0.0
      %2449 = vmatprep.subr.mxu0 0.0
      %2450 = vmatpush1.msra.mxu0 0.0
      %2451 = vmatprep.subr.mxu0 0.0
      %2452 = vmatpush1.msra.mxu0 0.0
      %2453 = vmatprep.subr.mxu0 0.0
      %2454 = vmatpush1.msra.mxu0 0.0
      %2455 = vmatprep.subr.mxu0 0.0
      %2456 = vmatpush1.msra.mxu0 0.0
      %2457 = vmatprep.subr.mxu0 0.0
      %2458 = vmatpush1.msra.mxu0 0.0
      %2459 = vmatprep.subr.mxu0 0.0
      %2460 = vmatpush1.msra.mxu0 0.0
      %2461 = vmatprep.subr.mxu0 0.0
      %2462 = vmatpush1.msra.mxu0 0.0
      %2463 = vmatprep.subr.mxu0 0.0
      %2464 = vmatpush1.msra.mxu0 0.0
      %2465 = vmatprep.subr.mxu0 0.0
      %2466 = vmatpush1.msra.mxu0 0.0
      %2467 = vmatprep.subr.mxu0 0.0
      %2468 = vmatpush1.msra.mxu0 0.0
      %2469 = vmatprep.subr.mxu0 0.0
      %2470 = vmatpush1.msra.mxu0 0.0
      %2471 = vmatprep.subr.mxu0 0.0
      %2472 = vmatpush1.msra.mxu0 0.0
      %2473 = vmatprep.subr.mxu0 0.0
      %2474 = vmatpush1.msra.mxu0 0.0
      %2475 = vmatprep.subr.mxu0 0.0
      %2476 = vmatpush1.msra.mxu0 0.0
      %2477 = vmatprep.subr.mxu0 0.0
      %2478 = vmatpush1.msra.mxu0 0.0
      %2479 = vmatprep.subr.mxu0 0.0
      %2480 = vmatpush1.msra.mxu0 0.0
      %2481 = vmatprep.subr.mxu0 0.0
      %2482 = vmatpush1.msra.mxu0 0.0
      %2483 = vmatprep.mubr.f32.mxu0 0.0
      %2484 = vmatmul.mubr.f32.gmra.mrb[0].mxu0 %v2396
      %v2485 = vpop.f32.mrb[0].mxu0
      %v2486 = vadd.f32 0.0, %v2485
      %v2487 = vpop.f32.mrb[0].mxu0
      %2488 = vmatprep.mubr.f32.mxu0 0.0
      %2489 = vmatmul.mubr.f32.gmra.mrb[0].mxu0 %v2399
      %v2490 = vpop.f32.mrb[0].mxu0
      %v2491 = vadd.f32 0.0, %v2490
      %v2492 = vpop.f32.mrb[0].mxu0
      %2493 = vmatprep.mubr.f32.mxu0 0.0
      %2494 = vmatmul.mubr.f32.gmra.mrb[0].mxu0 %v2402
      %v2495 = vpop.f32.mrb[0].mxu0
      %v2496 = vadd.f32 0.0, %v2495
      %v2497 = vpop.f32.mrb[0].mxu0
      %2498 = vmatprep.mubr.f32.mxu0 0.0
      %2499 = vmatmul.mubr.f32.gmra.mrb[0].mxu0 %v2405
      %v2500 = vpop.f32.mrb[0].mxu0
      %v2501 = vadd.f32 0.0, %v2500
      %v2502 = vpop.f32.mrb[0].mxu0
      %2503 = vmatprep.mubr.f32.mxu0 0.0
      %2504 = vmatmul.mubr.f32.gmra.mrb[0].mxu0 %v2408
      %v2505 = vpop.f32.mrb[0].mxu0
      %v2506 = vadd.f32 0.0, %v2505
      %v2507 = vpop.f32.mrb[0].mxu0
      %2508 = vmatprep.mubr.f32.mxu0 0.0
      %2509 = vmatmul.mubr.f32.gmra.mrb[0].mxu0 %v2411
      %v2510 = vpop.f32.mrb[0].mxu0
      %v2511 = vadd.f32 0.0, %v2510
      %v2512 = vpop.f32.mrb[0].mxu0
      %2513 = vmatprep.mubr.f32.mxu0 0.0
      %2514 = vmatmul.mubr.f32.gmra.mrb[0].mxu0 %v2414
      %v2515 = vpop.f32.mrb[0].mxu0
      %v2516 = vadd.f32 0.0, %v2515
      %v2517 = vpop.f32.mrb[0].mxu0
      %2518 = vmatprep.mubr.f32.mxu0 0.0
      %2519 = vmatmul.mubr.f32.gmra.mrb[0].mxu0 %v2417
      %v2520 = vpop.f32.mrb[0].mxu0
      %v2521 = vadd.f32 0.0, %v2520
      %v2522 = vpop.f32.mrb[0].mxu0
      %2523 = vdwg.mxu0
      %v2524 = vadd.f32 %v2262, %v2486
      %v2525 = vadd.f32 %v2263, %v2491
      %v2526 = vadd.f32 %v2264, %v2496
      %v2527 = vadd.f32 %v2265, %v2501
      %v2528 = vadd.f32 %v2266, %v2506
      %v2529 = vadd.f32 %v2267, %v2511
      %v2530 = vadd.f32 %v2268, %v2516
      %v2531 = vadd.f32 %v2269, %v2521
      %s2532 = scalar_lea.vmem %s6, 768
      %v2533 = vld [vmem:[%s2532] sm:$0xff]
      %v2534 = vld [vmem:[%s2532 + $0x8] sm:$0xff]
      %v2535 = vld [vmem:[%s2532 + $0x10] sm:$0xff]
      %v2536 = vld [vmem:[%s2532 + $0x18] sm:$0xff]
      %v2537 = vld [vmem:[%s2532 + $0x20] sm:$0xff]
      %v2538 = vld [vmem:[%s2532 + $0x28] sm:$0xff]
      %v2539 = vld [vmem:[%s2532 + $0x30] sm:$0xff]
      %v2540 = vld [vmem:[%s2532 + $0x38] sm:$0xff]
      %v2541 = vld [vmem:[%s2532 + $0x40] sm:$0xff]
      %v2542 = vld [vmem:[%s2532 + $0x48] sm:$0xff]
      %v2543 = vld [vmem:[%s2532 + $0x50] sm:$0xff]
      %v2544 = vld [vmem:[%s2532 + $0x58] sm:$0xff]
      %v2545 = vld [vmem:[%s2532 + $0x60] sm:$0xff]
      %v2546 = vld [vmem:[%s2532 + $0x68] sm:$0xff]
      %v2547 = vld [vmem:[%s2532 + $0x70] sm:$0xff]
      %v2548 = vld [vmem:[%s2532 + $0x78] sm:$0xff]
      %2549 = vmatprep.subr.mxu0 0.0
      %2550 = vmatpush1.msra.mxu0 %v943
      %2551 = vmatprep.subr.mxu0 0.0
      %2552 = vmatpush1.msra.mxu0 %v944
      %2553 = vmatprep.subr.mxu0 0.0
      %2554 = vmatpush1.msra.mxu0 %v945
      %2555 = vmatprep.subr.mxu0 0.0
      %2556 = vmatpush1.msra.mxu0 %v946
      %2557 = vmatprep.subr.mxu0 0.0
      %2558 = vmatpush1.msra.mxu0 %v947
      %2559 = vmatprep.subr.mxu0 0.0
      %2560 = vmatpush1.msra.mxu0 %v948
      %2561 = vmatprep.subr.mxu0 0.0
      %2562 = vmatpush1.msra.mxu0 %v949
      %2563 = vmatprep.subr.mxu0 0.0
      %2564 = vmatpush1.msra.mxu0 %v950
      %2565 = vmatprep.subr.mxu0 0.0
      %2566 = vmatpush1.msra.mxu0 %v951
      %2567 = vmatprep.subr.mxu0 0.0
      %2568 = vmatpush1.msra.mxu0 %v952
      %2569 = vmatprep.subr.mxu0 0.0
      %2570 = vmatpush1.msra.mxu0 %v953
      %2571 = vmatprep.subr.mxu0 0.0
      %2572 = vmatpush1.msra.mxu0 %v954
      %2573 = vmatprep.subr.mxu0 0.0
      %2574 = vmatpush1.msra.mxu0 %v955
      %2575 = vmatprep.subr.mxu0 0.0
      %2576 = vmatpush1.msra.mxu0 %v956
      %2577 = vmatprep.subr.mxu0 0.0
      %2578 = vmatpush1.msra.mxu0 %v957
      %2579 = vmatprep.subr.mxu0 0.0
      %2580 = vmatpush1.msra.mxu0 %v958
      %2581 = vmatprep.subr.mxu0 0.0
      %2582 = vmatpush1.msra.mxu0 %v959
      %2583 = vmatprep.subr.mxu0 0.0
      %2584 = vmatpush1.msra.mxu0 %v960
      %2585 = vmatprep.subr.mxu0 0.0
      %2586 = vmatpush1.msra.mxu0 %v961
      %2587 = vmatprep.subr.mxu0 0.0
      %2588 = vmatpush1.msra.mxu0 %v962
      %2589 = vmatprep.subr.mxu0 0.0
      %2590 = vmatpush1.msra.mxu0 %v963
      %2591 = vmatprep.subr.mxu0 0.0
      %2592 = vmatpush1.msra.mxu0 %v964
      %2593 = vmatprep.subr.mxu0 0.0
      %2594 = vmatpush1.msra.mxu0 %v965
      %2595 = vmatprep.subr.mxu0 0.0
      %2596 = vmatpush1.msra.mxu0 %v966
      %2597 = vmatprep.subr.mxu0 0.0
      %2598 = vmatpush1.msra.mxu0 %v967
      %2599 = vmatprep.subr.mxu0 0.0
      %2600 = vmatpush1.msra.mxu0 %v968
      %2601 = vmatprep.subr.mxu0 0.0
      %2602 = vmatpush1.msra.mxu0 %v969
      %2603 = vmatprep.subr.mxu0 0.0
      %2604 = vmatpush1.msra.mxu0 %v970
      %2605 = vmatprep.subr.mxu0 0.0
      %2606 = vmatpush1.msra.mxu0 %v971
      %2607 = vmatprep.subr.mxu0 0.0
      %2608 = vmatpush1.msra.mxu0 %v972
      %2609 = vmatprep.subr.mxu0 0.0
      %2610 = vmatpush1.msra.mxu0 %v973
      %2611 = vmatprep.subr.mxu0 0.0
      %2612 = vmatpush1.msra.mxu0 %v974
      %2613 = vmatprep.mubr.f32.mxu0 %v2534
      %2614 = vmatmul.mubr.f32.gmra.mrb[0].mxu0 %v2533
      %v2615 = vpop.f32.mrb[0].mxu0
      %v2616 = vadd.f32 0.0, %v2615
      %v2617 = vpop.f32.mrb[0].mxu0
      %2618 = vmatprep.mubr.f32.mxu0 %v2536
      %2619 = vmatmul.mubr.f32.gmra.mrb[0].mxu0 %v2535
      %v2620 = vpop.f32.mrb[0].mxu0
      %v2621 = vadd.f32 0.0, %v2620
      %v2622 = vpop.f32.mrb[0].mxu0
      %2623 = vmatprep.mubr.f32.mxu0 %v2538
      %2624 = vmatmul.mubr.f32.gmra.mrb[0].mxu0 %v2537
      %v2625 = vpop.f32.mrb[0].mxu0
      %v2626 = vadd.f32 0.0, %v2625
      %v2627 = vpop.f32.mrb[0].mxu0
      %2628 = vmatprep.mubr.f32.mxu0 %v2540
      %2629 = vmatmul.mubr.f32.gmra.mrb[0].mxu0 %v2539
      %v2630 = vpop.f32.mrb[0].mxu0
      %v2631 = vadd.f32 0.0, %v2630
      %v2632 = vpop.f32.mrb[0].mxu0
      %2633 = vmatprep.mubr.f32.mxu0 %v2542
      %2634 = vmatmul.mubr.f32.gmra.mrb[0].mxu0 %v2541
      %v2635 = vpop.f32.mrb[0].mxu0
      %v2636 = vadd.f32 0.0, %v2635
      %v2637 = vpop.f32.mrb[0].mxu0
      %2638 = vmatprep.mubr.f32.mxu0 %v2544
      %2639 = vmatmul.mubr.f32.gmra.mrb[0].mxu0 %v2543
      %v2640 = vpop.f32.mrb[0].mxu0
      %v2641 = vadd.f32 0.0, %v2640
      %v2642 = vpop.f32.mrb[0].mxu0
      %2643 = vmatprep.mubr.f32.mxu0 %v2546
      %2644 = vmatmul.mubr.f32.gmra.mrb[0].mxu0 %v2545
      %v2645 = vpop.f32.mrb[0].mxu0
      %v2646 = vadd.f32 0.0, %v2645
      %v2647 = vpop.f32.mrb[0].mxu0
      %2648 = vmatprep.mubr.f32.mxu0 %v2548
      %2649 = vmatmul.mubr.f32.gmra.mrb[0].mxu0 %v2547
      %v2650 = vpop.f32.mrb[0].mxu0
      %v2651 = vadd.f32 0.0, %v2650
      %v2652 = vpop.f32.mrb[0].mxu0
      %2653 = vdwg.mxu0
      %s2654 = scalar_lea.vmem %s2, 96
      %v2655 = vld [vmem:[%s2654] sm:$0xff]
      %v2656 = vld [vmem:[%s2654 + $0x8] sm:$0xff]
      %v2658 = vsel %vm1225, %v2616, 0
      %v2661 = vsel %vm1225, %v2621, 0
      %v2664 = vsel %vm1225, %v2626, 0
      %v2667 = vsel %vm1225, %v2631, 0
      %v2670 = vsel %vm1225, %v2636, 0
      %v2673 = vsel %vm1225, %v2641, 0
      %v2676 = vsel %vm1225, %v2646, 0
      %v2679 = vsel %vm1225, %v2651, 0
      %2681 = vmatprep.subr.mxu0 0.0
      %2682 = vmatpush1.msra.mxu0 %v2655
      %2683 = vmatprep.subr.mxu0 0.0
      %2684 = vmatpush1.msra.mxu0 %v2656
      %2685 = vmatprep.subr.mxu0 0.0
      %2686 = vmatpush1.msra.mxu0 0.0
      %2687 = vmatprep.subr.mxu0 0.0
      %2688 = vmatpush1.msra.mxu0 0.0
      %2689 = vmatprep.subr.mxu0 0.0
      %2690 = vmatpush1.msra.mxu0 0.0
      %2691 = vmatprep.subr.mxu0 0.0
      %2692 = vmatpush1.msra.mxu0 0.0
      %2693 = vmatprep.subr.mxu0 0.0
      %2694 = vmatpush1.msra.mxu0 0.0
      %2695 = vmatprep.subr.mxu0 0.0
      %2696 = vmatpush1.msra.mxu0 0.0
      %2697 = vmatprep.subr.mxu0 0.0
      %2698 = vmatpush1.msra.mxu0 0.0
      %2699 = vmatprep.subr.mxu0 0.0
      %2700 = vmatpush1.msra.mxu0 0.0
      %2701 = vmatprep.subr.mxu0 0.0
      %2702 = vmatpush1.msra.mxu0 0.0
      %2703 = vmatprep.subr.mxu0 0.0
      %2704 = vmatpush1.msra.mxu0 0.0
      %2705 = vmatprep.subr.mxu0 0.0
      %2706 = vmatpush1.msra.mxu0 0.0
      %2707 = vmatprep.subr.mxu0 0.0
      %2708 = vmatpush1.msra.mxu0 0.0
      %2709 = vmatprep.subr.mxu0 0.0
      %2710 = vmatpush1.msra.mxu0 0.0
      %2711 = vmatprep.subr.mxu0 0.0
      %2712 = vmatpush1.msra.mxu0 0.0
      %2713 = vmatprep.subr.mxu0 0.0
      %2714 = vmatpush1.msra.mxu0 0.0
      %2715 = vmatprep.subr.mxu0 0.0
      %2716 = vmatpush1.msra.mxu0 0.0
      %2717 = vmatprep.subr.mxu0 0.0
      %2718 = vmatpush1.msra.mxu0 0.0
      %2719 = vmatprep.subr.mxu0 0.0
      %2720 = vmatpush1.msra.mxu0 0.0
      %2721 = vmatprep.subr.mxu0 0.0
      %2722 = vmatpush1.msra.mxu0 0.0
      %2723 = vmatprep.subr.mxu0 0.0
      %2724 = vmatpush1.msra.mxu0 0.0
      %2725 = vmatprep.subr.mxu0 0.0
      %2726 = vmatpush1.msra.mxu0 0.0
      %2727 = vmatprep.subr.mxu0 0.0
      %2728 = vmatpush1.msra.mxu0 0.0
      %2729 = vmatprep.subr.mxu0 0.0
      %2730 = vmatpush1.msra.mxu0 0.0
      %2731 = vmatprep.subr.mxu0 0.0
      %2732 = vmatpush1.msra.mxu0 0.0
      %2733 = vmatprep.subr.mxu0 0.0
      %2734 = vmatpush1.msra.mxu0 0.0
      %2735 = vmatprep.subr.mxu0 0.0
      %2736 = vmatpush1.msra.mxu0 0.0
      %2737 = vmatprep.subr.mxu0 0.0
      %2738 = vmatpush1.msra.mxu0 0.0
      %2739 = vmatprep.subr.mxu0 0.0
      %2740 = vmatpush1.msra.mxu0 0.0
      %2741 = vmatprep.subr.mxu0 0.0
      %2742 = vmatpush1.msra.mxu0 0.0
      %2743 = vmatprep.subr.mxu0 0.0
      %2744 = vmatpush1.msra.mxu0 0.0
      %2745 = vmatprep.mubr.f32.mxu0 0.0
      %2746 = vmatmul.mubr.f32.gmra.mrb[0].mxu0 %v2658
      %v2747 = vpop.f32.mrb[0].mxu0
      %v2748 = vadd.f32 0.0, %v2747
      %v2749 = vpop.f32.mrb[0].mxu0
      %2750 = vmatprep.mubr.f32.mxu0 0.0
      %2751 = vmatmul.mubr.f32.gmra.mrb[0].mxu0 %v2661
      %v2752 = vpop.f32.mrb[0].mxu0
      %v2753 = vadd.f32 0.0, %v2752
      %v2754 = vpop.f32.mrb[0].mxu0
      %2755 = vmatprep.mubr.f32.mxu0 0.0
      %2756 = vmatmul.mubr.f32.gmra.mrb[0].mxu0 %v2664
      %v2757 = vpop.f32.mrb[0].mxu0
      %v2758 = vadd.f32 0.0, %v2757
      %v2759 = vpop.f32.mrb[0].mxu0
      %2760 = vmatprep.mubr.f32.mxu0 0.0
      %2761 = vmatmul.mubr.f32.gmra.mrb[0].mxu0 %v2667
      %v2762 = vpop.f32.mrb[0].mxu0
      %v2763 = vadd.f32 0.0, %v2762
      %v2764 = vpop.f32.mrb[0].mxu0
      %2765 = vmatprep.mubr.f32.mxu0 0.0
      %2766 = vmatmul.mubr.f32.gmra.mrb[0].mxu0 %v2670
      %v2767 = vpop.f32.mrb[0].mxu0
      %v2768 = vadd.f32 0.0, %v2767
      %v2769 = vpop.f32.mrb[0].mxu0
      %2770 = vmatprep.mubr.f32.mxu0 0.0
      %2771 = vmatmul.mubr.f32.gmra.mrb[0].mxu0 %v2673
      %v2772 = vpop.f32.mrb[0].mxu0
      %v2773 = vadd.f32 0.0, %v2772
      %v2774 = vpop.f32.mrb[0].mxu0
      %2775 = vmatprep.mubr.f32.mxu0 0.0
      %2776 = vmatmul.mubr.f32.gmra.mrb[0].mxu0 %v2676
      %v2777 = vpop.f32.mrb[0].mxu0
      %v2778 = vadd.f32 0.0, %v2777
      %v2779 = vpop.f32.mrb[0].mxu0
      %2780 = vmatprep.mubr.f32.mxu0 0.0
      %2781 = vmatmul.mubr.f32.gmra.mrb[0].mxu0 %v2679
      %v2782 = vpop.f32.mrb[0].mxu0
      %v2783 = vadd.f32 0.0, %v2782
      %v2784 = vpop.f32.mrb[0].mxu0
      %2785 = vdwg.mxu0
      %v2786 = vadd.f32 %v2524, %v2748
      %v2787 = vadd.f32 %v2525, %v2753
      %v2788 = vadd.f32 %v2526, %v2758
      %v2789 = vadd.f32 %v2527, %v2763
      %v2790 = vadd.f32 %v2528, %v2768
      %v2791 = vadd.f32 %v2529, %v2773
      %v2792 = vadd.f32 %v2530, %v2778
      %v2793 = vadd.f32 %v2531, %v2783
      %s2794 = scalar_lea.vmem %s6, 896
      %v2795 = vld [vmem:[%s2794] sm:$0xff]
      %v2796 = vld [vmem:[%s2794 + $0x8] sm:$0xff]
      %v2797 = vld [vmem:[%s2794 + $0x10] sm:$0xff]
      %v2798 = vld [vmem:[%s2794 + $0x18] sm:$0xff]
      %v2799 = vld [vmem:[%s2794 + $0x20] sm:$0xff]
      %v2800 = vld [vmem:[%s2794 + $0x28] sm:$0xff]
      %v2801 = vld [vmem:[%s2794 + $0x30] sm:$0xff]
      %v2802 = vld [vmem:[%s2794 + $0x38] sm:$0xff]
      %v2803 = vld [vmem:[%s2794 + $0x40] sm:$0xff]
      %v2804 = vld [vmem:[%s2794 + $0x48] sm:$0xff]
      %v2805 = vld [vmem:[%s2794 + $0x50] sm:$0xff]
      %v2806 = vld [vmem:[%s2794 + $0x58] sm:$0xff]
      %v2807 = vld [vmem:[%s2794 + $0x60] sm:$0xff]
      %v2808 = vld [vmem:[%s2794 + $0x68] sm:$0xff]
      %v2809 = vld [vmem:[%s2794 + $0x70] sm:$0xff]
      %v2810 = vld [vmem:[%s2794 + $0x78] sm:$0xff]
      %2811 = vmatprep.subr.mxu0 0.0
      %2812 = vmatpush1.msra.mxu0 %v943
      %2813 = vmatprep.subr.mxu0 0.0
      %2814 = vmatpush1.msra.mxu0 %v944
      %2815 = vmatprep.subr.mxu0 0.0
      %2816 = vmatpush1.msra.mxu0 %v945
      %2817 = vmatprep.subr.mxu0 0.0
      %2818 = vmatpush1.msra.mxu0 %v946
      %2819 = vmatprep.subr.mxu0 0.0
      %2820 = vmatpush1.msra.mxu0 %v947
      %2821 = vmatprep.subr.mxu0 0.0
      %2822 = vmatpush1.msra.mxu0 %v948
      %2823 = vmatprep.subr.mxu0 0.0
      %2824 = vmatpush1.msra.mxu0 %v949
      %2825 = vmatprep.subr.mxu0 0.0
      %2826 = vmatpush1.msra.mxu0 %v950
      %2827 = vmatprep.subr.mxu0 0.0
      %2828 = vmatpush1.msra.mxu0 %v951
      %2829 = vmatprep.subr.mxu0 0.0
      %2830 = vmatpush1.msra.mxu0 %v952
      %2831 = vmatprep.subr.mxu0 0.0
      %2832 = vmatpush1.msra.mxu0 %v953
      %2833 = vmatprep.subr.mxu0 0.0
      %2834 = vmatpush1.msra.mxu0 %v954
      %2835 = vmatprep.subr.mxu0 0.0
      %2836 = vmatpush1.msra.mxu0 %v955
      %2837 = vmatprep.subr.mxu0 0.0
      %2838 = vmatpush1.msra.mxu0 %v956
      %2839 = vmatprep.subr.mxu0 0.0
      %2840 = vmatpush1.msra.mxu0 %v957
      %2841 = vmatprep.subr.mxu0 0.0
      %2842 = vmatpush1.msra.mxu0 %v958
      %2843 = vmatprep.subr.mxu0 0.0
      %2844 = vmatpush1.msra.mxu0 %v959
      %2845 = vmatprep.subr.mxu0 0.0
      %2846 = vmatpush1.msra.mxu0 %v960
      %2847 = vmatprep.subr.mxu0 0.0
      %2848 = vmatpush1.msra.mxu0 %v961
      %2849 = vmatprep.subr.mxu0 0.0
      %2850 = vmatpush1.msra.mxu0 %v962
      %2851 = vmatprep.subr.mxu0 0.0
      %2852 = vmatpush1.msra.mxu0 %v963
      %2853 = vmatprep.subr.mxu0 0.0
      %2854 = vmatpush1.msra.mxu0 %v964
      %2855 = vmatprep.subr.mxu0 0.0
      %2856 = vmatpush1.msra.mxu0 %v965
      %2857 = vmatprep.subr.mxu0 0.0
      %2858 = vmatpush1.msra.mxu0 %v966
      %2859 = vmatprep.subr.mxu0 0.0
      %2860 = vmatpush1.msra.mxu0 %v967
      %2861 = vmatprep.subr.mxu0 0.0
      %2862 = vmatpush1.msra.mxu0 %v968
      %2863 = vmatprep.subr.mxu0 0.0
      %2864 = vmatpush1.msra.mxu0 %v969
      %2865 = vmatprep.subr.mxu0 0.0
      %2866 = vmatpush1.msra.mxu0 %v970
      %2867 = vmatprep.subr.mxu0 0.0
      %2868 = vmatpush1.msra.mxu0 %v971
      %2869 = vmatprep.subr.mxu0 0.0
      %2870 = vmatpush1.msra.mxu0 %v972
      %2871 = vmatprep.subr.mxu0 0.0
      %2872 = vmatpush1.msra.mxu0 %v973
      %2873 = vmatprep.subr.mxu0 0.0
      %2874 = vmatpush1.msra.mxu0 %v974
      %2875 = vmatprep.mubr.f32.mxu0 %v2796
      %2876 = vmatmul.mubr.f32.gmra.mrb[0].mxu0 %v2795
      %v2877 = vpop.f32.mrb[0].mxu0
      %v2878 = vadd.f32 0.0, %v2877
      %v2879 = vpop.f32.mrb[0].mxu0
      %2880 = vmatprep.mubr.f32.mxu0 %v2798
      %2881 = vmatmul.mubr.f32.gmra.mrb[0].mxu0 %v2797
      %v2882 = vpop.f32.mrb[0].mxu0
      %v2883 = vadd.f32 0.0, %v2882
      %v2884 = vpop.f32.mrb[0].mxu0
      %2885 = vmatprep.mubr.f32.mxu0 %v2800
      %2886 = vmatmul.mubr.f32.gmra.mrb[0].mxu0 %v2799
      %v2887 = vpop.f32.mrb[0].mxu0
      %v2888 = vadd.f32 0.0, %v2887
      %v2889 = vpop.f32.mrb[0].mxu0
      %2890 = vmatprep.mubr.f32.mxu0 %v2802
      %2891 = vmatmul.mubr.f32.gmra.mrb[0].mxu0 %v2801
      %v2892 = vpop.f32.mrb[0].mxu0
      %v2893 = vadd.f32 0.0, %v2892
      %v2894 = vpop.f32.mrb[0].mxu0
      %2895 = vmatprep.mubr.f32.mxu0 %v2804
      %2896 = vmatmul.mubr.f32.gmra.mrb[0].mxu0 %v2803
      %v2897 = vpop.f32.mrb[0].mxu0
      %v2898 = vadd.f32 0.0, %v2897
      %v2899 = vpop.f32.mrb[0].mxu0
      %2900 = vmatprep.mubr.f32.mxu0 %v2806
      %2901 = vmatmul.mubr.f32.gmra.mrb[0].mxu0 %v2805
      %v2902 = vpop.f32.mrb[0].mxu0
      %v2903 = vadd.f32 0.0, %v2902
      %v2904 = vpop.f32.mrb[0].mxu0
      %2905 = vmatprep.mubr.f32.mxu0 %v2808
      %2906 = vmatmul.mubr.f32.gmra.mrb[0].mxu0 %v2807
      %v2907 = vpop.f32.mrb[0].mxu0
      %v2908 = vadd.f32 0.0, %v2907
      %v2909 = vpop.f32.mrb[0].mxu0
      %2910 = vmatprep.mubr.f32.mxu0 %v2810
      %2911 = vmatmul.mubr.f32.gmra.mrb[0].mxu0 %v2809
      %v2912 = vpop.f32.mrb[0].mxu0
      %v2913 = vadd.f32 0.0, %v2912
      %v2914 = vpop.f32.mrb[0].mxu0
      %2915 = vdwg.mxu0
      %s2916 = scalar_lea.vmem %s2, 112
      %v2917 = vld [vmem:[%s2916] sm:$0xff]
      %v2918 = vld [vmem:[%s2916 + $0x8] sm:$0xff]
      %v2920 = vsel %vm1225, %v2878, 0
      %v2923 = vsel %vm1225, %v2883, 0
      %v2926 = vsel %vm1225, %v2888, 0
      %v2929 = vsel %vm1225, %v2893, 0
      %v2932 = vsel %vm1225, %v2898, 0
      %v2935 = vsel %vm1225, %v2903, 0
      %v2938 = vsel %vm1225, %v2908, 0
      %v2941 = vsel %vm1225, %v2913, 0
      %2943 = vmatprep.subr.mxu0 0.0
      %2944 = vmatpush1.msra.mxu0 %v2917
      %2945 = vmatprep.subr.mxu0 0.0
      %2946 = vmatpush1.msra.mxu0 %v2918
      %2947 = vmatprep.subr.mxu0 0.0
      %2948 = vmatpush1.msra.mxu0 0.0
      %2949 = vmatprep.subr.mxu0 0.0
      %2950 = vmatpush1.msra.mxu0 0.0
      %2951 = vmatprep.subr.mxu0 0.0
      %2952 = vmatpush1.msra.mxu0 0.0
      %2953 = vmatprep.subr.mxu0 0.0
      %2954 = vmatpush1.msra.mxu0 0.0
      %2955 = vmatprep.subr.mxu0 0.0
      %2956 = vmatpush1.msra.mxu0 0.0
      %2957 = vmatprep.subr.mxu0 0.0
      %2958 = vmatpush1.msra.mxu0 0.0
      %2959 = vmatprep.subr.mxu0 0.0
      %2960 = vmatpush1.msra.mxu0 0.0
      %2961 = vmatprep.subr.mxu0 0.0
      %2962 = vmatpush1.msra.mxu0 0.0
      %2963 = vmatprep.subr.mxu0 0.0
      %2964 = vmatpush1.msra.mxu0 0.0
      %2965 = vmatprep.subr.mxu0 0.0
      %2966 = vmatpush1.msra.mxu0 0.0
      %2967 = vmatprep.subr.mxu0 0.0
      %2968 = vmatpush1.msra.mxu0 0.0
      %2969 = vmatprep.subr.mxu0 0.0
      %2970 = vmatpush1.msra.mxu0 0.0
      %2971 = vmatprep.subr.mxu0 0.0
      %2972 = vmatpush1.msra.mxu0 0.0
      %2973 = vmatprep.subr.mxu0 0.0
      %2974 = vmatpush1.msra.mxu0 0.0
      %2975 = vmatprep.subr.mxu0 0.0
      %2976 = vmatpush1.msra.mxu0 0.0
      %2977 = vmatprep.subr.mxu0 0.0
      %2978 = vmatpush1.msra.mxu0 0.0
      %2979 = vmatprep.subr.mxu0 0.0
      %2980 = vmatpush1.msra.mxu0 0.0
      %2981 = vmatprep.subr.mxu0 0.0
      %2982 = vmatpush1.msra.mxu0 0.0
      %2983 = vmatprep.subr.mxu0 0.0
      %2984 = vmatpush1.msra.mxu0 0.0
      %2985 = vmatprep.subr.mxu0 0.0
      %2986 = vmatpush1.msra.mxu0 0.0
      %2987 = vmatprep.subr.mxu0 0.0
      %2988 = vmatpush1.msra.mxu0 0.0
      %2989 = vmatprep.subr.mxu0 0.0
      %2990 = vmatpush1.msra.mxu0 0.0
      %2991 = vmatprep.subr.mxu0 0.0
      %2992 = vmatpush1.msra.mxu0 0.0
      %2993 = vmatprep.subr.mxu0 0.0
      %2994 = vmatpush1.msra.mxu0 0.0
      %2995 = vmatprep.subr.mxu0 0.0
      %2996 = vmatpush1.msra.mxu0 0.0
      %2997 = vmatprep.subr.mxu0 0.0
      %2998 = vmatpush1.msra.mxu0 0.0
      %2999 = vmatprep.subr.mxu0 0.0
      %3000 = vmatpush1.msra.mxu0 0.0
      %3001 = vmatprep.subr.mxu0 0.0
      %3002 = vmatpush1.msra.mxu0 0.0
      %3003 = vmatprep.subr.mxu0 0.0
      %3004 = vmatpush1.msra.mxu0 0.0
      %3005 = vmatprep.subr.mxu0 0.0
      %3006 = vmatpush1.msra.mxu0 0.0
      %3007 = vmatprep.mubr.f32.mxu0 0.0
      %3008 = vmatmul.mubr.f32.gmra.mrb[0].mxu0 %v2920
      %v3009 = vpop.f32.mrb[0].mxu0
      %v3010 = vadd.f32 0.0, %v3009
      %v3011 = vpop.f32.mrb[0].mxu0
      %3012 = vmatprep.mubr.f32.mxu0 0.0
      %3013 = vmatmul.mubr.f32.gmra.mrb[0].mxu0 %v2923
      %v3014 = vpop.f32.mrb[0].mxu0
      %v3015 = vadd.f32 0.0, %v3014
      %v3016 = vpop.f32.mrb[0].mxu0
      %3017 = vmatprep.mubr.f32.mxu0 0.0
      %3018 = vmatmul.mubr.f32.gmra.mrb[0].mxu0 %v2926
      %v3019 = vpop.f32.mrb[0].mxu0
      %v3020 = vadd.f32 0.0, %v3019
      %v3021 = vpop.f32.mrb[0].mxu0
      %3022 = vmatprep.mubr.f32.mxu0 0.0
      %3023 = vmatmul.mubr.f32.gmra.mrb[0].mxu0 %v2929
      %v3024 = vpop.f32.mrb[0].mxu0
      %v3025 = vadd.f32 0.0, %v3024
      %v3026 = vpop.f32.mrb[0].mxu0
      %3027 = vmatprep.mubr.f32.mxu0 0.0
      %3028 = vmatmul.mubr.f32.gmra.mrb[0].mxu0 %v2932
      %v3029 = vpop.f32.mrb[0].mxu0
      %v3030 = vadd.f32 0.0, %v3029
      %v3031 = vpop.f32.mrb[0].mxu0
      %3032 = vmatprep.mubr.f32.mxu0 0.0
      %3033 = vmatmul.mubr.f32.gmra.mrb[0].mxu0 %v2935
      %v3034 = vpop.f32.mrb[0].mxu0
      %v3035 = vadd.f32 0.0, %v3034
      %v3036 = vpop.f32.mrb[0].mxu0
      %3037 = vmatprep.mubr.f32.mxu0 0.0
      %3038 = vmatmul.mubr.f32.gmra.mrb[0].mxu0 %v2938
      %v3039 = vpop.f32.mrb[0].mxu0
      %v3040 = vadd.f32 0.0, %v3039
      %v3041 = vpop.f32.mrb[0].mxu0
      %3042 = vmatprep.mubr.f32.mxu0 0.0
      %3043 = vmatmul.mubr.f32.gmra.mrb[0].mxu0 %v2941
      %v3044 = vpop.f32.mrb[0].mxu0
      %v3045 = vadd.f32 0.0, %v3044
      %v3046 = vpop.f32.mrb[0].mxu0
      %3047 = vdwg.mxu0
      %v3048 = vadd.f32 %v2786, %v3010
      %v3049 = vadd.f32 %v2787, %v3015
      %v3050 = vadd.f32 %v2788, %v3020
      %v3051 = vadd.f32 %v2789, %v3025
      %v3052 = vadd.f32 %v2790, %v3030
      %v3053 = vadd.f32 %v2791, %v3035
      %v3054 = vadd.f32 %v2792, %v3040
      %v3055 = vadd.f32 %v2793, %v3045
      %s3056 = scalar_lea.vmem %s6, 1024
      %v3057 = vld [vmem:[%s3056] sm:$0xff]
      %v3058 = vld [vmem:[%s3056 + $0x8] sm:$0xff]
      %v3059 = vld [vmem:[%s3056 + $0x10] sm:$0xff]
      %v3060 = vld [vmem:[%s3056 + $0x18] sm:$0xff]
      %v3061 = vld [vmem:[%s3056 + $0x20] sm:$0xff]
      %v3062 = vld [vmem:[%s3056 + $0x28] sm:$0xff]
      %v3063 = vld [vmem:[%s3056 + $0x30] sm:$0xff]
      %v3064 = vld [vmem:[%s3056 + $0x38] sm:$0xff]
      %v3065 = vld [vmem:[%s3056 + $0x40] sm:$0xff]
      %v3066 = vld [vmem:[%s3056 + $0x48] sm:$0xff]
      %v3067 = vld [vmem:[%s3056 + $0x50] sm:$0xff]
      %v3068 = vld [vmem:[%s3056 + $0x58] sm:$0xff]
      %v3069 = vld [vmem:[%s3056 + $0x60] sm:$0xff]
      %v3070 = vld [vmem:[%s3056 + $0x68] sm:$0xff]
      %v3071 = vld [vmem:[%s3056 + $0x70] sm:$0xff]
      %v3072 = vld [vmem:[%s3056 + $0x78] sm:$0xff]
      %3073 = vmatprep.subr.mxu0 0.0
      %3074 = vmatpush1.msra.mxu0 %v943
      %3075 = vmatprep.subr.mxu0 0.0
      %3076 = vmatpush1.msra.mxu0 %v944
      %3077 = vmatprep.subr.mxu0 0.0
      %3078 = vmatpush1.msra.mxu0 %v945
      %3079 = vmatprep.subr.mxu0 0.0
      %3080 = vmatpush1.msra.mxu0 %v946
      %3081 = vmatprep.subr.mxu0 0.0
      %3082 = vmatpush1.msra.mxu0 %v947
      %3083 = vmatprep.subr.mxu0 0.0
      %3084 = vmatpush1.msra.mxu0 %v948
      %3085 = vmatprep.subr.mxu0 0.0
      %3086 = vmatpush1.msra.mxu0 %v949
      %3087 = vmatprep.subr.mxu0 0.0
      %3088 = vmatpush1.msra.mxu0 %v950
      %3089 = vmatprep.subr.mxu0 0.0
      %3090 = vmatpush1.msra.mxu0 %v951
      %3091 = vmatprep.subr.mxu0 0.0
      %3092 = vmatpush1.msra.mxu0 %v952
      %3093 = vmatprep.subr.mxu0 0.0
      %3094 = vmatpush1.msra.mxu0 %v953
      %3095 = vmatprep.subr.mxu0 0.0
      %3096 = vmatpush1.msra.mxu0 %v954
      %3097 = vmatprep.subr.mxu0 0.0
      %3098 = vmatpush1.msra.mxu0 %v955
      %3099 = vmatprep.subr.mxu0 0.0
      %3100 = vmatpush1.msra.mxu0 %v956
      %3101 = vmatprep.subr.mxu0 0.0
      %3102 = vmatpush1.msra.mxu0 %v957
      %3103 = vmatprep.subr.mxu0 0.0
      %3104 = vmatpush1.msra.mxu0 %v958
      %3105 = vmatprep.subr.mxu0 0.0
      %3106 = vmatpush1.msra.mxu0 %v959
      %3107 = vmatprep.subr.mxu0 0.0
      %3108 = vmatpush1.msra.mxu0 %v960
      %3109 = vmatprep.subr.mxu0 0.0
      %3110 = vmatpush1.msra.mxu0 %v961
      %3111 = vmatprep.subr.mxu0 0.0
      %3112 = vmatpush1.msra.mxu0 %v962
      %3113 = vmatprep.subr.mxu0 0.0
      %3114 = vmatpush1.msra.mxu0 %v963
      %3115 = vmatprep.subr.mxu0 0.0
      %3116 = vmatpush1.msra.mxu0 %v964
      %3117 = vmatprep.subr.mxu0 0.0
      %3118 = vmatpush1.msra.mxu0 %v965
      %3119 = vmatprep.subr.mxu0 0.0
      %3120 = vmatpush1.msra.mxu0 %v966
      %3121 = vmatprep.subr.mxu0 0.0
      %3122 = vmatpush1.msra.mxu0 %v967
      %3123 = vmatprep.subr.mxu0 0.0
      %3124 = vmatpush1.msra.mxu0 %v968
      %3125 = vmatprep.subr.mxu0 0.0
      %3126 = vmatpush1.msra.mxu0 %v969
      %3127 = vmatprep.subr.mxu0 0.0
      %3128 = vmatpush1.msra.mxu0 %v970
      %3129 = vmatprep.subr.mxu0 0.0
      %3130 = vmatpush1.msra.mxu0 %v971
      %3131 = vmatprep.subr.mxu0 0.0
      %3132 = vmatpush1.msra.mxu0 %v972
      %3133 = vmatprep.subr.mxu0 0.0
      %3134 = vmatpush1.msra.mxu0 %v973
      %3135 = vmatprep.subr.mxu0 0.0
      %3136 = vmatpush1.msra.mxu0 %v974
      %3137 = vmatprep.mubr.f32.mxu0 %v3058
      %3138 = vmatmul.mubr.f32.gmra.mrb[0].mxu0 %v3057
      %v3139 = vpop.f32.mrb[0].mxu0
      %v3140 = vadd.f32 0.0, %v3139
      %v3141 = vpop.f32.mrb[0].mxu0
      %3142 = vmatprep.mubr.f32.mxu0 %v3060
      %3143 = vmatmul.mubr.f32.gmra.mrb[0].mxu0 %v3059
      %v3144 = vpop.f32.mrb[0].mxu0
      %v3145 = vadd.f32 0.0, %v3144
      %v3146 = vpop.f32.mrb[0].mxu0
      %3147 = vmatprep.mubr.f32.mxu0 %v3062
      %3148 = vmatmul.mubr.f32.gmra.mrb[0].mxu0 %v3061
      %v3149 = vpop.f32.mrb[0].mxu0
      %v3150 = vadd.f32 0.0, %v3149
      %v3151 = vpop.f32.mrb[0].mxu0
      %3152 = vmatprep.mubr.f32.mxu0 %v3064
      %3153 = vmatmul.mubr.f32.gmra.mrb[0].mxu0 %v3063
      %v3154 = vpop.f32.mrb[0].mxu0
      %v3155 = vadd.f32 0.0, %v3154
      %v3156 = vpop.f32.mrb[0].mxu0
      %3157 = vmatprep.mubr.f32.mxu0 %v3066
      %3158 = vmatmul.mubr.f32.gmra.mrb[0].mxu0 %v3065
      %v3159 = vpop.f32.mrb[0].mxu0
      %v3160 = vadd.f32 0.0, %v3159
      %v3161 = vpop.f32.mrb[0].mxu0
      %3162 = vmatprep.mubr.f32.mxu0 %v3068
      %3163 = vmatmul.mubr.f32.gmra.mrb[0].mxu0 %v3067
      %v3164 = vpop.f32.mrb[0].mxu0
      %v3165 = vadd.f32 0.0, %v3164
      %v3166 = vpop.f32.mrb[0].mxu0
      %3167 = vmatprep.mubr.f32.mxu0 %v3070
      %3168 = vmatmul.mubr.f32.gmra.mrb[0].mxu0 %v3069
      %v3169 = vpop.f32.mrb[0].mxu0
      %v3170 = vadd.f32 0.0, %v3169
      %v3171 = vpop.f32.mrb[0].mxu0
      %3172 = vmatprep.mubr.f32.mxu0 %v3072
      %3173 = vmatmul.mubr.f32.gmra.mrb[0].mxu0 %v3071
      %v3174 = vpop.f32.mrb[0].mxu0
      %v3175 = vadd.f32 0.0, %v3174
      %v3176 = vpop.f32.mrb[0].mxu0
      %3177 = vdwg.mxu0
      %s3178 = scalar_lea.vmem %s2, 128
      %v3179 = vld [vmem:[%s3178] sm:$0xff]
      %v3180 = vld [vmem:[%s3178 + $0x8] sm:$0xff]
      %v3182 = vsel %vm1225, %v3140, 0
      %v3185 = vsel %vm1225, %v3145, 0
      %v3188 = vsel %vm1225, %v3150, 0
      %v3191 = vsel %vm1225, %v3155, 0
      %v3194 = vsel %vm1225, %v3160, 0
      %v3197 = vsel %vm1225, %v3165, 0
      %v3200 = vsel %vm1225, %v3170, 0
      %v3203 = vsel %vm1225, %v3175, 0
      %3205 = vmatprep.subr.mxu0 0.0
      %3206 = vmatpush1.msra.mxu0 %v3179
      %3207 = vmatprep.subr.mxu0 0.0
      %3208 = vmatpush1.msra.mxu0 %v3180
      %3209 = vmatprep.subr.mxu0 0.0
      %3210 = vmatpush1.msra.mxu0 0.0
      %3211 = vmatprep.subr.mxu0 0.0
      %3212 = vmatpush1.msra.mxu0 0.0
      %3213 = vmatprep.subr.mxu0 0.0
      %3214 = vmatpush1.msra.mxu0 0.0
      %3215 = vmatprep.subr.mxu0 0.0
      %3216 = vmatpush1.msra.mxu0 0.0
      %3217 = vmatprep.subr.mxu0 0.0
      %3218 = vmatpush1.msra.mxu0 0.0
      %3219 = vmatprep.subr.mxu0 0.0
      %3220 = vmatpush1.msra.mxu0 0.0
      %3221 = vmatprep.subr.mxu0 0.0
      %3222 = vmatpush1.msra.mxu0 0.0
      %3223 = vmatprep.subr.mxu0 0.0
      %3224 = vmatpush1.msra.mxu0 0.0
      %3225 = vmatprep.subr.mxu0 0.0
      %3226 = vmatpush1.msra.mxu0 0.0
      %3227 = vmatprep.subr.mxu0 0.0
      %3228 = vmatpush1.msra.mxu0 0.0
      %3229 = vmatprep.subr.mxu0 0.0
      %3230 = vmatpush1.msra.mxu0 0.0
      %3231 = vmatprep.subr.mxu0 0.0
      %3232 = vmatpush1.msra.mxu0 0.0
      %3233 = vmatprep.subr.mxu0 0.0
      %3234 = vmatpush1.msra.mxu0 0.0
      %3235 = vmatprep.subr.mxu0 0.0
      %3236 = vmatpush1.msra.mxu0 0.0
      %3237 = vmatprep.subr.mxu0 0.0
      %3238 = vmatpush1.msra.mxu0 0.0
      %3239 = vmatprep.subr.mxu0 0.0
      %3240 = vmatpush1.msra.mxu0 0.0
      %3241 = vmatprep.subr.mxu0 0.0
      %3242 = vmatpush1.msra.mxu0 0.0
      %3243 = vmatprep.subr.mxu0 0.0
      %3244 = vmatpush1.msra.mxu0 0.0
      %3245 = vmatprep.subr.mxu0 0.0
      %3246 = vmatpush1.msra.mxu0 0.0
      %3247 = vmatprep.subr.mxu0 0.0
      %3248 = vmatpush1.msra.mxu0 0.0
      %3249 = vmatprep.subr.mxu0 0.0
      %3250 = vmatpush1.msra.mxu0 0.0
      %3251 = vmatprep.subr.mxu0 0.0
      %3252 = vmatpush1.msra.mxu0 0.0
      %3253 = vmatprep.subr.mxu0 0.0
      %3254 = vmatpush1.msra.mxu0 0.0
      %3255 = vmatprep.subr.mxu0 0.0
      %3256 = vmatpush1.msra.mxu0 0.0
      %3257 = vmatprep.subr.mxu0 0.0
      %3258 = vmatpush1.msra.mxu0 0.0
      %3259 = vmatprep.subr.mxu0 0.0
      %3260 = vmatpush1.msra.mxu0 0.0
      %3261 = vmatprep.subr.mxu0 0.0
      %3262 = vmatpush1.msra.mxu0 0.0
      %3263 = vmatprep.subr.mxu0 0.0
      %3264 = vmatpush1.msra.mxu0 0.0
      %3265 = vmatprep.subr.mxu0 0.0
      %3266 = vmatpush1.msra.mxu0 0.0
      %3267 = vmatprep.subr.mxu0 0.0
      %3268 = vmatpush1.msra.mxu0 0.0
      %3269 = vmatprep.mubr.f32.mxu0 0.0
      %3270 = vmatmul.mubr.f32.gmra.mrb[0].mxu0 %v3182
      %v3271 = vpop.f32.mrb[0].mxu0
      %v3272 = vadd.f32 0.0, %v3271
      %v3273 = vpop.f32.mrb[0].mxu0
      %3274 = vmatprep.mubr.f32.mxu0 0.0
      %3275 = vmatmul.mubr.f32.gmra.mrb[0].mxu0 %v3185
      %v3276 = vpop.f32.mrb[0].mxu0
      %v3277 = vadd.f32 0.0, %v3276
      %v3278 = vpop.f32.mrb[0].mxu0
      %3279 = vmatprep.mubr.f32.mxu0 0.0
      %3280 = vmatmul.mubr.f32.gmra.mrb[0].mxu0 %v3188
      %v3281 = vpop.f32.mrb[0].mxu0
      %v3282 = vadd.f32 0.0, %v3281
      %v3283 = vpop.f32.mrb[0].mxu0
      %3284 = vmatprep.mubr.f32.mxu0 0.0
      %3285 = vmatmul.mubr.f32.gmra.mrb[0].mxu0 %v3191
      %v3286 = vpop.f32.mrb[0].mxu0
      %v3287 = vadd.f32 0.0, %v3286
      %v3288 = vpop.f32.mrb[0].mxu0
      %3289 = vmatprep.mubr.f32.mxu0 0.0
      %3290 = vmatmul.mubr.f32.gmra.mrb[0].mxu0 %v3194
      %v3291 = vpop.f32.mrb[0].mxu0
      %v3292 = vadd.f32 0.0, %v3291
      %v3293 = vpop.f32.mrb[0].mxu0
      %3294 = vmatprep.mubr.f32.mxu0 0.0
      %3295 = vmatmul.mubr.f32.gmra.mrb[0].mxu0 %v3197
      %v3296 = vpop.f32.mrb[0].mxu0
      %v3297 = vadd.f32 0.0, %v3296
      %v3298 = vpop.f32.mrb[0].mxu0
      %3299 = vmatprep.mubr.f32.mxu0 0.0
      %3300 = vmatmul.mubr.f32.gmra.mrb[0].mxu0 %v3200
      %v3301 = vpop.f32.mrb[0].mxu0
      %v3302 = vadd.f32 0.0, %v3301
      %v3303 = vpop.f32.mrb[0].mxu0
      %3304 = vmatprep.mubr.f32.mxu0 0.0
      %3305 = vmatmul.mubr.f32.gmra.mrb[0].mxu0 %v3203
      %v3306 = vpop.f32.mrb[0].mxu0
      %v3307 = vadd.f32 0.0, %v3306
      %v3308 = vpop.f32.mrb[0].mxu0
      %3309 = vdwg.mxu0
      %v3310 = vadd.f32 %v3048, %v3272
      %v3311 = vadd.f32 %v3049, %v3277
      %v3312 = vadd.f32 %v3050, %v3282
      %v3313 = vadd.f32 %v3051, %v3287
      %v3314 = vadd.f32 %v3052, %v3292
      %v3315 = vadd.f32 %v3053, %v3297
      %v3316 = vadd.f32 %v3054, %v3302
      %v3317 = vadd.f32 %v3055, %v3307
      %v3318 = vlaneseq
      %v3319 = vshrl.u32 %v3318, 7
      %v3320 = vsub.s32 0, %v3319
      %v3321 = vrot.slane %v976, %v3320
      %v3322 = vadd.f32 %v3310, %v3321
      %v3323 = vadd.f32 %v3311, %v3321
      %v3324 = vadd.f32 %v3312, %v3321
      %v3325 = vadd.f32 %v3313, %v3321
      %v3326 = vadd.f32 %v3314, %v3321
      %v3327 = vadd.f32 %v3315, %v3321
      %v3328 = vadd.f32 %v3316, %v3321
      %v3329 = vadd.f32 %v3317, %v3321
      %vm3330 = vcmp.ge.f32.partialorder %v3322, 0.0
      %vm3331 = vcmp.ge.f32.partialorder %v3323, 0.0
      %vm3332 = vcmp.ge.f32.partialorder %v3324, 0.0
      %vm3333 = vcmp.ge.f32.partialorder %v3325, 0.0
      %vm3334 = vcmp.ge.f32.partialorder %v3326, 0.0
      %vm3335 = vcmp.ge.f32.partialorder %v3327, 0.0
      %vm3336 = vcmp.ge.f32.partialorder %v3328, 0.0
      %vm3337 = vcmp.ge.f32.partialorder %v3329, 0.0
      %v3338 = vmul.f32 %v3322, 0.2
      %v3339 = vmul.f32 %v3323, 0.2
      %v3340 = vmul.f32 %v3324, 0.2
      %v3341 = vmul.f32 %v3325, 0.2
      %v3342 = vmul.f32 %v3326, 0.2
      %v3343 = vmul.f32 %v3327, 0.2
      %v3344 = vmul.f32 %v3328, 0.2
      %v3345 = vmul.f32 %v3329, 0.2
      %v3346 = vsel %vm3330, %v3322, %v3338
      %v3347 = vsel %vm3331, %v3323, %v3339
      %v3348 = vsel %vm3332, %v3324, %v3340
      %v3349 = vsel %vm3333, %v3325, %v3341
      %v3350 = vsel %vm3334, %v3326, %v3342
      %v3351 = vsel %vm3335, %v3327, %v3343
      %v3352 = vsel %vm3336, %v3328, %v3344
      %v3353 = vsel %vm3337, %v3329, %v3345
      %v3354 = vlaneseq
      %v3355 = vshrl.u32 %v3354, 7
      %v3356 = vsub.s32 1, %v3355
      %v3357 = vrot.slane %v976, %v3356
      %v3358 = vmul.f32 %v3346, %v3357
      %v3359 = vmul.f32 %v3347, %v3357
      %v3360 = vmul.f32 %v3348, %v3357
      %v3361 = vmul.f32 %v3349, %v3357
      %v3362 = vmul.f32 %v3350, %v3357
      %v3363 = vmul.f32 %v3351, %v3357
      %v3364 = vmul.f32 %v3352, %v3357
      %v3365 = vmul.f32 %v3353, %v3357
      %v3366 = vlaneseq
      %v3367 = vshrl.u32 %v3366, 7
      %v3368 = vsub.s32 2, %v3367
      %v3369 = vrot.slane %v976, %v3368
      %v3370 = vadd.f32 %v3358, %v3369
      %v3371 = vadd.f32 %v3359, %v3369
      %v3372 = vadd.f32 %v3360, %v3369
      %v3373 = vadd.f32 %v3361, %v3369
      %v3374 = vadd.f32 %v3362, %v3369
      %v3375 = vadd.f32 %v3363, %v3369
      %v3376 = vadd.f32 %v3364, %v3369
      %v3377 = vadd.f32 %v3365, %v3369
      %s3378 = scalar_lea.vmem %s10, 16
      %v3379 = vld [vmem:[%s3378] sm:$0x77]
      %v3380 = vld [vmem:[%s7] sm:$0xff]
      %v3381 = vld [vmem:[%s7 + $0x8] sm:$0xff]
      %vm3382 = vcmask 523264
      %v3384 = vsel %vm3382, %v3380, 0
      %v3387 = vsel %vm3382, %v3381, 0
      %3389 = vmatprep.subr.mxu0 0.0
      %3390 = vmatpush1.msra.mxu0 %v3370
      %3391 = vmatprep.subr.mxu0 0.0
      %3392 = vmatpush1.msra.mxu0 %v3371
      %3393 = vmatprep.subr.mxu0 0.0
      %3394 = vmatpush1.msra.mxu0 %v3372
      %3395 = vmatprep.subr.mxu0 0.0
      %3396 = vmatpush1.msra.mxu0 %v3373
      %3397 = vmatprep.subr.mxu0 0.0
      %3398 = vmatpush1.msra.mxu0 %v3374
      %3399 = vmatprep.subr.mxu0 0.0
      %3400 = vmatpush1.msra.mxu0 %v3375
      %3401 = vmatprep.subr.mxu0 0.0
      %3402 = vmatpush1.msra.mxu0 %v3376
      %3403 = vmatprep.subr.mxu0 0.0
      %3404 = vmatpush1.msra.mxu0 %v3377
      %3405 = vmatprep.subr.mxu0 0.0
      %3406 = vmatpush1.msra.mxu0 0.0
      %3407 = vmatprep.subr.mxu0 0.0
      %3408 = vmatpush1.msra.mxu0 0.0
      %3409 = vmatprep.subr.mxu0 0.0
      %3410 = vmatpush1.msra.mxu0 0.0
      %3411 = vmatprep.subr.mxu0 0.0
      %3412 = vmatpush1.msra.mxu0 0.0
      %3413 = vmatprep.subr.mxu0 0.0
      %3414 = vmatpush1.msra.mxu0 0.0
      %3415 = vmatprep.subr.mxu0 0.0
      %3416 = vmatpush1.msra.mxu0 0.0
      %3417 = vmatprep.subr.mxu0 0.0
      %3418 = vmatpush1.msra.mxu0 0.0
      %3419 = vmatprep.subr.mxu0 0.0
      %3420 = vmatpush1.msra.mxu0 0.0
      %3421 = vmatprep.subr.mxu0 0.0
      %3422 = vmatpush1.msra.mxu0 0.0
      %3423 = vmatprep.subr.mxu0 0.0
      %3424 = vmatpush1.msra.mxu0 0.0
      %3425 = vmatprep.subr.mxu0 0.0
      %3426 = vmatpush1.msra.mxu0 0.0
      %3427 = vmatprep.subr.mxu0 0.0
      %3428 = vmatpush1.msra.mxu0 0.0
      %3429 = vmatprep.subr.mxu0 0.0
      %3430 = vmatpush1.msra.mxu0 0.0
      %3431 = vmatprep.subr.mxu0 0.0
      %3432 = vmatpush1.msra.mxu0 0.0
      %3433 = vmatprep.subr.mxu0 0.0
      %3434 = vmatpush1.msra.mxu0 0.0
      %3435 = vmatprep.subr.mxu0 0.0
      %3436 = vmatpush1.msra.mxu0 0.0
      %3437 = vmatprep.subr.mxu0 0.0
      %3438 = vmatpush1.msra.mxu0 0.0
      %3439 = vmatprep.subr.mxu0 0.0
      %3440 = vmatpush1.msra.mxu0 0.0
      %3441 = vmatprep.subr.mxu0 0.0
      %3442 = vmatpush1.msra.mxu0 0.0
      %3443 = vmatprep.subr.mxu0 0.0
      %3444 = vmatpush1.msra.mxu0 0.0
      %3445 = vmatprep.subr.mxu0 0.0
      %3446 = vmatpush1.msra.mxu0 0.0
      %3447 = vmatprep.subr.mxu0 0.0
      %3448 = vmatpush1.msra.mxu0 0.0
      %3449 = vmatprep.subr.mxu0 0.0
      %3450 = vmatpush1.msra.mxu0 0.0
      %3451 = vmatprep.subr.mxu0 0.0
      %3452 = vmatpush1.msra.mxu0 0.0
      %3453 = vmatprep.mubr.f32.mxu0 0.0
      %3454 = vmatmul.mubr.f32.gmra.mrb[0].mxu0 %v3384
      %v3455 = vpop.f32.mrb[0].mxu0
      %v3456 = vadd.f32 0.0, %v3455
      %v3457 = vpop.f32.mrb[0].mxu0
      %3458 = vmatprep.mubr.f32.mxu0 0.0
      %3459 = vmatmul.mubr.f32.gmra.mrb[0].mxu0 %v3387
      %v3460 = vpop.f32.mrb[0].mxu0
      %v3461 = vadd.f32 0.0, %v3460
      %v3462 = vpop.f32.mrb[0].mxu0
      %3463 = vdwg.mxu0
      %v3464 = vld [vmem:[%s3] sm:$0xff]
      %v3465 = vld [vmem:[%s3 + $0x8] sm:$0xff]
      %v3466 = vld [vmem:[%s3 + $0x10] sm:$0xff]
      %v3467 = vld [vmem:[%s3 + $0x18] sm:$0xff]
      %s3468 = scalar_lea.vmem %s7, 16
      %v3469 = vld [vmem:[%s3468] sm:$0xff]
      %v3470 = vld [vmem:[%s3468 + $0x8] sm:$0xff]
      %v3472 = vsel %vm3382, %v3469, 0
      %v3475 = vsel %vm3382, %v3470, 0
      %3477 = vmatprep.subr.mxu0 0.0
      %3478 = vmatpush1.msra.mxu0 %v3370
      %3479 = vmatprep.subr.mxu0 0.0
      %3480 = vmatpush1.msra.mxu0 %v3371
      %3481 = vmatprep.subr.mxu0 0.0
      %3482 = vmatpush1.msra.mxu0 %v3372
      %3483 = vmatprep.subr.mxu0 0.0
      %3484 = vmatpush1.msra.mxu0 %v3373
      %3485 = vmatprep.subr.mxu0 0.0
      %3486 = vmatpush1.msra.mxu0 %v3374
      %3487 = vmatprep.subr.mxu0 0.0
      %3488 = vmatpush1.msra.mxu0 %v3375
      %3489 = vmatprep.subr.mxu0 0.0
      %3490 = vmatpush1.msra.mxu0 %v3376
      %3491 = vmatprep.subr.mxu0 0.0
      %3492 = vmatpush1.msra.mxu0 %v3377
      %3493 = vmatprep.subr.mxu0 0.0
      %3494 = vmatpush1.msra.mxu0 0.0
      %3495 = vmatprep.subr.mxu0 0.0
      %3496 = vmatpush1.msra.mxu0 0.0
      %3497 = vmatprep.subr.mxu0 0.0
      %3498 = vmatpush1.msra.mxu0 0.0
      %3499 = vmatprep.subr.mxu0 0.0
      %3500 = vmatpush1.msra.mxu0 0.0
      %3501 = vmatprep.subr.mxu0 0.0
      %3502 = vmatpush1.msra.mxu0 0.0
      %3503 = vmatprep.subr.mxu0 0.0
      %3504 = vmatpush1.msra.mxu0 0.0
      %3505 = vmatprep.subr.mxu0 0.0
      %3506 = vmatpush1.msra.mxu0 0.0
      %3507 = vmatprep.subr.mxu0 0.0
      %3508 = vmatpush1.msra.mxu0 0.0
      %3509 = vmatprep.subr.mxu0 0.0
      %3510 = vmatpush1.msra.mxu0 0.0
      %3511 = vmatprep.subr.mxu0 0.0
      %3512 = vmatpush1.msra.mxu0 0.0
      %3513 = vmatprep.subr.mxu0 0.0
      %3514 = vmatpush1.msra.mxu0 0.0
      %3515 = vmatprep.subr.mxu0 0.0
      %3516 = vmatpush1.msra.mxu0 0.0
      %3517 = vmatprep.subr.mxu0 0.0
      %3518 = vmatpush1.msra.mxu0 0.0
      %3519 = vmatprep.subr.mxu0 0.0
      %3520 = vmatpush1.msra.mxu0 0.0
      %3521 = vmatprep.subr.mxu0 0.0
      %3522 = vmatpush1.msra.mxu0 0.0
      %3523 = vmatprep.subr.mxu0 0.0
      %3524 = vmatpush1.msra.mxu0 0.0
      %3525 = vmatprep.subr.mxu0 0.0
      %3526 = vmatpush1.msra.mxu0 0.0
      %3527 = vmatprep.subr.mxu0 0.0
      %3528 = vmatpush1.msra.mxu0 0.0
      %3529 = vmatprep.subr.mxu0 0.0
      %3530 = vmatpush1.msra.mxu0 0.0
      %3531 = vmatprep.subr.mxu0 0.0
      %3532 = vmatpush1.msra.mxu0 0.0
      %3533 = vmatprep.subr.mxu0 0.0
      %3534 = vmatpush1.msra.mxu0 0.0
      %3535 = vmatprep.subr.mxu0 0.0
      %3536 = vmatpush1.msra.mxu0 0.0
      %3537 = vmatprep.subr.mxu0 0.0
      %3538 = vmatpush1.msra.mxu0 0.0
      %3539 = vmatprep.subr.mxu0 0.0
      %3540 = vmatpush1.msra.mxu0 0.0
      %3541 = vmatprep.mubr.f32.mxu0 0.0
      %3542 = vmatmul.mubr.f32.gmra.mrb[0].mxu0 %v3472
      %v3543 = vpop.f32.mrb[0].mxu0
      %v3544 = vadd.f32 0.0, %v3543
      %v3545 = vpop.f32.mrb[0].mxu0
      %3546 = vmatprep.mubr.f32.mxu0 0.0
      %3547 = vmatmul.mubr.f32.gmra.mrb[0].mxu0 %v3475
      %v3548 = vpop.f32.mrb[0].mxu0
      %v3549 = vadd.f32 0.0, %v3548
      %v3550 = vpop.f32.mrb[0].mxu0
      %3551 = vdwg.mxu0
      %s3552 = scalar_lea.vmem %s3, 32
      %v3553 = vld [vmem:[%s3552] sm:$0xff]
      %v3554 = vld [vmem:[%s3552 + $0x8] sm:$0xff]
      %v3555 = vld [vmem:[%s3552 + $0x10] sm:$0xff]
      %v3556 = vld [vmem:[%s3552 + $0x18] sm:$0xff]
      %vm3557 = vcmask 261120
      %v3559 = vsel %vm3557, %v3544, 0
      %v3562 = vsel %vm3557, %v3549, 0
      %3564 = vmatprep.subr.mxu0 0.0
      %3565 = vmatpush1.msra.mxu0 %v3553
      %3566 = vmatprep.subr.mxu0 0.0
      %3567 = vmatpush1.msra.mxu0 %v3554
      %3568 = vmatprep.subr.mxu0 0.0
      %3569 = vmatpush1.msra.mxu0 %v3555
      %3570 = vmatprep.subr.mxu0 0.0
      %3571 = vmatpush1.msra.mxu0 %v3556
      %3572 = vmatprep.subr.mxu0 0.0
      %3573 = vmatpush1.msra.mxu0 0.0
      %3574 = vmatprep.subr.mxu0 0.0
      %3575 = vmatpush1.msra.mxu0 0.0
      %3576 = vmatprep.subr.mxu0 0.0
      %3577 = vmatpush1.msra.mxu0 0.0
      %3578 = vmatprep.subr.mxu0 0.0
      %3579 = vmatpush1.msra.mxu0 0.0
      %3580 = vmatprep.subr.mxu0 0.0
      %3581 = vmatpush1.msra.mxu0 0.0
      %3582 = vmatprep.subr.mxu0 0.0
      %3583 = vmatpush1.msra.mxu0 0.0
      %3584 = vmatprep.subr.mxu0 0.0
      %3585 = vmatpush1.msra.mxu0 0.0
      %3586 = vmatprep.subr.mxu0 0.0
      %3587 = vmatpush1.msra.mxu0 0.0
      %3588 = vmatprep.subr.mxu0 0.0
      %3589 = vmatpush1.msra.mxu0 0.0
      %3590 = vmatprep.subr.mxu0 0.0
      %3591 = vmatpush1.msra.mxu0 0.0
      %3592 = vmatprep.subr.mxu0 0.0
      %3593 = vmatpush1.msra.mxu0 0.0
      %3594 = vmatprep.subr.mxu0 0.0
      %3595 = vmatpush1.msra.mxu0 0.0
      %3596 = vmatprep.subr.mxu0 0.0
      %3597 = vmatpush1.msra.mxu0 0.0
      %3598 = vmatprep.subr.mxu0 0.0
      %3599 = vmatpush1.msra.mxu0 0.0
      %3600 = vmatprep.subr.mxu0 0.0
      %3601 = vmatpush1.msra.mxu0 0.0
      %3602 = vmatprep.subr.mxu0 0.0
      %3603 = vmatpush1.msra.mxu0 0.0
      %3604 = vmatprep.subr.mxu0 0.0
      %3605 = vmatpush1.msra.mxu0 0.0
      %3606 = vmatprep.subr.mxu0 0.0
      %3607 = vmatpush1.msra.mxu0 0.0
      %3608 = vmatprep.subr.mxu0 0.0
      %3609 = vmatpush1.msra.mxu0 0.0
      %3610 = vmatprep.subr.mxu0 0.0
      %3611 = vmatpush1.msra.mxu0 0.0
      %3612 = vmatprep.subr.mxu0 0.0
      %3613 = vmatpush1.msra.mxu0 0.0
      %3614 = vmatprep.subr.mxu0 0.0
      %3615 = vmatpush1.msra.mxu0 0.0
      %3616 = vmatprep.subr.mxu0 0.0
      %3617 = vmatpush1.msra.mxu0 0.0
      %3618 = vmatprep.subr.mxu0 0.0
      %3619 = vmatpush1.msra.mxu0 0.0
      %3620 = vmatprep.subr.mxu0 0.0
      %3621 = vmatpush1.msra.mxu0 0.0
      %3622 = vmatprep.subr.mxu0 0.0
      %3623 = vmatpush1.msra.mxu0 0.0
      %3624 = vmatprep.subr.mxu0 0.0
      %3625 = vmatpush1.msra.mxu0 0.0
      %3626 = vmatprep.subr.mxu0 0.0
      %3627 = vmatpush1.msra.mxu0 0.0
      %3628 = vmatprep.mubr.f32.mxu0 0.0
      %3629 = vmatmul.mubr.f32.gmra.mrb[0].mxu0 %v3559
      %v3630 = vpop.f32.mrb[0].mxu0
      %v3631 = vadd.f32 0.0, %v3630
      %v3632 = vpop.f32.mrb[0].mxu0
      %3633 = vmatprep.mubr.f32.mxu0 0.0
      %3634 = vmatmul.mubr.f32.gmra.mrb[0].mxu0 %v3562
      %v3635 = vpop.f32.mrb[0].mxu0
      %v3636 = vadd.f32 0.0, %v3635
      %v3637 = vpop.f32.mrb[0].mxu0
      %3638 = vdwg.mxu0
      %v3640 = vsel %vm3557, %v3456, 0
      %v3643 = vsel %vm3557, %v3461, 0
      %3645 = vmatprep.subr.mxu0 0.0
      %3646 = vmatpush1.msra.mxu0 %v3464
      %3647 = vmatprep.subr.mxu0 0.0
      %3648 = vmatpush1.msra.mxu0 %v3465
      %3649 = vmatprep.subr.mxu0 0.0
      %3650 = vmatpush1.msra.mxu0 %v3466
      %3651 = vmatprep.subr.mxu0 0.0
      %3652 = vmatpush1.msra.mxu0 %v3467
      %3653 = vmatprep.subr.mxu0 0.0
      %3654 = vmatpush1.msra.mxu0 0.0
      %3655 = vmatprep.subr.mxu0 0.0
      %3656 = vmatpush1.msra.mxu0 0.0
      %3657 = vmatprep.subr.mxu0 0.0
      %3658 = vmatpush1.msra.mxu0 0.0
      %3659 = vmatprep.subr.mxu0 0.0
      %3660 = vmatpush1.msra.mxu0 0.0
      %3661 = vmatprep.subr.mxu0 0.0
      %3662 = vmatpush1.msra.mxu0 0.0
      %3663 = vmatprep.subr.mxu0 0.0
      %3664 = vmatpush1.msra.mxu0 0.0
      %3665 = vmatprep.subr.mxu0 0.0
      %3666 = vmatpush1.msra.mxu0 0.0
      %3667 = vmatprep.subr.mxu0 0.0
      %3668 = vmatpush1.msra.mxu0 0.0
      %3669 = vmatprep.subr.mxu0 0.0
      %3670 = vmatpush1.msra.mxu0 0.0
      %3671 = vmatprep.subr.mxu0 0.0
      %3672 = vmatpush1.msra.mxu0 0.0
      %3673 = vmatprep.subr.mxu0 0.0
      %3674 = vmatpush1.msra.mxu0 0.0
      %3675 = vmatprep.subr.mxu0 0.0
      %3676 = vmatpush1.msra.mxu0 0.0
      %3677 = vmatprep.subr.mxu0 0.0
      %3678 = vmatpush1.msra.mxu0 0.0
      %3679 = vmatprep.subr.mxu0 0.0
      %3680 = vmatpush1.msra.mxu0 0.0
      %3681 = vmatprep.subr.mxu0 0.0
      %3682 = vmatpush1.msra.mxu0 0.0
      %3683 = vmatprep.subr.mxu0 0.0
      %3684 = vmatpush1.msra.mxu0 0.0
      %3685 = vmatprep.subr.mxu0 0.0
      %3686 = vmatpush1.msra.mxu0 0.0
      %3687 = vmatprep.subr.mxu0 0.0
      %3688 = vmatpush1.msra.mxu0 0.0
      %3689 = vmatprep.subr.mxu0 0.0
      %3690 = vmatpush1.msra.mxu0 0.0
      %3691 = vmatprep.subr.mxu0 0.0
      %3692 = vmatpush1.msra.mxu0 0.0
      %3693 = vmatprep.subr.mxu0 0.0
      %3694 = vmatpush1.msra.mxu0 0.0
      %3695 = vmatprep.subr.mxu0 0.0
      %3696 = vmatpush1.msra.mxu0 0.0
      %3697 = vmatprep.subr.mxu0 0.0
      %3698 = vmatpush1.msra.mxu0 0.0
      %3699 = vmatprep.subr.mxu0 0.0
      %3700 = vmatpush1.msra.mxu0 0.0
      %3701 = vmatprep.subr.mxu0 0.0
      %3702 = vmatpush1.msra.mxu0 0.0
      %3703 = vmatprep.subr.mxu0 0.0
      %3704 = vmatpush1.msra.mxu0 0.0
      %3705 = vmatprep.subr.mxu0 0.0
      %3706 = vmatpush1.msra.mxu0 0.0
      %3707 = vmatprep.subr.mxu0 0.0
      %3708 = vmatpush1.msra.mxu0 0.0
      %3709 = vmatprep.mubr.f32.mxu0 0.0
      %3710 = vmatmul.mubr.f32.gmra.mrb[0].mxu0 %v3640
      %v3711 = vpop.f32.mrb[0].mxu0
      %v3712 = vadd.f32 %v3631, %v3711
      %v3713 = vpop.f32.mrb[0].mxu0
      %3714 = vmatprep.mubr.f32.mxu0 0.0
      %3715 = vmatmul.mubr.f32.gmra.mrb[0].mxu0 %v3643
      %v3716 = vpop.f32.mrb[0].mxu0
      %v3717 = vadd.f32 %v3636, %v3716
      %v3718 = vpop.f32.mrb[0].mxu0
      %3719 = vdwg.mxu0
      %s3720 = scalar_lea.vmem %s7, 32
      %v3721 = vld [vmem:[%s3720] sm:$0xff]
      %v3722 = vld [vmem:[%s3720 + $0x8] sm:$0xff]
      %v3724 = vsel %vm3382, %v3721, 0
      %v3727 = vsel %vm3382, %v3722, 0
      %3729 = vmatprep.subr.mxu0 0.0
      %3730 = vmatpush1.msra.mxu0 %v3370
      %3731 = vmatprep.subr.mxu0 0.0
      %3732 = vmatpush1.msra.mxu0 %v3371
      %3733 = vmatprep.subr.mxu0 0.0
      %3734 = vmatpush1.msra.mxu0 %v3372
      %3735 = vmatprep.subr.mxu0 0.0
      %3736 = vmatpush1.msra.mxu0 %v3373
      %3737 = vmatprep.subr.mxu0 0.0
      %3738 = vmatpush1.msra.mxu0 %v3374
      %3739 = vmatprep.subr.mxu0 0.0
      %3740 = vmatpush1.msra.mxu0 %v3375
      %3741 = vmatprep.subr.mxu0 0.0
      %3742 = vmatpush1.msra.mxu0 %v3376
      %3743 = vmatprep.subr.mxu0 0.0
      %3744 = vmatpush1.msra.mxu0 %v3377
      %3745 = vmatprep.subr.mxu0 0.0
      %3746 = vmatpush1.msra.mxu0 0.0
      %3747 = vmatprep.subr.mxu0 0.0
      %3748 = vmatpush1.msra.mxu0 0.0
      %3749 = vmatprep.subr.mxu0 0.0
      %3750 = vmatpush1.msra.mxu0 0.0
      %3751 = vmatprep.subr.mxu0 0.0
      %3752 = vmatpush1.msra.mxu0 0.0
      %3753 = vmatprep.subr.mxu0 0.0
      %3754 = vmatpush1.msra.mxu0 0.0
      %3755 = vmatprep.subr.mxu0 0.0
      %3756 = vmatpush1.msra.mxu0 0.0
      %3757 = vmatprep.subr.mxu0 0.0
      %3758 = vmatpush1.msra.mxu0 0.0
      %3759 = vmatprep.subr.mxu0 0.0
      %3760 = vmatpush1.msra.mxu0 0.0
      %3761 = vmatprep.subr.mxu0 0.0
      %3762 = vmatpush1.msra.mxu0 0.0
      %3763 = vmatprep.subr.mxu0 0.0
      %3764 = vmatpush1.msra.mxu0 0.0
      %3765 = vmatprep.subr.mxu0 0.0
      %3766 = vmatpush1.msra.mxu0 0.0
      %3767 = vmatprep.subr.mxu0 0.0
      %3768 = vmatpush1.msra.mxu0 0.0
      %3769 = vmatprep.subr.mxu0 0.0
      %3770 = vmatpush1.msra.mxu0 0.0
      %3771 = vmatprep.subr.mxu0 0.0
      %3772 = vmatpush1.msra.mxu0 0.0
      %3773 = vmatprep.subr.mxu0 0.0
      %3774 = vmatpush1.msra.mxu0 0.0
      %3775 = vmatprep.subr.mxu0 0.0
      %3776 = vmatpush1.msra.mxu0 0.0
      %3777 = vmatprep.subr.mxu0 0.0
      %3778 = vmatpush1.msra.mxu0 0.0
      %3779 = vmatprep.subr.mxu0 0.0
      %3780 = vmatpush1.msra.mxu0 0.0
      %3781 = vmatprep.subr.mxu0 0.0
      %3782 = vmatpush1.msra.mxu0 0.0
      %3783 = vmatprep.subr.mxu0 0.0
      %3784 = vmatpush1.msra.mxu0 0.0
      %3785 = vmatprep.subr.mxu0 0.0
      %3786 = vmatpush1.msra.mxu0 0.0
      %3787 = vmatprep.subr.mxu0 0.0
      %3788 = vmatpush1.msra.mxu0 0.0
      %3789 = vmatprep.subr.mxu0 0.0
      %3790 = vmatpush1.msra.mxu0 0.0
      %3791 = vmatprep.subr.mxu0 0.0
      %3792 = vmatpush1.msra.mxu0 0.0
      %3793 = vmatprep.mubr.f32.mxu0 0.0
      %3794 = vmatmul.mubr.f32.gmra.mrb[0].mxu0 %v3724
      %v3795 = vpop.f32.mrb[0].mxu0
      %v3796 = vadd.f32 0.0, %v3795
      %v3797 = vpop.f32.mrb[0].mxu0
      %3798 = vmatprep.mubr.f32.mxu0 0.0
      %3799 = vmatmul.mubr.f32.gmra.mrb[0].mxu0 %v3727
      %v3800 = vpop.f32.mrb[0].mxu0
      %v3801 = vadd.f32 0.0, %v3800
      %v3802 = vpop.f32.mrb[0].mxu0
      %3803 = vdwg.mxu0
      %s3804 = scalar_lea.vmem %s3, 64
      %v3805 = vld [vmem:[%s3804] sm:$0xff]
      %v3806 = vld [vmem:[%s3804 + $0x8] sm:$0xff]
      %v3807 = vld [vmem:[%s3804 + $0x10] sm:$0xff]
      %v3808 = vld [vmem:[%s3804 + $0x18] sm:$0xff]
      %v3810 = vsel %vm3557, %v3796, 0
      %v3813 = vsel %vm3557, %v3801, 0
      %3815 = vmatprep.subr.mxu0 0.0
      %3816 = vmatpush1.msra.mxu0 %v3805
      %3817 = vmatprep.subr.mxu0 0.0
      %3818 = vmatpush1.msra.mxu0 %v3806
      %3819 = vmatprep.subr.mxu0 0.0
      %3820 = vmatpush1.msra.mxu0 %v3807
      %3821 = vmatprep.subr.mxu0 0.0
      %3822 = vmatpush1.msra.mxu0 %v3808
      %3823 = vmatprep.subr.mxu0 0.0
      %3824 = vmatpush1.msra.mxu0 0.0
      %3825 = vmatprep.subr.mxu0 0.0
      %3826 = vmatpush1.msra.mxu0 0.0
      %3827 = vmatprep.subr.mxu0 0.0
      %3828 = vmatpush1.msra.mxu0 0.0
      %3829 = vmatprep.subr.mxu0 0.0
      %3830 = vmatpush1.msra.mxu0 0.0
      %3831 = vmatprep.subr.mxu0 0.0
      %3832 = vmatpush1.msra.mxu0 0.0
      %3833 = vmatprep.subr.mxu0 0.0
      %3834 = vmatpush1.msra.mxu0 0.0
      %3835 = vmatprep.subr.mxu0 0.0
      %3836 = vmatpush1.msra.mxu0 0.0
      %3837 = vmatprep.subr.mxu0 0.0
      %3838 = vmatpush1.msra.mxu0 0.0
      %3839 = vmatprep.subr.mxu0 0.0
      %3840 = vmatpush1.msra.mxu0 0.0
      %3841 = vmatprep.subr.mxu0 0.0
      %3842 = vmatpush1.msra.mxu0 0.0
      %3843 = vmatprep.subr.mxu0 0.0
      %3844 = vmatpush1.msra.mxu0 0.0
      %3845 = vmatprep.subr.mxu0 0.0
      %3846 = vmatpush1.msra.mxu0 0.0
      %3847 = vmatprep.subr.mxu0 0.0
      %3848 = vmatpush1.msra.mxu0 0.0
      %3849 = vmatprep.subr.mxu0 0.0
      %3850 = vmatpush1.msra.mxu0 0.0
      %3851 = vmatprep.subr.mxu0 0.0
      %3852 = vmatpush1.msra.mxu0 0.0
      %3853 = vmatprep.subr.mxu0 0.0
      %3854 = vmatpush1.msra.mxu0 0.0
      %3855 = vmatprep.subr.mxu0 0.0
      %3856 = vmatpush1.msra.mxu0 0.0
      %3857 = vmatprep.subr.mxu0 0.0
      %3858 = vmatpush1.msra.mxu0 0.0
      %3859 = vmatprep.subr.mxu0 0.0
      %3860 = vmatpush1.msra.mxu0 0.0
      %3861 = vmatprep.subr.mxu0 0.0
      %3862 = vmatpush1.msra.mxu0 0.0
      %3863 = vmatprep.subr.mxu0 0.0
      %3864 = vmatpush1.msra.mxu0 0.0
      %3865 = vmatprep.subr.mxu0 0.0
      %3866 = vmatpush1.msra.mxu0 0.0
      %3867 = vmatprep.subr.mxu0 0.0
      %3868 = vmatpush1.msra.mxu0 0.0
      %3869 = vmatprep.subr.mxu0 0.0
      %3870 = vmatpush1.msra.mxu0 0.0
      %3871 = vmatprep.subr.mxu0 0.0
      %3872 = vmatpush1.msra.mxu0 0.0
      %3873 = vmatprep.subr.mxu0 0.0
      %3874 = vmatpush1.msra.mxu0 0.0
      %3875 = vmatprep.subr.mxu0 0.0
      %3876 = vmatpush1.msra.mxu0 0.0
      %3877 = vmatprep.subr.mxu0 0.0
      %3878 = vmatpush1.msra.mxu0 0.0
      %3879 = vmatprep.mubr.f32.mxu0 0.0
      %3880 = vmatmul.mubr.f32.gmra.mrb[0].mxu0 %v3810
      %v3881 = vpop.f32.mrb[0].mxu0
      %v3882 = vadd.f32 0.0, %v3881
      %v3883 = vpop.f32.mrb[0].mxu0
      %3884 = vmatprep.mubr.f32.mxu0 0.0
      %3885 = vmatmul.mubr.f32.gmra.mrb[0].mxu0 %v3813
      %v3886 = vpop.f32.mrb[0].mxu0
      %v3887 = vadd.f32 0.0, %v3886
      %v3888 = vpop.f32.mrb[0].mxu0
      %3889 = vdwg.mxu0
      %v3890 = vadd.f32 %v3712, %v3882
      %v3891 = vadd.f32 %v3717, %v3887
      %s3892 = scalar_lea.vmem %s7, 48
      %v3893 = vld [vmem:[%s3892] sm:$0xff]
      %v3894 = vld [vmem:[%s3892 + $0x8] sm:$0xff]
      %v3896 = vsel %vm3382, %v3893, 0
      %v3899 = vsel %vm3382, %v3894, 0
      %3901 = vmatprep.subr.mxu0 0.0
      %3902 = vmatpush1.msra.mxu0 %v3370
      %3903 = vmatprep.subr.mxu0 0.0
      %3904 = vmatpush1.msra.mxu0 %v3371
      %3905 = vmatprep.subr.mxu0 0.0
      %3906 = vmatpush1.msra.mxu0 %v3372
      %3907 = vmatprep.subr.mxu0 0.0
      %3908 = vmatpush1.msra.mxu0 %v3373
      %3909 = vmatprep.subr.mxu0 0.0
      %3910 = vmatpush1.msra.mxu0 %v3374
      %3911 = vmatprep.subr.mxu0 0.0
      %3912 = vmatpush1.msra.mxu0 %v3375
      %3913 = vmatprep.subr.mxu0 0.0
      %3914 = vmatpush1.msra.mxu0 %v3376
      %3915 = vmatprep.subr.mxu0 0.0
      %3916 = vmatpush1.msra.mxu0 %v3377
      %3917 = vmatprep.subr.mxu0 0.0
      %3918 = vmatpush1.msra.mxu0 0.0
      %3919 = vmatprep.subr.mxu0 0.0
      %3920 = vmatpush1.msra.mxu0 0.0
      %3921 = vmatprep.subr.mxu0 0.0
      %3922 = vmatpush1.msra.mxu0 0.0
      %3923 = vmatprep.subr.mxu0 0.0
      %3924 = vmatpush1.msra.mxu0 0.0
      %3925 = vmatprep.subr.mxu0 0.0
      %3926 = vmatpush1.msra.mxu0 0.0
      %3927 = vmatprep.subr.mxu0 0.0
      %3928 = vmatpush1.msra.mxu0 0.0
      %3929 = vmatprep.subr.mxu0 0.0
      %3930 = vmatpush1.msra.mxu0 0.0
      %3931 = vmatprep.subr.mxu0 0.0
      %3932 = vmatpush1.msra.mxu0 0.0
      %3933 = vmatprep.subr.mxu0 0.0
      %3934 = vmatpush1.msra.mxu0 0.0
      %3935 = vmatprep.subr.mxu0 0.0
      %3936 = vmatpush1.msra.mxu0 0.0
      %3937 = vmatprep.subr.mxu0 0.0
      %3938 = vmatpush1.msra.mxu0 0.0
      %3939 = vmatprep.subr.mxu0 0.0
      %3940 = vmatpush1.msra.mxu0 0.0
      %3941 = vmatprep.subr.mxu0 0.0
      %3942 = vmatpush1.msra.mxu0 0.0
      %3943 = vmatprep.subr.mxu0 0.0
      %3944 = vmatpush1.msra.mxu0 0.0
      %3945 = vmatprep.subr.mxu0 0.0
      %3946 = vmatpush1.msra.mxu0 0.0
      %3947 = vmatprep.subr.mxu0 0.0
      %3948 = vmatpush1.msra.mxu0 0.0
      %3949 = vmatprep.subr.mxu0 0.0
      %3950 = vmatpush1.msra.mxu0 0.0
      %3951 = vmatprep.subr.mxu0 0.0
      %3952 = vmatpush1.msra.mxu0 0.0
      %3953 = vmatprep.subr.mxu0 0.0
      %3954 = vmatpush1.msra.mxu0 0.0
      %3955 = vmatprep.subr.mxu0 0.0
      %3956 = vmatpush1.msra.mxu0 0.0
      %3957 = vmatprep.subr.mxu0 0.0
      %3958 = vmatpush1.msra.mxu0 0.0
      %3959 = vmatprep.subr.mxu0 0.0
      %3960 = vmatpush1.msra.mxu0 0.0
      %3961 = vmatprep.subr.mxu0 0.0
      %3962 = vmatpush1.msra.mxu0 0.0
      %3963 = vmatprep.subr.mxu0 0.0
      %3964 = vmatpush1.msra.mxu0 0.0
      %3965 = vmatprep.mubr.f32.mxu0 0.0
      %3966 = vmatmul.mubr.f32.gmra.mrb[0].mxu0 %v3896
      %v3967 = vpop.f32.mrb[0].mxu0
      %v3968 = vadd.f32 0.0, %v3967
      %v3969 = vpop.f32.mrb[0].mxu0
      %3970 = vmatprep.mubr.f32.mxu0 0.0
      %3971 = vmatmul.mubr.f32.gmra.mrb[0].mxu0 %v3899
      %v3972 = vpop.f32.mrb[0].mxu0
      %v3973 = vadd.f32 0.0, %v3972
      %v3974 = vpop.f32.mrb[0].mxu0
      %3975 = vdwg.mxu0
      %s3976 = scalar_lea.vmem %s3, 96
      %v3977 = vld [vmem:[%s3976] sm:$0xff]
      %v3978 = vld [vmem:[%s3976 + $0x8] sm:$0xff]
      %v3979 = vld [vmem:[%s3976 + $0x10] sm:$0xff]
      %v3980 = vld [vmem:[%s3976 + $0x18] sm:$0xff]
      %v3982 = vsel %vm3557, %v3968, 0
      %v3985 = vsel %vm3557, %v3973, 0
      %3987 = vmatprep.subr.mxu0 0.0
      %3988 = vmatpush1.msra.mxu0 %v3977
      %3989 = vmatprep.subr.mxu0 0.0
      %3990 = vmatpush1.msra.mxu0 %v3978
      %3991 = vmatprep.subr.mxu0 0.0
      %3992 = vmatpush1.msra.mxu0 %v3979
      %3993 = vmatprep.subr.mxu0 0.0
      %3994 = vmatpush1.msra.mxu0 %v3980
      %3995 = vmatprep.subr.mxu0 0.0
      %3996 = vmatpush1.msra.mxu0 0.0
      %3997 = vmatprep.subr.mxu0 0.0
      %3998 = vmatpush1.msra.mxu0 0.0
      %3999 = vmatprep.subr.mxu0 0.0
      %4000 = vmatpush1.msra.mxu0 0.0
      %4001 = vmatprep.subr.mxu0 0.0
      %4002 = vmatpush1.msra.mxu0 0.0
      %4003 = vmatprep.subr.mxu0 0.0
      %4004 = vmatpush1.msra.mxu0 0.0
      %4005 = vmatprep.subr.mxu0 0.0
      %4006 = vmatpush1.msra.mxu0 0.0
      %4007 = vmatprep.subr.mxu0 0.0
      %4008 = vmatpush1.msra.mxu0 0.0
      %4009 = vmatprep.subr.mxu0 0.0
      %4010 = vmatpush1.msra.mxu0 0.0
      %4011 = vmatprep.subr.mxu0 0.0
      %4012 = vmatpush1.msra.mxu0 0.0
      %4013 = vmatprep.subr.mxu0 0.0
      %4014 = vmatpush1.msra.mxu0 0.0
      %4015 = vmatprep.subr.mxu0 0.0
      %4016 = vmatpush1.msra.mxu0 0.0
      %4017 = vmatprep.subr.mxu0 0.0
      %4018 = vmatpush1.msra.mxu0 0.0
      %4019 = vmatprep.subr.mxu0 0.0
      %4020 = vmatpush1.msra.mxu0 0.0
      %4021 = vmatprep.subr.mxu0 0.0
      %4022 = vmatpush1.msra.mxu0 0.0
      %4023 = vmatprep.subr.mxu0 0.0
      %4024 = vmatpush1.msra.mxu0 0.0
      %4025 = vmatprep.subr.mxu0 0.0
      %4026 = vmatpush1.msra.mxu0 0.0
      %4027 = vmatprep.subr.mxu0 0.0
      %4028 = vmatpush1.msra.mxu0 0.0
      %4029 = vmatprep.subr.mxu0 0.0
      %4030 = vmatpush1.msra.mxu0 0.0
      %4031 = vmatprep.subr.mxu0 0.0
      %4032 = vmatpush1.msra.mxu0 0.0
      %4033 = vmatprep.subr.mxu0 0.0
      %4034 = vmatpush1.msra.mxu0 0.0
      %4035 = vmatprep.subr.mxu0 0.0
      %4036 = vmatpush1.msra.mxu0 0.0
      %4037 = vmatprep.subr.mxu0 0.0
      %4038 = vmatpush1.msra.mxu0 0.0
      %4039 = vmatprep.subr.mxu0 0.0
      %4040 = vmatpush1.msra.mxu0 0.0
      %4041 = vmatprep.subr.mxu0 0.0
      %4042 = vmatpush1.msra.mxu0 0.0
      %4043 = vmatprep.subr.mxu0 0.0
      %4044 = vmatpush1.msra.mxu0 0.0
      %4045 = vmatprep.subr.mxu0 0.0
      %4046 = vmatpush1.msra.mxu0 0.0
      %4047 = vmatprep.subr.mxu0 0.0
      %4048 = vmatpush1.msra.mxu0 0.0
      %4049 = vmatprep.subr.mxu0 0.0
      %4050 = vmatpush1.msra.mxu0 0.0
      %4051 = vmatprep.mubr.f32.mxu0 0.0
      %4052 = vmatmul.mubr.f32.gmra.mrb[0].mxu0 %v3982
      %v4053 = vpop.f32.mrb[0].mxu0
      %v4054 = vadd.f32 0.0, %v4053
      %v4055 = vpop.f32.mrb[0].mxu0
      %4056 = vmatprep.mubr.f32.mxu0 0.0
      %4057 = vmatmul.mubr.f32.gmra.mrb[0].mxu0 %v3985
      %v4058 = vpop.f32.mrb[0].mxu0
      %v4059 = vadd.f32 0.0, %v4058
      %v4060 = vpop.f32.mrb[0].mxu0
      %4061 = vdwg.mxu0
      %v4062 = vadd.f32 %v3890, %v4054
      %v4063 = vadd.f32 %v3891, %v4059
      %s4064 = scalar_lea.vmem %s7, 64
      %v4065 = vld [vmem:[%s4064] sm:$0xff]
      %v4066 = vld [vmem:[%s4064 + $0x8] sm:$0xff]
      %v4068 = vsel %vm3382, %v4065, 0
      %v4071 = vsel %vm3382, %v4066, 0
      %4073 = vmatprep.subr.mxu0 0.0
      %4074 = vmatpush1.msra.mxu0 %v3370
      %4075 = vmatprep.subr.mxu0 0.0
      %4076 = vmatpush1.msra.mxu0 %v3371
      %4077 = vmatprep.subr.mxu0 0.0
      %4078 = vmatpush1.msra.mxu0 %v3372
      %4079 = vmatprep.subr.mxu0 0.0
      %4080 = vmatpush1.msra.mxu0 %v3373
      %4081 = vmatprep.subr.mxu0 0.0
      %4082 = vmatpush1.msra.mxu0 %v3374
      %4083 = vmatprep.subr.mxu0 0.0
      %4084 = vmatpush1.msra.mxu0 %v3375
      %4085 = vmatprep.subr.mxu0 0.0
      %4086 = vmatpush1.msra.mxu0 %v3376
      %4087 = vmatprep.subr.mxu0 0.0
      %4088 = vmatpush1.msra.mxu0 %v3377
      %4089 = vmatprep.subr.mxu0 0.0
      %4090 = vmatpush1.msra.mxu0 0.0
      %4091 = vmatprep.subr.mxu0 0.0
      %4092 = vmatpush1.msra.mxu0 0.0
      %4093 = vmatprep.subr.mxu0 0.0
      %4094 = vmatpush1.msra.mxu0 0.0
      %4095 = vmatprep.subr.mxu0 0.0
      %4096 = vmatpush1.msra.mxu0 0.0
      %4097 = vmatprep.subr.mxu0 0.0
      %4098 = vmatpush1.msra.mxu0 0.0
      %4099 = vmatprep.subr.mxu0 0.0
      %4100 = vmatpush1.msra.mxu0 0.0
      %4101 = vmatprep.subr.mxu0 0.0
      %4102 = vmatpush1.msra.mxu0 0.0
      %4103 = vmatprep.subr.mxu0 0.0
      %4104 = vmatpush1.msra.mxu0 0.0
      %4105 = vmatprep.subr.mxu0 0.0
      %4106 = vmatpush1.msra.mxu0 0.0
      %4107 = vmatprep.subr.mxu0 0.0
      %4108 = vmatpush1.msra.mxu0 0.0
      %4109 = vmatprep.subr.mxu0 0.0
      %4110 = vmatpush1.msra.mxu0 0.0
      %4111 = vmatprep.subr.mxu0 0.0
      %4112 = vmatpush1.msra.mxu0 0.0
      %4113 = vmatprep.subr.mxu0 0.0
      %4114 = vmatpush1.msra.mxu0 0.0
      %4115 = vmatprep.subr.mxu0 0.0
      %4116 = vmatpush1.msra.mxu0 0.0
      %4117 = vmatprep.subr.mxu0 0.0
      %4118 = vmatpush1.msra.mxu0 0.0
      %4119 = vmatprep.subr.mxu0 0.0
      %4120 = vmatpush1.msra.mxu0 0.0
      %4121 = vmatprep.subr.mxu0 0.0
      %4122 = vmatpush1.msra.mxu0 0.0
      %4123 = vmatprep.subr.mxu0 0.0
      %4124 = vmatpush1.msra.mxu0 0.0
      %4125 = vmatprep.subr.mxu0 0.0
      %4126 = vmatpush1.msra.mxu0 0.0
      %4127 = vmatprep.subr.mxu0 0.0
      %4128 = vmatpush1.msra.mxu0 0.0
      %4129 = vmatprep.subr.mxu0 0.0
      %4130 = vmatpush1.msra.mxu0 0.0
      %4131 = vmatprep.subr.mxu0 0.0
      %4132 = vmatpush1.msra.mxu0 0.0
      %4133 = vmatprep.subr.mxu0 0.0
      %4134 = vmatpush1.msra.mxu0 0.0
      %4135 = vmatprep.subr.mxu0 0.0
      %4136 = vmatpush1.msra.mxu0 0.0
      %4137 = vmatprep.mubr.f32.mxu0 0.0
      %4138 = vmatmul.mubr.f32.gmra.mrb[0].mxu0 %v4068
      %v4139 = vpop.f32.mrb[0].mxu0
      %v4140 = vadd.f32 0.0, %v4139
      %v4141 = vpop.f32.mrb[0].mxu0
      %4142 = vmatprep.mubr.f32.mxu0 0.0
      %4143 = vmatmul.mubr.f32.gmra.mrb[0].mxu0 %v4071
      %v4144 = vpop.f32.mrb[0].mxu0
      %v4145 = vadd.f32 0.0, %v4144
      %v4146 = vpop.f32.mrb[0].mxu0
      %4147 = vdwg.mxu0
      %s4148 = scalar_lea.vmem %s3, 128
      %v4149 = vld [vmem:[%s4148] sm:$0xff]
      %v4150 = vld [vmem:[%s4148 + $0x8] sm:$0xff]
      %v4151 = vld [vmem:[%s4148 + $0x10] sm:$0xff]
      %v4152 = vld [vmem:[%s4148 + $0x18] sm:$0xff]
      %v4154 = vsel %vm3557, %v4140, 0
      %v4157 = vsel %vm3557, %v4145, 0
      %4159 = vmatprep.subr.mxu0 0.0
      %4160 = vmatpush1.msra.mxu0 %v4149
      %4161 = vmatprep.subr.mxu0 0.0
      %4162 = vmatpush1.msra.mxu0 %v4150
      %4163 = vmatprep.subr.mxu0 0.0
      %4164 = vmatpush1.msra.mxu0 %v4151
      %4165 = vmatprep.subr.mxu0 0.0
      %4166 = vmatpush1.msra.mxu0 %v4152
      %4167 = vmatprep.subr.mxu0 0.0
      %4168 = vmatpush1.msra.mxu0 0.0
      %4169 = vmatprep.subr.mxu0 0.0
      %4170 = vmatpush1.msra.mxu0 0.0
      %4171 = vmatprep.subr.mxu0 0.0
      %4172 = vmatpush1.msra.mxu0 0.0
      %4173 = vmatprep.subr.mxu0 0.0
      %4174 = vmatpush1.msra.mxu0 0.0
      %4175 = vmatprep.subr.mxu0 0.0
      %4176 = vmatpush1.msra.mxu0 0.0
      %4177 = vmatprep.subr.mxu0 0.0
      %4178 = vmatpush1.msra.mxu0 0.0
      %4179 = vmatprep.subr.mxu0 0.0
      %4180 = vmatpush1.msra.mxu0 0.0
      %4181 = vmatprep.subr.mxu0 0.0
      %4182 = vmatpush1.msra.mxu0 0.0
      %4183 = vmatprep.subr.mxu0 0.0
      %4184 = vmatpush1.msra.mxu0 0.0
      %4185 = vmatprep.subr.mxu0 0.0
      %4186 = vmatpush1.msra.mxu0 0.0
      %4187 = vmatprep.subr.mxu0 0.0
      %4188 = vmatpush1.msra.mxu0 0.0
      %4189 = vmatprep.subr.mxu0 0.0
      %4190 = vmatpush1.msra.mxu0 0.0
      %4191 = vmatprep.subr.mxu0 0.0
      %4192 = vmatpush1.msra.mxu0 0.0
      %4193 = vmatprep.subr.mxu0 0.0
      %4194 = vmatpush1.msra.mxu0 0.0
      %4195 = vmatprep.subr.mxu0 0.0
      %4196 = vmatpush1.msra.mxu0 0.0
      %4197 = vmatprep.subr.mxu0 0.0
      %4198 = vmatpush1.msra.mxu0 0.0
      %4199 = vmatprep.subr.mxu0 0.0
      %4200 = vmatpush1.msra.mxu0 0.0
      %4201 = vmatprep.subr.mxu0 0.0
      %4202 = vmatpush1.msra.mxu0 0.0
      %4203 = vmatprep.subr.mxu0 0.0
      %4204 = vmatpush1.msra.mxu0 0.0
      %4205 = vmatprep.subr.mxu0 0.0
      %4206 = vmatpush1.msra.mxu0 0.0
      %4207 = vmatprep.subr.mxu0 0.0
      %4208 = vmatpush1.msra.mxu0 0.0
      %4209 = vmatprep.subr.mxu0 0.0
      %4210 = vmatpush1.msra.mxu0 0.0
      %4211 = vmatprep.subr.mxu0 0.0
      %4212 = vmatpush1.msra.mxu0 0.0
      %4213 = vmatprep.subr.mxu0 0.0
      %4214 = vmatpush1.msra.mxu0 0.0
      %4215 = vmatprep.subr.mxu0 0.0
      %4216 = vmatpush1.msra.mxu0 0.0
      %4217 = vmatprep.subr.mxu0 0.0
      %4218 = vmatpush1.msra.mxu0 0.0
      %4219 = vmatprep.subr.mxu0 0.0
      %4220 = vmatpush1.msra.mxu0 0.0
      %4221 = vmatprep.subr.mxu0 0.0
      %4222 = vmatpush1.msra.mxu0 0.0
      %4223 = vmatprep.mubr.f32.mxu0 0.0
      %4224 = vmatmul.mubr.f32.gmra.mrb[0].mxu0 %v4154
      %v4225 = vpop.f32.mrb[0].mxu0
      %v4226 = vadd.f32 0.0, %v4225
      %v4227 = vpop.f32.mrb[0].mxu0
      %4228 = vmatprep.mubr.f32.mxu0 0.0
      %4229 = vmatmul.mubr.f32.gmra.mrb[0].mxu0 %v4157
      %v4230 = vpop.f32.mrb[0].mxu0
      %v4231 = vadd.f32 0.0, %v4230
      %v4232 = vpop.f32.mrb[0].mxu0
      %4233 = vdwg.mxu0
      %v4234 = vadd.f32 %v4062, %v4226
      %v4235 = vadd.f32 %v4063, %v4231
      %s4236 = scalar_lea.vmem %s7, 80
      %v4237 = vld [vmem:[%s4236] sm:$0xff]
      %v4238 = vld [vmem:[%s4236 + $0x8] sm:$0xff]
      %v4240 = vsel %vm3382, %v4237, 0
      %v4243 = vsel %vm3382, %v4238, 0
      %4245 = vmatprep.subr.mxu0 0.0
      %4246 = vmatpush1.msra.mxu0 %v3370
      %4247 = vmatprep.subr.mxu0 0.0
      %4248 = vmatpush1.msra.mxu0 %v3371
      %4249 = vmatprep.subr.mxu0 0.0
      %4250 = vmatpush1.msra.mxu0 %v3372
      %4251 = vmatprep.subr.mxu0 0.0
      %4252 = vmatpush1.msra.mxu0 %v3373
      %4253 = vmatprep.subr.mxu0 0.0
      %4254 = vmatpush1.msra.mxu0 %v3374
      %4255 = vmatprep.subr.mxu0 0.0
      %4256 = vmatpush1.msra.mxu0 %v3375
      %4257 = vmatprep.subr.mxu0 0.0
      %4258 = vmatpush1.msra.mxu0 %v3376
      %4259 = vmatprep.subr.mxu0 0.0
      %4260 = vmatpush1.msra.mxu0 %v3377
      %4261 = vmatprep.subr.mxu0 0.0
      %4262 = vmatpush1.msra.mxu0 0.0
      %4263 = vmatprep.subr.mxu0 0.0
      %4264 = vmatpush1.msra.mxu0 0.0
      %4265 = vmatprep.subr.mxu0 0.0
      %4266 = vmatpush1.msra.mxu0 0.0
      %4267 = vmatprep.subr.mxu0 0.0
      %4268 = vmatpush1.msra.mxu0 0.0
      %4269 = vmatprep.subr.mxu0 0.0
      %4270 = vmatpush1.msra.mxu0 0.0
      %4271 = vmatprep.subr.mxu0 0.0
      %4272 = vmatpush1.msra.mxu0 0.0
      %4273 = vmatprep.subr.mxu0 0.0
      %4274 = vmatpush1.msra.mxu0 0.0
      %4275 = vmatprep.subr.mxu0 0.0
      %4276 = vmatpush1.msra.mxu0 0.0
      %4277 = vmatprep.subr.mxu0 0.0
      %4278 = vmatpush1.msra.mxu0 0.0
      %4279 = vmatprep.subr.mxu0 0.0
      %4280 = vmatpush1.msra.mxu0 0.0
      %4281 = vmatprep.subr.mxu0 0.0
      %4282 = vmatpush1.msra.mxu0 0.0
      %4283 = vmatprep.subr.mxu0 0.0
      %4284 = vmatpush1.msra.mxu0 0.0
      %4285 = vmatprep.subr.mxu0 0.0
      %4286 = vmatpush1.msra.mxu0 0.0
      %4287 = vmatprep.subr.mxu0 0.0
      %4288 = vmatpush1.msra.mxu0 0.0
      %4289 = vmatprep.subr.mxu0 0.0
      %4290 = vmatpush1.msra.mxu0 0.0
      %4291 = vmatprep.subr.mxu0 0.0
      %4292 = vmatpush1.msra.mxu0 0.0
      %4293 = vmatprep.subr.mxu0 0.0
      %4294 = vmatpush1.msra.mxu0 0.0
      %4295 = vmatprep.subr.mxu0 0.0
      %4296 = vmatpush1.msra.mxu0 0.0
      %4297 = vmatprep.subr.mxu0 0.0
      %4298 = vmatpush1.msra.mxu0 0.0
      %4299 = vmatprep.subr.mxu0 0.0
      %4300 = vmatpush1.msra.mxu0 0.0
      %4301 = vmatprep.subr.mxu0 0.0
      %4302 = vmatpush1.msra.mxu0 0.0
      %4303 = vmatprep.subr.mxu0 0.0
      %4304 = vmatpush1.msra.mxu0 0.0
      %4305 = vmatprep.subr.mxu0 0.0
      %4306 = vmatpush1.msra.mxu0 0.0
      %4307 = vmatprep.subr.mxu0 0.0
      %4308 = vmatpush1.msra.mxu0 0.0
      %4309 = vmatprep.mubr.f32.mxu0 0.0
      %4310 = vmatmul.mubr.f32.gmra.mrb[0].mxu0 %v4240
      %v4311 = vpop.f32.mrb[0].mxu0
      %v4312 = vadd.f32 0.0, %v4311
      %v4313 = vpop.f32.mrb[0].mxu0
      %4314 = vmatprep.mubr.f32.mxu0 0.0
      %4315 = vmatmul.mubr.f32.gmra.mrb[0].mxu0 %v4243
      %v4316 = vpop.f32.mrb[0].mxu0
      %v4317 = vadd.f32 0.0, %v4316
      %v4318 = vpop.f32.mrb[0].mxu0
      %4319 = vdwg.mxu0
      %s4320 = scalar_lea.vmem %s3, 160
      %v4321 = vld [vmem:[%s4320] sm:$0xff]
      %v4322 = vld [vmem:[%s4320 + $0x8] sm:$0xff]
      %v4323 = vld [vmem:[%s4320 + $0x10] sm:$0xff]
      %v4324 = vld [vmem:[%s4320 + $0x18] sm:$0xff]
      %v4326 = vsel %vm3557, %v4312, 0
      %v4329 = vsel %vm3557, %v4317, 0
      %4331 = vmatprep.subr.mxu0 0.0
      %4332 = vmatpush1.msra.mxu0 %v4321
      %4333 = vmatprep.subr.mxu0 0.0
      %4334 = vmatpush1.msra.mxu0 %v4322
      %4335 = vmatprep.subr.mxu0 0.0
      %4336 = vmatpush1.msra.mxu0 %v4323
      %4337 = vmatprep.subr.mxu0 0.0
      %4338 = vmatpush1.msra.mxu0 %v4324
      %4339 = vmatprep.subr.mxu0 0.0
      %4340 = vmatpush1.msra.mxu0 0.0
      %4341 = vmatprep.subr.mxu0 0.0
      %4342 = vmatpush1.msra.mxu0 0.0
      %4343 = vmatprep.subr.mxu0 0.0
      %4344 = vmatpush1.msra.mxu0 0.0
      %4345 = vmatprep.subr.mxu0 0.0
      %4346 = vmatpush1.msra.mxu0 0.0
      %4347 = vmatprep.subr.mxu0 0.0
      %4348 = vmatpush1.msra.mxu0 0.0
      %4349 = vmatprep.subr.mxu0 0.0
      %4350 = vmatpush1.msra.mxu0 0.0
      %4351 = vmatprep.subr.mxu0 0.0
      %4352 = vmatpush1.msra.mxu0 0.0
      %4353 = vmatprep.subr.mxu0 0.0
      %4354 = vmatpush1.msra.mxu0 0.0
      %4355 = vmatprep.subr.mxu0 0.0
      %4356 = vmatpush1.msra.mxu0 0.0
      %4357 = vmatprep.subr.mxu0 0.0
      %4358 = vmatpush1.msra.mxu0 0.0
      %4359 = vmatprep.subr.mxu0 0.0
      %4360 = vmatpush1.msra.mxu0 0.0
      %4361 = vmatprep.subr.mxu0 0.0
      %4362 = vmatpush1.msra.mxu0 0.0
      %4363 = vmatprep.subr.mxu0 0.0
      %4364 = vmatpush1.msra.mxu0 0.0
      %4365 = vmatprep.subr.mxu0 0.0
      %4366 = vmatpush1.msra.mxu0 0.0
      %4367 = vmatprep.subr.mxu0 0.0
      %4368 = vmatpush1.msra.mxu0 0.0
      %4369 = vmatprep.subr.mxu0 0.0
      %4370 = vmatpush1.msra.mxu0 0.0
      %4371 = vmatprep.subr.mxu0 0.0
      %4372 = vmatpush1.msra.mxu0 0.0
      %4373 = vmatprep.subr.mxu0 0.0
      %4374 = vmatpush1.msra.mxu0 0.0
      %4375 = vmatprep.subr.mxu0 0.0
      %4376 = vmatpush1.msra.mxu0 0.0
      %4377 = vmatprep.subr.mxu0 0.0
      %4378 = vmatpush1.msra.mxu0 0.0
      %4379 = vmatprep.subr.mxu0 0.0
      %4380 = vmatpush1.msra.mxu0 0.0
      %4381 = vmatprep.subr.mxu0 0.0
      %4382 = vmatpush1.msra.mxu0 0.0
      %4383 = vmatprep.subr.mxu0 0.0
      %4384 = vmatpush1.msra.mxu0 0.0
      %4385 = vmatprep.subr.mxu0 0.0
      %4386 = vmatpush1.msra.mxu0 0.0
      %4387 = vmatprep.subr.mxu0 0.0
      %4388 = vmatpush1.msra.mxu0 0.0
      %4389 = vmatprep.subr.mxu0 0.0
      %4390 = vmatpush1.msra.mxu0 0.0
      %4391 = vmatprep.subr.mxu0 0.0
      %4392 = vmatpush1.msra.mxu0 0.0
      %4393 = vmatprep.subr.mxu0 0.0
      %4394 = vmatpush1.msra.mxu0 0.0
      %4395 = vmatprep.mubr.f32.mxu0 0.0
      %4396 = vmatmul.mubr.f32.gmra.mrb[0].mxu0 %v4326
      %v4397 = vpop.f32.mrb[0].mxu0
      %v4398 = vadd.f32 0.0, %v4397
      %v4399 = vpop.f32.mrb[0].mxu0
      %4400 = vmatprep.mubr.f32.mxu0 0.0
      %4401 = vmatmul.mubr.f32.gmra.mrb[0].mxu0 %v4329
      %v4402 = vpop.f32.mrb[0].mxu0
      %v4403 = vadd.f32 0.0, %v4402
      %v4404 = vpop.f32.mrb[0].mxu0
      %4405 = vdwg.mxu0
      %v4406 = vadd.f32 %v4234, %v4398
      %v4407 = vadd.f32 %v4235, %v4403
      %s4408 = scalar_lea.vmem %s7, 96
      %v4409 = vld [vmem:[%s4408] sm:$0xff]
      %v4410 = vld [vmem:[%s4408 + $0x8] sm:$0xff]
      %v4412 = vsel %vm3382, %v4409, 0
      %v4415 = vsel %vm3382, %v4410, 0
      %4417 = vmatprep.subr.mxu0 0.0
      %4418 = vmatpush1.msra.mxu0 %v3370
      %4419 = vmatprep.subr.mxu0 0.0
      %4420 = vmatpush1.msra.mxu0 %v3371
      %4421 = vmatprep.subr.mxu0 0.0
      %4422 = vmatpush1.msra.mxu0 %v3372
      %4423 = vmatprep.subr.mxu0 0.0
      %4424 = vmatpush1.msra.mxu0 %v3373
      %4425 = vmatprep.subr.mxu0 0.0
      %4426 = vmatpush1.msra.mxu0 %v3374
      %4427 = vmatprep.subr.mxu0 0.0
      %4428 = vmatpush1.msra.mxu0 %v3375
      %4429 = vmatprep.subr.mxu0 0.0
      %4430 = vmatpush1.msra.mxu0 %v3376
      %4431 = vmatprep.subr.mxu0 0.0
      %4432 = vmatpush1.msra.mxu0 %v3377
      %4433 = vmatprep.subr.mxu0 0.0
      %4434 = vmatpush1.msra.mxu0 0.0
      %4435 = vmatprep.subr.mxu0 0.0
      %4436 = vmatpush1.msra.mxu0 0.0
      %4437 = vmatprep.subr.mxu0 0.0
      %4438 = vmatpush1.msra.mxu0 0.0
      %4439 = vmatprep.subr.mxu0 0.0
      %4440 = vmatpush1.msra.mxu0 0.0
      %4441 = vmatprep.subr.mxu0 0.0
      %4442 = vmatpush1.msra.mxu0 0.0
      %4443 = vmatprep.subr.mxu0 0.0
      %4444 = vmatpush1.msra.mxu0 0.0
      %4445 = vmatprep.subr.mxu0 0.0
      %4446 = vmatpush1.msra.mxu0 0.0
      %4447 = vmatprep.subr.mxu0 0.0
      %4448 = vmatpush1.msra.mxu0 0.0
      %4449 = vmatprep.subr.mxu0 0.0
      %4450 = vmatpush1.msra.mxu0 0.0
      %4451 = vmatprep.subr.mxu0 0.0
      %4452 = vmatpush1.msra.mxu0 0.0
      %4453 = vmatprep.subr.mxu0 0.0
      %4454 = vmatpush1.msra.mxu0 0.0
      %4455 = vmatprep.subr.mxu0 0.0
      %4456 = vmatpush1.msra.mxu0 0.0
      %4457 = vmatprep.subr.mxu0 0.0
      %4458 = vmatpush1.msra.mxu0 0.0
      %4459 = vmatprep.subr.mxu0 0.0
      %4460 = vmatpush1.msra.mxu0 0.0
      %4461 = vmatprep.subr.mxu0 0.0
      %4462 = vmatpush1.msra.mxu0 0.0
      %4463 = vmatprep.subr.mxu0 0.0
      %4464 = vmatpush1.msra.mxu0 0.0
      %4465 = vmatprep.subr.mxu0 0.0
      %4466 = vmatpush1.msra.mxu0 0.0
      %4467 = vmatprep.subr.mxu0 0.0
      %4468 = vmatpush1.msra.mxu0 0.0
      %4469 = vmatprep.subr.mxu0 0.0
      %4470 = vmatpush1.msra.mxu0 0.0
      %4471 = vmatprep.subr.mxu0 0.0
      %4472 = vmatpush1.msra.mxu0 0.0
      %4473 = vmatprep.subr.mxu0 0.0
      %4474 = vmatpush1.msra.mxu0 0.0
      %4475 = vmatprep.subr.mxu0 0.0
      %4476 = vmatpush1.msra.mxu0 0.0
      %4477 = vmatprep.subr.mxu0 0.0
      %4478 = vmatpush1.msra.mxu0 0.0
      %4479 = vmatprep.subr.mxu0 0.0
      %4480 = vmatpush1.msra.mxu0 0.0
      %4481 = vmatprep.mubr.f32.mxu0 0.0
      %4482 = vmatmul.mubr.f32.gmra.mrb[0].mxu0 %v4412
      %v4483 = vpop.f32.mrb[0].mxu0
      %v4484 = vadd.f32 0.0, %v4483
      %v4485 = vpop.f32.mrb[0].mxu0
      %4486 = vmatprep.mubr.f32.mxu0 0.0
      %4487 = vmatmul.mubr.f32.gmra.mrb[0].mxu0 %v4415
      %v4488 = vpop.f32.mrb[0].mxu0
      %v4489 = vadd.f32 0.0, %v4488
      %v4490 = vpop.f32.mrb[0].mxu0
      %4491 = vdwg.mxu0
      %s4492 = scalar_lea.vmem %s3, 192
      %v4493 = vld [vmem:[%s4492] sm:$0xff]
      %v4494 = vld [vmem:[%s4492 + $0x8] sm:$0xff]
      %v4495 = vld [vmem:[%s4492 + $0x10] sm:$0xff]
      %v4496 = vld [vmem:[%s4492 + $0x18] sm:$0xff]
      %v4498 = vsel %vm3557, %v4484, 0
      %v4501 = vsel %vm3557, %v4489, 0
      %4503 = vmatprep.subr.mxu0 0.0
      %4504 = vmatpush1.msra.mxu0 %v4493
      %4505 = vmatprep.subr.mxu0 0.0
      %4506 = vmatpush1.msra.mxu0 %v4494
      %4507 = vmatprep.subr.mxu0 0.0
      %4508 = vmatpush1.msra.mxu0 %v4495
      %4509 = vmatprep.subr.mxu0 0.0
      %4510 = vmatpush1.msra.mxu0 %v4496
      %4511 = vmatprep.subr.mxu0 0.0
      %4512 = vmatpush1.msra.mxu0 0.0
      %4513 = vmatprep.subr.mxu0 0.0
      %4514 = vmatpush1.msra.mxu0 0.0
      %4515 = vmatprep.subr.mxu0 0.0
      %4516 = vmatpush1.msra.mxu0 0.0
      %4517 = vmatprep.subr.mxu0 0.0
      %4518 = vmatpush1.msra.mxu0 0.0
      %4519 = vmatprep.subr.mxu0 0.0
      %4520 = vmatpush1.msra.mxu0 0.0
      %4521 = vmatprep.subr.mxu0 0.0
      %4522 = vmatpush1.msra.mxu0 0.0
      %4523 = vmatprep.subr.mxu0 0.0
      %4524 = vmatpush1.msra.mxu0 0.0
      %4525 = vmatprep.subr.mxu0 0.0
      %4526 = vmatpush1.msra.mxu0 0.0
      %4527 = vmatprep.subr.mxu0 0.0
      %4528 = vmatpush1.msra.mxu0 0.0
      %4529 = vmatprep.subr.mxu0 0.0
      %4530 = vmatpush1.msra.mxu0 0.0
      %4531 = vmatprep.subr.mxu0 0.0
      %4532 = vmatpush1.msra.mxu0 0.0
      %4533 = vmatprep.subr.mxu0 0.0
      %4534 = vmatpush1.msra.mxu0 0.0
      %4535 = vmatprep.subr.mxu0 0.0
      %4536 = vmatpush1.msra.mxu0 0.0
      %4537 = vmatprep.subr.mxu0 0.0
      %4538 = vmatpush1.msra.mxu0 0.0
      %4539 = vmatprep.subr.mxu0 0.0
      %4540 = vmatpush1.msra.mxu0 0.0
      %4541 = vmatprep.subr.mxu0 0.0
      %4542 = vmatpush1.msra.mxu0 0.0
      %4543 = vmatprep.subr.mxu0 0.0
      %4544 = vmatpush1.msra.mxu0 0.0
      %4545 = vmatprep.subr.mxu0 0.0
      %4546 = vmatpush1.msra.mxu0 0.0
      %4547 = vmatprep.subr.mxu0 0.0
      %4548 = vmatpush1.msra.mxu0 0.0
      %4549 = vmatprep.subr.mxu0 0.0
      %4550 = vmatpush1.msra.mxu0 0.0
      %4551 = vmatprep.subr.mxu0 0.0
      %4552 = vmatpush1.msra.mxu0 0.0
      %4553 = vmatprep.subr.mxu0 0.0
      %4554 = vmatpush1.msra.mxu0 0.0
      %4555 = vmatprep.subr.mxu0 0.0
      %4556 = vmatpush1.msra.mxu0 0.0
      %4557 = vmatprep.subr.mxu0 0.0
      %4558 = vmatpush1.msra.mxu0 0.0
      %4559 = vmatprep.subr.mxu0 0.0
      %4560 = vmatpush1.msra.mxu0 0.0
      %4561 = vmatprep.subr.mxu0 0.0
      %4562 = vmatpush1.msra.mxu0 0.0
      %4563 = vmatprep.subr.mxu0 0.0
      %4564 = vmatpush1.msra.mxu0 0.0
      %4565 = vmatprep.subr.mxu0 0.0
      %4566 = vmatpush1.msra.mxu0 0.0
      %4567 = vmatprep.mubr.f32.mxu0 0.0
      %4568 = vmatmul.mubr.f32.gmra.mrb[0].mxu0 %v4498
      %v4569 = vpop.f32.mrb[0].mxu0
      %v4570 = vadd.f32 0.0, %v4569
      %v4571 = vpop.f32.mrb[0].mxu0
      %4572 = vmatprep.mubr.f32.mxu0 0.0
      %4573 = vmatmul.mubr.f32.gmra.mrb[0].mxu0 %v4501
      %v4574 = vpop.f32.mrb[0].mxu0
      %v4575 = vadd.f32 0.0, %v4574
      %v4576 = vpop.f32.mrb[0].mxu0
      %4577 = vdwg.mxu0
      %v4578 = vadd.f32 %v4406, %v4570
      %v4579 = vadd.f32 %v4407, %v4575
      %s4580 = scalar_lea.vmem %s7, 112
      %v4581 = vld [vmem:[%s4580] sm:$0xff]
      %v4582 = vld [vmem:[%s4580 + $0x8] sm:$0xff]
      %v4584 = vsel %vm3382, %v4581, 0
      %v4587 = vsel %vm3382, %v4582, 0
      %4589 = vmatprep.subr.mxu0 0.0
      %4590 = vmatpush1.msra.mxu0 %v3370
      %4591 = vmatprep.subr.mxu0 0.0
      %4592 = vmatpush1.msra.mxu0 %v3371
      %4593 = vmatprep.subr.mxu0 0.0
      %4594 = vmatpush1.msra.mxu0 %v3372
      %4595 = vmatprep.subr.mxu0 0.0
      %4596 = vmatpush1.msra.mxu0 %v3373
      %4597 = vmatprep.subr.mxu0 0.0
      %4598 = vmatpush1.msra.mxu0 %v3374
      %4599 = vmatprep.subr.mxu0 0.0
      %4600 = vmatpush1.msra.mxu0 %v3375
      %4601 = vmatprep.subr.mxu0 0.0
      %4602 = vmatpush1.msra.mxu0 %v3376
      %4603 = vmatprep.subr.mxu0 0.0
      %4604 = vmatpush1.msra.mxu0 %v3377
      %4605 = vmatprep.subr.mxu0 0.0
      %4606 = vmatpush1.msra.mxu0 0.0
      %4607 = vmatprep.subr.mxu0 0.0
      %4608 = vmatpush1.msra.mxu0 0.0
      %4609 = vmatprep.subr.mxu0 0.0
      %4610 = vmatpush1.msra.mxu0 0.0
      %4611 = vmatprep.subr.mxu0 0.0
      %4612 = vmatpush1.msra.mxu0 0.0
      %4613 = vmatprep.subr.mxu0 0.0
      %4614 = vmatpush1.msra.mxu0 0.0
      %4615 = vmatprep.subr.mxu0 0.0
      %4616 = vmatpush1.msra.mxu0 0.0
      %4617 = vmatprep.subr.mxu0 0.0
      %4618 = vmatpush1.msra.mxu0 0.0
      %4619 = vmatprep.subr.mxu0 0.0
      %4620 = vmatpush1.msra.mxu0 0.0
      %4621 = vmatprep.subr.mxu0 0.0
      %4622 = vmatpush1.msra.mxu0 0.0
      %4623 = vmatprep.subr.mxu0 0.0
      %4624 = vmatpush1.msra.mxu0 0.0
      %4625 = vmatprep.subr.mxu0 0.0
      %4626 = vmatpush1.msra.mxu0 0.0
      %4627 = vmatprep.subr.mxu0 0.0
      %4628 = vmatpush1.msra.mxu0 0.0
      %4629 = vmatprep.subr.mxu0 0.0
      %4630 = vmatpush1.msra.mxu0 0.0
      %4631 = vmatprep.subr.mxu0 0.0
      %4632 = vmatpush1.msra.mxu0 0.0
      %4633 = vmatprep.subr.mxu0 0.0
      %4634 = vmatpush1.msra.mxu0 0.0
      %4635 = vmatprep.subr.mxu0 0.0
      %4636 = vmatpush1.msra.mxu0 0.0
      %4637 = vmatprep.subr.mxu0 0.0
      %4638 = vmatpush1.msra.mxu0 0.0
      %4639 = vmatprep.subr.mxu0 0.0
      %4640 = vmatpush1.msra.mxu0 0.0
      %4641 = vmatprep.subr.mxu0 0.0
      %4642 = vmatpush1.msra.mxu0 0.0
      %4643 = vmatprep.subr.mxu0 0.0
      %4644 = vmatpush1.msra.mxu0 0.0
      %4645 = vmatprep.subr.mxu0 0.0
      %4646 = vmatpush1.msra.mxu0 0.0
      %4647 = vmatprep.subr.mxu0 0.0
      %4648 = vmatpush1.msra.mxu0 0.0
      %4649 = vmatprep.subr.mxu0 0.0
      %4650 = vmatpush1.msra.mxu0 0.0
      %4651 = vmatprep.subr.mxu0 0.0
      %4652 = vmatpush1.msra.mxu0 0.0
      %4653 = vmatprep.mubr.f32.mxu0 0.0
      %4654 = vmatmul.mubr.f32.gmra.mrb[0].mxu0 %v4584
      %v4655 = vpop.f32.mrb[0].mxu0
      %v4656 = vadd.f32 0.0, %v4655
      %v4657 = vpop.f32.mrb[0].mxu0
      %4658 = vmatprep.mubr.f32.mxu0 0.0
      %4659 = vmatmul.mubr.f32.gmra.mrb[0].mxu0 %v4587
      %v4660 = vpop.f32.mrb[0].mxu0
      %v4661 = vadd.f32 0.0, %v4660
      %v4662 = vpop.f32.mrb[0].mxu0
      %4663 = vdwg.mxu0
      %s4664 = scalar_lea.vmem %s3, 224
      %v4665 = vld [vmem:[%s4664] sm:$0xff]
      %v4666 = vld [vmem:[%s4664 + $0x8] sm:$0xff]
      %v4667 = vld [vmem:[%s4664 + $0x10] sm:$0xff]
      %v4668 = vld [vmem:[%s4664 + $0x18] sm:$0xff]
      %v4670 = vsel %vm3557, %v4656, 0
      %v4673 = vsel %vm3557, %v4661, 0
      %4675 = vmatprep.subr.mxu0 0.0
      %4676 = vmatpush1.msra.mxu0 %v4665
      %4677 = vmatprep.subr.mxu0 0.0
      %4678 = vmatpush1.msra.mxu0 %v4666
      %4679 = vmatprep.subr.mxu0 0.0
      %4680 = vmatpush1.msra.mxu0 %v4667
      %4681 = vmatprep.subr.mxu0 0.0
      %4682 = vmatpush1.msra.mxu0 %v4668
      %4683 = vmatprep.subr.mxu0 0.0
      %4684 = vmatpush1.msra.mxu0 0.0
      %4685 = vmatprep.subr.mxu0 0.0
      %4686 = vmatpush1.msra.mxu0 0.0
      %4687 = vmatprep.subr.mxu0 0.0
      %4688 = vmatpush1.msra.mxu0 0.0
      %4689 = vmatprep.subr.mxu0 0.0
      %4690 = vmatpush1.msra.mxu0 0.0
      %4691 = vmatprep.subr.mxu0 0.0
      %4692 = vmatpush1.msra.mxu0 0.0
      %4693 = vmatprep.subr.mxu0 0.0
      %4694 = vmatpush1.msra.mxu0 0.0
      %4695 = vmatprep.subr.mxu0 0.0
      %4696 = vmatpush1.msra.mxu0 0.0
      %4697 = vmatprep.subr.mxu0 0.0
      %4698 = vmatpush1.msra.mxu0 0.0
      %4699 = vmatprep.subr.mxu0 0.0
      %4700 = vmatpush1.msra.mxu0 0.0
      %4701 = vmatprep.subr.mxu0 0.0
      %4702 = vmatpush1.msra.mxu0 0.0
      %4703 = vmatprep.subr.mxu0 0.0
      %4704 = vmatpush1.msra.mxu0 0.0
      %4705 = vmatprep.subr.mxu0 0.0
      %4706 = vmatpush1.msra.mxu0 0.0
      %4707 = vmatprep.subr.mxu0 0.0
      %4708 = vmatpush1.msra.mxu0 0.0
      %4709 = vmatprep.subr.mxu0 0.0
      %4710 = vmatpush1.msra.mxu0 0.0
      %4711 = vmatprep.subr.mxu0 0.0
      %4712 = vmatpush1.msra.mxu0 0.0
      %4713 = vmatprep.subr.mxu0 0.0
      %4714 = vmatpush1.msra.mxu0 0.0
      %4715 = vmatprep.subr.mxu0 0.0
      %4716 = vmatpush1.msra.mxu0 0.0
      %4717 = vmatprep.subr.mxu0 0.0
      %4718 = vmatpush1.msra.mxu0 0.0
      %4719 = vmatprep.subr.mxu0 0.0
      %4720 = vmatpush1.msra.mxu0 0.0
      %4721 = vmatprep.subr.mxu0 0.0
      %4722 = vmatpush1.msra.mxu0 0.0
      %4723 = vmatprep.subr.mxu0 0.0
      %4724 = vmatpush1.msra.mxu0 0.0
      %4725 = vmatprep.subr.mxu0 0.0
      %4726 = vmatpush1.msra.mxu0 0.0
      %4727 = vmatprep.subr.mxu0 0.0
      %4728 = vmatpush1.msra.mxu0 0.0
      %4729 = vmatprep.subr.mxu0 0.0
      %4730 = vmatpush1.msra.mxu0 0.0
      %4731 = vmatprep.subr.mxu0 0.0
      %4732 = vmatpush1.msra.mxu0 0.0
      %4733 = vmatprep.subr.mxu0 0.0
      %4734 = vmatpush1.msra.mxu0 0.0
      %4735 = vmatprep.subr.mxu0 0.0
      %4736 = vmatpush1.msra.mxu0 0.0
      %4737 = vmatprep.subr.mxu0 0.0
      %4738 = vmatpush1.msra.mxu0 0.0
      %4739 = vmatprep.mubr.f32.mxu0 0.0
      %4740 = vmatmul.mubr.f32.gmra.mrb[0].mxu0 %v4670
      %v4741 = vpop.f32.mrb[0].mxu0
      %v4742 = vadd.f32 0.0, %v4741
      %v4743 = vpop.f32.mrb[0].mxu0
      %4744 = vmatprep.mubr.f32.mxu0 0.0
      %4745 = vmatmul.mubr.f32.gmra.mrb[0].mxu0 %v4673
      %v4746 = vpop.f32.mrb[0].mxu0
      %v4747 = vadd.f32 0.0, %v4746
      %v4748 = vpop.f32.mrb[0].mxu0
      %4749 = vdwg.mxu0
      %v4750 = vadd.f32 %v4578, %v4742
      %v4751 = vadd.f32 %v4579, %v4747
      %s4752 = scalar_lea.vmem %s7, 128
      %v4753 = vld [vmem:[%s4752] sm:$0xff]
      %v4754 = vld [vmem:[%s4752 + $0x8] sm:$0xff]
      %v4756 = vsel %vm3382, %v4753, 0
      %v4759 = vsel %vm3382, %v4754, 0
      %4761 = vmatprep.subr.mxu0 0.0
      %4762 = vmatpush1.msra.mxu0 %v3370
      %4763 = vmatprep.subr.mxu0 0.0
      %4764 = vmatpush1.msra.mxu0 %v3371
      %4765 = vmatprep.subr.mxu0 0.0
      %4766 = vmatpush1.msra.mxu0 %v3372
      %4767 = vmatprep.subr.mxu0 0.0
      %4768 = vmatpush1.msra.mxu0 %v3373
      %4769 = vmatprep.subr.mxu0 0.0
      %4770 = vmatpush1.msra.mxu0 %v3374
      %4771 = vmatprep.subr.mxu0 0.0
      %4772 = vmatpush1.msra.mxu0 %v3375
      %4773 = vmatprep.subr.mxu0 0.0
      %4774 = vmatpush1.msra.mxu0 %v3376
      %4775 = vmatprep.subr.mxu0 0.0
      %4776 = vmatpush1.msra.mxu0 %v3377
      %4777 = vmatprep.subr.mxu0 0.0
      %4778 = vmatpush1.msra.mxu0 0.0
      %4779 = vmatprep.subr.mxu0 0.0
      %4780 = vmatpush1.msra.mxu0 0.0
      %4781 = vmatprep.subr.mxu0 0.0
      %4782 = vmatpush1.msra.mxu0 0.0
      %4783 = vmatprep.subr.mxu0 0.0
      %4784 = vmatpush1.msra.mxu0 0.0
      %4785 = vmatprep.subr.mxu0 0.0
      %4786 = vmatpush1.msra.mxu0 0.0
      %4787 = vmatprep.subr.mxu0 0.0
      %4788 = vmatpush1.msra.mxu0 0.0
      %4789 = vmatprep.subr.mxu0 0.0
      %4790 = vmatpush1.msra.mxu0 0.0
      %4791 = vmatprep.subr.mxu0 0.0
      %4792 = vmatpush1.msra.mxu0 0.0
      %4793 = vmatprep.subr.mxu0 0.0
      %4794 = vmatpush1.msra.mxu0 0.0
      %4795 = vmatprep.subr.mxu0 0.0
      %4796 = vmatpush1.msra.mxu0 0.0
      %4797 = vmatprep.subr.mxu0 0.0
      %4798 = vmatpush1.msra.mxu0 0.0
      %4799 = vmatprep.subr.mxu0 0.0
      %4800 = vmatpush1.msra.mxu0 0.0
      %4801 = vmatprep.subr.mxu0 0.0
      %4802 = vmatpush1.msra.mxu0 0.0
      %4803 = vmatprep.subr.mxu0 0.0
      %4804 = vmatpush1.msra.mxu0 0.0
      %4805 = vmatprep.subr.mxu0 0.0
      %4806 = vmatpush1.msra.mxu0 0.0
      %4807 = vmatprep.subr.mxu0 0.0
      %4808 = vmatpush1.msra.mxu0 0.0
      %4809 = vmatprep.subr.mxu0 0.0
      %4810 = vmatpush1.msra.mxu0 0.0
      %4811 = vmatprep.subr.mxu0 0.0
      %4812 = vmatpush1.msra.mxu0 0.0
      %4813 = vmatprep.subr.mxu0 0.0
      %4814 = vmatpush1.msra.mxu0 0.0
      %4815 = vmatprep.subr.mxu0 0.0
      %4816 = vmatpush1.msra.mxu0 0.0
      %4817 = vmatprep.subr.mxu0 0.0
      %4818 = vmatpush1.msra.mxu0 0.0
      %4819 = vmatprep.subr.mxu0 0.0
      %4820 = vmatpush1.msra.mxu0 0.0
      %4821 = vmatprep.subr.mxu0 0.0
      %4822 = vmatpush1.msra.mxu0 0.0
      %4823 = vmatprep.subr.mxu0 0.0
      %4824 = vmatpush1.msra.mxu0 0.0
      %4825 = vmatprep.mubr.f32.mxu0 0.0
      %4826 = vmatmul.mubr.f32.gmra.mrb[0].mxu0 %v4756
      %v4827 = vpop.f32.mrb[0].mxu0
      %v4828 = vadd.f32 0.0, %v4827
      %v4829 = vpop.f32.mrb[0].mxu0
      %4830 = vmatprep.mubr.f32.mxu0 0.0
      %4831 = vmatmul.mubr.f32.gmra.mrb[0].mxu0 %v4759
      %v4832 = vpop.f32.mrb[0].mxu0
      %v4833 = vadd.f32 0.0, %v4832
      %v4834 = vpop.f32.mrb[0].mxu0
      %4835 = vdwg.mxu0
      %s4836 = scalar_lea.vmem %s3, 256
      %v4837 = vld [vmem:[%s4836] sm:$0xff]
      %v4838 = vld [vmem:[%s4836 + $0x8] sm:$0xff]
      %v4839 = vld [vmem:[%s4836 + $0x10] sm:$0xff]
      %v4840 = vld [vmem:[%s4836 + $0x18] sm:$0xff]
      %v4842 = vsel %vm3557, %v4828, 0
      %v4845 = vsel %vm3557, %v4833, 0
      %4847 = vmatprep.subr.mxu0 0.0
      %4848 = vmatpush1.msra.mxu0 %v4837
      %4849 = vmatprep.subr.mxu0 0.0
      %4850 = vmatpush1.msra.mxu0 %v4838
      %4851 = vmatprep.subr.mxu0 0.0
      %4852 = vmatpush1.msra.mxu0 %v4839
      %4853 = vmatprep.subr.mxu0 0.0
      %4854 = vmatpush1.msra.mxu0 %v4840
      %4855 = vmatprep.subr.mxu0 0.0
      %4856 = vmatpush1.msra.mxu0 0.0
      %4857 = vmatprep.subr.mxu0 0.0
      %4858 = vmatpush1.msra.mxu0 0.0
      %4859 = vmatprep.subr.mxu0 0.0
      %4860 = vmatpush1.msra.mxu0 0.0
      %4861 = vmatprep.subr.mxu0 0.0
      %4862 = vmatpush1.msra.mxu0 0.0
      %4863 = vmatprep.subr.mxu0 0.0
      %4864 = vmatpush1.msra.mxu0 0.0
      %4865 = vmatprep.subr.mxu0 0.0
      %4866 = vmatpush1.msra.mxu0 0.0
      %4867 = vmatprep.subr.mxu0 0.0
      %4868 = vmatpush1.msra.mxu0 0.0
      %4869 = vmatprep.subr.mxu0 0.0
      %4870 = vmatpush1.msra.mxu0 0.0
      %4871 = vmatprep.subr.mxu0 0.0
      %4872 = vmatpush1.msra.mxu0 0.0
      %4873 = vmatprep.subr.mxu0 0.0
      %4874 = vmatpush1.msra.mxu0 0.0
      %4875 = vmatprep.subr.mxu0 0.0
      %4876 = vmatpush1.msra.mxu0 0.0
      %4877 = vmatprep.subr.mxu0 0.0
      %4878 = vmatpush1.msra.mxu0 0.0
      %4879 = vmatprep.subr.mxu0 0.0
      %4880 = vmatpush1.msra.mxu0 0.0
      %4881 = vmatprep.subr.mxu0 0.0
      %4882 = vmatpush1.msra.mxu0 0.0
      %4883 = vmatprep.subr.mxu0 0.0
      %4884 = vmatpush1.msra.mxu0 0.0
      %4885 = vmatprep.subr.mxu0 0.0
      %4886 = vmatpush1.msra.mxu0 0.0
      %4887 = vmatprep.subr.mxu0 0.0
      %4888 = vmatpush1.msra.mxu0 0.0
      %4889 = vmatprep.subr.mxu0 0.0
      %4890 = vmatpush1.msra.mxu0 0.0
      %4891 = vmatprep.subr.mxu0 0.0
      %4892 = vmatpush1.msra.mxu0 0.0
      %4893 = vmatprep.subr.mxu0 0.0
      %4894 = vmatpush1.msra.mxu0 0.0
      %4895 = vmatprep.subr.mxu0 0.0
      %4896 = vmatpush1.msra.mxu0 0.0
      %4897 = vmatprep.subr.mxu0 0.0
      %4898 = vmatpush1.msra.mxu0 0.0
      %4899 = vmatprep.subr.mxu0 0.0
      %4900 = vmatpush1.msra.mxu0 0.0
      %4901 = vmatprep.subr.mxu0 0.0
      %4902 = vmatpush1.msra.mxu0 0.0
      %4903 = vmatprep.subr.mxu0 0.0
      %4904 = vmatpush1.msra.mxu0 0.0
      %4905 = vmatprep.subr.mxu0 0.0
      %4906 = vmatpush1.msra.mxu0 0.0
      %4907 = vmatprep.subr.mxu0 0.0
      %4908 = vmatpush1.msra.mxu0 0.0
      %4909 = vmatprep.subr.mxu0 0.0
      %4910 = vmatpush1.msra.mxu0 0.0
      %4911 = vmatprep.mubr.f32.mxu0 0.0
      %4912 = vmatmul.mubr.f32.gmra.mrb[0].mxu0 %v4842
      %v4913 = vpop.f32.mrb[0].mxu0
      %v4914 = vadd.f32 0.0, %v4913
      %v4915 = vpop.f32.mrb[0].mxu0
      %4916 = vmatprep.mubr.f32.mxu0 0.0
      %4917 = vmatmul.mubr.f32.gmra.mrb[0].mxu0 %v4845
      %v4918 = vpop.f32.mrb[0].mxu0
      %v4919 = vadd.f32 0.0, %v4918
      %v4920 = vpop.f32.mrb[0].mxu0
      %4921 = vdwg.mxu0
      %v4922 = vadd.f32 %v4750, %v4914
      %v4923 = vadd.f32 %v4751, %v4919
      %v4924 = vlaneseq
      %v4925 = vshrl.u32 %v4924, 7
      %v4926 = vsub.s32 0, %v4925
      %v4927 = vrot.slane %v3379, %v4926
      %v4928 = vadd.f32 %v4922, %v4927
      %v4929 = vadd.f32 %v4923, %v4927
      %vm4930 = vcmp.ge.f32.partialorder %v4928, 0.0
      %vm4931 = vcmp.ge.f32.partialorder %v4929, 0.0
      %v4932 = vmul.f32 %v4928, 0.2
      %v4933 = vmul.f32 %v4929, 0.2
      %v4934 = vsel %vm4930, %v4928, %v4932
      %v4935 = vsel %vm4931, %v4929, %v4933
      %v4936 = vlaneseq
      %v4937 = vshrl.u32 %v4936, 7
      %v4938 = vsub.s32 1, %v4937
      %v4939 = vrot.slane %v3379, %v4938
      %v4940 = vmul.f32 %v4934, %v4939
      %v4941 = vmul.f32 %v4935, %v4939
      %v4942 = vlaneseq
      %v4943 = vshrl.u32 %v4942, 7
      %v4944 = vsub.s32 2, %v4943
      %v4945 = vrot.slane %v3379, %v4944
      %v4946 = vadd.f32 %v4940, %v4945
      %v4947 = vadd.f32 %v4941, %v4945
      %s4948 = scalar_lea.vmem %s10, 24
      %v4949 = vld [vmem:[%s4948] sm:$0x77]
      %v4950 = vld [vmem:[%s8] sm:$0xff]
      %v4952 = vsel %vm1225, %v4950, 0
      %4954 = vmatprep.subr.mxu0 0.0
      %4955 = vmatpush1.msra.mxu0 %v4946
      %4956 = vmatprep.subr.mxu0 0.0
      %4957 = vmatpush1.msra.mxu0 %v4947
      %4958 = vmatprep.subr.mxu0 0.0
      %4959 = vmatpush1.msra.mxu0 0.0
      %4960 = vmatprep.subr.mxu0 0.0
      %4961 = vmatpush1.msra.mxu0 0.0
      %4962 = vmatprep.subr.mxu0 0.0
      %4963 = vmatpush1.msra.mxu0 0.0
      %4964 = vmatprep.subr.mxu0 0.0
      %4965 = vmatpush1.msra.mxu0 0.0
      %4966 = vmatprep.subr.mxu0 0.0
      %4967 = vmatpush1.msra.mxu0 0.0
      %4968 = vmatprep.subr.mxu0 0.0
      %4969 = vmatpush1.msra.mxu0 0.0
      %4970 = vmatprep.subr.mxu0 0.0
      %4971 = vmatpush1.msra.mxu0 0.0
      %4972 = vmatprep.subr.mxu0 0.0
      %4973 = vmatpush1.msra.mxu0 0.0
      %4974 = vmatprep.subr.mxu0 0.0
      %4975 = vmatpush1.msra.mxu0 0.0
      %4976 = vmatprep.subr.mxu0 0.0
      %4977 = vmatpush1.msra.mxu0 0.0
      %4978 = vmatprep.subr.mxu0 0.0
      %4979 = vmatpush1.msra.mxu0 0.0
      %4980 = vmatprep.subr.mxu0 0.0
      %4981 = vmatpush1.msra.mxu0 0.0
      %4982 = vmatprep.subr.mxu0 0.0
      %4983 = vmatpush1.msra.mxu0 0.0
      %4984 = vmatprep.subr.mxu0 0.0
      %4985 = vmatpush1.msra.mxu0 0.0
      %4986 = vmatprep.subr.mxu0 0.0
      %4987 = vmatpush1.msra.mxu0 0.0
      %4988 = vmatprep.subr.mxu0 0.0
      %4989 = vmatpush1.msra.mxu0 0.0
      %4990 = vmatprep.subr.mxu0 0.0
      %4991 = vmatpush1.msra.mxu0 0.0
      %4992 = vmatprep.subr.mxu0 0.0
      %4993 = vmatpush1.msra.mxu0 0.0
      %4994 = vmatprep.subr.mxu0 0.0
      %4995 = vmatpush1.msra.mxu0 0.0
      %4996 = vmatprep.subr.mxu0 0.0
      %4997 = vmatpush1.msra.mxu0 0.0
      %4998 = vmatprep.subr.mxu0 0.0
      %4999 = vmatpush1.msra.mxu0 0.0
      %5000 = vmatprep.subr.mxu0 0.0
      %5001 = vmatpush1.msra.mxu0 0.0
      %5002 = vmatprep.subr.mxu0 0.0
      %5003 = vmatpush1.msra.mxu0 0.0
      %5004 = vmatprep.subr.mxu0 0.0
      %5005 = vmatpush1.msra.mxu0 0.0
      %5006 = vmatprep.subr.mxu0 0.0
      %5007 = vmatpush1.msra.mxu0 0.0
      %5008 = vmatprep.subr.mxu0 0.0
      %5009 = vmatpush1.msra.mxu0 0.0
      %5010 = vmatprep.subr.mxu0 0.0
      %5011 = vmatpush1.msra.mxu0 0.0
      %5012 = vmatprep.subr.mxu0 0.0
      %5013 = vmatpush1.msra.mxu0 0.0
      %5014 = vmatprep.subr.mxu0 0.0
      %5015 = vmatpush1.msra.mxu0 0.0
      %5016 = vmatprep.subr.mxu0 0.0
      %5017 = vmatpush1.msra.mxu0 0.0
      %5018 = vmatprep.mubr.f32.mxu0 0.0
      %5019 = vmatmul.mubr.f32.gmra.mrb[0].mxu0 %v4952
      %v5020 = vpop.f32.mrb[0].mxu0
      %v5021 = vadd.f32 0.0, %v5020
      %v5022 = vpop.f32.mrb[0].mxu0
      %5023 = vdwg.mxu0
      %v5024 = vld [vmem:[%s4] sm:$0xff]
      %v5025 = vld [vmem:[%s4 + $0x8] sm:$0xff]
      %v5026 = vld [vmem:[%s4 + $0x10] sm:$0xff]
      %v5027 = vld [vmem:[%s4 + $0x18] sm:$0xff]
      %v5028 = vld [vmem:[%s4 + $0x20] sm:$0xff]
      %v5029 = vld [vmem:[%s4 + $0x28] sm:$0xff]
      %v5030 = vld [vmem:[%s4 + $0x30] sm:$0xff]
      %v5031 = vld [vmem:[%s4 + $0x38] sm:$0xff]
      %s5032 = scalar_lea.vmem %s8, 8
      %v5033 = vld [vmem:[%s5032] sm:$0xff]
      %v5035 = vsel %vm1225, %v5033, 0
      %5037 = vmatprep.subr.mxu0 0.0
      %5038 = vmatpush1.msra.mxu0 %v4946
      %5039 = vmatprep.subr.mxu0 0.0
      %5040 = vmatpush1.msra.mxu0 %v4947
      %5041 = vmatprep.subr.mxu0 0.0
      %5042 = vmatpush1.msra.mxu0 0.0
      %5043 = vmatprep.subr.mxu0 0.0
      %5044 = vmatpush1.msra.mxu0 0.0
      %5045 = vmatprep.subr.mxu0 0.0
      %5046 = vmatpush1.msra.mxu0 0.0
      %5047 = vmatprep.subr.mxu0 0.0
      %5048 = vmatpush1.msra.mxu0 0.0
      %5049 = vmatprep.subr.mxu0 0.0
      %5050 = vmatpush1.msra.mxu0 0.0
      %5051 = vmatprep.subr.mxu0 0.0
      %5052 = vmatpush1.msra.mxu0 0.0
      %5053 = vmatprep.subr.mxu0 0.0
      %5054 = vmatpush1.msra.mxu0 0.0
      %5055 = vmatprep.subr.mxu0 0.0
      %5056 = vmatpush1.msra.mxu0 0.0
      %5057 = vmatprep.subr.mxu0 0.0
      %5058 = vmatpush1.msra.mxu0 0.0
      %5059 = vmatprep.subr.mxu0 0.0
      %5060 = vmatpush1.msra.mxu0 0.0
      %5061 = vmatprep.subr.mxu0 0.0
      %5062 = vmatpush1.msra.mxu0 0.0
      %5063 = vmatprep.subr.mxu0 0.0
      %5064 = vmatpush1.msra.mxu0 0.0
      %5065 = vmatprep.subr.mxu0 0.0
      %5066 = vmatpush1.msra.mxu0 0.0
      %5067 = vmatprep.subr.mxu0 0.0
      %5068 = vmatpush1.msra.mxu0 0.0
      %5069 = vmatprep.subr.mxu0 0.0
      %5070 = vmatpush1.msra.mxu0 0.0
      %5071 = vmatprep.subr.mxu0 0.0
      %5072 = vmatpush1.msra.mxu0 0.0
      %5073 = vmatprep.subr.mxu0 0.0
      %5074 = vmatpush1.msra.mxu0 0.0
      %5075 = vmatprep.subr.mxu0 0.0
      %5076 = vmatpush1.msra.mxu0 0.0
      %5077 = vmatprep.subr.mxu0 0.0
      %5078 = vmatpush1.msra.mxu0 0.0
      %5079 = vmatprep.subr.mxu0 0.0
      %5080 = vmatpush1.msra.mxu0 0.0
      %5081 = vmatprep.subr.mxu0 0.0
      %5082 = vmatpush1.msra.mxu0 0.0
      %5083 = vmatprep.subr.mxu0 0.0
      %5084 = vmatpush1.msra.mxu0 0.0
      %5085 = vmatprep.subr.mxu0 0.0
      %5086 = vmatpush1.msra.mxu0 0.0
      %5087 = vmatprep.subr.mxu0 0.0
      %5088 = vmatpush1.msra.mxu0 0.0
      %5089 = vmatprep.subr.mxu0 0.0
      %5090 = vmatpush1.msra.mxu0 0.0
      %5091 = vmatprep.subr.mxu0 0.0
      %5092 = vmatpush1.msra.mxu0 0.0
      %5093 = vmatprep.subr.mxu0 0.0
      %5094 = vmatpush1.msra.mxu0 0.0
      %5095 = vmatprep.subr.mxu0 0.0
      %5096 = vmatpush1.msra.mxu0 0.0
      %5097 = vmatprep.subr.mxu0 0.0
      %5098 = vmatpush1.msra.mxu0 0.0
      %5099 = vmatprep.subr.mxu0 0.0
      %5100 = vmatpush1.msra.mxu0 0.0
      %5101 = vmatprep.mubr.f32.mxu0 0.0
      %5102 = vmatmul.mubr.f32.gmra.mrb[0].mxu0 %v5035
      %v5103 = vpop.f32.mrb[0].mxu0
      %v5104 = vadd.f32 0.0, %v5103
      %v5105 = vpop.f32.mrb[0].mxu0
      %5106 = vdwg.mxu0
      %s5107 = scalar_lea.vmem %s4, 64
      %v5108 = vld [vmem:[%s5107] sm:$0xff]
      %v5109 = vld [vmem:[%s5107 + $0x8] sm:$0xff]
      %v5110 = vld [vmem:[%s5107 + $0x10] sm:$0xff]
      %v5111 = vld [vmem:[%s5107 + $0x18] sm:$0xff]
      %v5112 = vld [vmem:[%s5107 + $0x20] sm:$0xff]
      %v5113 = vld [vmem:[%s5107 + $0x28] sm:$0xff]
      %v5114 = vld [vmem:[%s5107 + $0x30] sm:$0xff]
      %v5115 = vld [vmem:[%s5107 + $0x38] sm:$0xff]
      %v5117 = vsel %vm3382, %v5104, 0
      %5119 = vmatprep.subr.mxu0 0.0
      %5120 = vmatpush1.msra.mxu0 %v5108
      %5121 = vmatprep.subr.mxu0 0.0
      %5122 = vmatpush1.msra.mxu0 %v5109
      %5123 = vmatprep.subr.mxu0 0.0
      %5124 = vmatpush1.msra.mxu0 %v5110
      %5125 = vmatprep.subr.mxu0 0.0
      %5126 = vmatpush1.msra.mxu0 %v5111
      %5127 = vmatprep.subr.mxu0 0.0
      %5128 = vmatpush1.msra.mxu0 %v5112
      %5129 = vmatprep.subr.mxu0 0.0
      %5130 = vmatpush1.msra.mxu0 %v5113
      %5131 = vmatprep.subr.mxu0 0.0
      %5132 = vmatpush1.msra.mxu0 %v5114
      %5133 = vmatprep.subr.mxu0 0.0
      %5134 = vmatpush1.msra.mxu0 %v5115
      %5135 = vmatprep.subr.mxu0 0.0
      %5136 = vmatpush1.msra.mxu0 0.0
      %5137 = vmatprep.subr.mxu0 0.0
      %5138 = vmatpush1.msra.mxu0 0.0
      %5139 = vmatprep.subr.mxu0 0.0
      %5140 = vmatpush1.msra.mxu0 0.0
      %5141 = vmatprep.subr.mxu0 0.0
      %5142 = vmatpush1.msra.mxu0 0.0
      %5143 = vmatprep.subr.mxu0 0.0
      %5144 = vmatpush1.msra.mxu0 0.0
      %5145 = vmatprep.subr.mxu0 0.0
      %5146 = vmatpush1.msra.mxu0 0.0
      %5147 = vmatprep.subr.mxu0 0.0
      %5148 = vmatpush1.msra.mxu0 0.0
      %5149 = vmatprep.subr.mxu0 0.0
      %5150 = vmatpush1.msra.mxu0 0.0
      %5151 = vmatprep.subr.mxu0 0.0
      %5152 = vmatpush1.msra.mxu0 0.0
      %5153 = vmatprep.subr.mxu0 0.0
      %5154 = vmatpush1.msra.mxu0 0.0
      %5155 = vmatprep.subr.mxu0 0.0
      %5156 = vmatpush1.msra.mxu0 0.0
      %5157 = vmatprep.subr.mxu0 0.0
      %5158 = vmatpush1.msra.mxu0 0.0
      %5159 = vmatprep.subr.mxu0 0.0
      %5160 = vmatpush1.msra.mxu0 0.0
      %5161 = vmatprep.subr.mxu0 0.0
      %5162 = vmatpush1.msra.mxu0 0.0
      %5163 = vmatprep.subr.mxu0 0.0
      %5164 = vmatpush1.msra.mxu0 0.0
      %5165 = vmatprep.subr.mxu0 0.0
      %5166 = vmatpush1.msra.mxu0 0.0
      %5167 = vmatprep.subr.mxu0 0.0
      %5168 = vmatpush1.msra.mxu0 0.0
      %5169 = vmatprep.subr.mxu0 0.0
      %5170 = vmatpush1.msra.mxu0 0.0
      %5171 = vmatprep.subr.mxu0 0.0
      %5172 = vmatpush1.msra.mxu0 0.0
      %5173 = vmatprep.subr.mxu0 0.0
      %5174 = vmatpush1.msra.mxu0 0.0
      %5175 = vmatprep.subr.mxu0 0.0
      %5176 = vmatpush1.msra.mxu0 0.0
      %5177 = vmatprep.subr.mxu0 0.0
      %5178 = vmatpush1.msra.mxu0 0.0
      %5179 = vmatprep.subr.mxu0 0.0
      %5180 = vmatpush1.msra.mxu0 0.0
      %5181 = vmatprep.subr.mxu0 0.0
      %5182 = vmatpush1.msra.mxu0 0.0
      %5183 = vmatprep.mubr.f32.mxu0 0.0
      %5184 = vmatmul.mubr.f32.gmra.mrb[0].mxu0 %v5117
      %v5185 = vpop.f32.mrb[0].mxu0
      %v5186 = vadd.f32 0.0, %v5185
      %v5187 = vpop.f32.mrb[0].mxu0
      %5188 = vdwg.mxu0
      %v5190 = vsel %vm3382, %v5021, 0
      %5192 = vmatprep.subr.mxu0 0.0
      %5193 = vmatpush1.msra.mxu0 %v5024
      %5194 = vmatprep.subr.mxu0 0.0
      %5195 = vmatpush1.msra.mxu0 %v5025
      %5196 = vmatprep.subr.mxu0 0.0
      %5197 = vmatpush1.msra.mxu0 %v5026
      %5198 = vmatprep.subr.mxu0 0.0
      %5199 = vmatpush1.msra.mxu0 %v5027
      %5200 = vmatprep.subr.mxu0 0.0
      %5201 = vmatpush1.msra.mxu0 %v5028
      %5202 = vmatprep.subr.mxu0 0.0
      %5203 = vmatpush1.msra.mxu0 %v5029
      %5204 = vmatprep.subr.mxu0 0.0
      %5205 = vmatpush1.msra.mxu0 %v5030
      %5206 = vmatprep.subr.mxu0 0.0
      %5207 = vmatpush1.msra.mxu0 %v5031
      %5208 = vmatprep.subr.mxu0 0.0
      %5209 = vmatpush1.msra.mxu0 0.0
      %5210 = vmatprep.subr.mxu0 0.0
      %5211 = vmatpush1.msra.mxu0 0.0
      %5212 = vmatprep.subr.mxu0 0.0
      %5213 = vmatpush1.msra.mxu0 0.0
      %5214 = vmatprep.subr.mxu0 0.0
      %5215 = vmatpush1.msra.mxu0 0.0
      %5216 = vmatprep.subr.mxu0 0.0
      %5217 = vmatpush1.msra.mxu0 0.0
      %5218 = vmatprep.subr.mxu0 0.0
      %5219 = vmatpush1.msra.mxu0 0.0
      %5220 = vmatprep.subr.mxu0 0.0
      %5221 = vmatpush1.msra.mxu0 0.0
      %5222 = vmatprep.subr.mxu0 0.0
      %5223 = vmatpush1.msra.mxu0 0.0
      %5224 = vmatprep.subr.mxu0 0.0
      %5225 = vmatpush1.msra.mxu0 0.0
      %5226 = vmatprep.subr.mxu0 0.0
      %5227 = vmatpush1.msra.mxu0 0.0
      %5228 = vmatprep.subr.mxu0 0.0
      %5229 = vmatpush1.msra.mxu0 0.0
      %5230 = vmatprep.subr.mxu0 0.0
      %5231 = vmatpush1.msra.mxu0 0.0
      %5232 = vmatprep.subr.mxu0 0.0
      %5233 = vmatpush1.msra.mxu0 0.0
      %5234 = vmatprep.subr.mxu0 0.0
      %5235 = vmatpush1.msra.mxu0 0.0
      %5236 = vmatprep.subr.mxu0 0.0
      %5237 = vmatpush1.msra.mxu0 0.0
      %5238 = vmatprep.subr.mxu0 0.0
      %5239 = vmatpush1.msra.mxu0 0.0
      %5240 = vmatprep.subr.mxu0 0.0
      %5241 = vmatpush1.msra.mxu0 0.0
      %5242 = vmatprep.subr.mxu0 0.0
      %5243 = vmatpush1.msra.mxu0 0.0
      %5244 = vmatprep.subr.mxu0 0.0
      %5245 = vmatpush1.msra.mxu0 0.0
      %5246 = vmatprep.subr.mxu0 0.0
      %5247 = vmatpush1.msra.mxu0 0.0
      %5248 = vmatprep.subr.mxu0 0.0
      %5249 = vmatpush1.msra.mxu0 0.0
      %5250 = vmatprep.subr.mxu0 0.0
      %5251 = vmatpush1.msra.mxu0 0.0
      %5252 = vmatprep.subr.mxu0 0.0
      %5253 = vmatpush1.msra.mxu0 0.0
      %5254 = vmatprep.subr.mxu0 0.0
      %5255 = vmatpush1.msra.mxu0 0.0
      %5256 = vmatprep.mubr.f32.mxu0 0.0
      %5257 = vmatmul.mubr.f32.gmra.mrb[0].mxu0 %v5190
      %v5258 = vpop.f32.mrb[0].mxu0
      %v5259 = vadd.f32 %v5186, %v5258
      %v5260 = vpop.f32.mrb[0].mxu0
      %5261 = vdwg.mxu0
      %s5262 = scalar_lea.vmem %s8, 16
      %v5263 = vld [vmem:[%s5262] sm:$0xff]
      %v5265 = vsel %vm1225, %v5263, 0
      %5267 = vmatprep.subr.mxu0 0.0
      %5268 = vmatpush1.msra.mxu0 %v4946
      %5269 = vmatprep.subr.mxu0 0.0
      %5270 = vmatpush1.msra.mxu0 %v4947
      %5271 = vmatprep.subr.mxu0 0.0
      %5272 = vmatpush1.msra.mxu0 0.0
      %5273 = vmatprep.subr.mxu0 0.0
      %5274 = vmatpush1.msra.mxu0 0.0
      %5275 = vmatprep.subr.mxu0 0.0
      %5276 = vmatpush1.msra.mxu0 0.0
      %5277 = vmatprep.subr.mxu0 0.0
      %5278 = vmatpush1.msra.mxu0 0.0
      %5279 = vmatprep.subr.mxu0 0.0
      %5280 = vmatpush1.msra.mxu0 0.0
      %5281 = vmatprep.subr.mxu0 0.0
      %5282 = vmatpush1.msra.mxu0 0.0
      %5283 = vmatprep.subr.mxu0 0.0
      %5284 = vmatpush1.msra.mxu0 0.0
      %5285 = vmatprep.subr.mxu0 0.0
      %5286 = vmatpush1.msra.mxu0 0.0
      %5287 = vmatprep.subr.mxu0 0.0
      %5288 = vmatpush1.msra.mxu0 0.0
      %5289 = vmatprep.subr.mxu0 0.0
      %5290 = vmatpush1.msra.mxu0 0.0
      %5291 = vmatprep.subr.mxu0 0.0
      %5292 = vmatpush1.msra.mxu0 0.0
      %5293 = vmatprep.subr.mxu0 0.0
      %5294 = vmatpush1.msra.mxu0 0.0
      %5295 = vmatprep.subr.mxu0 0.0
      %5296 = vmatpush1.msra.mxu0 0.0
      %5297 = vmatprep.subr.mxu0 0.0
      %5298 = vmatpush1.msra.mxu0 0.0
      %5299 = vmatprep.subr.mxu0 0.0
      %5300 = vmatpush1.msra.mxu0 0.0
      %5301 = vmatprep.subr.mxu0 0.0
      %5302 = vmatpush1.msra.mxu0 0.0
      %5303 = vmatprep.subr.mxu0 0.0
      %5304 = vmatpush1.msra.mxu0 0.0
      %5305 = vmatprep.subr.mxu0 0.0
      %5306 = vmatpush1.msra.mxu0 0.0
      %5307 = vmatprep.subr.mxu0 0.0
      %5308 = vmatpush1.msra.mxu0 0.0
      %5309 = vmatprep.subr.mxu0 0.0
      %5310 = vmatpush1.msra.mxu0 0.0
      %5311 = vmatprep.subr.mxu0 0.0
      %5312 = vmatpush1.msra.mxu0 0.0
      %5313 = vmatprep.subr.mxu0 0.0
      %5314 = vmatpush1.msra.mxu0 0.0
      %5315 = vmatprep.subr.mxu0 0.0
      %5316 = vmatpush1.msra.mxu0 0.0
      %5317 = vmatprep.subr.mxu0 0.0
      %5318 = vmatpush1.msra.mxu0 0.0
      %5319 = vmatprep.subr.mxu0 0.0
      %5320 = vmatpush1.msra.mxu0 0.0
      %5321 = vmatprep.subr.mxu0 0.0
      %5322 = vmatpush1.msra.mxu0 0.0
      %5323 = vmatprep.subr.mxu0 0.0
      %5324 = vmatpush1.msra.mxu0 0.0
      %5325 = vmatprep.subr.mxu0 0.0
      %5326 = vmatpush1.msra.mxu0 0.0
      %5327 = vmatprep.subr.mxu0 0.0
      %5328 = vmatpush1.msra.mxu0 0.0
      %5329 = vmatprep.subr.mxu0 0.0
      %5330 = vmatpush1.msra.mxu0 0.0
      %5331 = vmatprep.mubr.f32.mxu0 0.0
      %5332 = vmatmul.mubr.f32.gmra.mrb[0].mxu0 %v5265
      %v5333 = vpop.f32.mrb[0].mxu0
      %v5334 = vadd.f32 0.0, %v5333
      %v5335 = vpop.f32.mrb[0].mxu0
      %5336 = vdwg.mxu0
      %s5337 = scalar_lea.vmem %s4, 128
      %v5338 = vld [vmem:[%s5337] sm:$0xff]
      %v5339 = vld [vmem:[%s5337 + $0x8] sm:$0xff]
      %v5340 = vld [vmem:[%s5337 + $0x10] sm:$0xff]
      %v5341 = vld [vmem:[%s5337 + $0x18] sm:$0xff]
      %v5342 = vld [vmem:[%s5337 + $0x20] sm:$0xff]
      %v5343 = vld [vmem:[%s5337 + $0x28] sm:$0xff]
      %v5344 = vld [vmem:[%s5337 + $0x30] sm:$0xff]
      %v5345 = vld [vmem:[%s5337 + $0x38] sm:$0xff]
      %v5347 = vsel %vm3382, %v5334, 0
      %5349 = vmatprep.subr.mxu0 0.0
      %5350 = vmatpush1.msra.mxu0 %v5338
      %5351 = vmatprep.subr.mxu0 0.0
      %5352 = vmatpush1.msra.mxu0 %v5339
      %5353 = vmatprep.subr.mxu0 0.0
      %5354 = vmatpush1.msra.mxu0 %v5340
      %5355 = vmatprep.subr.mxu0 0.0
      %5356 = vmatpush1.msra.mxu0 %v5341
      %5357 = vmatprep.subr.mxu0 0.0
      %5358 = vmatpush1.msra.mxu0 %v5342
      %5359 = vmatprep.subr.mxu0 0.0
      %5360 = vmatpush1.msra.mxu0 %v5343
      %5361 = vmatprep.subr.mxu0 0.0
      %5362 = vmatpush1.msra.mxu0 %v5344
      %5363 = vmatprep.subr.mxu0 0.0
      %5364 = vmatpush1.msra.mxu0 %v5345
      %5365 = vmatprep.subr.mxu0 0.0
      %5366 = vmatpush1.msra.mxu0 0.0
      %5367 = vmatprep.subr.mxu0 0.0
      %5368 = vmatpush1.msra.mxu0 0.0
      %5369 = vmatprep.subr.mxu0 0.0
      %5370 = vmatpush1.msra.mxu0 0.0
      %5371 = vmatprep.subr.mxu0 0.0
      %5372 = vmatpush1.msra.mxu0 0.0
      %5373 = vmatprep.subr.mxu0 0.0
      %5374 = vmatpush1.msra.mxu0 0.0
      %5375 = vmatprep.subr.mxu0 0.0
      %5376 = vmatpush1.msra.mxu0 0.0
      %5377 = vmatprep.subr.mxu0 0.0
      %5378 = vmatpush1.msra.mxu0 0.0
      %5379 = vmatprep.subr.mxu0 0.0
      %5380 = vmatpush1.msra.mxu0 0.0
      %5381 = vmatprep.subr.mxu0 0.0
      %5382 = vmatpush1.msra.mxu0 0.0
      %5383 = vmatprep.subr.mxu0 0.0
      %5384 = vmatpush1.msra.mxu0 0.0
      %5385 = vmatprep.subr.mxu0 0.0
      %5386 = vmatpush1.msra.mxu0 0.0
      %5387 = vmatprep.subr.mxu0 0.0
      %5388 = vmatpush1.msra.mxu0 0.0
      %5389 = vmatprep.subr.mxu0 0.0
      %5390 = vmatpush1.msra.mxu0 0.0
      %5391 = vmatprep.subr.mxu0 0.0
      %5392 = vmatpush1.msra.mxu0 0.0
      %5393 = vmatprep.subr.mxu0 0.0
      %5394 = vmatpush1.msra.mxu0 0.0
      %5395 = vmatprep.subr.mxu0 0.0
      %5396 = vmatpush1.msra.mxu0 0.0
      %5397 = vmatprep.subr.mxu0 0.0
      %5398 = vmatpush1.msra.mxu0 0.0
      %5399 = vmatprep.subr.mxu0 0.0
      %5400 = vmatpush1.msra.mxu0 0.0
      %5401 = vmatprep.subr.mxu0 0.0
      %5402 = vmatpush1.msra.mxu0 0.0
      %5403 = vmatprep.subr.mxu0 0.0
      %5404 = vmatpush1.msra.mxu0 0.0
      %5405 = vmatprep.subr.mxu0 0.0
      %5406 = vmatpush1.msra.mxu0 0.0
      %5407 = vmatprep.subr.mxu0 0.0
      %5408 = vmatpush1.msra.mxu0 0.0
      %5409 = vmatprep.subr.mxu0 0.0
      %5410 = vmatpush1.msra.mxu0 0.0
      %5411 = vmatprep.subr.mxu0 0.0
      %5412 = vmatpush1.msra.mxu0 0.0
      %5413 = vmatprep.mubr.f32.mxu0 0.0
      %5414 = vmatmul.mubr.f32.gmra.mrb[0].mxu0 %v5347
      %v5415 = vpop.f32.mrb[0].mxu0
      %v5416 = vadd.f32 0.0, %v5415
      %v5417 = vpop.f32.mrb[0].mxu0
      %5418 = vdwg.mxu0
      %v5419 = vadd.f32 %v5259, %v5416
      %s5420 = scalar_lea.vmem %s8, 24
      %v5421 = vld [vmem:[%s5420] sm:$0xff]
      %v5423 = vsel %vm1225, %v5421, 0
      %5425 = vmatprep.subr.mxu0 0.0
      %5426 = vmatpush1.msra.mxu0 %v4946
      %5427 = vmatprep.subr.mxu0 0.0
      %5428 = vmatpush1.msra.mxu0 %v4947
      %5429 = vmatprep.subr.mxu0 0.0
      %5430 = vmatpush1.msra.mxu0 0.0
      %5431 = vmatprep.subr.mxu0 0.0
      %5432 = vmatpush1.msra.mxu0 0.0
      %5433 = vmatprep.subr.mxu0 0.0
      %5434 = vmatpush1.msra.mxu0 0.0
      %5435 = vmatprep.subr.mxu0 0.0
      %5436 = vmatpush1.msra.mxu0 0.0
      %5437 = vmatprep.subr.mxu0 0.0
      %5438 = vmatpush1.msra.mxu0 0.0
      %5439 = vmatprep.subr.mxu0 0.0
      %5440 = vmatpush1.msra.mxu0 0.0
      %5441 = vmatprep.subr.mxu0 0.0
      %5442 = vmatpush1.msra.mxu0 0.0
      %5443 = vmatprep.subr.mxu0 0.0
      %5444 = vmatpush1.msra.mxu0 0.0
      %5445 = vmatprep.subr.mxu0 0.0
      %5446 = vmatpush1.msra.mxu0 0.0
      %5447 = vmatprep.subr.mxu0 0.0
      %5448 = vmatpush1.msra.mxu0 0.0
      %5449 = vmatprep.subr.mxu0 0.0
      %5450 = vmatpush1.msra.mxu0 0.0
      %5451 = vmatprep.subr.mxu0 0.0
      %5452 = vmatpush1.msra.mxu0 0.0
      %5453 = vmatprep.subr.mxu0 0.0
      %5454 = vmatpush1.msra.mxu0 0.0
      %5455 = vmatprep.subr.mxu0 0.0
      %5456 = vmatpush1.msra.mxu0 0.0
      %5457 = vmatprep.subr.mxu0 0.0
      %5458 = vmatpush1.msra.mxu0 0.0
      %5459 = vmatprep.subr.mxu0 0.0
      %5460 = vmatpush1.msra.mxu0 0.0
      %5461 = vmatprep.subr.mxu0 0.0
      %5462 = vmatpush1.msra.mxu0 0.0
      %5463 = vmatprep.subr.mxu0 0.0
      %5464 = vmatpush1.msra.mxu0 0.0
      %5465 = vmatprep.subr.mxu0 0.0
      %5466 = vmatpush1.msra.mxu0 0.0
      %5467 = vmatprep.subr.mxu0 0.0
      %5468 = vmatpush1.msra.mxu0 0.0
      %5469 = vmatprep.subr.mxu0 0.0
      %5470 = vmatpush1.msra.mxu0 0.0
      %5471 = vmatprep.subr.mxu0 0.0
      %5472 = vmatpush1.msra.mxu0 0.0
      %5473 = vmatprep.subr.mxu0 0.0
      %5474 = vmatpush1.msra.mxu0 0.0
      %5475 = vmatprep.subr.mxu0 0.0
      %5476 = vmatpush1.msra.mxu0 0.0
      %5477 = vmatprep.subr.mxu0 0.0
      %5478 = vmatpush1.msra.mxu0 0.0
      %5479 = vmatprep.subr.mxu0 0.0
      %5480 = vmatpush1.msra.mxu0 0.0
      %5481 = vmatprep.subr.mxu0 0.0
      %5482 = vmatpush1.msra.mxu0 0.0
      %5483 = vmatprep.subr.mxu0 0.0
      %5484 = vmatpush1.msra.mxu0 0.0
      %5485 = vmatprep.subr.mxu0 0.0
      %5486 = vmatpush1.msra.mxu0 0.0
      %5487 = vmatprep.subr.mxu0 0.0
      %5488 = vmatpush1.msra.mxu0 0.0
      %5489 = vmatprep.mubr.f32.mxu0 0.0
      %5490 = vmatmul.mubr.f32.gmra.mrb[0].mxu0 %v5423
      %v5491 = vpop.f32.mrb[0].mxu0
      %v5492 = vadd.f32 0.0, %v5491
      %v5493 = vpop.f32.mrb[0].mxu0
      %5494 = vdwg.mxu0
      %s5495 = scalar_lea.vmem %s4, 192
      %v5496 = vld [vmem:[%s5495] sm:$0xff]
      %v5497 = vld [vmem:[%s5495 + $0x8] sm:$0xff]
      %v5498 = vld [vmem:[%s5495 + $0x10] sm:$0xff]
      %v5499 = vld [vmem:[%s5495 + $0x18] sm:$0xff]
      %v5500 = vld [vmem:[%s5495 + $0x20] sm:$0xff]
      %v5501 = vld [vmem:[%s5495 + $0x28] sm:$0xff]
      %v5502 = vld [vmem:[%s5495 + $0x30] sm:$0xff]
      %v5503 = vld [vmem:[%s5495 + $0x38] sm:$0xff]
      %v5505 = vsel %vm3382, %v5492, 0
      %5507 = vmatprep.subr.mxu0 0.0
      %5508 = vmatpush1.msra.mxu0 %v5496
      %5509 = vmatprep.subr.mxu0 0.0
      %5510 = vmatpush1.msra.mxu0 %v5497
      %5511 = vmatprep.subr.mxu0 0.0
      %5512 = vmatpush1.msra.mxu0 %v5498
      %5513 = vmatprep.subr.mxu0 0.0
      %5514 = vmatpush1.msra.mxu0 %v5499
      %5515 = vmatprep.subr.mxu0 0.0
      %5516 = vmatpush1.msra.mxu0 %v5500
      %5517 = vmatprep.subr.mxu0 0.0
      %5518 = vmatpush1.msra.mxu0 %v5501
      %5519 = vmatprep.subr.mxu0 0.0
      %5520 = vmatpush1.msra.mxu0 %v5502
      %5521 = vmatprep.subr.mxu0 0.0
      %5522 = vmatpush1.msra.mxu0 %v5503
      %5523 = vmatprep.subr.mxu0 0.0
      %5524 = vmatpush1.msra.mxu0 0.0
      %5525 = vmatprep.subr.mxu0 0.0
      %5526 = vmatpush1.msra.mxu0 0.0
      %5527 = vmatprep.subr.mxu0 0.0
      %5528 = vmatpush1.msra.mxu0 0.0
      %5529 = vmatprep.subr.mxu0 0.0
      %5530 = vmatpush1.msra.mxu0 0.0
      %5531 = vmatprep.subr.mxu0 0.0
      %5532 = vmatpush1.msra.mxu0 0.0
      %5533 = vmatprep.subr.mxu0 0.0
      %5534 = vmatpush1.msra.mxu0 0.0
      %5535 = vmatprep.subr.mxu0 0.0
      %5536 = vmatpush1.msra.mxu0 0.0
      %5537 = vmatprep.subr.mxu0 0.0
      %5538 = vmatpush1.msra.mxu0 0.0
      %5539 = vmatprep.subr.mxu0 0.0
      %5540 = vmatpush1.msra.mxu0 0.0
      %5541 = vmatprep.subr.mxu0 0.0
      %5542 = vmatpush1.msra.mxu0 0.0
      %5543 = vmatprep.subr.mxu0 0.0
      %5544 = vmatpush1.msra.mxu0 0.0
      %5545 = vmatprep.subr.mxu0 0.0
      %5546 = vmatpush1.msra.mxu0 0.0
      %5547 = vmatprep.subr.mxu0 0.0
      %5548 = vmatpush1.msra.mxu0 0.0
      %5549 = vmatprep.subr.mxu0 0.0
      %5550 = vmatpush1.msra.mxu0 0.0
      %5551 = vmatprep.subr.mxu0 0.0
      %5552 = vmatpush1.msra.mxu0 0.0
      %5553 = vmatprep.subr.mxu0 0.0
      %5554 = vmatpush1.msra.mxu0 0.0
      %5555 = vmatprep.subr.mxu0 0.0
      %5556 = vmatpush1.msra.mxu0 0.0
      %5557 = vmatprep.subr.mxu0 0.0
      %5558 = vmatpush1.msra.mxu0 0.0
      %5559 = vmatprep.subr.mxu0 0.0
      %5560 = vmatpush1.msra.mxu0 0.0
      %5561 = vmatprep.subr.mxu0 0.0
      %5562 = vmatpush1.msra.mxu0 0.0
      %5563 = vmatprep.subr.mxu0 0.0
      %5564 = vmatpush1.msra.mxu0 0.0
      %5565 = vmatprep.subr.mxu0 0.0
      %5566 = vmatpush1.msra.mxu0 0.0
      %5567 = vmatprep.subr.mxu0 0.0
      %5568 = vmatpush1.msra.mxu0 0.0
      %5569 = vmatprep.subr.mxu0 0.0
      %5570 = vmatpush1.msra.mxu0 0.0
      %5571 = vmatprep.mubr.f32.mxu0 0.0
      %5572 = vmatmul.mubr.f32.gmra.mrb[0].mxu0 %v5505
      %v5573 = vpop.f32.mrb[0].mxu0
      %v5574 = vadd.f32 0.0, %v5573
      %v5575 = vpop.f32.mrb[0].mxu0
      %5576 = vdwg.mxu0
      %v5577 = vadd.f32 %v5419, %v5574
      %s5578 = scalar_lea.vmem %s8, 32
      %v5579 = vld [vmem:[%s5578] sm:$0xff]
      %v5581 = vsel %vm1225, %v5579, 0
      %5583 = vmatprep.subr.mxu0 0.0
      %5584 = vmatpush1.msra.mxu0 %v4946
      %5585 = vmatprep.subr.mxu0 0.0
      %5586 = vmatpush1.msra.mxu0 %v4947
      %5587 = vmatprep.subr.mxu0 0.0
      %5588 = vmatpush1.msra.mxu0 0.0
      %5589 = vmatprep.subr.mxu0 0.0
      %5590 = vmatpush1.msra.mxu0 0.0
      %5591 = vmatprep.subr.mxu0 0.0
      %5592 = vmatpush1.msra.mxu0 0.0
      %5593 = vmatprep.subr.mxu0 0.0
      %5594 = vmatpush1.msra.mxu0 0.0
      %5595 = vmatprep.subr.mxu0 0.0
      %5596 = vmatpush1.msra.mxu0 0.0
      %5597 = vmatprep.subr.mxu0 0.0
      %5598 = vmatpush1.msra.mxu0 0.0
      %5599 = vmatprep.subr.mxu0 0.0
      %5600 = vmatpush1.msra.mxu0 0.0
      %5601 = vmatprep.subr.mxu0 0.0
      %5602 = vmatpush1.msra.mxu0 0.0
      %5603 = vmatprep.subr.mxu0 0.0
      %5604 = vmatpush1.msra.mxu0 0.0
      %5605 = vmatprep.subr.mxu0 0.0
      %5606 = vmatpush1.msra.mxu0 0.0
      %5607 = vmatprep.subr.mxu0 0.0
      %5608 = vmatpush1.msra.mxu0 0.0
      %5609 = vmatprep.subr.mxu0 0.0
      %5610 = vmatpush1.msra.mxu0 0.0
      %5611 = vmatprep.subr.mxu0 0.0
      %5612 = vmatpush1.msra.mxu0 0.0
      %5613 = vmatprep.subr.mxu0 0.0
      %5614 = vmatpush1.msra.mxu0 0.0
      %5615 = vmatprep.subr.mxu0 0.0
      %5616 = vmatpush1.msra.mxu0 0.0
      %5617 = vmatprep.subr.mxu0 0.0
      %5618 = vmatpush1.msra.mxu0 0.0
      %5619 = vmatprep.subr.mxu0 0.0
      %5620 = vmatpush1.msra.mxu0 0.0
      %5621 = vmatprep.subr.mxu0 0.0
      %5622 = vmatpush1.msra.mxu0 0.0
      %5623 = vmatprep.subr.mxu0 0.0
      %5624 = vmatpush1.msra.mxu0 0.0
      %5625 = vmatprep.subr.mxu0 0.0
      %5626 = vmatpush1.msra.mxu0 0.0
      %5627 = vmatprep.subr.mxu0 0.0
      %5628 = vmatpush1.msra.mxu0 0.0
      %5629 = vmatprep.subr.mxu0 0.0
      %5630 = vmatpush1.msra.mxu0 0.0
      %5631 = vmatprep.subr.mxu0 0.0
      %5632 = vmatpush1.msra.mxu0 0.0
      %5633 = vmatprep.subr.mxu0 0.0
      %5634 = vmatpush1.msra.mxu0 0.0
      %5635 = vmatprep.subr.mxu0 0.0
      %5636 = vmatpush1.msra.mxu0 0.0
      %5637 = vmatprep.subr.mxu0 0.0
      %5638 = vmatpush1.msra.mxu0 0.0
      %5639 = vmatprep.subr.mxu0 0.0
      %5640 = vmatpush1.msra.mxu0 0.0
      %5641 = vmatprep.subr.mxu0 0.0
      %5642 = vmatpush1.msra.mxu0 0.0
      %5643 = vmatprep.subr.mxu0 0.0
      %5644 = vmatpush1.msra.mxu0 0.0
      %5645 = vmatprep.subr.mxu0 0.0
      %5646 = vmatpush1.msra.mxu0 0.0
      %5647 = vmatprep.mubr.f32.mxu0 0.0
      %5648 = vmatmul.mubr.f32.gmra.mrb[0].mxu0 %v5581
      %v5649 = vpop.f32.mrb[0].mxu0
      %v5650 = vadd.f32 0.0, %v5649
      %v5651 = vpop.f32.mrb[0].mxu0
      %5652 = vdwg.mxu0
      %s5653 = scalar_lea.vmem %s4, 256
      %v5654 = vld [vmem:[%s5653] sm:$0xff]
      %v5655 = vld [vmem:[%s5653 + $0x8] sm:$0xff]
      %v5656 = vld [vmem:[%s5653 + $0x10] sm:$0xff]
      %v5657 = vld [vmem:[%s5653 + $0x18] sm:$0xff]
      %v5658 = vld [vmem:[%s5653 + $0x20] sm:$0xff]
      %v5659 = vld [vmem:[%s5653 + $0x28] sm:$0xff]
      %v5660 = vld [vmem:[%s5653 + $0x30] sm:$0xff]
      %v5661 = vld [vmem:[%s5653 + $0x38] sm:$0xff]
      %v5663 = vsel %vm3382, %v5650, 0
      %5665 = vmatprep.subr.mxu0 0.0
      %5666 = vmatpush1.msra.mxu0 %v5654
      %5667 = vmatprep.subr.mxu0 0.0
      %5668 = vmatpush1.msra.mxu0 %v5655
      %5669 = vmatprep.subr.mxu0 0.0
      %5670 = vmatpush1.msra.mxu0 %v5656
      %5671 = vmatprep.subr.mxu0 0.0
      %5672 = vmatpush1.msra.mxu0 %v5657
      %5673 = vmatprep.subr.mxu0 0.0
      %5674 = vmatpush1.msra.mxu0 %v5658
      %5675 = vmatprep.subr.mxu0 0.0
      %5676 = vmatpush1.msra.mxu0 %v5659
      %5677 = vmatprep.subr.mxu0 0.0
      %5678 = vmatpush1.msra.mxu0 %v5660
      %5679 = vmatprep.subr.mxu0 0.0
      %5680 = vmatpush1.msra.mxu0 %v5661
      %5681 = vmatprep.subr.mxu0 0.0
      %5682 = vmatpush1.msra.mxu0 0.0
      %5683 = vmatprep.subr.mxu0 0.0
      %5684 = vmatpush1.msra.mxu0 0.0
      %5685 = vmatprep.subr.mxu0 0.0
      %5686 = vmatpush1.msra.mxu0 0.0
      %5687 = vmatprep.subr.mxu0 0.0
      %5688 = vmatpush1.msra.mxu0 0.0
      %5689 = vmatprep.subr.mxu0 0.0
      %5690 = vmatpush1.msra.mxu0 0.0
      %5691 = vmatprep.subr.mxu0 0.0
      %5692 = vmatpush1.msra.mxu0 0.0
      %5693 = vmatprep.subr.mxu0 0.0
      %5694 = vmatpush1.msra.mxu0 0.0
      %5695 = vmatprep.subr.mxu0 0.0
      %5696 = vmatpush1.msra.mxu0 0.0
      %5697 = vmatprep.subr.mxu0 0.0
      %5698 = vmatpush1.msra.mxu0 0.0
      %5699 = vmatprep.subr.mxu0 0.0
      %5700 = vmatpush1.msra.mxu0 0.0
      %5701 = vmatprep.subr.mxu0 0.0
      %5702 = vmatpush1.msra.mxu0 0.0
      %5703 = vmatprep.subr.mxu0 0.0
      %5704 = vmatpush1.msra.mxu0 0.0
      %5705 = vmatprep.subr.mxu0 0.0
      %5706 = vmatpush1.msra.mxu0 0.0
      %5707 = vmatprep.subr.mxu0 0.0
      %5708 = vmatpush1.msra.mxu0 0.0
      %5709 = vmatprep.subr.mxu0 0.0
      %5710 = vmatpush1.msra.mxu0 0.0
      %5711 = vmatprep.subr.mxu0 0.0
      %5712 = vmatpush1.msra.mxu0 0.0
      %5713 = vmatprep.subr.mxu0 0.0
      %5714 = vmatpush1.msra.mxu0 0.0
      %5715 = vmatprep.subr.mxu0 0.0
      %5716 = vmatpush1.msra.mxu0 0.0
      %5717 = vmatprep.subr.mxu0 0.0
      %5718 = vmatpush1.msra.mxu0 0.0
      %5719 = vmatprep.subr.mxu0 0.0
      %5720 = vmatpush1.msra.mxu0 0.0
      %5721 = vmatprep.subr.mxu0 0.0
      %5722 = vmatpush1.msra.mxu0 0.0
      %5723 = vmatprep.subr.mxu0 0.0
      %5724 = vmatpush1.msra.mxu0 0.0
      %5725 = vmatprep.subr.mxu0 0.0
      %5726 = vmatpush1.msra.mxu0 0.0
      %5727 = vmatprep.subr.mxu0 0.0
      %5728 = vmatpush1.msra.mxu0 0.0
      %5729 = vmatprep.mubr.f32.mxu0 0.0
      %5730 = vmatmul.mubr.f32.gmra.mrb[0].mxu0 %v5663
      %v5731 = vpop.f32.mrb[0].mxu0
      %v5732 = vadd.f32 0.0, %v5731
      %v5733 = vpop.f32.mrb[0].mxu0
      %5734 = vdwg.mxu0
      %v5735 = vadd.f32 %v5577, %v5732
      %s5736 = scalar_lea.vmem %s8, 40
      %v5737 = vld [vmem:[%s5736] sm:$0xff]
      %v5739 = vsel %vm1225, %v5737, 0
      %5741 = vmatprep.subr.mxu0 0.0
      %5742 = vmatpush1.msra.mxu0 %v4946
      %5743 = vmatprep.subr.mxu0 0.0
      %5744 = vmatpush1.msra.mxu0 %v4947
      %5745 = vmatprep.subr.mxu0 0.0
      %5746 = vmatpush1.msra.mxu0 0.0
      %5747 = vmatprep.subr.mxu0 0.0
      %5748 = vmatpush1.msra.mxu0 0.0
      %5749 = vmatprep.subr.mxu0 0.0
      %5750 = vmatpush1.msra.mxu0 0.0
      %5751 = vmatprep.subr.mxu0 0.0
      %5752 = vmatpush1.msra.mxu0 0.0
      %5753 = vmatprep.subr.mxu0 0.0
      %5754 = vmatpush1.msra.mxu0 0.0
      %5755 = vmatprep.subr.mxu0 0.0
      %5756 = vmatpush1.msra.mxu0 0.0
      %5757 = vmatprep.subr.mxu0 0.0
      %5758 = vmatpush1.msra.mxu0 0.0
      %5759 = vmatprep.subr.mxu0 0.0
      %5760 = vmatpush1.msra.mxu0 0.0
      %5761 = vmatprep.subr.mxu0 0.0
      %5762 = vmatpush1.msra.mxu0 0.0
      %5763 = vmatprep.subr.mxu0 0.0
      %5764 = vmatpush1.msra.mxu0 0.0
      %5765 = vmatprep.subr.mxu0 0.0
      %5766 = vmatpush1.msra.mxu0 0.0
      %5767 = vmatprep.subr.mxu0 0.0
      %5768 = vmatpush1.msra.mxu0 0.0
      %5769 = vmatprep.subr.mxu0 0.0
      %5770 = vmatpush1.msra.mxu0 0.0
      %5771 = vmatprep.subr.mxu0 0.0
      %5772 = vmatpush1.msra.mxu0 0.0
      %5773 = vmatprep.subr.mxu0 0.0
      %5774 = vmatpush1.msra.mxu0 0.0
      %5775 = vmatprep.subr.mxu0 0.0
      %5776 = vmatpush1.msra.mxu0 0.0
      %5777 = vmatprep.subr.mxu0 0.0
      %5778 = vmatpush1.msra.mxu0 0.0
      %5779 = vmatprep.subr.mxu0 0.0
      %5780 = vmatpush1.msra.mxu0 0.0
      %5781 = vmatprep.subr.mxu0 0.0
      %5782 = vmatpush1.msra.mxu0 0.0
      %5783 = vmatprep.subr.mxu0 0.0
      %5784 = vmatpush1.msra.mxu0 0.0
      %5785 = vmatprep.subr.mxu0 0.0
      %5786 = vmatpush1.msra.mxu0 0.0
      %5787 = vmatprep.subr.mxu0 0.0
      %5788 = vmatpush1.msra.mxu0 0.0
      %5789 = vmatprep.subr.mxu0 0.0
      %5790 = vmatpush1.msra.mxu0 0.0
      %5791 = vmatprep.subr.mxu0 0.0
      %5792 = vmatpush1.msra.mxu0 0.0
      %5793 = vmatprep.subr.mxu0 0.0
      %5794 = vmatpush1.msra.mxu0 0.0
      %5795 = vmatprep.subr.mxu0 0.0
      %5796 = vmatpush1.msra.mxu0 0.0
      %5797 = vmatprep.subr.mxu0 0.0
      %5798 = vmatpush1.msra.mxu0 0.0
      %5799 = vmatprep.subr.mxu0 0.0
      %5800 = vmatpush1.msra.mxu0 0.0
      %5801 = vmatprep.subr.mxu0 0.0
      %5802 = vmatpush1.msra.mxu0 0.0
      %5803 = vmatprep.subr.mxu0 0.0
      %5804 = vmatpush1.msra.mxu0 0.0
      %5805 = vmatprep.mubr.f32.mxu0 0.0
      %5806 = vmatmul.mubr.f32.gmra.mrb[0].mxu0 %v5739
      %v5807 = vpop.f32.mrb[0].mxu0
      %v5808 = vadd.f32 0.0, %v5807
      %v5809 = vpop.f32.mrb[0].mxu0
      %5810 = vdwg.mxu0
      %s5811 = scalar_lea.vmem %s4, 320
      %v5812 = vld [vmem:[%s5811] sm:$0xff]
      %v5813 = vld [vmem:[%s5811 + $0x8] sm:$0xff]
      %v5814 = vld [vmem:[%s5811 + $0x10] sm:$0xff]
      %v5815 = vld [vmem:[%s5811 + $0x18] sm:$0xff]
      %v5816 = vld [vmem:[%s5811 + $0x20] sm:$0xff]
      %v5817 = vld [vmem:[%s5811 + $0x28] sm:$0xff]
      %v5818 = vld [vmem:[%s5811 + $0x30] sm:$0xff]
      %v5819 = vld [vmem:[%s5811 + $0x38] sm:$0xff]
      %v5821 = vsel %vm3382, %v5808, 0
      %5823 = vmatprep.subr.mxu0 0.0
      %5824 = vmatpush1.msra.mxu0 %v5812
      %5825 = vmatprep.subr.mxu0 0.0
      %5826 = vmatpush1.msra.mxu0 %v5813
      %5827 = vmatprep.subr.mxu0 0.0
      %5828 = vmatpush1.msra.mxu0 %v5814
      %5829 = vmatprep.subr.mxu0 0.0
      %5830 = vmatpush1.msra.mxu0 %v5815
      %5831 = vmatprep.subr.mxu0 0.0
      %5832 = vmatpush1.msra.mxu0 %v5816
      %5833 = vmatprep.subr.mxu0 0.0
      %5834 = vmatpush1.msra.mxu0 %v5817
      %5835 = vmatprep.subr.mxu0 0.0
      %5836 = vmatpush1.msra.mxu0 %v5818
      %5837 = vmatprep.subr.mxu0 0.0
      %5838 = vmatpush1.msra.mxu0 %v5819
      %5839 = vmatprep.subr.mxu0 0.0
      %5840 = vmatpush1.msra.mxu0 0.0
      %5841 = vmatprep.subr.mxu0 0.0
      %5842 = vmatpush1.msra.mxu0 0.0
      %5843 = vmatprep.subr.mxu0 0.0
      %5844 = vmatpush1.msra.mxu0 0.0
      %5845 = vmatprep.subr.mxu0 0.0
      %5846 = vmatpush1.msra.mxu0 0.0
      %5847 = vmatprep.subr.mxu0 0.0
      %5848 = vmatpush1.msra.mxu0 0.0
      %5849 = vmatprep.subr.mxu0 0.0
      %5850 = vmatpush1.msra.mxu0 0.0
      %5851 = vmatprep.subr.mxu0 0.0
      %5852 = vmatpush1.msra.mxu0 0.0
      %5853 = vmatprep.subr.mxu0 0.0
      %5854 = vmatpush1.msra.mxu0 0.0
      %5855 = vmatprep.subr.mxu0 0.0
      %5856 = vmatpush1.msra.mxu0 0.0
      %5857 = vmatprep.subr.mxu0 0.0
      %5858 = vmatpush1.msra.mxu0 0.0
      %5859 = vmatprep.subr.mxu0 0.0
      %5860 = vmatpush1.msra.mxu0 0.0
      %5861 = vmatprep.subr.mxu0 0.0
      %5862 = vmatpush1.msra.mxu0 0.0
      %5863 = vmatprep.subr.mxu0 0.0
      %5864 = vmatpush1.msra.mxu0 0.0
      %5865 = vmatprep.subr.mxu0 0.0
      %5866 = vmatpush1.msra.mxu0 0.0
      %5867 = vmatprep.subr.mxu0 0.0
      %5868 = vmatpush1.msra.mxu0 0.0
      %5869 = vmatprep.subr.mxu0 0.0
      %5870 = vmatpush1.msra.mxu0 0.0
      %5871 = vmatprep.subr.mxu0 0.0
      %5872 = vmatpush1.msra.mxu0 0.0
      %5873 = vmatprep.subr.mxu0 0.0
      %5874 = vmatpush1.msra.mxu0 0.0
      %5875 = vmatprep.subr.mxu0 0.0
      %5876 = vmatpush1.msra.mxu0 0.0
      %5877 = vmatprep.subr.mxu0 0.0
      %5878 = vmatpush1.msra.mxu0 0.0
      %5879 = vmatprep.subr.mxu0 0.0
      %5880 = vmatpush1.msra.mxu0 0.0
      %5881 = vmatprep.subr.mxu0 0.0
      %5882 = vmatpush1.msra.mxu0 0.0
      %5883 = vmatprep.subr.mxu0 0.0
      %5884 = vmatpush1.msra.mxu0 0.0
      %5885 = vmatprep.subr.mxu0 0.0
      %5886 = vmatpush1.msra.mxu0 0.0
      %5887 = vmatprep.mubr.f32.mxu0 0.0
      %5888 = vmatmul.mubr.f32.gmra.mrb[0].mxu0 %v5821
      %v5889 = vpop.f32.mrb[0].mxu0
      %v5890 = vadd.f32 0.0, %v5889
      %v5891 = vpop.f32.mrb[0].mxu0
      %5892 = vdwg.mxu0
      %v5893 = vadd.f32 %v5735, %v5890
      %s5894 = scalar_lea.vmem %s8, 48
      %v5895 = vld [vmem:[%s5894] sm:$0xff]
      %v5897 = vsel %vm1225, %v5895, 0
      %5899 = vmatprep.subr.mxu0 0.0
      %5900 = vmatpush1.msra.mxu0 %v4946
      %5901 = vmatprep.subr.mxu0 0.0
      %5902 = vmatpush1.msra.mxu0 %v4947
      %5903 = vmatprep.subr.mxu0 0.0
      %5904 = vmatpush1.msra.mxu0 0.0
      %5905 = vmatprep.subr.mxu0 0.0
      %5906 = vmatpush1.msra.mxu0 0.0
      %5907 = vmatprep.subr.mxu0 0.0
      %5908 = vmatpush1.msra.mxu0 0.0
      %5909 = vmatprep.subr.mxu0 0.0
      %5910 = vmatpush1.msra.mxu0 0.0
      %5911 = vmatprep.subr.mxu0 0.0
      %5912 = vmatpush1.msra.mxu0 0.0
      %5913 = vmatprep.subr.mxu0 0.0
      %5914 = vmatpush1.msra.mxu0 0.0
      %5915 = vmatprep.subr.mxu0 0.0
      %5916 = vmatpush1.msra.mxu0 0.0
      %5917 = vmatprep.subr.mxu0 0.0
      %5918 = vmatpush1.msra.mxu0 0.0
      %5919 = vmatprep.subr.mxu0 0.0
      %5920 = vmatpush1.msra.mxu0 0.0
      %5921 = vmatprep.subr.mxu0 0.0
      %5922 = vmatpush1.msra.mxu0 0.0
      %5923 = vmatprep.subr.mxu0 0.0
      %5924 = vmatpush1.msra.mxu0 0.0
      %5925 = vmatprep.subr.mxu0 0.0
      %5926 = vmatpush1.msra.mxu0 0.0
      %5927 = vmatprep.subr.mxu0 0.0
      %5928 = vmatpush1.msra.mxu0 0.0
      %5929 = vmatprep.subr.mxu0 0.0
      %5930 = vmatpush1.msra.mxu0 0.0
      %5931 = vmatprep.subr.mxu0 0.0
      %5932 = vmatpush1.msra.mxu0 0.0
      %5933 = vmatprep.subr.mxu0 0.0
      %5934 = vmatpush1.msra.mxu0 0.0
      %5935 = vmatprep.subr.mxu0 0.0
      %5936 = vmatpush1.msra.mxu0 0.0
      %5937 = vmatprep.subr.mxu0 0.0
      %5938 = vmatpush1.msra.mxu0 0.0
      %5939 = vmatprep.subr.mxu0 0.0
      %5940 = vmatpush1.msra.mxu0 0.0
      %5941 = vmatprep.subr.mxu0 0.0
      %5942 = vmatpush1.msra.mxu0 0.0
      %5943 = vmatprep.subr.mxu0 0.0
      %5944 = vmatpush1.msra.mxu0 0.0
      %5945 = vmatprep.subr.mxu0 0.0
      %5946 = vmatpush1.msra.mxu0 0.0
      %5947 = vmatprep.subr.mxu0 0.0
      %5948 = vmatpush1.msra.mxu0 0.0
      %5949 = vmatprep.subr.mxu0 0.0
      %5950 = vmatpush1.msra.mxu0 0.0
      %5951 = vmatprep.subr.mxu0 0.0
      %5952 = vmatpush1.msra.mxu0 0.0
      %5953 = vmatprep.subr.mxu0 0.0
      %5954 = vmatpush1.msra.mxu0 0.0
      %5955 = vmatprep.subr.mxu0 0.0
      %5956 = vmatpush1.msra.mxu0 0.0
      %5957 = vmatprep.subr.mxu0 0.0
      %5958 = vmatpush1.msra.mxu0 0.0
      %5959 = vmatprep.subr.mxu0 0.0
      %5960 = vmatpush1.msra.mxu0 0.0
      %5961 = vmatprep.subr.mxu0 0.0
      %5962 = vmatpush1.msra.mxu0 0.0
      %5963 = vmatprep.mubr.f32.mxu0 0.0
      %5964 = vmatmul.mubr.f32.gmra.mrb[0].mxu0 %v5897
      %v5965 = vpop.f32.mrb[0].mxu0
      %v5966 = vadd.f32 0.0, %v5965
      %v5967 = vpop.f32.mrb[0].mxu0
      %5968 = vdwg.mxu0
      %s5969 = scalar_lea.vmem %s4, 384
      %v5970 = vld [vmem:[%s5969] sm:$0xff]
      %v5971 = vld [vmem:[%s5969 + $0x8] sm:$0xff]
      %v5972 = vld [vmem:[%s5969 + $0x10] sm:$0xff]
      %v5973 = vld [vmem:[%s5969 + $0x18] sm:$0xff]
      %v5974 = vld [vmem:[%s5969 + $0x20] sm:$0xff]
      %v5975 = vld [vmem:[%s5969 + $0x28] sm:$0xff]
      %v5976 = vld [vmem:[%s5969 + $0x30] sm:$0xff]
      %v5977 = vld [vmem:[%s5969 + $0x38] sm:$0xff]
      %v5979 = vsel %vm3382, %v5966, 0
      %5981 = vmatprep.subr.mxu0 0.0
      %5982 = vmatpush1.msra.mxu0 %v5970
      %5983 = vmatprep.subr.mxu0 0.0
      %5984 = vmatpush1.msra.mxu0 %v5971
      %5985 = vmatprep.subr.mxu0 0.0
      %5986 = vmatpush1.msra.mxu0 %v5972
      %5987 = vmatprep.subr.mxu0 0.0
      %5988 = vmatpush1.msra.mxu0 %v5973
      %5989 = vmatprep.subr.mxu0 0.0
      %5990 = vmatpush1.msra.mxu0 %v5974
      %5991 = vmatprep.subr.mxu0 0.0
      %5992 = vmatpush1.msra.mxu0 %v5975
      %5993 = vmatprep.subr.mxu0 0.0
      %5994 = vmatpush1.msra.mxu0 %v5976
      %5995 = vmatprep.subr.mxu0 0.0
      %5996 = vmatpush1.msra.mxu0 %v5977
      %5997 = vmatprep.subr.mxu0 0.0
      %5998 = vmatpush1.msra.mxu0 0.0
      %5999 = vmatprep.subr.mxu0 0.0
      %6000 = vmatpush1.msra.mxu0 0.0
      %6001 = vmatprep.subr.mxu0 0.0
      %6002 = vmatpush1.msra.mxu0 0.0
      %6003 = vmatprep.subr.mxu0 0.0
      %6004 = vmatpush1.msra.mxu0 0.0
      %6005 = vmatprep.subr.mxu0 0.0
      %6006 = vmatpush1.msra.mxu0 0.0
      %6007 = vmatprep.subr.mxu0 0.0
      %6008 = vmatpush1.msra.mxu0 0.0
      %6009 = vmatprep.subr.mxu0 0.0
      %6010 = vmatpush1.msra.mxu0 0.0
      %6011 = vmatprep.subr.mxu0 0.0
      %6012 = vmatpush1.msra.mxu0 0.0
      %6013 = vmatprep.subr.mxu0 0.0
      %6014 = vmatpush1.msra.mxu0 0.0
      %6015 = vmatprep.subr.mxu0 0.0
      %6016 = vmatpush1.msra.mxu0 0.0
      %6017 = vmatprep.subr.mxu0 0.0
      %6018 = vmatpush1.msra.mxu0 0.0
      %6019 = vmatprep.subr.mxu0 0.0
      %6020 = vmatpush1.msra.mxu0 0.0
      %6021 = vmatprep.subr.mxu0 0.0
      %6022 = vmatpush1.msra.mxu0 0.0
      %6023 = vmatprep.subr.mxu0 0.0
      %6024 = vmatpush1.msra.mxu0 0.0
      %6025 = vmatprep.subr.mxu0 0.0
      %6026 = vmatpush1.msra.mxu0 0.0
      %6027 = vmatprep.subr.mxu0 0.0
      %6028 = vmatpush1.msra.mxu0 0.0
      %6029 = vmatprep.subr.mxu0 0.0
      %6030 = vmatpush1.msra.mxu0 0.0
      %6031 = vmatprep.subr.mxu0 0.0
      %6032 = vmatpush1.msra.mxu0 0.0
      %6033 = vmatprep.subr.mxu0 0.0
      %6034 = vmatpush1.msra.mxu0 0.0
      %6035 = vmatprep.subr.mxu0 0.0
      %6036 = vmatpush1.msra.mxu0 0.0
      %6037 = vmatprep.subr.mxu0 0.0
      %6038 = vmatpush1.msra.mxu0 0.0
      %6039 = vmatprep.subr.mxu0 0.0
      %6040 = vmatpush1.msra.mxu0 0.0
      %6041 = vmatprep.subr.mxu0 0.0
      %6042 = vmatpush1.msra.mxu0 0.0
      %6043 = vmatprep.subr.mxu0 0.0
      %6044 = vmatpush1.msra.mxu0 0.0
      %6045 = vmatprep.mubr.f32.mxu0 0.0
      %6046 = vmatmul.mubr.f32.gmra.mrb[0].mxu0 %v5979
      %v6047 = vpop.f32.mrb[0].mxu0
      %v6048 = vadd.f32 0.0, %v6047
      %v6049 = vpop.f32.mrb[0].mxu0
      %6050 = vdwg.mxu0
      %v6051 = vadd.f32 %v5893, %v6048
      %s6052 = scalar_lea.vmem %s8, 56
      %v6053 = vld [vmem:[%s6052] sm:$0xff]
      %v6055 = vsel %vm1225, %v6053, 0
      %6057 = vmatprep.subr.mxu0 0.0
      %6058 = vmatpush1.msra.mxu0 %v4946
      %6059 = vmatprep.subr.mxu0 0.0
      %6060 = vmatpush1.msra.mxu0 %v4947
      %6061 = vmatprep.subr.mxu0 0.0
      %6062 = vmatpush1.msra.mxu0 0.0
      %6063 = vmatprep.subr.mxu0 0.0
      %6064 = vmatpush1.msra.mxu0 0.0
      %6065 = vmatprep.subr.mxu0 0.0
      %6066 = vmatpush1.msra.mxu0 0.0
      %6067 = vmatprep.subr.mxu0 0.0
      %6068 = vmatpush1.msra.mxu0 0.0
      %6069 = vmatprep.subr.mxu0 0.0
      %6070 = vmatpush1.msra.mxu0 0.0
      %6071 = vmatprep.subr.mxu0 0.0
      %6072 = vmatpush1.msra.mxu0 0.0
      %6073 = vmatprep.subr.mxu0 0.0
      %6074 = vmatpush1.msra.mxu0 0.0
      %6075 = vmatprep.subr.mxu0 0.0
      %6076 = vmatpush1.msra.mxu0 0.0
      %6077 = vmatprep.subr.mxu0 0.0
      %6078 = vmatpush1.msra.mxu0 0.0
      %6079 = vmatprep.subr.mxu0 0.0
      %6080 = vmatpush1.msra.mxu0 0.0
      %6081 = vmatprep.subr.mxu0 0.0
      %6082 = vmatpush1.msra.mxu0 0.0
      %6083 = vmatprep.subr.mxu0 0.0
      %6084 = vmatpush1.msra.mxu0 0.0
      %6085 = vmatprep.subr.mxu0 0.0
      %6086 = vmatpush1.msra.mxu0 0.0
      %6087 = vmatprep.subr.mxu0 0.0
      %6088 = vmatpush1.msra.mxu0 0.0
      %6089 = vmatprep.subr.mxu0 0.0
      %6090 = vmatpush1.msra.mxu0 0.0
      %6091 = vmatprep.subr.mxu0 0.0
      %6092 = vmatpush1.msra.mxu0 0.0
      %6093 = vmatprep.subr.mxu0 0.0
      %6094 = vmatpush1.msra.mxu0 0.0
      %6095 = vmatprep.subr.mxu0 0.0
      %6096 = vmatpush1.msra.mxu0 0.0
      %6097 = vmatprep.subr.mxu0 0.0
      %6098 = vmatpush1.msra.mxu0 0.0
      %6099 = vmatprep.subr.mxu0 0.0
      %6100 = vmatpush1.msra.mxu0 0.0
      %6101 = vmatprep.subr.mxu0 0.0
      %6102 = vmatpush1.msra.mxu0 0.0
      %6103 = vmatprep.subr.mxu0 0.0
      %6104 = vmatpush1.msra.mxu0 0.0
      %6105 = vmatprep.subr.mxu0 0.0
      %6106 = vmatpush1.msra.mxu0 0.0
      %6107 = vmatprep.subr.mxu0 0.0
      %6108 = vmatpush1.msra.mxu0 0.0
      %6109 = vmatprep.subr.mxu0 0.0
      %6110 = vmatpush1.msra.mxu0 0.0
      %6111 = vmatprep.subr.mxu0 0.0
      %6112 = vmatpush1.msra.mxu0 0.0
      %6113 = vmatprep.subr.mxu0 0.0
      %6114 = vmatpush1.msra.mxu0 0.0
      %6115 = vmatprep.subr.mxu0 0.0
      %6116 = vmatpush1.msra.mxu0 0.0
      %6117 = vmatprep.subr.mxu0 0.0
      %6118 = vmatpush1.msra.mxu0 0.0
      %6119 = vmatprep.subr.mxu0 0.0
      %6120 = vmatpush1.msra.mxu0 0.0
      %6121 = vmatprep.mubr.f32.mxu0 0.0
      %6122 = vmatmul.mubr.f32.gmra.mrb[0].mxu0 %v6055
      %v6123 = vpop.f32.mrb[0].mxu0
      %v6124 = vadd.f32 0.0, %v6123
      %v6125 = vpop.f32.mrb[0].mxu0
      %6126 = vdwg.mxu0
      %s6127 = scalar_lea.vmem %s4, 448
      %v6128 = vld [vmem:[%s6127] sm:$0xff]
      %v6129 = vld [vmem:[%s6127 + $0x8] sm:$0xff]
      %v6130 = vld [vmem:[%s6127 + $0x10] sm:$0xff]
      %v6131 = vld [vmem:[%s6127 + $0x18] sm:$0xff]
      %v6132 = vld [vmem:[%s6127 + $0x20] sm:$0xff]
      %v6133 = vld [vmem:[%s6127 + $0x28] sm:$0xff]
      %v6134 = vld [vmem:[%s6127 + $0x30] sm:$0xff]
      %v6135 = vld [vmem:[%s6127 + $0x38] sm:$0xff]
      %v6137 = vsel %vm3382, %v6124, 0
      %6139 = vmatprep.subr.mxu0 0.0
      %6140 = vmatpush1.msra.mxu0 %v6128
      %6141 = vmatprep.subr.mxu0 0.0
      %6142 = vmatpush1.msra.mxu0 %v6129
      %6143 = vmatprep.subr.mxu0 0.0
      %6144 = vmatpush1.msra.mxu0 %v6130
      %6145 = vmatprep.subr.mxu0 0.0
      %6146 = vmatpush1.msra.mxu0 %v6131
      %6147 = vmatprep.subr.mxu0 0.0
      %6148 = vmatpush1.msra.mxu0 %v6132
      %6149 = vmatprep.subr.mxu0 0.0
      %6150 = vmatpush1.msra.mxu0 %v6133
      %6151 = vmatprep.subr.mxu0 0.0
      %6152 = vmatpush1.msra.mxu0 %v6134
      %6153 = vmatprep.subr.mxu0 0.0
      %6154 = vmatpush1.msra.mxu0 %v6135
      %6155 = vmatprep.subr.mxu0 0.0
      %6156 = vmatpush1.msra.mxu0 0.0
      %6157 = vmatprep.subr.mxu0 0.0
      %6158 = vmatpush1.msra.mxu0 0.0
      %6159 = vmatprep.subr.mxu0 0.0
      %6160 = vmatpush1.msra.mxu0 0.0
      %6161 = vmatprep.subr.mxu0 0.0
      %6162 = vmatpush1.msra.mxu0 0.0
      %6163 = vmatprep.subr.mxu0 0.0
      %6164 = vmatpush1.msra.mxu0 0.0
      %6165 = vmatprep.subr.mxu0 0.0
      %6166 = vmatpush1.msra.mxu0 0.0
      %6167 = vmatprep.subr.mxu0 0.0
      %6168 = vmatpush1.msra.mxu0 0.0
      %6169 = vmatprep.subr.mxu0 0.0
      %6170 = vmatpush1.msra.mxu0 0.0
      %6171 = vmatprep.subr.mxu0 0.0
      %6172 = vmatpush1.msra.mxu0 0.0
      %6173 = vmatprep.subr.mxu0 0.0
      %6174 = vmatpush1.msra.mxu0 0.0
      %6175 = vmatprep.subr.mxu0 0.0
      %6176 = vmatpush1.msra.mxu0 0.0
      %6177 = vmatprep.subr.mxu0 0.0
      %6178 = vmatpush1.msra.mxu0 0.0
      %6179 = vmatprep.subr.mxu0 0.0
      %6180 = vmatpush1.msra.mxu0 0.0
      %6181 = vmatprep.subr.mxu0 0.0
      %6182 = vmatpush1.msra.mxu0 0.0
      %6183 = vmatprep.subr.mxu0 0.0
      %6184 = vmatpush1.msra.mxu0 0.0
      %6185 = vmatprep.subr.mxu0 0.0
      %6186 = vmatpush1.msra.mxu0 0.0
      %6187 = vmatprep.subr.mxu0 0.0
      %6188 = vmatpush1.msra.mxu0 0.0
      %6189 = vmatprep.subr.mxu0 0.0
      %6190 = vmatpush1.msra.mxu0 0.0
      %6191 = vmatprep.subr.mxu0 0.0
      %6192 = vmatpush1.msra.mxu0 0.0
      %6193 = vmatprep.subr.mxu0 0.0
      %6194 = vmatpush1.msra.mxu0 0.0
      %6195 = vmatprep.subr.mxu0 0.0
      %6196 = vmatpush1.msra.mxu0 0.0
      %6197 = vmatprep.subr.mxu0 0.0
      %6198 = vmatpush1.msra.mxu0 0.0
      %6199 = vmatprep.subr.mxu0 0.0
      %6200 = vmatpush1.msra.mxu0 0.0
      %6201 = vmatprep.subr.mxu0 0.0
      %6202 = vmatpush1.msra.mxu0 0.0
      %6203 = vmatprep.mubr.f32.mxu0 0.0
      %6204 = vmatmul.mubr.f32.gmra.mrb[0].mxu0 %v6137
      %v6205 = vpop.f32.mrb[0].mxu0
      %v6206 = vadd.f32 0.0, %v6205
      %v6207 = vpop.f32.mrb[0].mxu0
      %6208 = vdwg.mxu0
      %v6209 = vadd.f32 %v6051, %v6206
      %s6210 = scalar_lea.vmem %s8, 64
      %v6211 = vld [vmem:[%s6210] sm:$0xff]
      %v6213 = vsel %vm1225, %v6211, 0
      %6215 = vmatprep.subr.mxu0 0.0
      %6216 = vmatpush1.msra.mxu0 %v4946
      %6217 = vmatprep.subr.mxu0 0.0
      %6218 = vmatpush1.msra.mxu0 %v4947
      %6219 = vmatprep.subr.mxu0 0.0
      %6220 = vmatpush1.msra.mxu0 0.0
      %6221 = vmatprep.subr.mxu0 0.0
      %6222 = vmatpush1.msra.mxu0 0.0
      %6223 = vmatprep.subr.mxu0 0.0
      %6224 = vmatpush1.msra.mxu0 0.0
      %6225 = vmatprep.subr.mxu0 0.0
      %6226 = vmatpush1.msra.mxu0 0.0
      %6227 = vmatprep.subr.mxu0 0.0
      %6228 = vmatpush1.msra.mxu0 0.0
      %6229 = vmatprep.subr.mxu0 0.0
      %6230 = vmatpush1.msra.mxu0 0.0
      %6231 = vmatprep.subr.mxu0 0.0
      %6232 = vmatpush1.msra.mxu0 0.0
      %6233 = vmatprep.subr.mxu0 0.0
      %6234 = vmatpush1.msra.mxu0 0.0
      %6235 = vmatprep.subr.mxu0 0.0
      %6236 = vmatpush1.msra.mxu0 0.0
      %6237 = vmatprep.subr.mxu0 0.0
      %6238 = vmatpush1.msra.mxu0 0.0
      %6239 = vmatprep.subr.mxu0 0.0
      %6240 = vmatpush1.msra.mxu0 0.0
      %6241 = vmatprep.subr.mxu0 0.0
      %6242 = vmatpush1.msra.mxu0 0.0
      %6243 = vmatprep.subr.mxu0 0.0
      %6244 = vmatpush1.msra.mxu0 0.0
      %6245 = vmatprep.subr.mxu0 0.0
      %6246 = vmatpush1.msra.mxu0 0.0
      %6247 = vmatprep.subr.mxu0 0.0
      %6248 = vmatpush1.msra.mxu0 0.0
      %6249 = vmatprep.subr.mxu0 0.0
      %6250 = vmatpush1.msra.mxu0 0.0
      %6251 = vmatprep.subr.mxu0 0.0
      %6252 = vmatpush1.msra.mxu0 0.0
      %6253 = vmatprep.subr.mxu0 0.0
      %6254 = vmatpush1.msra.mxu0 0.0
      %6255 = vmatprep.subr.mxu0 0.0
      %6256 = vmatpush1.msra.mxu0 0.0
      %6257 = vmatprep.subr.mxu0 0.0
      %6258 = vmatpush1.msra.mxu0 0.0
      %6259 = vmatprep.subr.mxu0 0.0
      %6260 = vmatpush1.msra.mxu0 0.0
      %6261 = vmatprep.subr.mxu0 0.0
      %6262 = vmatpush1.msra.mxu0 0.0
      %6263 = vmatprep.subr.mxu0 0.0
      %6264 = vmatpush1.msra.mxu0 0.0
      %6265 = vmatprep.subr.mxu0 0.0
      %6266 = vmatpush1.msra.mxu0 0.0
      %6267 = vmatprep.subr.mxu0 0.0
      %6268 = vmatpush1.msra.mxu0 0.0
      %6269 = vmatprep.subr.mxu0 0.0
      %6270 = vmatpush1.msra.mxu0 0.0
      %6271 = vmatprep.subr.mxu0 0.0
      %6272 = vmatpush1.msra.mxu0 0.0
      %6273 = vmatprep.subr.mxu0 0.0
      %6274 = vmatpush1.msra.mxu0 0.0
      %6275 = vmatprep.subr.mxu0 0.0
      %6276 = vmatpush1.msra.mxu0 0.0
      %6277 = vmatprep.subr.mxu0 0.0
      %6278 = vmatpush1.msra.mxu0 0.0
      %6279 = vmatprep.mubr.f32.mxu0 0.0
      %6280 = vmatmul.mubr.f32.gmra.mrb[0].mxu0 %v6213
      %v6281 = vpop.f32.mrb[0].mxu0
      %v6282 = vadd.f32 0.0, %v6281
      %v6283 = vpop.f32.mrb[0].mxu0
      %6284 = vdwg.mxu0
      %s6285 = scalar_lea.vmem %s4, 512
      %v6286 = vld [vmem:[%s6285] sm:$0xff]
      %v6287 = vld [vmem:[%s6285 + $0x8] sm:$0xff]
      %v6288 = vld [vmem:[%s6285 + $0x10] sm:$0xff]
      %v6289 = vld [vmem:[%s6285 + $0x18] sm:$0xff]
      %v6290 = vld [vmem:[%s6285 + $0x20] sm:$0xff]
      %v6291 = vld [vmem:[%s6285 + $0x28] sm:$0xff]
      %v6292 = vld [vmem:[%s6285 + $0x30] sm:$0xff]
      %v6293 = vld [vmem:[%s6285 + $0x38] sm:$0xff]
      %v6295 = vsel %vm3382, %v6282, 0
      %6297 = vmatprep.subr.mxu0 0.0
      %6298 = vmatpush1.msra.mxu0 %v6286
      %6299 = vmatprep.subr.mxu0 0.0
      %6300 = vmatpush1.msra.mxu0 %v6287
      %6301 = vmatprep.subr.mxu0 0.0
      %6302 = vmatpush1.msra.mxu0 %v6288
      %6303 = vmatprep.subr.mxu0 0.0
      %6304 = vmatpush1.msra.mxu0 %v6289
      %6305 = vmatprep.subr.mxu0 0.0
      %6306 = vmatpush1.msra.mxu0 %v6290
      %6307 = vmatprep.subr.mxu0 0.0
      %6308 = vmatpush1.msra.mxu0 %v6291
      %6309 = vmatprep.subr.mxu0 0.0
      %6310 = vmatpush1.msra.mxu0 %v6292
      %6311 = vmatprep.subr.mxu0 0.0
      %6312 = vmatpush1.msra.mxu0 %v6293
      %6313 = vmatprep.subr.mxu0 0.0
      %6314 = vmatpush1.msra.mxu0 0.0
      %6315 = vmatprep.subr.mxu0 0.0
      %6316 = vmatpush1.msra.mxu0 0.0
      %6317 = vmatprep.subr.mxu0 0.0
      %6318 = vmatpush1.msra.mxu0 0.0
      %6319 = vmatprep.subr.mxu0 0.0
      %6320 = vmatpush1.msra.mxu0 0.0
      %6321 = vmatprep.subr.mxu0 0.0
      %6322 = vmatpush1.msra.mxu0 0.0
      %6323 = vmatprep.subr.mxu0 0.0
      %6324 = vmatpush1.msra.mxu0 0.0
      %6325 = vmatprep.subr.mxu0 0.0
      %6326 = vmatpush1.msra.mxu0 0.0
      %6327 = vmatprep.subr.mxu0 0.0
      %6328 = vmatpush1.msra.mxu0 0.0
      %6329 = vmatprep.subr.mxu0 0.0
      %6330 = vmatpush1.msra.mxu0 0.0
      %6331 = vmatprep.subr.mxu0 0.0
      %6332 = vmatpush1.msra.mxu0 0.0
      %6333 = vmatprep.subr.mxu0 0.0
      %6334 = vmatpush1.msra.mxu0 0.0
      %6335 = vmatprep.subr.mxu0 0.0
      %6336 = vmatpush1.msra.mxu0 0.0
      %6337 = vmatprep.subr.mxu0 0.0
      %6338 = vmatpush1.msra.mxu0 0.0
      %6339 = vmatprep.subr.mxu0 0.0
      %6340 = vmatpush1.msra.mxu0 0.0
      %6341 = vmatprep.subr.mxu0 0.0
      %6342 = vmatpush1.msra.mxu0 0.0
      %6343 = vmatprep.subr.mxu0 0.0
      %6344 = vmatpush1.msra.mxu0 0.0
      %6345 = vmatprep.subr.mxu0 0.0
      %6346 = vmatpush1.msra.mxu0 0.0
      %6347 = vmatprep.subr.mxu0 0.0
      %6348 = vmatpush1.msra.mxu0 0.0
      %6349 = vmatprep.subr.mxu0 0.0
      %6350 = vmatpush1.msra.mxu0 0.0
      %6351 = vmatprep.subr.mxu0 0.0
      %6352 = vmatpush1.msra.mxu0 0.0
      %6353 = vmatprep.subr.mxu0 0.0
      %6354 = vmatpush1.msra.mxu0 0.0
      %6355 = vmatprep.subr.mxu0 0.0
      %6356 = vmatpush1.msra.mxu0 0.0
      %6357 = vmatprep.subr.mxu0 0.0
      %6358 = vmatpush1.msra.mxu0 0.0
      %6359 = vmatprep.subr.mxu0 0.0
      %6360 = vmatpush1.msra.mxu0 0.0
      %6361 = vmatprep.mubr.f32.mxu0 0.0
      %6362 = vmatmul.mubr.f32.gmra.mrb[0].mxu0 %v6295
      %v6363 = vpop.f32.mrb[0].mxu0
      %v6364 = vadd.f32 0.0, %v6363
      %v6365 = vpop.f32.mrb[0].mxu0
      %6366 = vdwg.mxu0
      %v6367 = vadd.f32 %v6209, %v6364
      %v6368 = vlaneseq
      %v6369 = vshrl.u32 %v6368, 7
      %v6370 = vsub.s32 0, %v6369
      %v6371 = vrot.slane %v4949, %v6370
      %v6372 = vadd.f32 %v6367, %v6371
      %vm6373 = vcmp.ge.f32.partialorder %v6372, 0.0
      %v6374 = vmul.f32 %v6372, 0.2
      %v6375 = vsel %vm6373, %v6372, %v6374
      %v6376 = vlaneseq
      %v6377 = vshrl.u32 %v6376, 7
      %v6378 = vsub.s32 1, %v6377
      %v6379 = vrot.slane %v4949, %v6378
      %v6380 = vmul.f32 %v6375, %v6379
      %v6381 = vlaneseq
      %v6382 = vshrl.u32 %v6381, 7
      %v6383 = vsub.s32 2, %v6382
      %v6384 = vrot.slane %v4949, %v6383
      %v6385 = vadd.f32 %v6380, %v6384
      %s6386 = scalar_lea.vmem %s10, 32
      %v6387 = vld [vmem:[%s6386] sm:$0x77]
      %v6388 = vld [vmem:[%s9] sm:$0xff]
      %vm6389 = vcmask 64512
      %v6391 = vsel %vm6389, %v6388, 0
      %6393 = vmatprep.subr.mxu0 0.0
      %6394 = vmatpush1.msra.mxu0 %v6385
      %6395 = vmatprep.subr.mxu0 0.0
      %6396 = vmatpush1.msra.mxu0 0.0
      %6397 = vmatprep.subr.mxu0 0.0
      %6398 = vmatpush1.msra.mxu0 0.0
      %6399 = vmatprep.subr.mxu0 0.0
      %6400 = vmatpush1.msra.mxu0 0.0
      %6401 = vmatprep.subr.mxu0 0.0
      %6402 = vmatpush1.msra.mxu0 0.0
      %6403 = vmatprep.subr.mxu0 0.0
      %6404 = vmatpush1.msra.mxu0 0.0
      %6405 = vmatprep.subr.mxu0 0.0
      %6406 = vmatpush1.msra.mxu0 0.0
      %6407 = vmatprep.subr.mxu0 0.0
      %6408 = vmatpush1.msra.mxu0 0.0
      %6409 = vmatprep.subr.mxu0 0.0
      %6410 = vmatpush1.msra.mxu0 0.0
      %6411 = vmatprep.subr.mxu0 0.0
      %6412 = vmatpush1.msra.mxu0 0.0
      %6413 = vmatprep.subr.mxu0 0.0
      %6414 = vmatpush1.msra.mxu0 0.0
      %6415 = vmatprep.subr.mxu0 0.0
      %6416 = vmatpush1.msra.mxu0 0.0
      %6417 = vmatprep.subr.mxu0 0.0
      %6418 = vmatpush1.msra.mxu0 0.0
      %6419 = vmatprep.subr.mxu0 0.0
      %6420 = vmatpush1.msra.mxu0 0.0
      %6421 = vmatprep.subr.mxu0 0.0
      %6422 = vmatpush1.msra.mxu0 0.0
      %6423 = vmatprep.subr.mxu0 0.0
      %6424 = vmatpush1.msra.mxu0 0.0
      %6425 = vmatprep.subr.mxu0 0.0
      %6426 = vmatpush1.msra.mxu0 0.0
      %6427 = vmatprep.subr.mxu0 0.0
      %6428 = vmatpush1.msra.mxu0 0.0
      %6429 = vmatprep.subr.mxu0 0.0
      %6430 = vmatpush1.msra.mxu0 0.0
      %6431 = vmatprep.subr.mxu0 0.0
      %6432 = vmatpush1.msra.mxu0 0.0
      %6433 = vmatprep.subr.mxu0 0.0
      %6434 = vmatpush1.msra.mxu0 0.0
      %6435 = vmatprep.subr.mxu0 0.0
      %6436 = vmatpush1.msra.mxu0 0.0
      %6437 = vmatprep.subr.mxu0 0.0
      %6438 = vmatpush1.msra.mxu0 0.0
      %6439 = vmatprep.subr.mxu0 0.0
      %6440 = vmatpush1.msra.mxu0 0.0
      %6441 = vmatprep.subr.mxu0 0.0
      %6442 = vmatpush1.msra.mxu0 0.0
      %6443 = vmatprep.subr.mxu0 0.0
      %6444 = vmatpush1.msra.mxu0 0.0
      %6445 = vmatprep.subr.mxu0 0.0
      %6446 = vmatpush1.msra.mxu0 0.0
      %6447 = vmatprep.subr.mxu0 0.0
      %6448 = vmatpush1.msra.mxu0 0.0
      %6449 = vmatprep.subr.mxu0 0.0
      %6450 = vmatpush1.msra.mxu0 0.0
      %6451 = vmatprep.subr.mxu0 0.0
      %6452 = vmatpush1.msra.mxu0 0.0
      %6453 = vmatprep.subr.mxu0 0.0
      %6454 = vmatpush1.msra.mxu0 0.0
      %6455 = vmatprep.subr.mxu0 0.0
      %6456 = vmatpush1.msra.mxu0 0.0
      %6457 = vmatprep.mubr.f32.mxu0 0.0
      %6458 = vmatmul.mubr.f32.gmra.mrb[0].mxu0 %v6391
      %v6459 = vpop.f32.mrb[0].mxu0
      %v6460 = vadd.f32 0.0, %v6459
      %v6461 = vpop.f32.mrb[0].mxu0
      %6462 = vdwg.mxu0
      %v6463 = vld [vmem:[%s5] sm:$0xff]
      %v6464 = vld [vmem:[%s5 + $0x8] sm:$0xff]
      %v6465 = vld [vmem:[%s5 + $0x10] sm:$0xff]
      %v6466 = vld [vmem:[%s5 + $0x18] sm:$0xff]
      %v6467 = vld [vmem:[%s5 + $0x20] sm:$0xff]
      %v6468 = vld [vmem:[%s5 + $0x28] sm:$0xff]
      %v6469 = vld [vmem:[%s5 + $0x30] sm:$0xff]
      %v6470 = vld [vmem:[%s5 + $0x38] sm:$0xff]
      %v6471 = vld [vmem:[%s5 + $0x40] sm:$0xff]
      %v6472 = vld [vmem:[%s5 + $0x48] sm:$0xff]
      %v6473 = vld [vmem:[%s5 + $0x50] sm:$0xff]
      %v6474 = vld [vmem:[%s5 + $0x58] sm:$0xff]
      %v6475 = vld [vmem:[%s5 + $0x60] sm:$0xff]
      %v6476 = vld [vmem:[%s5 + $0x68] sm:$0xff]
      %v6477 = vld [vmem:[%s5 + $0x70] sm:$0xff]
      %v6478 = vld [vmem:[%s5 + $0x78] sm:$0xff]
      %v6479 = vld [vmem:[%s5 + $0x80] sm:$0xff]
      %v6480 = vld [vmem:[%s5 + $0x88] sm:$0xff]
      %v6481 = vld [vmem:[%s5 + $0x90] sm:$0xff]
      %v6482 = vld [vmem:[%s5 + $0x98] sm:$0xff]
      %v6483 = vld [vmem:[%s5 + $0xa0] sm:$0xff]
      %v6484 = vld [vmem:[%s5 + $0xa8] sm:$0xff]
      %v6485 = vld [vmem:[%s5 + $0xb0] sm:$0xff]
      %v6486 = vld [vmem:[%s5 + $0xb8] sm:$0xff]
      %v6487 = vld [vmem:[%s5 + $0xc0] sm:$0xff]
      %v6488 = vld [vmem:[%s5 + $0xc8] sm:$0xff]
      %v6489 = vld [vmem:[%s5 + $0xd0] sm:$0xff]
      %v6490 = vld [vmem:[%s5 + $0xd8] sm:$0xff]
      %v6491 = vld [vmem:[%s5 + $0xe0] sm:$0xff]
      %v6492 = vld [vmem:[%s5 + $0xe8] sm:$0xff]
      %v6493 = vld [vmem:[%s5 + $0xf0] sm:$0xff]
      %v6494 = vld [vmem:[%s5 + $0xf8] sm:$0xff]
      %s6495 = scalar_lea.vmem %s9, 8
      %v6496 = vld [vmem:[%s6495] sm:$0xff]
      %v6498 = vsel %vm6389, %v6496, 0
      %6500 = vmatprep.subr.mxu0 0.0
      %6501 = vmatpush1.msra.mxu0 %v6385
      %6502 = vmatprep.subr.mxu0 0.0
      %6503 = vmatpush1.msra.mxu0 0.0
      %6504 = vmatprep.subr.mxu0 0.0
      %6505 = vmatpush1.msra.mxu0 0.0
      %6506 = vmatprep.subr.mxu0 0.0
      %6507 = vmatpush1.msra.mxu0 0.0
      %6508 = vmatprep.subr.mxu0 0.0
      %6509 = vmatpush1.msra.mxu0 0.0
      %6510 = vmatprep.subr.mxu0 0.0
      %6511 = vmatpush1.msra.mxu0 0.0
      %6512 = vmatprep.subr.mxu0 0.0
      %6513 = vmatpush1.msra.mxu0 0.0
      %6514 = vmatprep.subr.mxu0 0.0
      %6515 = vmatpush1.msra.mxu0 0.0
      %6516 = vmatprep.subr.mxu0 0.0
      %6517 = vmatpush1.msra.mxu0 0.0
      %6518 = vmatprep.subr.mxu0 0.0
      %6519 = vmatpush1.msra.mxu0 0.0
      %6520 = vmatprep.subr.mxu0 0.0
      %6521 = vmatpush1.msra.mxu0 0.0
      %6522 = vmatprep.subr.mxu0 0.0
      %6523 = vmatpush1.msra.mxu0 0.0
      %6524 = vmatprep.subr.mxu0 0.0
      %6525 = vmatpush1.msra.mxu0 0.0
      %6526 = vmatprep.subr.mxu0 0.0
      %6527 = vmatpush1.msra.mxu0 0.0
      %6528 = vmatprep.subr.mxu0 0.0
      %6529 = vmatpush1.msra.mxu0 0.0
      %6530 = vmatprep.subr.mxu0 0.0
      %6531 = vmatpush1.msra.mxu0 0.0
      %6532 = vmatprep.subr.mxu0 0.0
      %6533 = vmatpush1.msra.mxu0 0.0
      %6534 = vmatprep.subr.mxu0 0.0
      %6535 = vmatpush1.msra.mxu0 0.0
      %6536 = vmatprep.subr.mxu0 0.0
      %6537 = vmatpush1.msra.mxu0 0.0
      %6538 = vmatprep.subr.mxu0 0.0
      %6539 = vmatpush1.msra.mxu0 0.0
      %6540 = vmatprep.subr.mxu0 0.0
      %6541 = vmatpush1.msra.mxu0 0.0
      %6542 = vmatprep.subr.mxu0 0.0
      %6543 = vmatpush1.msra.mxu0 0.0
      %6544 = vmatprep.subr.mxu0 0.0
      %6545 = vmatpush1.msra.mxu0 0.0
      %6546 = vmatprep.subr.mxu0 0.0
      %6547 = vmatpush1.msra.mxu0 0.0
      %6548 = vmatprep.subr.mxu0 0.0
      %6549 = vmatpush1.msra.mxu0 0.0
      %6550 = vmatprep.subr.mxu0 0.0
      %6551 = vmatpush1.msra.mxu0 0.0
      %6552 = vmatprep.subr.mxu0 0.0
      %6553 = vmatpush1.msra.mxu0 0.0
      %6554 = vmatprep.subr.mxu0 0.0
      %6555 = vmatpush1.msra.mxu0 0.0
      %6556 = vmatprep.subr.mxu0 0.0
      %6557 = vmatpush1.msra.mxu0 0.0
      %6558 = vmatprep.subr.mxu0 0.0
      %6559 = vmatpush1.msra.mxu0 0.0
      %6560 = vmatprep.subr.mxu0 0.0
      %6561 = vmatpush1.msra.mxu0 0.0
      %6562 = vmatprep.subr.mxu0 0.0
      %6563 = vmatpush1.msra.mxu0 0.0
      %6564 = vmatprep.mubr.f32.mxu0 0.0
      %6565 = vmatmul.mubr.f32.gmra.mrb[0].mxu0 %v6498
      %v6566 = vpop.f32.mrb[0].mxu0
      %v6567 = vadd.f32 0.0, %v6566
      %v6568 = vpop.f32.mrb[0].mxu0
      %6569 = vdwg.mxu0
      %s6570 = scalar_lea.vmem %s5, 256
      %v6571 = vld [vmem:[%s6570] sm:$0xff]
      %v6572 = vld [vmem:[%s6570 + $0x8] sm:$0xff]
      %v6573 = vld [vmem:[%s6570 + $0x10] sm:$0xff]
      %v6574 = vld [vmem:[%s6570 + $0x18] sm:$0xff]
      %v6575 = vld [vmem:[%s6570 + $0x20] sm:$0xff]
      %v6576 = vld [vmem:[%s6570 + $0x28] sm:$0xff]
      %v6577 = vld [vmem:[%s6570 + $0x30] sm:$0xff]
      %v6578 = vld [vmem:[%s6570 + $0x38] sm:$0xff]
      %v6579 = vld [vmem:[%s6570 + $0x40] sm:$0xff]
      %v6580 = vld [vmem:[%s6570 + $0x48] sm:$0xff]
      %v6581 = vld [vmem:[%s6570 + $0x50] sm:$0xff]
      %v6582 = vld [vmem:[%s6570 + $0x58] sm:$0xff]
      %v6583 = vld [vmem:[%s6570 + $0x60] sm:$0xff]
      %v6584 = vld [vmem:[%s6570 + $0x68] sm:$0xff]
      %v6585 = vld [vmem:[%s6570 + $0x70] sm:$0xff]
      %v6586 = vld [vmem:[%s6570 + $0x78] sm:$0xff]
      %v6587 = vld [vmem:[%s6570 + $0x80] sm:$0xff]
      %v6588 = vld [vmem:[%s6570 + $0x88] sm:$0xff]
      %v6589 = vld [vmem:[%s6570 + $0x90] sm:$0xff]
      %v6590 = vld [vmem:[%s6570 + $0x98] sm:$0xff]
      %v6591 = vld [vmem:[%s6570 + $0xa0] sm:$0xff]
      %v6592 = vld [vmem:[%s6570 + $0xa8] sm:$0xff]
      %v6593 = vld [vmem:[%s6570 + $0xb0] sm:$0xff]
      %v6594 = vld [vmem:[%s6570 + $0xb8] sm:$0xff]
      %v6595 = vld [vmem:[%s6570 + $0xc0] sm:$0xff]
      %v6596 = vld [vmem:[%s6570 + $0xc8] sm:$0xff]
      %v6597 = vld [vmem:[%s6570 + $0xd0] sm:$0xff]
      %v6598 = vld [vmem:[%s6570 + $0xd8] sm:$0xff]
      %v6599 = vld [vmem:[%s6570 + $0xe0] sm:$0xff]
      %v6600 = vld [vmem:[%s6570 + $0xe8] sm:$0xff]
      %v6601 = vld [vmem:[%s6570 + $0xf0] sm:$0xff]
      %v6602 = vld [vmem:[%s6570 + $0xf8] sm:$0xff]
      %6603 = vmatprep.subr.mxu0 %v6572
      %6604 = vmatpush1.msra.mxu0 %v6571
      %6605 = vmatprep.subr.mxu0 %v6574
      %6606 = vmatpush1.msra.mxu0 %v6573
      %6607 = vmatprep.subr.mxu0 %v6576
      %6608 = vmatpush1.msra.mxu0 %v6575
      %6609 = vmatprep.subr.mxu0 %v6578
      %6610 = vmatpush1.msra.mxu0 %v6577
      %6611 = vmatprep.subr.mxu0 %v6580
      %6612 = vmatpush1.msra.mxu0 %v6579
      %6613 = vmatprep.subr.mxu0 %v6582
      %6614 = vmatpush1.msra.mxu0 %v6581
      %6615 = vmatprep.subr.mxu0 %v6584
      %6616 = vmatpush1.msra.mxu0 %v6583
      %6617 = vmatprep.subr.mxu0 %v6586
      %6618 = vmatpush1.msra.mxu0 %v6585
      %6619 = vmatprep.subr.mxu0 %v6588
      %6620 = vmatpush1.msra.mxu0 %v6587
      %6621 = vmatprep.subr.mxu0 %v6590
      %6622 = vmatpush1.msra.mxu0 %v6589
      %6623 = vmatprep.subr.mxu0 %v6592
      %6624 = vmatpush1.msra.mxu0 %v6591
      %6625 = vmatprep.subr.mxu0 %v6594
      %6626 = vmatpush1.msra.mxu0 %v6593
      %6627 = vmatprep.subr.mxu0 %v6596
      %6628 = vmatpush1.msra.mxu0 %v6595
      %6629 = vmatprep.subr.mxu0 %v6598
      %6630 = vmatpush1.msra.mxu0 %v6597
      %6631 = vmatprep.subr.mxu0 %v6600
      %6632 = vmatpush1.msra.mxu0 %v6599
      %6633 = vmatprep.subr.mxu0 %v6602
      %6634 = vmatpush1.msra.mxu0 %v6601
      %6635 = vmatprep.subr.mxu0 0.0
      %6636 = vmatpush1.msra.mxu0 0.0
      %6637 = vmatprep.subr.mxu0 0.0
      %6638 = vmatpush1.msra.mxu0 0.0
      %6639 = vmatprep.subr.mxu0 0.0
      %6640 = vmatpush1.msra.mxu0 0.0
      %6641 = vmatprep.subr.mxu0 0.0
      %6642 = vmatpush1.msra.mxu0 0.0
      %6643 = vmatprep.subr.mxu0 0.0
      %6644 = vmatpush1.msra.mxu0 0.0
      %6645 = vmatprep.subr.mxu0 0.0
      %6646 = vmatpush1.msra.mxu0 0.0
      %6647 = vmatprep.subr.mxu0 0.0
      %6648 = vmatpush1.msra.mxu0 0.0
      %6649 = vmatprep.subr.mxu0 0.0
      %6650 = vmatpush1.msra.mxu0 0.0
      %6651 = vmatprep.subr.mxu0 0.0
      %6652 = vmatpush1.msra.mxu0 0.0
      %6653 = vmatprep.subr.mxu0 0.0
      %6654 = vmatpush1.msra.mxu0 0.0
      %6655 = vmatprep.subr.mxu0 0.0
      %6656 = vmatpush1.msra.mxu0 0.0
      %6657 = vmatprep.subr.mxu0 0.0
      %6658 = vmatpush1.msra.mxu0 0.0
      %6659 = vmatprep.subr.mxu0 0.0
      %6660 = vmatpush1.msra.mxu0 0.0
      %6661 = vmatprep.subr.mxu0 0.0
      %6662 = vmatpush1.msra.mxu0 0.0
      %6663 = vmatprep.subr.mxu0 0.0
      %6664 = vmatpush1.msra.mxu0 0.0
      %6665 = vmatprep.subr.mxu0 0.0
      %6666 = vmatpush1.msra.mxu0 0.0
      %6667 = vmatprep.mubr.f32.mxu0 0.0
      %6668 = vmatmul.mubr.f32.gmra.mrb[0].mxu0 %v6567
      %v6669 = vpop.f32.mrb[0].mxu0
      %v6670 = vadd.f32 0.0, %v6669
      %v6671 = vpop.f32.mrb[0].mxu0
      %v6672 = vadd.f32 0.0, %v6671
      %6673 = vdwg.mxu0
      %6674 = vmatprep.subr.mxu0 %v6464
      %6675 = vmatpush1.msra.mxu0 %v6463
      %6676 = vmatprep.subr.mxu0 %v6466
      %6677 = vmatpush1.msra.mxu0 %v6465
      %6678 = vmatprep.subr.mxu0 %v6468
      %6679 = vmatpush1.msra.mxu0 %v6467
      %6680 = vmatprep.subr.mxu0 %v6470
      %6681 = vmatpush1.msra.mxu0 %v6469
      %6682 = vmatprep.subr.mxu0 %v6472
      %6683 = vmatpush1.msra.mxu0 %v6471
      %6684 = vmatprep.subr.mxu0 %v6474
      %6685 = vmatpush1.msra.mxu0 %v6473
      %6686 = vmatprep.subr.mxu0 %v6476
      %6687 = vmatpush1.msra.mxu0 %v6475
      %6688 = vmatprep.subr.mxu0 %v6478
      %6689 = vmatpush1.msra.mxu0 %v6477
      %6690 = vmatprep.subr.mxu0 %v6480
      %6691 = vmatpush1.msra.mxu0 %v6479
      %6692 = vmatprep.subr.mxu0 %v6482
      %6693 = vmatpush1.msra.mxu0 %v6481
      %6694 = vmatprep.subr.mxu0 %v6484
      %6695 = vmatpush1.msra.mxu0 %v6483
      %6696 = vmatprep.subr.mxu0 %v6486
      %6697 = vmatpush1.msra.mxu0 %v6485
      %6698 = vmatprep.subr.mxu0 %v6488
      %6699 = vmatpush1.msra.mxu0 %v6487
      %6700 = vmatprep.subr.mxu0 %v6490
      %6701 = vmatpush1.msra.mxu0 %v6489
      %6702 = vmatprep.subr.mxu0 %v6492
      %6703 = vmatpush1.msra.mxu0 %v6491
      %6704 = vmatprep.subr.mxu0 %v6494
      %6705 = vmatpush1.msra.mxu0 %v6493
      %6706 = vmatprep.subr.mxu0 0.0
      %6707 = vmatpush1.msra.mxu0 0.0
      %6708 = vmatprep.subr.mxu0 0.0
      %6709 = vmatpush1.msra.mxu0 0.0
      %6710 = vmatprep.subr.mxu0 0.0
      %6711 = vmatpush1.msra.mxu0 0.0
      %6712 = vmatprep.subr.mxu0 0.0
      %6713 = vmatpush1.msra.mxu0 0.0
      %6714 = vmatprep.subr.mxu0 0.0
      %6715 = vmatpush1.msra.mxu0 0.0
      %6716 = vmatprep.subr.mxu0 0.0
      %6717 = vmatpush1.msra.mxu0 0.0
      %6718 = vmatprep.subr.mxu0 0.0
      %6719 = vmatpush1.msra.mxu0 0.0
      %6720 = vmatprep.subr.mxu0 0.0
      %6721 = vmatpush1.msra.mxu0 0.0
      %6722 = vmatprep.subr.mxu0 0.0
      %6723 = vmatpush1.msra.mxu0 0.0
      %6724 = vmatprep.subr.mxu0 0.0
      %6725 = vmatpush1.msra.mxu0 0.0
      %6726 = vmatprep.subr.mxu0 0.0
      %6727 = vmatpush1.msra.mxu0 0.0
      %6728 = vmatprep.subr.mxu0 0.0
      %6729 = vmatpush1.msra.mxu0 0.0
      %6730 = vmatprep.subr.mxu0 0.0
      %6731 = vmatpush1.msra.mxu0 0.0
      %6732 = vmatprep.subr.mxu0 0.0
      %6733 = vmatpush1.msra.mxu0 0.0
      %6734 = vmatprep.subr.mxu0 0.0
      %6735 = vmatpush1.msra.mxu0 0.0
      %6736 = vmatprep.subr.mxu0 0.0
      %6737 = vmatpush1.msra.mxu0 0.0
      %6738 = vmatprep.mubr.f32.mxu0 0.0
      %6739 = vmatmul.mubr.f32.gmra.mrb[0].mxu0 %v6460
      %v6740 = vpop.f32.mrb[0].mxu0
      %v6741 = vadd.f32 %v6670, %v6740
      %v6742 = vpop.f32.mrb[0].mxu0
      %v6743 = vadd.f32 %v6672, %v6742
      %6744 = vdwg.mxu0
      %s6745 = scalar_lea.vmem %s9, 16
      %v6746 = vld [vmem:[%s6745] sm:$0xff]
      %v6748 = vsel %vm6389, %v6746, 0
      %6750 = vmatprep.subr.mxu0 0.0
      %6751 = vmatpush1.msra.mxu0 %v6385
      %6752 = vmatprep.subr.mxu0 0.0
      %6753 = vmatpush1.msra.mxu0 0.0
      %6754 = vmatprep.subr.mxu0 0.0
      %6755 = vmatpush1.msra.mxu0 0.0
      %6756 = vmatprep.subr.mxu0 0.0
      %6757 = vmatpush1.msra.mxu0 0.0
      %6758 = vmatprep.subr.mxu0 0.0
      %6759 = vmatpush1.msra.mxu0 0.0
      %6760 = vmatprep.subr.mxu0 0.0
      %6761 = vmatpush1.msra.mxu0 0.0
      %6762 = vmatprep.subr.mxu0 0.0
      %6763 = vmatpush1.msra.mxu0 0.0
      %6764 = vmatprep.subr.mxu0 0.0
      %6765 = vmatpush1.msra.mxu0 0.0
      %6766 = vmatprep.subr.mxu0 0.0
      %6767 = vmatpush1.msra.mxu0 0.0
      %6768 = vmatprep.subr.mxu0 0.0
      %6769 = vmatpush1.msra.mxu0 0.0
      %6770 = vmatprep.subr.mxu0 0.0
      %6771 = vmatpush1.msra.mxu0 0.0
      %6772 = vmatprep.subr.mxu0 0.0
      %6773 = vmatpush1.msra.mxu0 0.0
      %6774 = vmatprep.subr.mxu0 0.0
      %6775 = vmatpush1.msra.mxu0 0.0
      %6776 = vmatprep.subr.mxu0 0.0
      %6777 = vmatpush1.msra.mxu0 0.0
      %6778 = vmatprep.subr.mxu0 0.0
      %6779 = vmatpush1.msra.mxu0 0.0
      %6780 = vmatprep.subr.mxu0 0.0
      %6781 = vmatpush1.msra.mxu0 0.0
      %6782 = vmatprep.subr.mxu0 0.0
      %6783 = vmatpush1.msra.mxu0 0.0
      %6784 = vmatprep.subr.mxu0 0.0
      %6785 = vmatpush1.msra.mxu0 0.0
      %6786 = vmatprep.subr.mxu0 0.0
      %6787 = vmatpush1.msra.mxu0 0.0
      %6788 = vmatprep.subr.mxu0 0.0
      %6789 = vmatpush1.msra.mxu0 0.0
      %6790 = vmatprep.subr.mxu0 0.0
      %6791 = vmatpush1.msra.mxu0 0.0
      %6792 = vmatprep.subr.mxu0 0.0
      %6793 = vmatpush1.msra.mxu0 0.0
      %6794 = vmatprep.subr.mxu0 0.0
      %6795 = vmatpush1.msra.mxu0 0.0
      %6796 = vmatprep.subr.mxu0 0.0
      %6797 = vmatpush1.msra.mxu0 0.0
      %6798 = vmatprep.subr.mxu0 0.0
      %6799 = vmatpush1.msra.mxu0 0.0
      %6800 = vmatprep.subr.mxu0 0.0
      %6801 = vmatpush1.msra.mxu0 0.0
      %6802 = vmatprep.subr.mxu0 0.0
      %6803 = vmatpush1.msra.mxu0 0.0
      %6804 = vmatprep.subr.mxu0 0.0
      %6805 = vmatpush1.msra.mxu0 0.0
      %6806 = vmatprep.subr.mxu0 0.0
      %6807 = vmatpush1.msra.mxu0 0.0
      %6808 = vmatprep.subr.mxu0 0.0
      %6809 = vmatpush1.msra.mxu0 0.0
      %6810 = vmatprep.subr.mxu0 0.0
      %6811 = vmatpush1.msra.mxu0 0.0
      %6812 = vmatprep.subr.mxu0 0.0
      %6813 = vmatpush1.msra.mxu0 0.0
      %6814 = vmatprep.mubr.f32.mxu0 0.0
      %6815 = vmatmul.mubr.f32.gmra.mrb[0].mxu0 %v6748
      %v6816 = vpop.f32.mrb[0].mxu0
      %v6817 = vadd.f32 0.0, %v6816
      %v6818 = vpop.f32.mrb[0].mxu0
      %6819 = vdwg.mxu0
      %s6820 = scalar_lea.vmem %s5, 512
      %v6821 = vld [vmem:[%s6820] sm:$0xff]
      %v6822 = vld [vmem:[%s6820 + $0x8] sm:$0xff]
      %v6823 = vld [vmem:[%s6820 + $0x10] sm:$0xff]
      %v6824 = vld [vmem:[%s6820 + $0x18] sm:$0xff]
      %v6825 = vld [vmem:[%s6820 + $0x20] sm:$0xff]
      %v6826 = vld [vmem:[%s6820 + $0x28] sm:$0xff]
      %v6827 = vld [vmem:[%s6820 + $0x30] sm:$0xff]
      %v6828 = vld [vmem:[%s6820 + $0x38] sm:$0xff]
      %v6829 = vld [vmem:[%s6820 + $0x40] sm:$0xff]
      %v6830 = vld [vmem:[%s6820 + $0x48] sm:$0xff]
      %v6831 = vld [vmem:[%s6820 + $0x50] sm:$0xff]
      %v6832 = vld [vmem:[%s6820 + $0x58] sm:$0xff]
      %v6833 = vld [vmem:[%s6820 + $0x60] sm:$0xff]
      %v6834 = vld [vmem:[%s6820 + $0x68] sm:$0xff]
      %v6835 = vld [vmem:[%s6820 + $0x70] sm:$0xff]
      %v6836 = vld [vmem:[%s6820 + $0x78] sm:$0xff]
      %v6837 = vld [vmem:[%s6820 + $0x80] sm:$0xff]
      %v6838 = vld [vmem:[%s6820 + $0x88] sm:$0xff]
      %v6839 = vld [vmem:[%s6820 + $0x90] sm:$0xff]
      %v6840 = vld [vmem:[%s6820 + $0x98] sm:$0xff]
      %v6841 = vld [vmem:[%s6820 + $0xa0] sm:$0xff]
      %v6842 = vld [vmem:[%s6820 + $0xa8] sm:$0xff]
      %v6843 = vld [vmem:[%s6820 + $0xb0] sm:$0xff]
      %v6844 = vld [vmem:[%s6820 + $0xb8] sm:$0xff]
      %v6845 = vld [vmem:[%s6820 + $0xc0] sm:$0xff]
      %v6846 = vld [vmem:[%s6820 + $0xc8] sm:$0xff]
      %v6847 = vld [vmem:[%s6820 + $0xd0] sm:$0xff]
      %v6848 = vld [vmem:[%s6820 + $0xd8] sm:$0xff]
      %v6849 = vld [vmem:[%s6820 + $0xe0] sm:$0xff]
      %v6850 = vld [vmem:[%s6820 + $0xe8] sm:$0xff]
      %v6851 = vld [vmem:[%s6820 + $0xf0] sm:$0xff]
      %v6852 = vld [vmem:[%s6820 + $0xf8] sm:$0xff]
      %6853 = vmatprep.subr.mxu0 %v6822
      %6854 = vmatpush1.msra.mxu0 %v6821
      %6855 = vmatprep.subr.mxu0 %v6824
      %6856 = vmatpush1.msra.mxu0 %v6823
      %6857 = vmatprep.subr.mxu0 %v6826
      %6858 = vmatpush1.msra.mxu0 %v6825
      %6859 = vmatprep.subr.mxu0 %v6828
      %6860 = vmatpush1.msra.mxu0 %v6827
      %6861 = vmatprep.subr.mxu0 %v6830
      %6862 = vmatpush1.msra.mxu0 %v6829
      %6863 = vmatprep.subr.mxu0 %v6832
      %6864 = vmatpush1.msra.mxu0 %v6831
      %6865 = vmatprep.subr.mxu0 %v6834
      %6866 = vmatpush1.msra.mxu0 %v6833
      %6867 = vmatprep.subr.mxu0 %v6836
      %6868 = vmatpush1.msra.mxu0 %v6835
      %6869 = vmatprep.subr.mxu0 %v6838
      %6870 = vmatpush1.msra.mxu0 %v6837
      %6871 = vmatprep.subr.mxu0 %v6840
      %6872 = vmatpush1.msra.mxu0 %v6839
      %6873 = vmatprep.subr.mxu0 %v6842
      %6874 = vmatpush1.msra.mxu0 %v6841
      %6875 = vmatprep.subr.mxu0 %v6844
      %6876 = vmatpush1.msra.mxu0 %v6843
      %6877 = vmatprep.subr.mxu0 %v6846
      %6878 = vmatpush1.msra.mxu0 %v6845
      %6879 = vmatprep.subr.mxu0 %v6848
      %6880 = vmatpush1.msra.mxu0 %v6847
      %6881 = vmatprep.subr.mxu0 %v6850
      %6882 = vmatpush1.msra.mxu0 %v6849
      %6883 = vmatprep.subr.mxu0 %v6852
      %6884 = vmatpush1.msra.mxu0 %v6851
      %6885 = vmatprep.subr.mxu0 0.0
      %6886 = vmatpush1.msra.mxu0 0.0
      %6887 = vmatprep.subr.mxu0 0.0
      %6888 = vmatpush1.msra.mxu0 0.0
      %6889 = vmatprep.subr.mxu0 0.0
      %6890 = vmatpush1.msra.mxu0 0.0
      %6891 = vmatprep.subr.mxu0 0.0
      %6892 = vmatpush1.msra.mxu0 0.0
      %6893 = vmatprep.subr.mxu0 0.0
      %6894 = vmatpush1.msra.mxu0 0.0
      %6895 = vmatprep.subr.mxu0 0.0
      %6896 = vmatpush1.msra.mxu0 0.0
      %6897 = vmatprep.subr.mxu0 0.0
      %6898 = vmatpush1.msra.mxu0 0.0
      %6899 = vmatprep.subr.mxu0 0.0
      %6900 = vmatpush1.msra.mxu0 0.0
      %6901 = vmatprep.subr.mxu0 0.0
      %6902 = vmatpush1.msra.mxu0 0.0
      %6903 = vmatprep.subr.mxu0 0.0
      %6904 = vmatpush1.msra.mxu0 0.0
      %6905 = vmatprep.subr.mxu0 0.0
      %6906 = vmatpush1.msra.mxu0 0.0
      %6907 = vmatprep.subr.mxu0 0.0
      %6908 = vmatpush1.msra.mxu0 0.0
      %6909 = vmatprep.subr.mxu0 0.0
      %6910 = vmatpush1.msra.mxu0 0.0
      %6911 = vmatprep.subr.mxu0 0.0
      %6912 = vmatpush1.msra.mxu0 0.0
      %6913 = vmatprep.subr.mxu0 0.0
      %6914 = vmatpush1.msra.mxu0 0.0
      %6915 = vmatprep.subr.mxu0 0.0
      %6916 = vmatpush1.msra.mxu0 0.0
      %6917 = vmatprep.mubr.f32.mxu0 0.0
      %6918 = vmatmul.mubr.f32.gmra.mrb[0].mxu0 %v6817
      %v6919 = vpop.f32.mrb[0].mxu0
      %v6920 = vadd.f32 0.0, %v6919
      %v6921 = vpop.f32.mrb[0].mxu0
      %v6922 = vadd.f32 0.0, %v6921
      %6923 = vdwg.mxu0
      %v6924 = vadd.f32 %v6741, %v6920
      %v6925 = vadd.f32 %v6743, %v6922
      %s6926 = scalar_lea.vmem %s9, 24
      %v6927 = vld [vmem:[%s6926] sm:$0xff]
      %v6929 = vsel %vm6389, %v6927, 0
      %6931 = vmatprep.subr.mxu0 0.0
      %6932 = vmatpush1.msra.mxu0 %v6385
      %6933 = vmatprep.subr.mxu0 0.0
      %6934 = vmatpush1.msra.mxu0 0.0
      %6935 = vmatprep.subr.mxu0 0.0
      %6936 = vmatpush1.msra.mxu0 0.0
      %6937 = vmatprep.subr.mxu0 0.0
      %6938 = vmatpush1.msra.mxu0 0.0
      %6939 = vmatprep.subr.mxu0 0.0
      %6940 = vmatpush1.msra.mxu0 0.0
      %6941 = vmatprep.subr.mxu0 0.0
      %6942 = vmatpush1.msra.mxu0 0.0
      %6943 = vmatprep.subr.mxu0 0.0
      %6944 = vmatpush1.msra.mxu0 0.0
      %6945 = vmatprep.subr.mxu0 0.0
      %6946 = vmatpush1.msra.mxu0 0.0
      %6947 = vmatprep.subr.mxu0 0.0
      %6948 = vmatpush1.msra.mxu0 0.0
      %6949 = vmatprep.subr.mxu0 0.0
      %6950 = vmatpush1.msra.mxu0 0.0
      %6951 = vmatprep.subr.mxu0 0.0
      %6952 = vmatpush1.msra.mxu0 0.0
      %6953 = vmatprep.subr.mxu0 0.0
      %6954 = vmatpush1.msra.mxu0 0.0
      %6955 = vmatprep.subr.mxu0 0.0
      %6956 = vmatpush1.msra.mxu0 0.0
      %6957 = vmatprep.subr.mxu0 0.0
      %6958 = vmatpush1.msra.mxu0 0.0
      %6959 = vmatprep.subr.mxu0 0.0
      %6960 = vmatpush1.msra.mxu0 0.0
      %6961 = vmatprep.subr.mxu0 0.0
      %6962 = vmatpush1.msra.mxu0 0.0
      %6963 = vmatprep.subr.mxu0 0.0
      %6964 = vmatpush1.msra.mxu0 0.0
      %6965 = vmatprep.subr.mxu0 0.0
      %6966 = vmatpush1.msra.mxu0 0.0
      %6967 = vmatprep.subr.mxu0 0.0
      %6968 = vmatpush1.msra.mxu0 0.0
      %6969 = vmatprep.subr.mxu0 0.0
      %6970 = vmatpush1.msra.mxu0 0.0
      %6971 = vmatprep.subr.mxu0 0.0
      %6972 = vmatpush1.msra.mxu0 0.0
      %6973 = vmatprep.subr.mxu0 0.0
      %6974 = vmatpush1.msra.mxu0 0.0
      %6975 = vmatprep.subr.mxu0 0.0
      %6976 = vmatpush1.msra.mxu0 0.0
      %6977 = vmatprep.subr.mxu0 0.0
      %6978 = vmatpush1.msra.mxu0 0.0
      %6979 = vmatprep.subr.mxu0 0.0
      %6980 = vmatpush1.msra.mxu0 0.0
      %6981 = vmatprep.subr.mxu0 0.0
      %6982 = vmatpush1.msra.mxu0 0.0
      %6983 = vmatprep.subr.mxu0 0.0
      %6984 = vmatpush1.msra.mxu0 0.0
      %6985 = vmatprep.subr.mxu0 0.0
      %6986 = vmatpush1.msra.mxu0 0.0
      %6987 = vmatprep.subr.mxu0 0.0
      %6988 = vmatpush1.msra.mxu0 0.0
      %6989 = vmatprep.subr.mxu0 0.0
      %6990 = vmatpush1.msra.mxu0 0.0
      %6991 = vmatprep.subr.mxu0 0.0
      %6992 = vmatpush1.msra.mxu0 0.0
      %6993 = vmatprep.subr.mxu0 0.0
      %6994 = vmatpush1.msra.mxu0 0.0
      %6995 = vmatprep.mubr.f32.mxu0 0.0
      %6996 = vmatmul.mubr.f32.gmra.mrb[0].mxu0 %v6929
      %v6997 = vpop.f32.mrb[0].mxu0
      %v6998 = vadd.f32 0.0, %v6997
      %v6999 = vpop.f32.mrb[0].mxu0
      %7000 = vdwg.mxu0
      %s7001 = scalar_lea.vmem %s5, 768
      %v7002 = vld [vmem:[%s7001] sm:$0xff]
      %v7003 = vld [vmem:[%s7001 + $0x8] sm:$0xff]
      %v7004 = vld [vmem:[%s7001 + $0x10] sm:$0xff]
      %v7005 = vld [vmem:[%s7001 + $0x18] sm:$0xff]
      %v7006 = vld [vmem:[%s7001 + $0x20] sm:$0xff]
      %v7007 = vld [vmem:[%s7001 + $0x28] sm:$0xff]
      %v7008 = vld [vmem:[%s7001 + $0x30] sm:$0xff]
      %v7009 = vld [vmem:[%s7001 + $0x38] sm:$0xff]
      %v7010 = vld [vmem:[%s7001 + $0x40] sm:$0xff]
      %v7011 = vld [vmem:[%s7001 + $0x48] sm:$0xff]
      %v7012 = vld [vmem:[%s7001 + $0x50] sm:$0xff]
      %v7013 = vld [vmem:[%s7001 + $0x58] sm:$0xff]
      %v7014 = vld [vmem:[%s7001 + $0x60] sm:$0xff]
      %v7015 = vld [vmem:[%s7001 + $0x68] sm:$0xff]
      %v7016 = vld [vmem:[%s7001 + $0x70] sm:$0xff]
      %v7017 = vld [vmem:[%s7001 + $0x78] sm:$0xff]
      %v7018 = vld [vmem:[%s7001 + $0x80] sm:$0xff]
      %v7019 = vld [vmem:[%s7001 + $0x88] sm:$0xff]
      %v7020 = vld [vmem:[%s7001 + $0x90] sm:$0xff]
      %v7021 = vld [vmem:[%s7001 + $0x98] sm:$0xff]
      %v7022 = vld [vmem:[%s7001 + $0xa0] sm:$0xff]
      %v7023 = vld [vmem:[%s7001 + $0xa8] sm:$0xff]
      %v7024 = vld [vmem:[%s7001 + $0xb0] sm:$0xff]
      %v7025 = vld [vmem:[%s7001 + $0xb8] sm:$0xff]
      %v7026 = vld [vmem:[%s7001 + $0xc0] sm:$0xff]
      %v7027 = vld [vmem:[%s7001 + $0xc8] sm:$0xff]
      %v7028 = vld [vmem:[%s7001 + $0xd0] sm:$0xff]
      %v7029 = vld [vmem:[%s7001 + $0xd8] sm:$0xff]
      %v7030 = vld [vmem:[%s7001 + $0xe0] sm:$0xff]
      %v7031 = vld [vmem:[%s7001 + $0xe8] sm:$0xff]
      %v7032 = vld [vmem:[%s7001 + $0xf0] sm:$0xff]
      %v7033 = vld [vmem:[%s7001 + $0xf8] sm:$0xff]
      %7034 = vmatprep.subr.mxu0 %v7003
      %7035 = vmatpush1.msra.mxu0 %v7002
      %7036 = vmatprep.subr.mxu0 %v7005
      %7037 = vmatpush1.msra.mxu0 %v7004
      %7038 = vmatprep.subr.mxu0 %v7007
      %7039 = vmatpush1.msra.mxu0 %v7006
      %7040 = vmatprep.subr.mxu0 %v7009
      %7041 = vmatpush1.msra.mxu0 %v7008
      %7042 = vmatprep.subr.mxu0 %v7011
      %7043 = vmatpush1.msra.mxu0 %v7010
      %7044 = vmatprep.subr.mxu0 %v7013
      %7045 = vmatpush1.msra.mxu0 %v7012
      %7046 = vmatprep.subr.mxu0 %v7015
      %7047 = vmatpush1.msra.mxu0 %v7014
      %7048 = vmatprep.subr.mxu0 %v7017
      %7049 = vmatpush1.msra.mxu0 %v7016
      %7050 = vmatprep.subr.mxu0 %v7019
      %7051 = vmatpush1.msra.mxu0 %v7018
      %7052 = vmatprep.subr.mxu0 %v7021
      %7053 = vmatpush1.msra.mxu0 %v7020
      %7054 = vmatprep.subr.mxu0 %v7023
      %7055 = vmatpush1.msra.mxu0 %v7022
      %7056 = vmatprep.subr.mxu0 %v7025
      %7057 = vmatpush1.msra.mxu0 %v7024
      %7058 = vmatprep.subr.mxu0 %v7027
      %7059 = vmatpush1.msra.mxu0 %v7026
      %7060 = vmatprep.subr.mxu0 %v7029
      %7061 = vmatpush1.msra.mxu0 %v7028
      %7062 = vmatprep.subr.mxu0 %v7031
      %7063 = vmatpush1.msra.mxu0 %v7030
      %7064 = vmatprep.subr.mxu0 %v7033
      %7065 = vmatpush1.msra.mxu0 %v7032
      %7066 = vmatprep.subr.mxu0 0.0
      %7067 = vmatpush1.msra.mxu0 0.0
      %7068 = vmatprep.subr.mxu0 0.0
      %7069 = vmatpush1.msra.mxu0 0.0
      %7070 = vmatprep.subr.mxu0 0.0
      %7071 = vmatpush1.msra.mxu0 0.0
      %7072 = vmatprep.subr.mxu0 0.0
      %7073 = vmatpush1.msra.mxu0 0.0
      %7074 = vmatprep.subr.mxu0 0.0
      %7075 = vmatpush1.msra.mxu0 0.0
      %7076 = vmatprep.subr.mxu0 0.0
      %7077 = vmatpush1.msra.mxu0 0.0
      %7078 = vmatprep.subr.mxu0 0.0
      %7079 = vmatpush1.msra.mxu0 0.0
      %7080 = vmatprep.subr.mxu0 0.0
      %7081 = vmatpush1.msra.mxu0 0.0
      %7082 = vmatprep.subr.mxu0 0.0
      %7083 = vmatpush1.msra.mxu0 0.0
      %7084 = vmatprep.subr.mxu0 0.0
      %7085 = vmatpush1.msra.mxu0 0.0
      %7086 = vmatprep.subr.mxu0 0.0
      %7087 = vmatpush1.msra.mxu0 0.0
      %7088 = vmatprep.subr.mxu0 0.0
      %7089 = vmatpush1.msra.mxu0 0.0
      %7090 = vmatprep.subr.mxu0 0.0
      %7091 = vmatpush1.msra.mxu0 0.0
      %7092 = vmatprep.subr.mxu0 0.0
      %7093 = vmatpush1.msra.mxu0 0.0
      %7094 = vmatprep.subr.mxu0 0.0
      %7095 = vmatpush1.msra.mxu0 0.0
      %7096 = vmatprep.subr.mxu0 0.0
      %7097 = vmatpush1.msra.mxu0 0.0
      %7098 = vmatprep.mubr.f32.mxu0 0.0
      %7099 = vmatmul.mubr.f32.gmra.mrb[0].mxu0 %v6998
      %v7100 = vpop.f32.mrb[0].mxu0
      %v7101 = vadd.f32 0.0, %v7100
      %v7102 = vpop.f32.mrb[0].mxu0
      %v7103 = vadd.f32 0.0, %v7102
      %7104 = vdwg.mxu0
      %v7105 = vadd.f32 %v6924, %v7101
      %v7106 = vadd.f32 %v6925, %v7103
      %s7107 = scalar_lea.vmem %s9, 32
      %v7108 = vld [vmem:[%s7107] sm:$0xff]
      %v7110 = vsel %vm6389, %v7108, 0
      %7112 = vmatprep.subr.mxu0 0.0
      %7113 = vmatpush1.msra.mxu0 %v6385
      %7114 = vmatprep.subr.mxu0 0.0
      %7115 = vmatpush1.msra.mxu0 0.0
      %7116 = vmatprep.subr.mxu0 0.0
      %7117 = vmatpush1.msra.mxu0 0.0
      %7118 = vmatprep.subr.mxu0 0.0
      %7119 = vmatpush1.msra.mxu0 0.0
      %7120 = vmatprep.subr.mxu0 0.0
      %7121 = vmatpush1.msra.mxu0 0.0
      %7122 = vmatprep.subr.mxu0 0.0
      %7123 = vmatpush1.msra.mxu0 0.0
      %7124 = vmatprep.subr.mxu0 0.0
      %7125 = vmatpush1.msra.mxu0 0.0
      %7126 = vmatprep.subr.mxu0 0.0
      %7127 = vmatpush1.msra.mxu0 0.0
      %7128 = vmatprep.subr.mxu0 0.0
      %7129 = vmatpush1.msra.mxu0 0.0
      %7130 = vmatprep.subr.mxu0 0.0
      %7131 = vmatpush1.msra.mxu0 0.0
      %7132 = vmatprep.subr.mxu0 0.0
      %7133 = vmatpush1.msra.mxu0 0.0
      %7134 = vmatprep.subr.mxu0 0.0
      %7135 = vmatpush1.msra.mxu0 0.0
      %7136 = vmatprep.subr.mxu0 0.0
      %7137 = vmatpush1.msra.mxu0 0.0
      %7138 = vmatprep.subr.mxu0 0.0
      %7139 = vmatpush1.msra.mxu0 0.0
      %7140 = vmatprep.subr.mxu0 0.0
      %7141 = vmatpush1.msra.mxu0 0.0
      %7142 = vmatprep.subr.mxu0 0.0
      %7143 = vmatpush1.msra.mxu0 0.0
      %7144 = vmatprep.subr.mxu0 0.0
      %7145 = vmatpush1.msra.mxu0 0.0
      %7146 = vmatprep.subr.mxu0 0.0
      %7147 = vmatpush1.msra.mxu0 0.0
      %7148 = vmatprep.subr.mxu0 0.0
      %7149 = vmatpush1.msra.mxu0 0.0
      %7150 = vmatprep.subr.mxu0 0.0
      %7151 = vmatpush1.msra.mxu0 0.0
      %7152 = vmatprep.subr.mxu0 0.0
      %7153 = vmatpush1.msra.mxu0 0.0
      %7154 = vmatprep.subr.mxu0 0.0
      %7155 = vmatpush1.msra.mxu0 0.0
      %7156 = vmatprep.subr.mxu0 0.0
      %7157 = vmatpush1.msra.mxu0 0.0
      %7158 = vmatprep.subr.mxu0 0.0
      %7159 = vmatpush1.msra.mxu0 0.0
      %7160 = vmatprep.subr.mxu0 0.0
      %7161 = vmatpush1.msra.mxu0 0.0
      %7162 = vmatprep.subr.mxu0 0.0
      %7163 = vmatpush1.msra.mxu0 0.0
      %7164 = vmatprep.subr.mxu0 0.0
      %7165 = vmatpush1.msra.mxu0 0.0
      %7166 = vmatprep.subr.mxu0 0.0
      %7167 = vmatpush1.msra.mxu0 0.0
      %7168 = vmatprep.subr.mxu0 0.0
      %7169 = vmatpush1.msra.mxu0 0.0
      %7170 = vmatprep.subr.mxu0 0.0
      %7171 = vmatpush1.msra.mxu0 0.0
      %7172 = vmatprep.subr.mxu0 0.0
      %7173 = vmatpush1.msra.mxu0 0.0
      %7174 = vmatprep.subr.mxu0 0.0
      %7175 = vmatpush1.msra.mxu0 0.0
      %7176 = vmatprep.mubr.f32.mxu0 0.0
      %7177 = vmatmul.mubr.f32.gmra.mrb[0].mxu0 %v7110
      %v7178 = vpop.f32.mrb[0].mxu0
      %v7179 = vadd.f32 0.0, %v7178
      %v7180 = vpop.f32.mrb[0].mxu0
      %7181 = vdwg.mxu0
      %s7182 = scalar_lea.vmem %s5, 1024
      %v7183 = vld [vmem:[%s7182] sm:$0xff]
      %v7184 = vld [vmem:[%s7182 + $0x8] sm:$0xff]
      %v7185 = vld [vmem:[%s7182 + $0x10] sm:$0xff]
      %v7186 = vld [vmem:[%s7182 + $0x18] sm:$0xff]
      %v7187 = vld [vmem:[%s7182 + $0x20] sm:$0xff]
      %v7188 = vld [vmem:[%s7182 + $0x28] sm:$0xff]
      %v7189 = vld [vmem:[%s7182 + $0x30] sm:$0xff]
      %v7190 = vld [vmem:[%s7182 + $0x38] sm:$0xff]
      %v7191 = vld [vmem:[%s7182 + $0x40] sm:$0xff]
      %v7192 = vld [vmem:[%s7182 + $0x48] sm:$0xff]
      %v7193 = vld [vmem:[%s7182 + $0x50] sm:$0xff]
      %v7194 = vld [vmem:[%s7182 + $0x58] sm:$0xff]
      %v7195 = vld [vmem:[%s7182 + $0x60] sm:$0xff]
      %v7196 = vld [vmem:[%s7182 + $0x68] sm:$0xff]
      %v7197 = vld [vmem:[%s7182 + $0x70] sm:$0xff]
      %v7198 = vld [vmem:[%s7182 + $0x78] sm:$0xff]
      %v7199 = vld [vmem:[%s7182 + $0x80] sm:$0xff]
      %v7200 = vld [vmem:[%s7182 + $0x88] sm:$0xff]
      %v7201 = vld [vmem:[%s7182 + $0x90] sm:$0xff]
      %v7202 = vld [vmem:[%s7182 + $0x98] sm:$0xff]
      %v7203 = vld [vmem:[%s7182 + $0xa0] sm:$0xff]
      %v7204 = vld [vmem:[%s7182 + $0xa8] sm:$0xff]
      %v7205 = vld [vmem:[%s7182 + $0xb0] sm:$0xff]
      %v7206 = vld [vmem:[%s7182 + $0xb8] sm:$0xff]
      %v7207 = vld [vmem:[%s7182 + $0xc0] sm:$0xff]
      %v7208 = vld [vmem:[%s7182 + $0xc8] sm:$0xff]
      %v7209 = vld [vmem:[%s7182 + $0xd0] sm:$0xff]
      %v7210 = vld [vmem:[%s7182 + $0xd8] sm:$0xff]
      %v7211 = vld [vmem:[%s7182 + $0xe0] sm:$0xff]
      %v7212 = vld [vmem:[%s7182 + $0xe8] sm:$0xff]
      %v7213 = vld [vmem:[%s7182 + $0xf0] sm:$0xff]
      %v7214 = vld [vmem:[%s7182 + $0xf8] sm:$0xff]
      %7215 = vmatprep.subr.mxu0 %v7184
      %7216 = vmatpush1.msra.mxu0 %v7183
      %7217 = vmatprep.subr.mxu0 %v7186
      %7218 = vmatpush1.msra.mxu0 %v7185
      %7219 = vmatprep.subr.mxu0 %v7188
      %7220 = vmatpush1.msra.mxu0 %v7187
      %7221 = vmatprep.subr.mxu0 %v7190
      %7222 = vmatpush1.msra.mxu0 %v7189
      %7223 = vmatprep.subr.mxu0 %v7192
      %7224 = vmatpush1.msra.mxu0 %v7191
      %7225 = vmatprep.subr.mxu0 %v7194
      %7226 = vmatpush1.msra.mxu0 %v7193
      %7227 = vmatprep.subr.mxu0 %v7196
      %7228 = vmatpush1.msra.mxu0 %v7195
      %7229 = vmatprep.subr.mxu0 %v7198
      %7230 = vmatpush1.msra.mxu0 %v7197
      %7231 = vmatprep.subr.mxu0 %v7200
      %7232 = vmatpush1.msra.mxu0 %v7199
      %7233 = vmatprep.subr.mxu0 %v7202
      %7234 = vmatpush1.msra.mxu0 %v7201
      %7235 = vmatprep.subr.mxu0 %v7204
      %7236 = vmatpush1.msra.mxu0 %v7203
      %7237 = vmatprep.subr.mxu0 %v7206
      %7238 = vmatpush1.msra.mxu0 %v7205
      %7239 = vmatprep.subr.mxu0 %v7208
      %7240 = vmatpush1.msra.mxu0 %v7207
      %7241 = vmatprep.subr.mxu0 %v7210
      %7242 = vmatpush1.msra.mxu0 %v7209
      %7243 = vmatprep.subr.mxu0 %v7212
      %7244 = vmatpush1.msra.mxu0 %v7211
      %7245 = vmatprep.subr.mxu0 %v7214
      %7246 = vmatpush1.msra.mxu0 %v7213
      %7247 = vmatprep.subr.mxu0 0.0
      %7248 = vmatpush1.msra.mxu0 0.0
      %7249 = vmatprep.subr.mxu0 0.0
      %7250 = vmatpush1.msra.mxu0 0.0
      %7251 = vmatprep.subr.mxu0 0.0
      %7252 = vmatpush1.msra.mxu0 0.0
      %7253 = vmatprep.subr.mxu0 0.0
      %7254 = vmatpush1.msra.mxu0 0.0
      %7255 = vmatprep.subr.mxu0 0.0
      %7256 = vmatpush1.msra.mxu0 0.0
      %7257 = vmatprep.subr.mxu0 0.0
      %7258 = vmatpush1.msra.mxu0 0.0
      %7259 = vmatprep.subr.mxu0 0.0
      %7260 = vmatpush1.msra.mxu0 0.0
      %7261 = vmatprep.subr.mxu0 0.0
      %7262 = vmatpush1.msra.mxu0 0.0
      %7263 = vmatprep.subr.mxu0 0.0
      %7264 = vmatpush1.msra.mxu0 0.0
      %7265 = vmatprep.subr.mxu0 0.0
      %7266 = vmatpush1.msra.mxu0 0.0
      %7267 = vmatprep.subr.mxu0 0.0
      %7268 = vmatpush1.msra.mxu0 0.0
      %7269 = vmatprep.subr.mxu0 0.0
      %7270 = vmatpush1.msra.mxu0 0.0
      %7271 = vmatprep.subr.mxu0 0.0
      %7272 = vmatpush1.msra.mxu0 0.0
      %7273 = vmatprep.subr.mxu0 0.0
      %7274 = vmatpush1.msra.mxu0 0.0
      %7275 = vmatprep.subr.mxu0 0.0
      %7276 = vmatpush1.msra.mxu0 0.0
      %7277 = vmatprep.subr.mxu0 0.0
      %7278 = vmatpush1.msra.mxu0 0.0
      %7279 = vmatprep.mubr.f32.mxu0 0.0
      %7280 = vmatmul.mubr.f32.gmra.mrb[0].mxu0 %v7179
      %v7281 = vpop.f32.mrb[0].mxu0
      %v7282 = vadd.f32 0.0, %v7281
      %v7283 = vpop.f32.mrb[0].mxu0
      %v7284 = vadd.f32 0.0, %v7283
      %7285 = vdwg.mxu0
      %v7286 = vadd.f32 %v7105, %v7282
      %v7287 = vadd.f32 %v7106, %v7284
      %s7288 = scalar_lea.vmem %s9, 40
      %v7289 = vld [vmem:[%s7288] sm:$0xff]
      %v7291 = vsel %vm6389, %v7289, 0
      %7293 = vmatprep.subr.mxu0 0.0
      %7294 = vmatpush1.msra.mxu0 %v6385
      %7295 = vmatprep.subr.mxu0 0.0
      %7296 = vmatpush1.msra.mxu0 0.0
      %7297 = vmatprep.subr.mxu0 0.0
      %7298 = vmatpush1.msra.mxu0 0.0
      %7299 = vmatprep.subr.mxu0 0.0
      %7300 = vmatpush1.msra.mxu0 0.0
      %7301 = vmatprep.subr.mxu0 0.0
      %7302 = vmatpush1.msra.mxu0 0.0
      %7303 = vmatprep.subr.mxu0 0.0
      %7304 = vmatpush1.msra.mxu0 0.0
      %7305 = vmatprep.subr.mxu0 0.0
      %7306 = vmatpush1.msra.mxu0 0.0
      %7307 = vmatprep.subr.mxu0 0.0
      %7308 = vmatpush1.msra.mxu0 0.0
      %7309 = vmatprep.subr.mxu0 0.0
      %7310 = vmatpush1.msra.mxu0 0.0
      %7311 = vmatprep.subr.mxu0 0.0
      %7312 = vmatpush1.msra.mxu0 0.0
      %7313 = vmatprep.subr.mxu0 0.0
      %7314 = vmatpush1.msra.mxu0 0.0
      %7315 = vmatprep.subr.mxu0 0.0
      %7316 = vmatpush1.msra.mxu0 0.0
      %7317 = vmatprep.subr.mxu0 0.0
      %7318 = vmatpush1.msra.mxu0 0.0
      %7319 = vmatprep.subr.mxu0 0.0
      %7320 = vmatpush1.msra.mxu0 0.0
      %7321 = vmatprep.subr.mxu0 0.0
      %7322 = vmatpush1.msra.mxu0 0.0
      %7323 = vmatprep.subr.mxu0 0.0
      %7324 = vmatpush1.msra.mxu0 0.0
      %7325 = vmatprep.subr.mxu0 0.0
      %7326 = vmatpush1.msra.mxu0 0.0
      %7327 = vmatprep.subr.mxu0 0.0
      %7328 = vmatpush1.msra.mxu0 0.0
      %7329 = vmatprep.subr.mxu0 0.0
      %7330 = vmatpush1.msra.mxu0 0.0
      %7331 = vmatprep.subr.mxu0 0.0
      %7332 = vmatpush1.msra.mxu0 0.0
      %7333 = vmatprep.subr.mxu0 0.0
      %7334 = vmatpush1.msra.mxu0 0.0
      %7335 = vmatprep.subr.mxu0 0.0
      %7336 = vmatpush1.msra.mxu0 0.0
      %7337 = vmatprep.subr.mxu0 0.0
      %7338 = vmatpush1.msra.mxu0 0.0
      %7339 = vmatprep.subr.mxu0 0.0
      %7340 = vmatpush1.msra.mxu0 0.0
      %7341 = vmatprep.subr.mxu0 0.0
      %7342 = vmatpush1.msra.mxu0 0.0
      %7343 = vmatprep.subr.mxu0 0.0
      %7344 = vmatpush1.msra.mxu0 0.0
      %7345 = vmatprep.subr.mxu0 0.0
      %7346 = vmatpush1.msra.mxu0 0.0
      %7347 = vmatprep.subr.mxu0 0.0
      %7348 = vmatpush1.msra.mxu0 0.0
      %7349 = vmatprep.subr.mxu0 0.0
      %7350 = vmatpush1.msra.mxu0 0.0
      %7351 = vmatprep.subr.mxu0 0.0
      %7352 = vmatpush1.msra.mxu0 0.0
      %7353 = vmatprep.subr.mxu0 0.0
      %7354 = vmatpush1.msra.mxu0 0.0
      %7355 = vmatprep.subr.mxu0 0.0
      %7356 = vmatpush1.msra.mxu0 0.0
      %7357 = vmatprep.mubr.f32.mxu0 0.0
      %7358 = vmatmul.mubr.f32.gmra.mrb[0].mxu0 %v7291
      %v7359 = vpop.f32.mrb[0].mxu0
      %v7360 = vadd.f32 0.0, %v7359
      %v7361 = vpop.f32.mrb[0].mxu0
      %7362 = vdwg.mxu0
      %s7363 = scalar_lea.vmem %s5, 1280
      %v7364 = vld [vmem:[%s7363] sm:$0xff]
      %v7365 = vld [vmem:[%s7363 + $0x8] sm:$0xff]
      %v7366 = vld [vmem:[%s7363 + $0x10] sm:$0xff]
      %v7367 = vld [vmem:[%s7363 + $0x18] sm:$0xff]
      %v7368 = vld [vmem:[%s7363 + $0x20] sm:$0xff]
      %v7369 = vld [vmem:[%s7363 + $0x28] sm:$0xff]
      %v7370 = vld [vmem:[%s7363 + $0x30] sm:$0xff]
      %v7371 = vld [vmem:[%s7363 + $0x38] sm:$0xff]
      %v7372 = vld [vmem:[%s7363 + $0x40] sm:$0xff]
      %v7373 = vld [vmem:[%s7363 + $0x48] sm:$0xff]
      %v7374 = vld [vmem:[%s7363 + $0x50] sm:$0xff]
      %v7375 = vld [vmem:[%s7363 + $0x58] sm:$0xff]
      %v7376 = vld [vmem:[%s7363 + $0x60] sm:$0xff]
      %v7377 = vld [vmem:[%s7363 + $0x68] sm:$0xff]
      %v7378 = vld [vmem:[%s7363 + $0x70] sm:$0xff]
      %v7379 = vld [vmem:[%s7363 + $0x78] sm:$0xff]
      %v7380 = vld [vmem:[%s7363 + $0x80] sm:$0xff]
      %v7381 = vld [vmem:[%s7363 + $0x88] sm:$0xff]
      %v7382 = vld [vmem:[%s7363 + $0x90] sm:$0xff]
      %v7383 = vld [vmem:[%s7363 + $0x98] sm:$0xff]
      %v7384 = vld [vmem:[%s7363 + $0xa0] sm:$0xff]
      %v7385 = vld [vmem:[%s7363 + $0xa8] sm:$0xff]
      %v7386 = vld [vmem:[%s7363 + $0xb0] sm:$0xff]
      %v7387 = vld [vmem:[%s7363 + $0xb8] sm:$0xff]
      %v7388 = vld [vmem:[%s7363 + $0xc0] sm:$0xff]
      %v7389 = vld [vmem:[%s7363 + $0xc8] sm:$0xff]
      %v7390 = vld [vmem:[%s7363 + $0xd0] sm:$0xff]
      %v7391 = vld [vmem:[%s7363 + $0xd8] sm:$0xff]
      %v7392 = vld [vmem:[%s7363 + $0xe0] sm:$0xff]
      %v7393 = vld [vmem:[%s7363 + $0xe8] sm:$0xff]
      %v7394 = vld [vmem:[%s7363 + $0xf0] sm:$0xff]
      %v7395 = vld [vmem:[%s7363 + $0xf8] sm:$0xff]
      %7396 = vmatprep.subr.mxu0 %v7365
      %7397 = vmatpush1.msra.mxu0 %v7364
      %7398 = vmatprep.subr.mxu0 %v7367
      %7399 = vmatpush1.msra.mxu0 %v7366
      %7400 = vmatprep.subr.mxu0 %v7369
      %7401 = vmatpush1.msra.mxu0 %v7368
      %7402 = vmatprep.subr.mxu0 %v7371
      %7403 = vmatpush1.msra.mxu0 %v7370
      %7404 = vmatprep.subr.mxu0 %v7373
      %7405 = vmatpush1.msra.mxu0 %v7372
      %7406 = vmatprep.subr.mxu0 %v7375
      %7407 = vmatpush1.msra.mxu0 %v7374
      %7408 = vmatprep.subr.mxu0 %v7377
      %7409 = vmatpush1.msra.mxu0 %v7376
      %7410 = vmatprep.subr.mxu0 %v7379
      %7411 = vmatpush1.msra.mxu0 %v7378
      %7412 = vmatprep.subr.mxu0 %v7381
      %7413 = vmatpush1.msra.mxu0 %v7380
      %7414 = vmatprep.subr.mxu0 %v7383
      %7415 = vmatpush1.msra.mxu0 %v7382
      %7416 = vmatprep.subr.mxu0 %v7385
      %7417 = vmatpush1.msra.mxu0 %v7384
      %7418 = vmatprep.subr.mxu0 %v7387
      %7419 = vmatpush1.msra.mxu0 %v7386
      %7420 = vmatprep.subr.mxu0 %v7389
      %7421 = vmatpush1.msra.mxu0 %v7388
      %7422 = vmatprep.subr.mxu0 %v7391
      %7423 = vmatpush1.msra.mxu0 %v7390
      %7424 = vmatprep.subr.mxu0 %v7393
      %7425 = vmatpush1.msra.mxu0 %v7392
      %7426 = vmatprep.subr.mxu0 %v7395
      %7427 = vmatpush1.msra.mxu0 %v7394
      %7428 = vmatprep.subr.mxu0 0.0
      %7429 = vmatpush1.msra.mxu0 0.0
      %7430 = vmatprep.subr.mxu0 0.0
      %7431 = vmatpush1.msra.mxu0 0.0
      %7432 = vmatprep.subr.mxu0 0.0
      %7433 = vmatpush1.msra.mxu0 0.0
      %7434 = vmatprep.subr.mxu0 0.0
      %7435 = vmatpush1.msra.mxu0 0.0
      %7436 = vmatprep.subr.mxu0 0.0
      %7437 = vmatpush1.msra.mxu0 0.0
      %7438 = vmatprep.subr.mxu0 0.0
      %7439 = vmatpush1.msra.mxu0 0.0
      %7440 = vmatprep.subr.mxu0 0.0
      %7441 = vmatpush1.msra.mxu0 0.0
      %7442 = vmatprep.subr.mxu0 0.0
      %7443 = vmatpush1.msra.mxu0 0.0
      %7444 = vmatprep.subr.mxu0 0.0
      %7445 = vmatpush1.msra.mxu0 0.0
      %7446 = vmatprep.subr.mxu0 0.0
      %7447 = vmatpush1.msra.mxu0 0.0
      %7448 = vmatprep.subr.mxu0 0.0
      %7449 = vmatpush1.msra.mxu0 0.0
      %7450 = vmatprep.subr.mxu0 0.0
      %7451 = vmatpush1.msra.mxu0 0.0
      %7452 = vmatprep.subr.mxu0 0.0
      %7453 = vmatpush1.msra.mxu0 0.0
      %7454 = vmatprep.subr.mxu0 0.0
      %7455 = vmatpush1.msra.mxu0 0.0
      %7456 = vmatprep.subr.mxu0 0.0
      %7457 = vmatpush1.msra.mxu0 0.0
      %7458 = vmatprep.subr.mxu0 0.0
      %7459 = vmatpush1.msra.mxu0 0.0
      %7460 = vmatprep.mubr.f32.mxu0 0.0
      %7461 = vmatmul.mubr.f32.gmra.mrb[0].mxu0 %v7360
      %v7462 = vpop.f32.mrb[0].mxu0
      %v7463 = vadd.f32 0.0, %v7462
      %v7464 = vpop.f32.mrb[0].mxu0
      %v7465 = vadd.f32 0.0, %v7464
      %7466 = vdwg.mxu0
      %v7467 = vadd.f32 %v7286, %v7463
      %v7468 = vadd.f32 %v7287, %v7465
      %s7469 = scalar_lea.vmem %s9, 48
      %v7470 = vld [vmem:[%s7469] sm:$0xff]
      %v7472 = vsel %vm6389, %v7470, 0
      %7474 = vmatprep.subr.mxu0 0.0
      %7475 = vmatpush1.msra.mxu0 %v6385
      %7476 = vmatprep.subr.mxu0 0.0
      %7477 = vmatpush1.msra.mxu0 0.0
      %7478 = vmatprep.subr.mxu0 0.0
      %7479 = vmatpush1.msra.mxu0 0.0
      %7480 = vmatprep.subr.mxu0 0.0
      %7481 = vmatpush1.msra.mxu0 0.0
      %7482 = vmatprep.subr.mxu0 0.0
      %7483 = vmatpush1.msra.mxu0 0.0
      %7484 = vmatprep.subr.mxu0 0.0
      %7485 = vmatpush1.msra.mxu0 0.0
      %7486 = vmatprep.subr.mxu0 0.0
      %7487 = vmatpush1.msra.mxu0 0.0
      %7488 = vmatprep.subr.mxu0 0.0
      %7489 = vmatpush1.msra.mxu0 0.0
      %7490 = vmatprep.subr.mxu0 0.0
      %7491 = vmatpush1.msra.mxu0 0.0
      %7492 = vmatprep.subr.mxu0 0.0
      %7493 = vmatpush1.msra.mxu0 0.0
      %7494 = vmatprep.subr.mxu0 0.0
      %7495 = vmatpush1.msra.mxu0 0.0
      %7496 = vmatprep.subr.mxu0 0.0
      %7497 = vmatpush1.msra.mxu0 0.0
      %7498 = vmatprep.subr.mxu0 0.0
      %7499 = vmatpush1.msra.mxu0 0.0
      %7500 = vmatprep.subr.mxu0 0.0
      %7501 = vmatpush1.msra.mxu0 0.0
      %7502 = vmatprep.subr.mxu0 0.0
      %7503 = vmatpush1.msra.mxu0 0.0
      %7504 = vmatprep.subr.mxu0 0.0
      %7505 = vmatpush1.msra.mxu0 0.0
      %7506 = vmatprep.subr.mxu0 0.0
      %7507 = vmatpush1.msra.mxu0 0.0
      %7508 = vmatprep.subr.mxu0 0.0
      %7509 = vmatpush1.msra.mxu0 0.0
      %7510 = vmatprep.subr.mxu0 0.0
      %7511 = vmatpush1.msra.mxu0 0.0
      %7512 = vmatprep.subr.mxu0 0.0
      %7513 = vmatpush1.msra.mxu0 0.0
      %7514 = vmatprep.subr.mxu0 0.0
      %7515 = vmatpush1.msra.mxu0 0.0
      %7516 = vmatprep.subr.mxu0 0.0
      %7517 = vmatpush1.msra.mxu0 0.0
      %7518 = vmatprep.subr.mxu0 0.0
      %7519 = vmatpush1.msra.mxu0 0.0
      %7520 = vmatprep.subr.mxu0 0.0
      %7521 = vmatpush1.msra.mxu0 0.0
      %7522 = vmatprep.subr.mxu0 0.0
      %7523 = vmatpush1.msra.mxu0 0.0
      %7524 = vmatprep.subr.mxu0 0.0
      %7525 = vmatpush1.msra.mxu0 0.0
      %7526 = vmatprep.subr.mxu0 0.0
      %7527 = vmatpush1.msra.mxu0 0.0
      %7528 = vmatprep.subr.mxu0 0.0
      %7529 = vmatpush1.msra.mxu0 0.0
      %7530 = vmatprep.subr.mxu0 0.0
      %7531 = vmatpush1.msra.mxu0 0.0
      %7532 = vmatprep.subr.mxu0 0.0
      %7533 = vmatpush1.msra.mxu0 0.0
      %7534 = vmatprep.subr.mxu0 0.0
      %7535 = vmatpush1.msra.mxu0 0.0
      %7536 = vmatprep.subr.mxu0 0.0
      %7537 = vmatpush1.msra.mxu0 0.0
      %7538 = vmatprep.mubr.f32.mxu0 0.0
      %7539 = vmatmul.mubr.f32.gmra.mrb[0].mxu0 %v7472
      %v7540 = vpop.f32.mrb[0].mxu0
      %v7541 = vadd.f32 0.0, %v7540
      %v7542 = vpop.f32.mrb[0].mxu0
      %7543 = vdwg.mxu0
      %s7544 = scalar_lea.vmem %s5, 1536
      %v7545 = vld [vmem:[%s7544] sm:$0xff]
      %v7546 = vld [vmem:[%s7544 + $0x8] sm:$0xff]
      %v7547 = vld [vmem:[%s7544 + $0x10] sm:$0xff]
      %v7548 = vld [vmem:[%s7544 + $0x18] sm:$0xff]
      %v7549 = vld [vmem:[%s7544 + $0x20] sm:$0xff]
      %v7550 = vld [vmem:[%s7544 + $0x28] sm:$0xff]
      %v7551 = vld [vmem:[%s7544 + $0x30] sm:$0xff]
      %v7552 = vld [vmem:[%s7544 + $0x38] sm:$0xff]
      %v7553 = vld [vmem:[%s7544 + $0x40] sm:$0xff]
      %v7554 = vld [vmem:[%s7544 + $0x48] sm:$0xff]
      %v7555 = vld [vmem:[%s7544 + $0x50] sm:$0xff]
      %v7556 = vld [vmem:[%s7544 + $0x58] sm:$0xff]
      %v7557 = vld [vmem:[%s7544 + $0x60] sm:$0xff]
      %v7558 = vld [vmem:[%s7544 + $0x68] sm:$0xff]
      %v7559 = vld [vmem:[%s7544 + $0x70] sm:$0xff]
      %v7560 = vld [vmem:[%s7544 + $0x78] sm:$0xff]
      %v7561 = vld [vmem:[%s7544 + $0x80] sm:$0xff]
      %v7562 = vld [vmem:[%s7544 + $0x88] sm:$0xff]
      %v7563 = vld [vmem:[%s7544 + $0x90] sm:$0xff]
      %v7564 = vld [vmem:[%s7544 + $0x98] sm:$0xff]
      %v7565 = vld [vmem:[%s7544 + $0xa0] sm:$0xff]
      %v7566 = vld [vmem:[%s7544 + $0xa8] sm:$0xff]
      %v7567 = vld [vmem:[%s7544 + $0xb0] sm:$0xff]
      %v7568 = vld [vmem:[%s7544 + $0xb8] sm:$0xff]
      %v7569 = vld [vmem:[%s7544 + $0xc0] sm:$0xff]
      %v7570 = vld [vmem:[%s7544 + $0xc8] sm:$0xff]
      %v7571 = vld [vmem:[%s7544 + $0xd0] sm:$0xff]
      %v7572 = vld [vmem:[%s7544 + $0xd8] sm:$0xff]
      %v7573 = vld [vmem:[%s7544 + $0xe0] sm:$0xff]
      %v7574 = vld [vmem:[%s7544 + $0xe8] sm:$0xff]
      %v7575 = vld [vmem:[%s7544 + $0xf0] sm:$0xff]
      %v7576 = vld [vmem:[%s7544 + $0xf8] sm:$0xff]
      %7577 = vmatprep.subr.mxu0 %v7546
      %7578 = vmatpush1.msra.mxu0 %v7545
      %7579 = vmatprep.subr.mxu0 %v7548
      %7580 = vmatpush1.msra.mxu0 %v7547
      %7581 = vmatprep.subr.mxu0 %v7550
      %7582 = vmatpush1.msra.mxu0 %v7549
      %7583 = vmatprep.subr.mxu0 %v7552
      %7584 = vmatpush1.msra.mxu0 %v7551
      %7585 = vmatprep.subr.mxu0 %v7554
      %7586 = vmatpush1.msra.mxu0 %v7553
      %7587 = vmatprep.subr.mxu0 %v7556
      %7588 = vmatpush1.msra.mxu0 %v7555
      %7589 = vmatprep.subr.mxu0 %v7558
      %7590 = vmatpush1.msra.mxu0 %v7557
      %7591 = vmatprep.subr.mxu0 %v7560
      %7592 = vmatpush1.msra.mxu0 %v7559
      %7593 = vmatprep.subr.mxu0 %v7562
      %7594 = vmatpush1.msra.mxu0 %v7561
      %7595 = vmatprep.subr.mxu0 %v7564
      %7596 = vmatpush1.msra.mxu0 %v7563
      %7597 = vmatprep.subr.mxu0 %v7566
      %7598 = vmatpush1.msra.mxu0 %v7565
      %7599 = vmatprep.subr.mxu0 %v7568
      %7600 = vmatpush1.msra.mxu0 %v7567
      %7601 = vmatprep.subr.mxu0 %v7570
      %7602 = vmatpush1.msra.mxu0 %v7569
      %7603 = vmatprep.subr.mxu0 %v7572
      %7604 = vmatpush1.msra.mxu0 %v7571
      %7605 = vmatprep.subr.mxu0 %v7574
      %7606 = vmatpush1.msra.mxu0 %v7573
      %7607 = vmatprep.subr.mxu0 %v7576
      %7608 = vmatpush1.msra.mxu0 %v7575
      %7609 = vmatprep.subr.mxu0 0.0
      %7610 = vmatpush1.msra.mxu0 0.0
      %7611 = vmatprep.subr.mxu0 0.0
      %7612 = vmatpush1.msra.mxu0 0.0
      %7613 = vmatprep.subr.mxu0 0.0
      %7614 = vmatpush1.msra.mxu0 0.0
      %7615 = vmatprep.subr.mxu0 0.0
      %7616 = vmatpush1.msra.mxu0 0.0
      %7617 = vmatprep.subr.mxu0 0.0
      %7618 = vmatpush1.msra.mxu0 0.0
      %7619 = vmatprep.subr.mxu0 0.0
      %7620 = vmatpush1.msra.mxu0 0.0
      %7621 = vmatprep.subr.mxu0 0.0
      %7622 = vmatpush1.msra.mxu0 0.0
      %7623 = vmatprep.subr.mxu0 0.0
      %7624 = vmatpush1.msra.mxu0 0.0
      %7625 = vmatprep.subr.mxu0 0.0
      %7626 = vmatpush1.msra.mxu0 0.0
      %7627 = vmatprep.subr.mxu0 0.0
      %7628 = vmatpush1.msra.mxu0 0.0
      %7629 = vmatprep.subr.mxu0 0.0
      %7630 = vmatpush1.msra.mxu0 0.0
      %7631 = vmatprep.subr.mxu0 0.0
      %7632 = vmatpush1.msra.mxu0 0.0
      %7633 = vmatprep.subr.mxu0 0.0
      %7634 = vmatpush1.msra.mxu0 0.0
      %7635 = vmatprep.subr.mxu0 0.0
      %7636 = vmatpush1.msra.mxu0 0.0
      %7637 = vmatprep.subr.mxu0 0.0
      %7638 = vmatpush1.msra.mxu0 0.0
      %7639 = vmatprep.subr.mxu0 0.0
      %7640 = vmatpush1.msra.mxu0 0.0
      %7641 = vmatprep.mubr.f32.mxu0 0.0
      %7642 = vmatmul.mubr.f32.gmra.mrb[0].mxu0 %v7541
      %v7643 = vpop.f32.mrb[0].mxu0
      %v7644 = vadd.f32 0.0, %v7643
      %v7645 = vpop.f32.mrb[0].mxu0
      %v7646 = vadd.f32 0.0, %v7645
      %7647 = vdwg.mxu0
      %v7648 = vadd.f32 %v7467, %v7644
      %v7649 = vadd.f32 %v7468, %v7646
      %s7650 = scalar_lea.vmem %s9, 56
      %v7651 = vld [vmem:[%s7650] sm:$0xff]
      %v7653 = vsel %vm6389, %v7651, 0
      %7655 = vmatprep.subr.mxu0 0.0
      %7656 = vmatpush1.msra.mxu0 %v6385
      %7657 = vmatprep.subr.mxu0 0.0
      %7658 = vmatpush1.msra.mxu0 0.0
      %7659 = vmatprep.subr.mxu0 0.0
      %7660 = vmatpush1.msra.mxu0 0.0
      %7661 = vmatprep.subr.mxu0 0.0
      %7662 = vmatpush1.msra.mxu0 0.0
      %7663 = vmatprep.subr.mxu0 0.0
      %7664 = vmatpush1.msra.mxu0 0.0
      %7665 = vmatprep.subr.mxu0 0.0
      %7666 = vmatpush1.msra.mxu0 0.0
      %7667 = vmatprep.subr.mxu0 0.0
      %7668 = vmatpush1.msra.mxu0 0.0
      %7669 = vmatprep.subr.mxu0 0.0
      %7670 = vmatpush1.msra.mxu0 0.0
      %7671 = vmatprep.subr.mxu0 0.0
      %7672 = vmatpush1.msra.mxu0 0.0
      %7673 = vmatprep.subr.mxu0 0.0
      %7674 = vmatpush1.msra.mxu0 0.0
      %7675 = vmatprep.subr.mxu0 0.0
      %7676 = vmatpush1.msra.mxu0 0.0
      %7677 = vmatprep.subr.mxu0 0.0
      %7678 = vmatpush1.msra.mxu0 0.0
      %7679 = vmatprep.subr.mxu0 0.0
      %7680 = vmatpush1.msra.mxu0 0.0
      %7681 = vmatprep.subr.mxu0 0.0
      %7682 = vmatpush1.msra.mxu0 0.0
      %7683 = vmatprep.subr.mxu0 0.0
      %7684 = vmatpush1.msra.mxu0 0.0
      %7685 = vmatprep.subr.mxu0 0.0
      %7686 = vmatpush1.msra.mxu0 0.0
      %7687 = vmatprep.subr.mxu0 0.0
      %7688 = vmatpush1.msra.mxu0 0.0
      %7689 = vmatprep.subr.mxu0 0.0
      %7690 = vmatpush1.msra.mxu0 0.0
      %7691 = vmatprep.subr.mxu0 0.0
      %7692 = vmatpush1.msra.mxu0 0.0
      %7693 = vmatprep.subr.mxu0 0.0
      %7694 = vmatpush1.msra.mxu0 0.0
      %7695 = vmatprep.subr.mxu0 0.0
      %7696 = vmatpush1.msra.mxu0 0.0
      %7697 = vmatprep.subr.mxu0 0.0
      %7698 = vmatpush1.msra.mxu0 0.0
      %7699 = vmatprep.subr.mxu0 0.0
      %7700 = vmatpush1.msra.mxu0 0.0
      %7701 = vmatprep.subr.mxu0 0.0
      %7702 = vmatpush1.msra.mxu0 0.0
      %7703 = vmatprep.subr.mxu0 0.0
      %7704 = vmatpush1.msra.mxu0 0.0
      %7705 = vmatprep.subr.mxu0 0.0
      %7706 = vmatpush1.msra.mxu0 0.0
      %7707 = vmatprep.subr.mxu0 0.0
      %7708 = vmatpush1.msra.mxu0 0.0
      %7709 = vmatprep.subr.mxu0 0.0
      %7710 = vmatpush1.msra.mxu0 0.0
      %7711 = vmatprep.subr.mxu0 0.0
      %7712 = vmatpush1.msra.mxu0 0.0
      %7713 = vmatprep.subr.mxu0 0.0
      %7714 = vmatpush1.msra.mxu0 0.0
      %7715 = vmatprep.subr.mxu0 0.0
      %7716 = vmatpush1.msra.mxu0 0.0
      %7717 = vmatprep.subr.mxu0 0.0
      %7718 = vmatpush1.msra.mxu0 0.0
      %7719 = vmatprep.mubr.f32.mxu0 0.0
      %7720 = vmatmul.mubr.f32.gmra.mrb[0].mxu0 %v7653
      %v7721 = vpop.f32.mrb[0].mxu0
      %v7722 = vadd.f32 0.0, %v7721
      %v7723 = vpop.f32.mrb[0].mxu0
      %7724 = vdwg.mxu0
      %s7725 = scalar_lea.vmem %s5, 1792
      %v7726 = vld [vmem:[%s7725] sm:$0xff]
      %v7727 = vld [vmem:[%s7725 + $0x8] sm:$0xff]
      %v7728 = vld [vmem:[%s7725 + $0x10] sm:$0xff]
      %v7729 = vld [vmem:[%s7725 + $0x18] sm:$0xff]
      %v7730 = vld [vmem:[%s7725 + $0x20] sm:$0xff]
      %v7731 = vld [vmem:[%s7725 + $0x28] sm:$0xff]
      %v7732 = vld [vmem:[%s7725 + $0x30] sm:$0xff]
      %v7733 = vld [vmem:[%s7725 + $0x38] sm:$0xff]
      %v7734 = vld [vmem:[%s7725 + $0x40] sm:$0xff]
      %v7735 = vld [vmem:[%s7725 + $0x48] sm:$0xff]
      %v7736 = vld [vmem:[%s7725 + $0x50] sm:$0xff]
      %v7737 = vld [vmem:[%s7725 + $0x58] sm:$0xff]
      %v7738 = vld [vmem:[%s7725 + $0x60] sm:$0xff]
      %v7739 = vld [vmem:[%s7725 + $0x68] sm:$0xff]
      %v7740 = vld [vmem:[%s7725 + $0x70] sm:$0xff]
      %v7741 = vld [vmem:[%s7725 + $0x78] sm:$0xff]
      %v7742 = vld [vmem:[%s7725 + $0x80] sm:$0xff]
      %v7743 = vld [vmem:[%s7725 + $0x88] sm:$0xff]
      %v7744 = vld [vmem:[%s7725 + $0x90] sm:$0xff]
      %v7745 = vld [vmem:[%s7725 + $0x98] sm:$0xff]
      %v7746 = vld [vmem:[%s7725 + $0xa0] sm:$0xff]
      %v7747 = vld [vmem:[%s7725 + $0xa8] sm:$0xff]
      %v7748 = vld [vmem:[%s7725 + $0xb0] sm:$0xff]
      %v7749 = vld [vmem:[%s7725 + $0xb8] sm:$0xff]
      %v7750 = vld [vmem:[%s7725 + $0xc0] sm:$0xff]
      %v7751 = vld [vmem:[%s7725 + $0xc8] sm:$0xff]
      %v7752 = vld [vmem:[%s7725 + $0xd0] sm:$0xff]
      %v7753 = vld [vmem:[%s7725 + $0xd8] sm:$0xff]
      %v7754 = vld [vmem:[%s7725 + $0xe0] sm:$0xff]
      %v7755 = vld [vmem:[%s7725 + $0xe8] sm:$0xff]
      %v7756 = vld [vmem:[%s7725 + $0xf0] sm:$0xff]
      %v7757 = vld [vmem:[%s7725 + $0xf8] sm:$0xff]
      %7758 = vmatprep.subr.mxu0 %v7727
      %7759 = vmatpush1.msra.mxu0 %v7726
      %7760 = vmatprep.subr.mxu0 %v7729
      %7761 = vmatpush1.msra.mxu0 %v7728
      %7762 = vmatprep.subr.mxu0 %v7731
      %7763 = vmatpush1.msra.mxu0 %v7730
      %7764 = vmatprep.subr.mxu0 %v7733
      %7765 = vmatpush1.msra.mxu0 %v7732
      %7766 = vmatprep.subr.mxu0 %v7735
      %7767 = vmatpush1.msra.mxu0 %v7734
      %7768 = vmatprep.subr.mxu0 %v7737
      %7769 = vmatpush1.msra.mxu0 %v7736
      %7770 = vmatprep.subr.mxu0 %v7739
      %7771 = vmatpush1.msra.mxu0 %v7738
      %7772 = vmatprep.subr.mxu0 %v7741
      %7773 = vmatpush1.msra.mxu0 %v7740
      %7774 = vmatprep.subr.mxu0 %v7743
      %7775 = vmatpush1.msra.mxu0 %v7742
      %7776 = vmatprep.subr.mxu0 %v7745
      %7777 = vmatpush1.msra.mxu0 %v7744
      %7778 = vmatprep.subr.mxu0 %v7747
      %7779 = vmatpush1.msra.mxu0 %v7746
      %7780 = vmatprep.subr.mxu0 %v7749
      %7781 = vmatpush1.msra.mxu0 %v7748
      %7782 = vmatprep.subr.mxu0 %v7751
      %7783 = vmatpush1.msra.mxu0 %v7750
      %7784 = vmatprep.subr.mxu0 %v7753
      %7785 = vmatpush1.msra.mxu0 %v7752
      %7786 = vmatprep.subr.mxu0 %v7755
      %7787 = vmatpush1.msra.mxu0 %v7754
      %7788 = vmatprep.subr.mxu0 %v7757
      %7789 = vmatpush1.msra.mxu0 %v7756
      %7790 = vmatprep.subr.mxu0 0.0
      %7791 = vmatpush1.msra.mxu0 0.0
      %7792 = vmatprep.subr.mxu0 0.0
      %7793 = vmatpush1.msra.mxu0 0.0
      %7794 = vmatprep.subr.mxu0 0.0
      %7795 = vmatpush1.msra.mxu0 0.0
      %7796 = vmatprep.subr.mxu0 0.0
      %7797 = vmatpush1.msra.mxu0 0.0
      %7798 = vmatprep.subr.mxu0 0.0
      %7799 = vmatpush1.msra.mxu0 0.0
      %7800 = vmatprep.subr.mxu0 0.0
      %7801 = vmatpush1.msra.mxu0 0.0
      %7802 = vmatprep.subr.mxu0 0.0
      %7803 = vmatpush1.msra.mxu0 0.0
      %7804 = vmatprep.subr.mxu0 0.0
      %7805 = vmatpush1.msra.mxu0 0.0
      %7806 = vmatprep.subr.mxu0 0.0
      %7807 = vmatpush1.msra.mxu0 0.0
      %7808 = vmatprep.subr.mxu0 0.0
      %7809 = vmatpush1.msra.mxu0 0.0
      %7810 = vmatprep.subr.mxu0 0.0
      %7811 = vmatpush1.msra.mxu0 0.0
      %7812 = vmatprep.subr.mxu0 0.0
      %7813 = vmatpush1.msra.mxu0 0.0
      %7814 = vmatprep.subr.mxu0 0.0
      %7815 = vmatpush1.msra.mxu0 0.0
      %7816 = vmatprep.subr.mxu0 0.0
      %7817 = vmatpush1.msra.mxu0 0.0
      %7818 = vmatprep.subr.mxu0 0.0
      %7819 = vmatpush1.msra.mxu0 0.0
      %7820 = vmatprep.subr.mxu0 0.0
      %7821 = vmatpush1.msra.mxu0 0.0
      %7822 = vmatprep.mubr.f32.mxu0 0.0
      %7823 = vmatmul.mubr.f32.gmra.mrb[0].mxu0 %v7722
      %v7824 = vpop.f32.mrb[0].mxu0
      %v7825 = vadd.f32 0.0, %v7824
      %v7826 = vpop.f32.mrb[0].mxu0
      %v7827 = vadd.f32 0.0, %v7826
      %7828 = vdwg.mxu0
      %v7829 = vadd.f32 %v7648, %v7825
      %v7830 = vadd.f32 %v7649, %v7827
      %s7831 = scalar_lea.vmem %s9, 64
      %v7832 = vld [vmem:[%s7831] sm:$0xff]
      %v7834 = vsel %vm6389, %v7832, 0
      %7836 = vmatprep.subr.mxu0 0.0
      %7837 = vmatpush1.msra.mxu0 %v6385
      %7838 = vmatprep.subr.mxu0 0.0
      %7839 = vmatpush1.msra.mxu0 0.0
      %7840 = vmatprep.subr.mxu0 0.0
      %7841 = vmatpush1.msra.mxu0 0.0
      %7842 = vmatprep.subr.mxu0 0.0
      %7843 = vmatpush1.msra.mxu0 0.0
      %7844 = vmatprep.subr.mxu0 0.0
      %7845 = vmatpush1.msra.mxu0 0.0
      %7846 = vmatprep.subr.mxu0 0.0
      %7847 = vmatpush1.msra.mxu0 0.0
      %7848 = vmatprep.subr.mxu0 0.0
      %7849 = vmatpush1.msra.mxu0 0.0
      %7850 = vmatprep.subr.mxu0 0.0
      %7851 = vmatpush1.msra.mxu0 0.0
      %7852 = vmatprep.subr.mxu0 0.0
      %7853 = vmatpush1.msra.mxu0 0.0
      %7854 = vmatprep.subr.mxu0 0.0
      %7855 = vmatpush1.msra.mxu0 0.0
      %7856 = vmatprep.subr.mxu0 0.0
      %7857 = vmatpush1.msra.mxu0 0.0
      %7858 = vmatprep.subr.mxu0 0.0
      %7859 = vmatpush1.msra.mxu0 0.0
      %7860 = vmatprep.subr.mxu0 0.0
      %7861 = vmatpush1.msra.mxu0 0.0
      %7862 = vmatprep.subr.mxu0 0.0
      %7863 = vmatpush1.msra.mxu0 0.0
      %7864 = vmatprep.subr.mxu0 0.0
      %7865 = vmatpush1.msra.mxu0 0.0
      %7866 = vmatprep.subr.mxu0 0.0
      %7867 = vmatpush1.msra.mxu0 0.0
      %7868 = vmatprep.subr.mxu0 0.0
      %7869 = vmatpush1.msra.mxu0 0.0
      %7870 = vmatprep.subr.mxu0 0.0
      %7871 = vmatpush1.msra.mxu0 0.0
      %7872 = vmatprep.subr.mxu0 0.0
      %7873 = vmatpush1.msra.mxu0 0.0
      %7874 = vmatprep.subr.mxu0 0.0
      %7875 = vmatpush1.msra.mxu0 0.0
      %7876 = vmatprep.subr.mxu0 0.0
      %7877 = vmatpush1.msra.mxu0 0.0
      %7878 = vmatprep.subr.mxu0 0.0
      %7879 = vmatpush1.msra.mxu0 0.0
      %7880 = vmatprep.subr.mxu0 0.0
      %7881 = vmatpush1.msra.mxu0 0.0
      %7882 = vmatprep.subr.mxu0 0.0
      %7883 = vmatpush1.msra.mxu0 0.0
      %7884 = vmatprep.subr.mxu0 0.0
      %7885 = vmatpush1.msra.mxu0 0.0
      %7886 = vmatprep.subr.mxu0 0.0
      %7887 = vmatpush1.msra.mxu0 0.0
      %7888 = vmatprep.subr.mxu0 0.0
      %7889 = vmatpush1.msra.mxu0 0.0
      %7890 = vmatprep.subr.mxu0 0.0
      %7891 = vmatpush1.msra.mxu0 0.0
      %7892 = vmatprep.subr.mxu0 0.0
      %7893 = vmatpush1.msra.mxu0 0.0
      %7894 = vmatprep.subr.mxu0 0.0
      %7895 = vmatpush1.msra.mxu0 0.0
      %7896 = vmatprep.subr.mxu0 0.0
      %7897 = vmatpush1.msra.mxu0 0.0
      %7898 = vmatprep.subr.mxu0 0.0
      %7899 = vmatpush1.msra.mxu0 0.0
      %7900 = vmatprep.mubr.f32.mxu0 0.0
      %7901 = vmatmul.mubr.f32.gmra.mrb[0].mxu0 %v7834
      %v7902 = vpop.f32.mrb[0].mxu0
      %v7903 = vadd.f32 0.0, %v7902
      %v7904 = vpop.f32.mrb[0].mxu0
      %7905 = vdwg.mxu0
      %s7906 = scalar_lea.vmem %s5, 2048
      %v7907 = vld [vmem:[%s7906] sm:$0xff]
      %v7908 = vld [vmem:[%s7906 + $0x8] sm:$0xff]
      %v7909 = vld [vmem:[%s7906 + $0x10] sm:$0xff]
      %v7910 = vld [vmem:[%s7906 + $0x18] sm:$0xff]
      %v7911 = vld [vmem:[%s7906 + $0x20] sm:$0xff]
      %v7912 = vld [vmem:[%s7906 + $0x28] sm:$0xff]
      %v7913 = vld [vmem:[%s7906 + $0x30] sm:$0xff]
      %v7914 = vld [vmem:[%s7906 + $0x38] sm:$0xff]
      %v7915 = vld [vmem:[%s7906 + $0x40] sm:$0xff]
      %v7916 = vld [vmem:[%s7906 + $0x48] sm:$0xff]
      %v7917 = vld [vmem:[%s7906 + $0x50] sm:$0xff]
      %v7918 = vld [vmem:[%s7906 + $0x58] sm:$0xff]
      %v7919 = vld [vmem:[%s7906 + $0x60] sm:$0xff]
      %v7920 = vld [vmem:[%s7906 + $0x68] sm:$0xff]
      %v7921 = vld [vmem:[%s7906 + $0x70] sm:$0xff]
      %v7922 = vld [vmem:[%s7906 + $0x78] sm:$0xff]
      %v7923 = vld [vmem:[%s7906 + $0x80] sm:$0xff]
      %v7924 = vld [vmem:[%s7906 + $0x88] sm:$0xff]
      %v7925 = vld [vmem:[%s7906 + $0x90] sm:$0xff]
      %v7926 = vld [vmem:[%s7906 + $0x98] sm:$0xff]
      %v7927 = vld [vmem:[%s7906 + $0xa0] sm:$0xff]
      %v7928 = vld [vmem:[%s7906 + $0xa8] sm:$0xff]
      %v7929 = vld [vmem:[%s7906 + $0xb0] sm:$0xff]
      %v7930 = vld [vmem:[%s7906 + $0xb8] sm:$0xff]
      %v7931 = vld [vmem:[%s7906 + $0xc0] sm:$0xff]
      %v7932 = vld [vmem:[%s7906 + $0xc8] sm:$0xff]
      %v7933 = vld [vmem:[%s7906 + $0xd0] sm:$0xff]
      %v7934 = vld [vmem:[%s7906 + $0xd8] sm:$0xff]
      %v7935 = vld [vmem:[%s7906 + $0xe0] sm:$0xff]
      %v7936 = vld [vmem:[%s7906 + $0xe8] sm:$0xff]
      %v7937 = vld [vmem:[%s7906 + $0xf0] sm:$0xff]
      %v7938 = vld [vmem:[%s7906 + $0xf8] sm:$0xff]
      %7939 = vmatprep.subr.mxu0 %v7908
      %7940 = vmatpush1.msra.mxu0 %v7907
      %7941 = vmatprep.subr.mxu0 %v7910
      %7942 = vmatpush1.msra.mxu0 %v7909
      %7943 = vmatprep.subr.mxu0 %v7912
      %7944 = vmatpush1.msra.mxu0 %v7911
      %7945 = vmatprep.subr.mxu0 %v7914
      %7946 = vmatpush1.msra.mxu0 %v7913
      %7947 = vmatprep.subr.mxu0 %v7916
      %7948 = vmatpush1.msra.mxu0 %v7915
      %7949 = vmatprep.subr.mxu0 %v7918
      %7950 = vmatpush1.msra.mxu0 %v7917
      %7951 = vmatprep.subr.mxu0 %v7920
      %7952 = vmatpush1.msra.mxu0 %v7919
      %7953 = vmatprep.subr.mxu0 %v7922
      %7954 = vmatpush1.msra.mxu0 %v7921
      %7955 = vmatprep.subr.mxu0 %v7924
      %7956 = vmatpush1.msra.mxu0 %v7923
      %7957 = vmatprep.subr.mxu0 %v7926
      %7958 = vmatpush1.msra.mxu0 %v7925
      %7959 = vmatprep.subr.mxu0 %v7928
      %7960 = vmatpush1.msra.mxu0 %v7927
      %7961 = vmatprep.subr.mxu0 %v7930
      %7962 = vmatpush1.msra.mxu0 %v7929
      %7963 = vmatprep.subr.mxu0 %v7932
      %7964 = vmatpush1.msra.mxu0 %v7931
      %7965 = vmatprep.subr.mxu0 %v7934
      %7966 = vmatpush1.msra.mxu0 %v7933
      %7967 = vmatprep.subr.mxu0 %v7936
      %7968 = vmatpush1.msra.mxu0 %v7935
      %7969 = vmatprep.subr.mxu0 %v7938
      %7970 = vmatpush1.msra.mxu0 %v7937
      %7971 = vmatprep.subr.mxu0 0.0
      %7972 = vmatpush1.msra.mxu0 0.0
      %7973 = vmatprep.subr.mxu0 0.0
      %7974 = vmatpush1.msra.mxu0 0.0
      %7975 = vmatprep.subr.mxu0 0.0
      %7976 = vmatpush1.msra.mxu0 0.0
      %7977 = vmatprep.subr.mxu0 0.0
      %7978 = vmatpush1.msra.mxu0 0.0
      %7979 = vmatprep.subr.mxu0 0.0
      %7980 = vmatpush1.msra.mxu0 0.0
      %7981 = vmatprep.subr.mxu0 0.0
      %7982 = vmatpush1.msra.mxu0 0.0
      %7983 = vmatprep.subr.mxu0 0.0
      %7984 = vmatpush1.msra.mxu0 0.0
      %7985 = vmatprep.subr.mxu0 0.0
      %7986 = vmatpush1.msra.mxu0 0.0
      %7987 = vmatprep.subr.mxu0 0.0
      %7988 = vmatpush1.msra.mxu0 0.0
      %7989 = vmatprep.subr.mxu0 0.0
      %7990 = vmatpush1.msra.mxu0 0.0
      %7991 = vmatprep.subr.mxu0 0.0
      %7992 = vmatpush1.msra.mxu0 0.0
      %7993 = vmatprep.subr.mxu0 0.0
      %7994 = vmatpush1.msra.mxu0 0.0
      %7995 = vmatprep.subr.mxu0 0.0
      %7996 = vmatpush1.msra.mxu0 0.0
      %7997 = vmatprep.subr.mxu0 0.0
      %7998 = vmatpush1.msra.mxu0 0.0
      %7999 = vmatprep.subr.mxu0 0.0
      %8000 = vmatpush1.msra.mxu0 0.0
      %8001 = vmatprep.subr.mxu0 0.0
      %8002 = vmatpush1.msra.mxu0 0.0
      %8003 = vmatprep.mubr.f32.mxu0 0.0
      %8004 = vmatmul.mubr.f32.gmra.mrb[0].mxu0 %v7903
      %v8005 = vpop.f32.mrb[0].mxu0
      %v8006 = vadd.f32 0.0, %v8005
      %v8007 = vpop.f32.mrb[0].mxu0
      %v8008 = vadd.f32 0.0, %v8007
      %8009 = vdwg.mxu0
      %v8010 = vadd.f32 %v7829, %v8006
      %v8011 = vadd.f32 %v7830, %v8008
      %v8013 = vlaneseq
      %v8014 = vshrl.u32 %v8013, 7
      %v8015 = vsub.s32 0, %v8014
      %v8016 = vrot.slane %v6387, %v8015
      %v8017 = vlaneseq
      %v8018 = vshrl.u32 %v8017, 7
      %v8019 = vsub.s32 4, %v8018
      %v8020 = vrot.slane %v6387, %v8019
      %v8023 = vlaneseq
      %v8024 = vshrl.u32 %v8023, 7
      %v8025 = vsub.s32 0, %v8024
      %v8026 = vrot.slane %v8016, %v8025
      %v8027 = vlaneseq
      %v8028 = vshrl.u32 %v8027, 7
      %v8029 = vsub.s32 0, %v8028
      %v8030 = vrot.slane %v8020, %v8029
      %v8031 = vadd.f32 %v8010, %v8026
      %v8032 = vadd.f32 %v8011, %v8030
      %vm8033 = vcmp.ge.f32.partialorder %v8031, 0.0
      %vm8034 = vcmp.ge.f32.partialorder %v8032, 0.0
      %v8035 = vmul.f32 %v8031, 0.2
      %v8036 = vmul.f32 %v8032, 0.2
      %v8037 = vsel %vm8033, %v8031, %v8035
      %v8038 = vsel %vm8034, %v8032, %v8036
      %v8039 = vlaneseq
      %v8040 = vshrl.u32 %v8039, 7
      %v8041 = vsub.s32 1, %v8040
      %v8042 = vrot.slane %v6387, %v8041
      %v8043 = vlaneseq
      %v8044 = vshrl.u32 %v8043, 7
      %v8045 = vsub.s32 5, %v8044
      %v8046 = vrot.slane %v6387, %v8045
      %v8049 = vlaneseq
      %v8050 = vshrl.u32 %v8049, 7
      %v8051 = vsub.s32 1, %v8050
      %v8052 = vrot.slane %v8042, %v8051
      %v8053 = vlaneseq
      %v8054 = vshrl.u32 %v8053, 7
      %v8055 = vsub.s32 1, %v8054
      %v8056 = vrot.slane %v8046, %v8055
      %v8057 = vmul.f32 %v8037, %v8052
      %v8058 = vmul.f32 %v8038, %v8056
      %v8059 = vlaneseq
      %v8060 = vshrl.u32 %v8059, 7
      %v8061 = vsub.s32 2, %v8060
      %v8062 = vrot.slane %v6387, %v8061
      %v8063 = vlaneseq
      %v8064 = vshrl.u32 %v8063, 7
      %v8065 = vsub.s32 6, %v8064
      %v8066 = vrot.slane %v6387, %v8065
      %v8069 = vlaneseq
      %v8070 = vshrl.u32 %v8069, 7
      %v8071 = vsub.s32 2, %v8070
      %v8072 = vrot.slane %v8062, %v8071
      %v8073 = vlaneseq
      %v8074 = vshrl.u32 %v8073, 7
      %v8075 = vsub.s32 2, %v8074
      %v8076 = vrot.slane %v8066, %v8075
      %v8077 = vadd.f32 %v8057, %v8072
      %v8078 = vadd.f32 %v8058, %v8076
      %v8079 = vld [vmem:[%s11] sm:$0xff]
      %v8080 = vld [vmem:[%s11 + $0x8] sm:$0xff]
      %v8081 = vld [vmem:[%s11 + $0x10] sm:$0xff]
      %v8082 = vld [vmem:[%s11 + $0x18] sm:$0xff]
      %v8083 = vld [vmem:[%s11 + $0x20] sm:$0xff]
      %v8084 = vld [vmem:[%s11 + $0x28] sm:$0xff]
      %v8085 = vld [vmem:[%s11 + $0x30] sm:$0xff]
      %v8086 = vld [vmem:[%s11 + $0x38] sm:$0xff]
      %v8087 = vld [vmem:[%s11 + $0x40] sm:$0xff]
      %v8088 = vld [vmem:[%s11 + $0x48] sm:$0xff]
      %v8089 = vld [vmem:[%s11 + $0x50] sm:$0xff]
      %v8090 = vld [vmem:[%s11 + $0x58] sm:$0xff]
      %v8091 = vld [vmem:[%s11 + $0x60] sm:$0xff]
      %v8092 = vld [vmem:[%s11 + $0x68] sm:$0xff]
      %v8093 = vld [vmem:[%s11 + $0x70] sm:$0xff]
      %v8094 = vld [vmem:[%s11 + $0x78] sm:$0xff]
      %v8095 = vld [vmem:[%s11 + $0x80] sm:$0xff]
      %v8096 = vld [vmem:[%s11 + $0x88] sm:$0xff]
      %v8097 = vld [vmem:[%s11 + $0x90] sm:$0xff]
      %v8098 = vld [vmem:[%s11 + $0x98] sm:$0xff]
      %v8099 = vld [vmem:[%s11 + $0xa0] sm:$0xff]
      %v8100 = vld [vmem:[%s11 + $0xa8] sm:$0xff]
      %v8101 = vld [vmem:[%s11 + $0xb0] sm:$0xff]
      %v8102 = vld [vmem:[%s11 + $0xb8] sm:$0xff]
      %v8103 = vld [vmem:[%s11 + $0xc0] sm:$0xff]
      %v8104 = vld [vmem:[%s11 + $0xc8] sm:$0xff]
      %v8105 = vld [vmem:[%s11 + $0xd0] sm:$0xff]
      %v8106 = vld [vmem:[%s11 + $0xd8] sm:$0xff]
      %v8107 = vld [vmem:[%s11 + $0xe0] sm:$0xff]
      %v8108 = vld [vmem:[%s11 + $0xe8] sm:$0xff]
      %v8109 = vld [vmem:[%s11 + $0xf0] sm:$0xff]
      %v8110 = vld [vmem:[%s11 + $0xf8] sm:$0xff]
      %v8111 = vld [vmem:[%s12] sm:$0x1]
      %v8113 = vlaneseq
      %v8114 = vshrl.u32 %v8113, 7
      %v8115 = vsub.s32 0, %v8114
      %v8116 = vrot.slane %v8111, %v8115
      %8118 = vmatprep.subr.mxu0 0.0
      %8119 = vmatpush1.msra.mxu0 %v8079
      %8120 = vmatprep.subr.mxu0 0.0
      %8121 = vmatpush1.msra.mxu0 %v8080
      %8122 = vmatprep.subr.mxu0 0.0
      %8123 = vmatpush1.msra.mxu0 %v8081
      %8124 = vmatprep.subr.mxu0 0.0
      %8125 = vmatpush1.msra.mxu0 %v8082
      %8126 = vmatprep.subr.mxu0 0.0
      %8127 = vmatpush1.msra.mxu0 %v8083
      %8128 = vmatprep.subr.mxu0 0.0
      %8129 = vmatpush1.msra.mxu0 %v8084
      %8130 = vmatprep.subr.mxu0 0.0
      %8131 = vmatpush1.msra.mxu0 %v8085
      %8132 = vmatprep.subr.mxu0 0.0
      %8133 = vmatpush1.msra.mxu0 %v8086
      %8134 = vmatprep.subr.mxu0 0.0
      %8135 = vmatpush1.msra.mxu0 %v8087
      %8136 = vmatprep.subr.mxu0 0.0
      %8137 = vmatpush1.msra.mxu0 %v8088
      %8138 = vmatprep.subr.mxu0 0.0
      %8139 = vmatpush1.msra.mxu0 %v8089
      %8140 = vmatprep.subr.mxu0 0.0
      %8141 = vmatpush1.msra.mxu0 %v8090
      %8142 = vmatprep.subr.mxu0 0.0
      %8143 = vmatpush1.msra.mxu0 %v8091
      %8144 = vmatprep.subr.mxu0 0.0
      %8145 = vmatpush1.msra.mxu0 %v8092
      %8146 = vmatprep.subr.mxu0 0.0
      %8147 = vmatpush1.msra.mxu0 %v8093
      %8148 = vmatprep.subr.mxu0 0.0
      %8149 = vmatpush1.msra.mxu0 %v8094
      %8150 = vmatprep.subr.mxu0 0.0
      %8151 = vmatpush1.msra.mxu0 %v8095
      %8152 = vmatprep.subr.mxu0 0.0
      %8153 = vmatpush1.msra.mxu0 %v8096
      %8154 = vmatprep.subr.mxu0 0.0
      %8155 = vmatpush1.msra.mxu0 %v8097
      %8156 = vmatprep.subr.mxu0 0.0
      %8157 = vmatpush1.msra.mxu0 %v8098
      %8158 = vmatprep.subr.mxu0 0.0
      %8159 = vmatpush1.msra.mxu0 %v8099
      %8160 = vmatprep.subr.mxu0 0.0
      %8161 = vmatpush1.msra.mxu0 %v8100
      %8162 = vmatprep.subr.mxu0 0.0
      %8163 = vmatpush1.msra.mxu0 %v8101
      %8164 = vmatprep.subr.mxu0 0.0
      %8165 = vmatpush1.msra.mxu0 %v8102
      %8166 = vmatprep.subr.mxu0 0.0
      %8167 = vmatpush1.msra.mxu0 %v8103
      %8168 = vmatprep.subr.mxu0 0.0
      %8169 = vmatpush1.msra.mxu0 %v8104
      %8170 = vmatprep.subr.mxu0 0.0
      %8171 = vmatpush1.msra.mxu0 %v8105
      %8172 = vmatprep.subr.mxu0 0.0
      %8173 = vmatpush1.msra.mxu0 %v8106
      %8174 = vmatprep.subr.mxu0 0.0
      %8175 = vmatpush1.msra.mxu0 %v8107
      %8176 = vmatprep.subr.mxu0 0.0
      %8177 = vmatpush1.msra.mxu0 %v8108
      %8178 = vmatprep.subr.mxu0 0.0
      %8179 = vmatpush1.msra.mxu0 %v8109
      %8180 = vmatprep.subr.mxu0 0.0
      %8181 = vmatpush1.msra.mxu0 %v8110
      %8182 = vmatprep.mubr.f32.mxu0 %v8078
      %8183 = vmatmul.mubr.f32.gmra.mrb[0].mxu0 %v8077
      %v8184 = vpop.f32.mrb[0].mxu0
      %v8185 = vadd.f32 %v8116, %v8184
      %v8186 = vpop.f32.mrb[0].mxu0
      %8187 = vdwg.mxu0
      %v8188 = vsub.f32 0.0, %v8185
      %v8189 = vmul.f32 %v8188, 1.442695
      %v8190 = vpow.pop %v8189
      %v8191 = vadd.f32 %v8190, 1.0
      %v8192 = vrcp.pop %v8191
      %v8193 = vmul.f32 1.0, %v8192
      %8194 = vst [vmem:[%s438] sm:$0xff] %v8193
      %p8195 = scmp.lt.s32.totalorder %s24, 1
      %s8196 = scalar_select %p8195, %s24, 1
      %s8197 = smul.addr %s8196, 8
      %s8198 = scalar_lea.vmem %s13, %s8197
      // Predicated region
      $region73: #{discriminator_forward_pallas.1} parent=71 // pred_check
        %p8199 = pneg %p320
      $region74: #{discriminator_forward_pallas.1} parent=71 // pred_check_branch
        %8201 = sbr.rel (%p8199) target = $region76
      $region75: #{discriminator_forward_pallas.1} parent=71 // pred_region
        _
      $region76: #{discriminator_forward_pallas.1} parent=71 // pred_fallthru
        _
    $region72: #{discriminator_forward_pallas.1} parent=5 // pred_fallthru
      _
    %p8202 = scmp.le.s32.totalorder 2, %s19
    // Predicated region
    $region77: #{discriminator_forward_pallas.1} parent=5 // pred_check
      %p8203 = pneg %p8202
    $region78: #{discriminator_forward_pallas.1} parent=5 // pred_check_branch
      %8205 = sbr.rel (%p8203) target = $region80
    $region79: #{discriminator_forward_pallas.1} parent=5 // pred_region
      %s8206 = ssub.s32 %s19, 2
      // Predicated region
      $region81: #{discriminator_forward_pallas.1} parent=79 // pred_check
        %p8207 = pneg %p326
      $region82: #{discriminator_forward_pallas.1} parent=79 // pred_check_branch
        %8209 = sbr.rel (%p8207) target = $region84
      $region83: #{discriminator_forward_pallas.1} parent=79 // pred_region
        %p8210 = scmp.lt.s32.totalorder %s25, 1
        %s8211 = scalar_select %p8210, %s25, 1
        %s8212 = smul.addr %s8211, 8
        %s8213 = scalar_lea.vmem %s13, %s8212
      $region84: #{discriminator_forward_pallas.1} parent=79 // pred_fallthru
        _
    $region80: #{discriminator_forward_pallas.1} parent=5 // pred_fallthru
      _
  $region6: #{discriminator_forward_pallas.1} parent=0 // loop_footer
    %s23 = sadd.s32 1, %s19
  $region7: #{discriminator_forward_pallas.1} parent=0 // loop_footer_branch
    %18 = sbr.rel target = $region3
  $region8: #{discriminator_forward_pallas.1} parent=0 // loop_exit
    _

</llo_original>
